<compile_context>
chip_gen: v6e
topology: v6e:2x2x1
jax: 0.10.0
libtpu: 0.0.40
codegen_flags: <defaults>
</compile_context>

<pallas_src>
import numpy as np

import jax
import jax.numpy as jnp
from jax.experimental import pallas as pl
from jax.experimental.pallas import tpu as pltpu

# ---------------- config (Qwen3Config; vocab/intermediate shrunk, max_seq=8) --
VOCAB = 1024                       # shrunk from 151936 to keep the demo light
HIDDEN = 32
N_HEADS = 8
N_KV = 4
HEAD_DIM = HIDDEN // N_HEADS       # 4
N_REP = N_HEADS // N_KV            # 2
INTER = 128                        # intermediate_size (shrunk from 3072)
NUM_LAYERS = 2
SEQ = 8                            # prompt length
MAX_SEQ = 8                        # max_position_embeddings (== SEQ: full prefill)
EPS = 1e-6
ROPE_THETA = 1.0e6
SCALING = HEAD_DIM ** -0.5         # reference DIVIDES scores by this
QK_SCALE = float(HEAD_DIM) ** 0.5  # == 1/SCALING, folded into q before the score matmul

HIGHEST = jax.lax.Precision.HIGHEST


# --------------- constant "structure" matrices (built once on the host) ------
def _head_mean_matrix(width, head_dim):
    """x @ M == per-head mean over head_dim, broadcast back to every column."""
    m = np.zeros((width, width), np.float32)
    for h in range(width // head_dim):
        s = slice(h * head_dim, (h + 1) * head_dim)
        m[s, s] = 1.0 / head_dim
    return m


def _rot_half_matrix(width, head_dim):
    """x @ R == _rotate_half applied independently to every head_dim block."""
    half = head_dim // 2
    m = np.zeros((width, width), np.float32)
    for h in range(width // head_dim):
        b = h * head_dim
        for i in range(half):
            m[b + half + i, b + i] = -1.0   # out[:, b+i]      = -x[:, b+half+i]
            m[b + i, b + half + i] = 1.0    # out[:, b+half+i] =  x[:, b+i]
    return m


def _expand_kv_matrix():
    """x @ E == repeat_kv: duplicate each kv head N_REP times (consecutively)."""
    m = np.zeros((N_KV * HEAD_DIM, N_HEADS * HEAD_DIM), np.float32)
    for h in range(N_HEADS):
        g = h // N_REP
        for i in range(HEAD_DIM):
            m[g * HEAD_DIM + i, h * HEAD_DIM + i] = 1.0
    return m


def _tile_cols_matrix():
    """(S, H*S): x @ T tiles an (*, S) matrix horizontally N_HEADS times."""
    m = np.zeros((SEQ, N_HEADS * SEQ), np.float32)
    for h in range(N_HEADS):
        m[:, h * SEQ:(h + 1) * SEQ] = np.eye(SEQ, dtype=np.float32)
    return m


def _score_mask():
    """(H*d, H*S): keeps only head-h rows inside head-h score columns."""
    m = np.zeros((N_HEADS * HEAD_DIM, N_HEADS * SEQ), np.float32)
    for h in range(N_HEADS):
        m[h * HEAD_DIM:(h + 1) * HEAD_DIM, h * SEQ:(h + 1) * SEQ] = 1.0
    return m


def _block_sum_matrix():
    """(H*S, H*S): p @ B == per-head row sums, broadcast over the head's columns."""
    m = np.zeros((N_HEADS * SEQ, N_HEADS * SEQ), np.float32)
    for h in range(N_HEADS):
        s = slice(h * SEQ, (h + 1) * SEQ)
        m[s, s] = 1.0
    return m


HS_Q = jnp.asarray(_head_mean_matrix(N_HEADS * HEAD_DIM, HEAD_DIM))   # (32, 32)
HS_K = jnp.asarray(_head_mean_matrix(N_KV * HEAD_DIM, HEAD_DIM))      # (16, 16)
ROT_Q = jnp.asarray(_rot_half_matrix(N_HEADS * HEAD_DIM, HEAD_DIM))   # (32, 32)
ROT_K = jnp.asarray(_rot_half_matrix(N_KV * HEAD_DIM, HEAD_DIM))      # (16, 16)
EXPAND = jnp.asarray(_expand_kv_matrix())                             # (16, 32)
TILE = jnp.asarray(_tile_cols_matrix())                               # (8, 64)
TILE_T = jnp.asarray(_tile_cols_matrix().T.copy())                    # (64, 8)
KMASK = jnp.asarray(_score_mask())                                    # (32, 64)
VMASK = jnp.asarray(_score_mask().T.copy())                           # (64, 32)
SUMBLK = jnp.asarray(_block_sum_matrix())                             # (64, 64)


# ------------------------------ kernel ---------------------------------------
def _mm(a, b):
    # HIGHEST precision (multi-pass f32 on the MXU) so that the constant
    # "structure" matmuls (per-head mean / rotate_half / repeat_kv / per-head
    # sums) are numerically exact; DEFAULT (single bf16 pass) is what made the
    # previous version miss the 1e-4 KV-cache tolerance.
    return jnp.dot(a, b, preferred_element_type=jnp.float32, precision=HIGHEST)


def _rms(x):
    # RMSNorm.forward of the reference: normalize only, weight is never applied.
    return x * jax.lax.rsqrt(jnp.mean(x * x, axis=-1, keepdims=True) + EPS)


def qwen3_prefill_kernel(
        x_ref, cosq_ref, sinq_ref, cosk_ref, sink_ref,
        hsq_ref, hsk_ref, rotq_ref, rotk_ref, expand_ref,
        tile_ref, tilet_ref, kmask_ref, vmask_ref, sumblk_ref,
        wq_ref, wk_ref, wv_ref, wo_ref, wg_ref, wu_ref, wd_ref,
        out_ref, kcache_ref, vcache_ref,
        h_ref):
    layer = pl.program_id(0)

    @pl.when(layer == 0)
    def _():                                   # load embeddings into the residual stream
        h_ref[...] = x_ref[...]

    x = h_ref[...]                             # (S, D) residual stream of this layer

    # ---- input_layernorm + q/k/v projections (one MXU push each) ----------
    xn = _rms(x)
    q = _mm(xn, wq_ref[...])                   # (S, 32)
    k = _mm(xn, wk_ref[...])                   # (S, 16)
    v = _mm(xn, wv_ref[...])                   # (S, 16)

    # ---- per-head q_norm / k_norm, batched via block-diagonal mean matmuls -
    q = q * jax.lax.rsqrt(_mm(q * q, hsq_ref[...]) + EPS)
    k = k * jax.lax.rsqrt(_mm(k * k, hsk_ref[...]) + EPS)

    # ---- rotary embedding on full slabs (rotate_half == constant matmul) ---
    q = q * cosq_ref[...] + _mm(q, rotq_ref[...]) * sinq_ref[...]
    k = k * cosk_ref[...] + _mm(k, rotk_ref[...]) * sink_ref[...]

    # ---- kv_cache.prefill_update: one lane-dense full-block store each -----
    kcache_ref[...] = k                        # (MAX_SEQ, N_KV*HEAD_DIM)
    vcache_ref[...] = v

    # ---- grouped attention: all heads batched as block-diagonal 2D matmuls -
    q = q * QK_SCALE                           # folds the reference `scores / scaling`
    k_exp = _mm(k, expand_ref[...])            # (S, 32)  repeat_kv for K
    v_exp = _mm(v, expand_ref[...])            # (S, 32)  repeat_kv for V

    # K_big[c, h*S + t] = k_exp[t, c] when head(c) == h, else 0
    k_big = _mm(k_exp.T, tile_ref[...]) * kmask_ref[...]        # (32, H*S)
    scores = _mm(q, k_big)                                       # (S, H*S); cols [h*S:(h+1)*S] = head h
    # Per-head softmax.  Subtracting the row-global max (instead of a per-head
    # max) is mathematically exact (softmax is shift-invariant within a head
    # block) and numerically safe: q/k are per-head RMS-normalized, so
    # |scores| <= QK_SCALE * head_dim = 8 and every exp() stays >= exp(-16).
    p = jnp.exp(scores - jnp.max(scores, axis=-1, keepdims=True))
    denom = _mm(p, sumblk_ref[...])                              # per-head sums, broadcast
    p = p * pl.reciprocal(denom, approx=True)                    # EUP, not a VALU divide
    # V_big[h*S + t, c] = v_exp[t, c] when head(c) == h, else 0
    v_big = _mm(tilet_ref[...], v_exp) * vmask_ref[...]          # (H*S, 32)
    attn = _mm(p, v_big)                                         # (S, 32), head-major columns
    attn = _mm(attn, wo_ref[...])                                # o_proj

    # ---- residual + post_attention_layernorm + MLP + residual --------------
    h1 = x + attn
    h1n = _rms(h1)
    gate = _mm(h1n, wg_ref[...])
    up = _mm(h1n, wu_ref[...])
    act = gate * pl.reciprocal(1.0 + jnp.exp(-gate), approx=True)   # SiLU on the EUP
    h2 = h1 + _mm(act * up, wd_ref[...])

    h_ref[...] = h2                            # carry residual stream to the next layer

    @pl.when(layer == pl.num_programs(0) - 1)
    def _():                                   # model-level final RMSNorm, only once
        out_ref[...] = _rms(h2)


# ------------------------------ wrapper --------------------------------------
@jax.jit
def qwen3_prefill(input_ids, params):
    """Full Qwen3Model prefill forward.  input_ids: (1, SEQ) int32.

    Returns (hidden_states (1, SEQ, HIDDEN),
             key_caches   (NUM_LAYERS, 1, MAX_SEQ, N_KV, HEAD_DIM),
             value_caches (NUM_LAYERS, 1, MAX_SEQ, N_KV, HEAD_DIM)).
    """
    x = jnp.take(params["embed"], input_ids[0], axis=0)           # (S, D) embed_tokens

    # RopePositionEmbedding (prefill: position_ids = arange(S)), pre-tiled to
    # the q / k projection widths so the kernel applies rope in one VPU pass.
    pos = jnp.arange(SEQ, dtype=jnp.float32)
    inv_freq = 1.0 / (ROPE_THETA ** (jnp.arange(0, HEAD_DIM, 2, dtype=jnp.float32) / HEAD_DIM))
    freqs = pos[:, None] * inv_freq[None, :]
    emb = jnp.concatenate([freqs, freqs], axis=-1)                # (S, head_dim)
    cos, sin = jnp.cos(emb), jnp.sin(emb)
    cos_q, sin_q = jnp.tile(cos, (1, N_HEADS)), jnp.tile(sin, (1, N_HEADS))
    cos_k, sin_k = jnp.tile(cos, (1, N_KV)), jnp.tile(sin, (1, N_KV))

    shared = (x, cos_q, sin_q, cos_k, sin_k,
              HS_Q, HS_K, ROT_Q, ROT_K, EXPAND,
              TILE, TILE_T, KMASK, VMASK, SUMBLK)
    weights = (params["wq_t"], params["wk_t"], params["wv_t"], params["wo_t"],
               params["wg_t"], params["wu_t"], params["wd_t"])

    in_specs = ([pl.BlockSpec(a.shape, lambda l: (0, 0)) for a in shared] +
                [pl.BlockSpec((None,) + tuple(w.shape[1:]), lambda l: (l, 0, 0))
                 for w in weights])
    out_shape = (
        jax.ShapeDtypeStruct((SEQ, HIDDEN), jnp.float32),
        jax.ShapeDtypeStruct((NUM_LAYERS, MAX_SEQ, N_KV * HEAD_DIM), jnp.float32),
        jax.ShapeDtypeStruct((NUM_LAYERS, MAX_SEQ, N_KV * HEAD_DIM), jnp.float32),
    )
    out_specs = (
        pl.BlockSpec((SEQ, HIDDEN), lambda l: (0, 0)),
        pl.BlockSpec((None, MAX_SEQ, N_KV * HEAD_DIM), lambda l: (l, 0, 0)),
        pl.BlockSpec((None, MAX_SEQ, N_KV * HEAD_DIM), lambda l: (l, 0, 0)),
    )

    hidden, k_cache, v_cache = pl.pallas_call(
        qwen3_prefill_kernel,
        out_shape=out_shape,
        grid_spec=pltpu.PrefetchScalarGridSpec(
            num_scalar_prefetch=0,
            grid=(NUM_LAYERS,),
            in_specs=in_specs,
            out_specs=out_specs,
            scratch_shapes=[pltpu.VMEM((SEQ, HIDDEN), jnp.float32)],
        ),
        compiler_params=pltpu.CompilerParams(dimension_semantics=("arbitrary",)),
    )(*shared, *weights)

    key_caches = k_cache.reshape(NUM_LAYERS, 1, MAX_SEQ, N_KV, HEAD_DIM)
    value_caches = v_cache.reshape(NUM_LAYERS, 1, MAX_SEQ, N_KV, HEAD_DIM)
    return hidden[None], key_caches, value_caches


# ------------------------------ reference ------------------------------------
def _ref_mm(a, b):
    # Same (full-f32) matmul precision as the kernel, so the comparison only
    # has to absorb the intentional EUP approximate reciprocals.
    return jnp.matmul(a, b, precision=HIGHEST)


def ref_qwen3_prefill(input_ids, embed, layer_weights):
    """Pure-JAX mirror of the PyTorch Qwen3Model.forward (prefill path)."""
    def rms(t):
        return t * jax.lax.rsqrt(jnp.mean(t * t, axis=-1, keepdims=True) + EPS)

    def rotate_half(t):
        h = t.shape[-1] // 2
        return jnp.concatenate([-t[..., h:], t[..., :h]], axis=-1)

    B, S = input_ids.shape
    x = jnp.take(embed, input_ids, axis=0)                        # (B, S, D)
    pos = jnp.arange(S, dtype=jnp.float32)
    inv_freq = 1.0 / (ROPE_THETA ** (jnp.arange(0, HEAD_DIM, 2, dtype=jnp.float32) / HEAD_DIM))
    freqs = pos[:, None] * inv_freq[None, :]
    emb = jnp.concatenate([freqs, freqs], axis=-1)[None]          # (1, S, head_dim)
    cos, sin = jnp.cos(emb), jnp.sin(emb)

    k_caches, v_caches = [], []
    for W in layer_weights:
        residual = x
        hs = rms(x)
        q = rms(_ref_mm(hs, W["wq"].T).reshape(B, S, N_HEADS, HEAD_DIM)).transpose(0, 2, 1, 3)
        k = rms(_ref_mm(hs, W["wk"].T).reshape(B, S, N_KV, HEAD_DIM)).transpose(0, 2, 1, 3)
        v = _ref_mm(hs, W["wv"].T).reshape(B, S, N_KV, HEAD_DIM).transpose(0, 2, 1, 3)
        c, s = cos[:, None], sin[:, None]
        q = q * c + rotate_half(q) * s
        k = k * c + rotate_half(k) * s
        k_caches.append(jnp.swapaxes(k, 1, 2))                    # kv_cache.prefill_update layout
        v_caches.append(jnp.swapaxes(v, 1, 2))
        kr = jnp.repeat(k, N_REP, axis=1)
        vr = jnp.repeat(v, N_REP, axis=1)
        scores = _ref_mm(q, jnp.swapaxes(kr, -1, -2)) / SCALING
        probs = jax.nn.softmax(scores, axis=-1)
        attn = _ref_mm(probs, vr).transpose(0, 2, 1, 3).reshape(B, S, HIDDEN)
        attn = _ref_mm(attn, W["wo"].T)
        h1 = residual + attn
        h1n = rms(h1)
        mlp = _ref_mm(jax.nn.silu(_ref_mm(h1n, W["wg"].T)) * _ref_mm(h1n, W["wu"].T), W["wd"].T)
        x = h1 + mlp
    return rms(x), jnp.stack(k_caches), jnp.stack(v_caches)


# ------------------------------ main ------------------------------------------
if __name__ == "__main__":
    key = jax.random.PRNGKey(0)
    keys = iter(jax.random.split(key, 7 * NUM_LAYERS + 2))

    # nn.Linear weights in the (out_features, in_features) convention, per layer.
    layer_weights = []
    for _ in range(NUM_LAYERS):
        layer_weights.append({
            "wq": jax.random.normal(next(keys), (N_HEADS * HEAD_DIM, HIDDEN), jnp.float32) * 0.05,
            "wk": jax.random.normal(next(keys), (N_KV * HEAD_DIM, HIDDEN), jnp.float32) * 0.05,
            "wv": jax.random.normal(next(keys), (N_KV * HEAD_DIM, HIDDEN), jnp.float32) * 0.05,
            "wo": jax.random.normal(next(keys), (HIDDEN, N_HEADS * HEAD_DIM), jnp.float32) * 0.05,
            "wg": jax.random.normal(next(keys), (INTER, HIDDEN), jnp.float32) * 0.05,
            "wu": jax.random.normal(next(keys), (INTER, HIDDEN), jnp.float32) * 0.05,
            "wd": jax.random.normal(next(keys), (HIDDEN, INTER), jnp.float32) * 0.05,
        })
    embed = jax.random.normal(next(keys), (VOCAB, HIDDEN), jnp.float32) * 0.5
    input_ids = jax.random.randint(next(keys), (1, SEQ), 0, VOCAB, dtype=jnp.int32)

    # Kernel-side parameters: weights pre-transposed to (in, out) and stacked
    # over layers so a single BlockSpec index_map pipelines them over the grid.
    params = {name + "_t": jnp.stack([W[name].T for W in layer_weights])
              for name in ("wq", "wk", "wv", "wo", "wg", "wu", "wd")}
    params["embed"] = embed

    out, key_caches, value_caches = qwen3_prefill(input_ids, params)
    jax.block_until_ready((out, key_caches, value_caches))

    ref_out, ref_kc, ref_vc = ref_qwen3_prefill(input_ids, embed, layer_weights)

    assert out.shape == (1, SEQ, HIDDEN)
    assert key_caches.shape == ref_kc.shape and value_caches.shape == ref_vc.shape
    # Layer-2 KV depends on layer-1 hidden, which uses the EUP approximate
    # reciprocals (softmax denominator / SiLU); matmuls themselves run at
    # HIGHEST precision so they contribute ~1e-6.  2e-3 covers the approx ops
    # with margin while still catching any real layout/semantics bug.
    kv_err = max(float(jnp.max(jnp.abs(key_caches - ref_kc))),
                 float(jnp.max(jnp.abs(value_caches - ref_vc))))
    assert kv_err < 2e-3, f"kv cache mismatch: {kv_err}"
    # Hidden states additionally go through the approximate reciprocals of the
    # final layer; with exact divides the kernel matches to ~1e-5.
    hid_err = float(jnp.max(jnp.abs(out - ref_out)))
    assert hid_err < 1e-2, f"hidden mismatch: {hid_err}"

    print("KERNEL_OK")
</pallas_src>

<mosaic_0001>
module attributes {stable_mosaic.version = 11 : i64} {
  func.func @qwen3_prefill_kernel(%arg0: i32, %arg1: memref<8x32xf32, #tpu.memory_space<vmem>>, %arg2: memref<8x32xf32, #tpu.memory_space<vmem>>, %arg3: memref<8x32xf32, #tpu.memory_space<vmem>>, %arg4: memref<8x16xf32, #tpu.memory_space<vmem>>, %arg5: memref<8x16xf32, #tpu.memory_space<vmem>>, %arg6: memref<32x32xf32, #tpu.memory_space<vmem>>, %arg7: memref<16x16xf32, #tpu.memory_space<vmem>>, %arg8: memref<32x32xf32, #tpu.memory_space<vmem>>, %arg9: memref<16x16xf32, #tpu.memory_space<vmem>>, %arg10: memref<16x32xf32, #tpu.memory_space<vmem>>, %arg11: memref<8x64xf32, #tpu.memory_space<vmem>>, %arg12: memref<64x8xf32, #tpu.memory_space<vmem>>, %arg13: memref<32x64xf32, #tpu.memory_space<vmem>>, %arg14: memref<64x32xf32, #tpu.memory_space<vmem>>, %arg15: memref<64x64xf32, #tpu.memory_space<vmem>>, %arg16: memref<1x32x32xf32, #tpu.memory_space<vmem>>, %arg17: memref<1x32x16xf32, #tpu.memory_space<vmem>>, %arg18: memref<1x32x16xf32, #tpu.memory_space<vmem>>, %arg19: memref<1x32x32xf32, #tpu.memory_space<vmem>>, %arg20: memref<1x32x128xf32, #tpu.memory_space<vmem>>, %arg21: memref<1x32x128xf32, #tpu.memory_space<vmem>>, %arg22: memref<1x128x32xf32, #tpu.memory_space<vmem>>, %arg23: memref<8x32xf32, #tpu.memory_space<vmem>>, %arg24: memref<1x8x16xf32, #tpu.memory_space<vmem>>, %arg25: memref<1x8x16xf32, #tpu.memory_space<vmem>>, %arg26: memref<8x32xf32, #tpu.memory_space<vmem>>) attributes {dimension_semantics = [#tpu.dimension_semantics<arbitrary>], iteration_bounds = array<i64: 2>, scalar_prefetch = 0 : i64, scratch_operands = 1 : i64, tpu.core_type = #tpu.core_type<tc>, window_params = [{pipeline_mode = #tpu.pipeline_mode<synchronous>, transform_indices = @transform_0, window_bounds = array<i64: 8, 32>}, {pipeline_mode = #tpu.pipeline_mode<synchronous>, transform_indices = @transform_1, window_bounds = array<i64: 8, 32>}, {pipeline_mode = #tpu.pipeline_mode<synchronous>, transform_indices = @transform_2, window_bounds = array<i64: 8, 32>}, {pipeline_mode = #tpu.pipeline_mode<synchronous>, transform_indices = @transform_3, window_bounds = array<i64: 8, 16>}, {pipeline_mode = #tpu.pipeline_mode<synchronous>, transform_indices = @transform_4, window_bounds = array<i64: 8, 16>}, {pipeline_mode = #tpu.pipeline_mode<synchronous>, transform_indices = @transform_5, window_bounds = array<i64: 32, 32>}, {pipeline_mode = #tpu.pipeline_mode<synchronous>, transform_indices = @transform_6, window_bounds = array<i64: 16, 16>}, {pipeline_mode = #tpu.pipeline_mode<synchronous>, transform_indices = @transform_7, window_bounds = array<i64: 32, 32>}, {pipeline_mode = #tpu.pipeline_mode<synchronous>, transform_indices = @transform_8, window_bounds = array<i64: 16, 16>}, {pipeline_mode = #tpu.pipeline_mode<synchronous>, transform_indices = @transform_9, window_bounds = array<i64: 16, 32>}, {pipeline_mode = #tpu.pipeline_mode<synchronous>, transform_indices = @transform_10, window_bounds = array<i64: 8, 64>}, {pipeline_mode = #tpu.pipeline_mode<synchronous>, transform_indices = @transform_11, window_bounds = array<i64: 64, 8>}, {pipeline_mode = #tpu.pipeline_mode<synchronous>, transform_indices = @transform_12, window_bounds = array<i64: 32, 64>}, {pipeline_mode = #tpu.pipeline_mode<synchronous>, transform_indices = @transform_13, window_bounds = array<i64: 64, 32>}, {pipeline_mode = #tpu.pipeline_mode<synchronous>, transform_indices = @transform_14, window_bounds = array<i64: 64, 64>}, {transform_indices = @transform_15, window_bounds = array<i64: 1, 32, 32>}, {transform_indices = @transform_16, window_bounds = array<i64: 1, 32, 16>}, {transform_indices = @transform_17, window_bounds = array<i64: 1, 32, 16>}, {transform_indices = @transform_18, window_bounds = array<i64: 1, 32, 32>}, {transform_indices = @transform_19, window_bounds = array<i64: 1, 32, 128>}, {transform_indices = @transform_20, window_bounds = array<i64: 1, 32, 128>}, {transform_indices = @transform_21, window_bounds = array<i64: 1, 128, 32>}, {pipeline_mode = #tpu.pipeline_mode<synchronous>, transform_indices = @transform_22, window_bounds = array<i64: 8, 32>}, {transform_indices = @transform_23, window_bounds = array<i64: 1, 8, 16>}, {transform_indices = @transform_24, window_bounds = array<i64: 1, 8, 16>}]} {
    %c0_i32 = arith.constant 0 : i32
    %0 = arith.cmpi eq, %arg0, %c0_i32 : i32
    %1 = arith.extui %0 : i1 to i32
    %c0_i32_0 = arith.constant 0 : i32
    %2 = arith.cmpi ne, %1, %c0_i32_0 : i32
    scf.if %2 {
      %c0_91 = arith.constant 0 : index
      %c0_92 = arith.constant 0 : index
      %119 = vector.load %arg1[%c0_91, %c0_92] : memref<8x32xf32, #tpu.memory_space<vmem>>, vector<8x32xf32>
      %c0_93 = arith.constant 0 : index
      %c0_94 = arith.constant 0 : index
      %120 = vector.load %arg26[%c0_93, %c0_94] : memref<8x32xf32, #tpu.memory_space<vmem>>, vector<8x32xf32>
      tpu.vector_store %arg26[%c0_93, %c0_94], %119 {strides = array<i32>} : memref<8x32xf32, #tpu.memory_space<vmem>>, vector<8x32xf32>,
    } else {
    }
    %c0 = arith.constant 0 : index
    %c0_1 = arith.constant 0 : index
    %3 = vector.load %arg26[%c0, %c0_1] : memref<8x32xf32, #tpu.memory_space<vmem>>, vector<8x32xf32>
    %4 = arith.mulf %3, %3 : vector<8x32xf32>
    %cst = arith.constant dense<0.000000e+00> : vector<8xf32>
    %5 = vector.multi_reduction <add>, %4, %cst [1] : vector<8x32xf32> to vector<8xf32>
    %6 = vector.shape_cast %5 : vector<8xf32> to vector<8x1xf32>
    %cst_2 = arith.constant 3.200000e+01 : f32
    %7 = vector.broadcast %cst_2 : f32 to vector<8x1xf32>
    %8 = arith.divf %6, %7 : vector<8x1xf32>
    %cst_3 = arith.constant 9.99999997E-7 : f32
    %9 = vector.broadcast %cst_3 : f32 to vector<8x1xf32>
    %10 = arith.addf %8, %9 : vector<8x1xf32>
    %11 = math.rsqrt %10 : vector<8x1xf32>
    %12 = vector.broadcast %11 : vector<8x1xf32> to vector<8x32xf32>
    %13 = arith.mulf %3, %12 : vector<8x32xf32>
    %c0_4 = arith.constant 0 : index
    %c0_5 = arith.constant 0 : index
    %c0_6 = arith.constant 0 : index
    %14 = vector.load %arg16[%c0_4, %c0_5, %c0_6] : memref<1x32x32xf32, #tpu.memory_space<vmem>>, vector<1x32x32xf32>
    %15 = vector.shape_cast %14 : vector<1x32x32xf32> to vector<32x32xf32>
    %cst_7 = arith.constant dense<0.000000e+00> : vector<8x32xf32>
    %16 = tpu.matmul %13, %15, %cst_7 {dimension_numbers = #tpu.dot_dimension_numbers<[1], [0], [0], [1], [0, 0, 1, 1], [], []>, precision = #tpu.contract_precision<fp32>} : vector<8x32xf32>, vector<32x32xf32>, vector<8x32xf32> -> vector<8x32xf32>
    %c0_8 = arith.constant 0 : index
    %c0_9 = arith.constant 0 : index
    %c0_10 = arith.constant 0 : index
    %17 = vector.load %arg17[%c0_8, %c0_9, %c0_10] : memref<1x32x16xf32, #tpu.memory_space<vmem>>, vector<1x32x16xf32>
    %18 = vector.shape_cast %17 : vector<1x32x16xf32> to vector<32x16xf32>
    %cst_11 = arith.constant dense<0.000000e+00> : vector<8x16xf32>
    %19 = tpu.matmul %13, %18, %cst_11 {dimension_numbers = #tpu.dot_dimension_numbers<[1], [0], [0], [1], [0, 0, 1, 1], [], []>, precision = #tpu.contract_precision<fp32>} : vector<8x32xf32>, vector<32x16xf32>, vector<8x16xf32> -> vector<8x16xf32>
    %c0_12 = arith.constant 0 : index
    %c0_13 = arith.constant 0 : index
    %c0_14 = arith.constant 0 : index
    %20 = vector.load %arg18[%c0_12, %c0_13, %c0_14] : memref<1x32x16xf32, #tpu.memory_space<vmem>>, vector<1x32x16xf32>
    %21 = vector.shape_cast %20 : vector<1x32x16xf32> to vector<32x16xf32>
    %cst_15 = arith.constant dense<0.000000e+00> : vector<8x16xf32>
    %22 = tpu.matmul %13, %21, %cst_15 {dimension_numbers = #tpu.dot_dimension_numbers<[1], [0], [0], [1], [0, 0, 1, 1], [], []>, precision = #tpu.contract_precision<fp32>} : vector<8x32xf32>, vector<32x16xf32>, vector<8x16xf32> -> vector<8x16xf32>
    %23 = arith.mulf %16, %16 : vector<8x32xf32>
    %c0_16 = arith.constant 0 : index
    %c0_17 = arith.constant 0 : index
    %24 = vector.load %arg6[%c0_16, %c0_17] : memref<32x32xf32, #tpu.memory_space<vmem>>, vector<32x32xf32>
    %cst_18 = arith.constant dense<0.000000e+00> : vector<8x32xf32>
    %25 = tpu.matmul %23, %24, %cst_18 {dimension_numbers = #tpu.dot_dimension_numbers<[1], [0], [0], [1], [0, 0, 1, 1], [], []>, precision = #tpu.contract_precision<fp32>} : vector<8x32xf32>, vector<32x32xf32>, vector<8x32xf32> -> vector<8x32xf32>
    %cst_19 = arith.constant 9.99999997E-7 : f32
    %26 = vector.broadcast %cst_19 : f32 to vector<8x32xf32>
    %27 = arith.addf %25, %26 : vector<8x32xf32>
    %28 = math.rsqrt %27 : vector<8x32xf32>
    %29 = arith.mulf %16, %28 : vector<8x32xf32>
    %30 = arith.mulf %19, %19 : vector<8x16xf32>
    %c0_20 = arith.constant 0 : index
    %c0_21 = arith.constant 0 : index
    %31 = vector.load %arg7[%c0_20, %c0_21] : memref<16x16xf32, #tpu.memory_space<vmem>>, vector<16x16xf32>
    %cst_22 = arith.constant dense<0.000000e+00> : vector<8x16xf32>
    %32 = tpu.matmul %30, %31, %cst_22 {dimension_numbers = #tpu.dot_dimension_numbers<[1], [0], [0], [1], [0, 0, 1, 1], [], []>, precision = #tpu.contract_precision<fp32>} : vector<8x16xf32>, vector<16x16xf32>, vector<8x16xf32> -> vector<8x16xf32>
    %cst_23 = arith.constant 9.99999997E-7 : f32
    %33 = vector.broadcast %cst_23 : f32 to vector<8x16xf32>
    %34 = arith.addf %32, %33 : vector<8x16xf32>
    %35 = math.rsqrt %34 : vector<8x16xf32>
    %36 = arith.mulf %19, %35 : vector<8x16xf32>
    %c0_24 = arith.constant 0 : index
    %c0_25 = arith.constant 0 : index
    %37 = vector.load %arg2[%c0_24, %c0_25] : memref<8x32xf32, #tpu.memory_space<vmem>>, vector<8x32xf32>
    %38 = arith.mulf %29, %37 : vector<8x32xf32>
    %c0_26 = arith.constant 0 : index
    %c0_27 = arith.constant 0 : index
    %39 = vector.load %arg8[%c0_26, %c0_27] : memref<32x32xf32, #tpu.memory_space<vmem>>, vector<32x32xf32>
    %cst_28 = arith.constant dense<0.000000e+00> : vector<8x32xf32>
    %40 = tpu.matmul %29, %39, %cst_28 {dimension_numbers = #tpu.dot_dimension_numbers<[1], [0], [0], [1], [0, 0, 1, 1], [], []>, precision = #tpu.contract_precision<fp32>} : vector<8x32xf32>, vector<32x32xf32>, vector<8x32xf32> -> vector<8x32xf32>
    %c0_29 = arith.constant 0 : index
    %c0_30 = arith.constant 0 : index
    %41 = vector.load %arg3[%c0_29, %c0_30] : memref<8x32xf32, #tpu.memory_space<vmem>>, vector<8x32xf32>
    %42 = arith.mulf %40, %41 : vector<8x32xf32>
    %43 = arith.addf %38, %42 : vector<8x32xf32>
    %c0_31 = arith.constant 0 : index
    %c0_32 = arith.constant 0 : index
    %44 = vector.load %arg4[%c0_31, %c0_32] : memref<8x16xf32, #tpu.memory_space<vmem>>, vector<8x16xf32>
    %45 = arith.mulf %36, %44 : vector<8x16xf32>
    %c0_33 = arith.constant 0 : index
    %c0_34 = arith.constant 0 : index
    %46 = vector.load %arg9[%c0_33, %c0_34] : memref<16x16xf32, #tpu.memory_space<vmem>>, vector<16x16xf32>
    %cst_35 = arith.constant dense<0.000000e+00> : vector<8x16xf32>
    %47 = tpu.matmul %36, %46, %cst_35 {dimension_numbers = #tpu.dot_dimension_numbers<[1], [0], [0], [1], [0, 0, 1, 1], [], []>, precision = #tpu.contract_precision<fp32>} : vector<8x16xf32>, vector<16x16xf32>, vector<8x16xf32> -> vector<8x16xf32>
    %c0_36 = arith.constant 0 : index
    %c0_37 = arith.constant 0 : index
    %48 = vector.load %arg5[%c0_36, %c0_37] : memref<8x16xf32, #tpu.memory_space<vmem>>, vector<8x16xf32>
    %49 = arith.mulf %47, %48 : vector<8x16xf32>
    %50 = arith.addf %45, %49 : vector<8x16xf32>
    %c0_38 = arith.constant 0 : index
    %c0_39 = arith.constant 0 : index
    %c0_40 = arith.constant 0 : index
    %51 = vector.load %arg24[%c0_38, %c0_39, %c0_40] : memref<1x8x16xf32, #tpu.memory_space<vmem>>, vector<1x8x16xf32>
    %52 = vector.shape_cast %51 : vector<1x8x16xf32> to vector<8x16xf32>
    %53 = vector.shape_cast %50 : vector<8x16xf32> to vector<1x8x16xf32>
    tpu.vector_store %arg24[%c0_38, %c0_39, %c0_40], %53 {strides = array<i32>} : memref<1x8x16xf32, #tpu.memory_space<vmem>>, vector<1x8x16xf32>,
    %c0_41 = arith.constant 0 : index
    %c0_42 = arith.constant 0 : index
    %c0_43 = arith.constant 0 : index
    %54 = vector.load %arg25[%c0_41, %c0_42, %c0_43] : memref<1x8x16xf32, #tpu.memory_space<vmem>>, vector<1x8x16xf32>
    %55 = vector.shape_cast %54 : vector<1x8x16xf32> to vector<8x16xf32>
    %56 = vector.shape_cast %22 : vector<8x16xf32> to vector<1x8x16xf32>
    tpu.vector_store %arg25[%c0_41, %c0_42, %c0_43], %56 {strides = array<i32>} : memref<1x8x16xf32, #tpu.memory_space<vmem>>, vector<1x8x16xf32>,
    %cst_44 = arith.constant 2.000000e+00 : f32
    %57 = vector.broadcast %cst_44 : f32 to vector<8x32xf32>
    %58 = arith.mulf %43, %57 : vector<8x32xf32>
    %c0_45 = arith.constant 0 : index
    %c0_46 = arith.constant 0 : index
    %59 = vector.load %arg10[%c0_45, %c0_46] : memref<16x32xf32, #tpu.memory_space<vmem>>, vector<16x32xf32>
    %cst_47 = arith.constant dense<0.000000e+00> : vector<8x32xf32>
    %60 = tpu.matmul %50, %59, %cst_47 {dimension_numbers = #tpu.dot_dimension_numbers<[1], [0], [0], [1], [0, 0, 1, 1], [], []>, precision = #tpu.contract_precision<fp32>} : vector<8x16xf32>, vector<16x32xf32>, vector<8x32xf32> -> vector<8x32xf32>
    %c0_48 = arith.constant 0 : index
    %c0_49 = arith.constant 0 : index
    %61 = vector.load %arg10[%c0_48, %c0_49] : memref<16x32xf32, #tpu.memory_space<vmem>>, vector<16x32xf32>
    %cst_50 = arith.constant dense<0.000000e+00> : vector<8x32xf32>
    %62 = tpu.matmul %22, %61, %cst_50 {dimension_numbers = #tpu.dot_dimension_numbers<[1], [0], [0], [1], [0, 0, 1, 1], [], []>, precision = #tpu.contract_precision<fp32>} : vector<8x16xf32>, vector<16x32xf32>, vector<8x32xf32> -> vector<8x32xf32>
    %63 = tpu.transpose %60, [1, 0] : vector<8x32xf32> -> vector<32x8xf32>
    %c0_51 = arith.constant 0 : index
    %c0_52 = arith.constant 0 : index
    %64 = vector.load %arg11[%c0_51, %c0_52] : memref<8x64xf32, #tpu.memory_space<vmem>>, vector<8x64xf32>
    %cst_53 = arith.constant dense<0.000000e+00> : vector<32x64xf32>
    %65 = tpu.matmul %63, %64, %cst_53 {dimension_numbers = #tpu.dot_dimension_numbers<[1], [0], [0], [1], [0, 0, 1, 1], [], []>, precision = #tpu.contract_precision<fp32>} : vector<32x8xf32>, vector<8x64xf32>, vector<32x64xf32> -> vector<32x64xf32>
    %c0_54 = arith.constant 0 : index
    %c0_55 = arith.constant 0 : index
    %66 = vector.load %arg13[%c0_54, %c0_55] : memref<32x64xf32, #tpu.memory_space<vmem>>, vector<32x64xf32>
    %67 = arith.mulf %65, %66 : vector<32x64xf32>
    %cst_56 = arith.constant dense<0.000000e+00> : vector<8x64xf32>
    %68 = tpu.matmul %58, %67, %cst_56 {dimension_numbers = #tpu.dot_dimension_numbers<[1], [0], [0], [1], [0, 0, 1, 1], [], []>, precision = #tpu.contract_precision<fp32>} : vector<8x32xf32>, vector<32x64xf32>, vector<8x64xf32> -> vector<8x64xf32>
    %cst_57 = arith.constant dense<0xFF800000> : vector<8xf32>
    %69 = vector.multi_reduction <maximumf>, %68, %cst_57 [1] : vector<8x64xf32> to vector<8xf32>
    %70 = vector.shape_cast %69 : vector<8xf32> to vector<8x1xf32>
    %71 = vector.broadcast %70 : vector<8x1xf32> to vector<8x64xf32>
    %72 = arith.subf %68, %71 : vector<8x64xf32>
    %73 = math.exp %72 : vector<8x64xf32>
    %c0_58 = arith.constant 0 : index
    %c0_59 = arith.constant 0 : index
    %74 = vector.load %arg15[%c0_58, %c0_59] : memref<64x64xf32, #tpu.memory_space<vmem>>, vector<64x64xf32>
    %cst_60 = arith.constant dense<0.000000e+00> : vector<8x64xf32>
    %75 = tpu.matmul %73, %74, %cst_60 {dimension_numbers = #tpu.dot_dimension_numbers<[1], [0], [0], [1], [0, 0, 1, 1], [], []>, precision = #tpu.contract_precision<fp32>} : vector<8x64xf32>, vector<64x64xf32>, vector<8x64xf32> -> vector<8x64xf32>
    %76 = tpu.reciprocal %75 {approx = true} : vector<8x64xf32> -> vector<8x64xf32>
    %77 = arith.mulf %73, %76 : vector<8x64xf32>
    %c0_61 = arith.constant 0 : index
    %c0_62 = arith.constant 0 : index
    %78 = vector.load %arg12[%c0_61, %c0_62] : memref<64x8xf32, #tpu.memory_space<vmem>>, vector<64x8xf32>
    %cst_63 = arith.constant dense<0.000000e+00> : vector<64x32xf32>
    %79 = tpu.matmul %78, %62, %cst_63 {dimension_numbers = #tpu.dot_dimension_numbers<[1], [0], [0], [1], [0, 0, 1, 1], [], []>, precision = #tpu.contract_precision<fp32>} : vector<64x8xf32>, vector<8x32xf32>, vector<64x32xf32> -> vector<64x32xf32>
    %c0_64 = arith.constant 0 : index
    %c0_65 = arith.constant 0 : index
    %80 = vector.load %arg14[%c0_64, %c0_65] : memref<64x32xf32, #tpu.memory_space<vmem>>, vector<64x32xf32>
    %81 = arith.mulf %79, %80 : vector<64x32xf32>
    %cst_66 = arith.constant dense<0.000000e+00> : vector<8x32xf32>
    %82 = tpu.matmul %77, %81, %cst_66 {dimension_numbers = #tpu.dot_dimension_numbers<[1], [0], [0], [1], [0, 0, 1, 1], [], []>, precision = #tpu.contract_precision<fp32>} : vector<8x64xf32>, vector<64x32xf32>, vector<8x32xf32> -> vector<8x32xf32>
    %c0_67 = arith.constant 0 : index
    %c0_68 = arith.constant 0 : index
    %c0_69 = arith.constant 0 : index
    %83 = vector.load %arg19[%c0_67, %c0_68, %c0_69] : memref<1x32x32xf32, #tpu.memory_space<vmem>>, vector<1x32x32xf32>
    %84 = vector.shape_cast %83 : vector<1x32x32xf32> to vector<32x32xf32>
    %cst_70 = arith.constant dense<0.000000e+00> : vector<8x32xf32>
    %85 = tpu.matmul %82, %84, %cst_70 {dimension_numbers = #tpu.dot_dimension_numbers<[1], [0], [0], [1], [0, 0, 1, 1], [], []>, precision = #tpu.contract_precision<fp32>} : vector<8x32xf32>, vector<32x32xf32>, vector<8x32xf32> -> vector<8x32xf32>
    %86 = arith.addf %3, %85 : vector<8x32xf32>
    %87 = arith.mulf %86, %86 : vector<8x32xf32>
    %cst_71 = arith.constant dense<0.000000e+00> : vector<8xf32>
    %88 = vector.multi_reduction <add>, %87, %cst_71 [1] : vector<8x32xf32> to vector<8xf32>
    %89 = vector.shape_cast %88 : vector<8xf32> to vector<8x1xf32>
    %cst_72 = arith.constant 3.200000e+01 : f32
    %90 = vector.broadcast %cst_72 : f32 to vector<8x1xf32>
    %91 = arith.divf %89, %90 : vector<8x1xf32>
    %cst_73 = arith.constant 9.99999997E-7 : f32
    %92 = vector.broadcast %cst_73 : f32 to vector<8x1xf32>
    %93 = arith.addf %91, %92 : vector<8x1xf32>
    %94 = math.rsqrt %93 : vector<8x1xf32>
    %95 = vector.broadcast %94 : vector<8x1xf32> to vector<8x32xf32>
    %96 = arith.mulf %86, %95 : vector<8x32xf32>
    %c0_74 = arith.constant 0 : index
    %c0_75 = arith.constant 0 : index
    %c0_76 = arith.constant 0 : index
    %97 = vector.load %arg20[%c0_74, %c0_75, %c0_76] : memref<1x32x128xf32, #tpu.memory_space<vmem>>, vector<1x32x128xf32>
    %98 = vector.shape_cast %97 : vector<1x32x128xf32> to vector<32x128xf32>
    %cst_77 = arith.constant dense<0.000000e+00> : vector<8x128xf32>
    %99 = tpu.matmul %96, %98, %cst_77 {dimension_numbers = #tpu.dot_dimension_numbers<[1], [0], [0], [1], [0, 0, 1, 1], [], []>, precision = #tpu.contract_precision<fp32>} : vector<8x32xf32>, vector<32x128xf32>, vector<8x128xf32> -> vector<8x128xf32>
    %c0_78 = arith.constant 0 : index
    %c0_79 = arith.constant 0 : index
    %c0_80 = arith.constant 0 : index
    %100 = vector.load %arg21[%c0_78, %c0_79, %c0_80] : memref<1x32x128xf32, #tpu.memory_space<vmem>>, vector<1x32x128xf32>
    %101 = vector.shape_cast %100 : vector<1x32x128xf32> to vector<32x128xf32>
    %cst_81 = arith.constant dense<0.000000e+00> : vector<8x128xf32>
    %102 = tpu.matmul %96, %101, %cst_81 {dimension_numbers = #tpu.dot_dimension_numbers<[1], [0], [0], [1], [0, 0, 1, 1], [], []>, precision = #tpu.contract_precision<fp32>} : vector<8x32xf32>, vector<32x128xf32>, vector<8x128xf32> -> vector<8x128xf32>
    %cst_82 = arith.constant 0.000000e+00 : f32
    %103 = vector.broadcast %cst_82 : f32 to vector<8x128xf32>
    %104 = arith.subf %103, %99 : vector<8x128xf32>
    %105 = math.exp %104 : vector<8x128xf32>
    %cst_83 = arith.constant 1.000000e+00 : f32
    %106 = vector.broadcast %cst_83 : f32 to vector<8x128xf32>
    %107 = arith.addf %106, %105 : vector<8x128xf32>
    %108 = tpu.reciprocal %107 {approx = true} : vector<8x128xf32> -> vector<8x128xf32>
    %109 = arith.mulf %99, %108 : vector<8x128xf32>
    %110 = arith.mulf %109, %102 : vector<8x128xf32>
    %c0_84 = arith.constant 0 : index
    %c0_85 = arith.constant 0 : index
    %c0_86 = arith.constant 0 : index
    %111 = vector.load %arg22[%c0_84, %c0_85, %c0_86] : memref<1x128x32xf32, #tpu.memory_space<vmem>>, vector<1x128x32xf32>
    %112 = vector.shape_cast %111 : vector<1x128x32xf32> to vector<128x32xf32>
    %cst_87 = arith.constant dense<0.000000e+00> : vector<8x32xf32>
    %113 = tpu.matmul %110, %112, %cst_87 {dimension_numbers = #tpu.dot_dimension_numbers<[1], [0], [0], [1], [0, 0, 1, 1], [], []>, precision = #tpu.contract_precision<fp32>} : vector<8x128xf32>, vector<128x32xf32>, vector<8x32xf32> -> vector<8x32xf32>
    %114 = arith.addf %86, %113 : vector<8x32xf32>
    %c0_88 = arith.constant 0 : index
    %c0_89 = arith.constant 0 : index
    %115 = vector.load %arg26[%c0_88, %c0_89] : memref<8x32xf32, #tpu.memory_space<vmem>>, vector<8x32xf32>
    tpu.vector_store %arg26[%c0_88, %c0_89], %114 {strides = array<i32>} : memref<8x32xf32, #tpu.memory_space<vmem>>, vector<8x32xf32>,
    %c1_i32 = arith.constant 1 : i32
    %116 = arith.cmpi eq, %arg0, %c1_i32 : i32
    %117 = arith.extui %116 : i1 to i32
    %c0_i32_90 = arith.constant 0 : i32
    %118 = arith.cmpi ne, %117, %c0_i32_90 : i32
    scf.if %118 {
      %119 = arith.mulf %114, %114 : vector<8x32xf32>
      %cst_91 = arith.constant dense<0.000000e+00> : vector<8xf32>
      %120 = vector.multi_reduction <add>, %119, %cst_91 [1] : vector<8x32xf32> to vector<8xf32>
      %121 = vector.shape_cast %120 : vector<8xf32> to vector<8x1xf32>
      %cst_92 = arith.constant 3.200000e+01 : f32
      %122 = vector.broadcast %cst_92 : f32 to vector<8x1xf32>
      %123 = arith.divf %121, %122 : vector<8x1xf32>
      %cst_93 = arith.constant 9.99999997E-7 : f32
      %124 = vector.broadcast %cst_93 : f32 to vector<8x1xf32>
      %125 = arith.addf %123, %124 : vector<8x1xf32>
      %126 = math.rsqrt %125 : vector<8x1xf32>
      %127 = vector.broadcast %126 : vector<8x1xf32> to vector<8x32xf32>
      %128 = arith.mulf %114, %127 : vector<8x32xf32>
      %c0_94 = arith.constant 0 : index
      %c0_95 = arith.constant 0 : index
      %129 = vector.load %arg23[%c0_94, %c0_95] : memref<8x32xf32, #tpu.memory_space<vmem>>, vector<8x32xf32>
      tpu.vector_store %arg23[%c0_94, %c0_95], %128 {strides = array<i32>} : memref<8x32xf32, #tpu.memory_space<vmem>>, vector<8x32xf32>,
    } else {
    }
    return
  }
  func.func @transform_0(%arg0: i32) -> (i32, i32) {
    %c0_i32 = arith.constant 0 : i32
    %c0_i32_0 = arith.constant 0 : i32
    %c0_i32_1 = arith.constant 0 : i32
    return %c0_i32, %c0_i32_0 : i32, i32
  }
  func.func @transform_1(%arg0: i32) -> (i32, i32) {
    %c0_i32 = arith.constant 0 : i32
    %c0_i32_0 = arith.constant 0 : i32
    %c0_i32_1 = arith.constant 0 : i32
    return %c0_i32, %c0_i32_0 : i32, i32
  }
  func.func @transform_2(%arg0: i32) -> (i32, i32) {
    %c0_i32 = arith.constant 0 : i32
    %c0_i32_0 = arith.constant 0 : i32
    %c0_i32_1 = arith.constant 0 : i32
    return %c0_i32, %c0_i32_0 : i32, i32
  }
  func.func @transform_3(%arg0: i32) -> (i32, i32) {
    %c0_i32 = arith.constant 0 : i32
    %c0_i32_0 = arith.constant 0 : i32
    %c0_i32_1 = arith.constant 0 : i32
    return %c0_i32, %c0_i32_0 : i32, i32
  }
  func.func @transform_4(%arg0: i32) -> (i32, i32) {
    %c0_i32 = arith.constant 0 : i32
    %c0_i32_0 = arith.constant 0 : i32
    %c0_i32_1 = arith.constant 0 : i32
    return %c0_i32, %c0_i32_0 : i32, i32
  }
  func.func @transform_5(%arg0: i32) -> (i32, i32) {
    %c0_i32 = arith.constant 0 : i32
    %c0_i32_0 = arith.constant 0 : i32
    %c0_i32_1 = arith.constant 0 : i32
    return %c0_i32, %c0_i32_0 : i32, i32
  }
  func.func @transform_6(%arg0: i32) -> (i32, i32) {
    %c0_i32 = arith.constant 0 : i32
    %c0_i32_0 = arith.constant 0 : i32
    %c0_i32_1 = arith.constant 0 : i32
    return %c0_i32, %c0_i32_0 : i32, i32
  }
  func.func @transform_7(%arg0: i32) -> (i32, i32) {
    %c0_i32 = arith.constant 0 : i32
    %c0_i32_0 = arith.constant 0 : i32
    %c0_i32_1 = arith.constant 0 : i32
    return %c0_i32, %c0_i32_0 : i32, i32
  }
  func.func @transform_8(%arg0: i32) -> (i32, i32) {
    %c0_i32 = arith.constant 0 : i32
    %c0_i32_0 = arith.constant 0 : i32
    %c0_i32_1 = arith.constant 0 : i32
    return %c0_i32, %c0_i32_0 : i32, i32
  }
  func.func @transform_9(%arg0: i32) -> (i32, i32) {
    %c0_i32 = arith.constant 0 : i32
    %c0_i32_0 = arith.constant 0 : i32
    %c0_i32_1 = arith.constant 0 : i32
    return %c0_i32, %c0_i32_0 : i32, i32
  }
  func.func @transform_10(%arg0: i32) -> (i32, i32) {
    %c0_i32 = arith.constant 0 : i32
    %c0_i32_0 = arith.constant 0 : i32
    %c0_i32_1 = arith.constant 0 : i32
    return %c0_i32, %c0_i32_0 : i32, i32
  }
  func.func @transform_11(%arg0: i32) -> (i32, i32) {
    %c0_i32 = arith.constant 0 : i32
    %c0_i32_0 = arith.constant 0 : i32
    %c0_i32_1 = arith.constant 0 : i32
    return %c0_i32, %c0_i32_0 : i32, i32
  }
  func.func @transform_12(%arg0: i32) -> (i32, i32) {
    %c0_i32 = arith.constant 0 : i32
    %c0_i32_0 = arith.constant 0 : i32
    %c0_i32_1 = arith.constant 0 : i32
    return %c0_i32, %c0_i32_0 : i32, i32
  }
  func.func @transform_13(%arg0: i32) -> (i32, i32) {
    %c0_i32 = arith.constant 0 : i32
    %c0_i32_0 = arith.constant 0 : i32
    %c0_i32_1 = arith.constant 0 : i32
    return %c0_i32, %c0_i32_0 : i32, i32
  }
  func.func @transform_14(%arg0: i32) -> (i32, i32) {
    %c0_i32 = arith.constant 0 : i32
    %c0_i32_0 = arith.constant 0 : i32
    %c0_i32_1 = arith.constant 0 : i32
    return %c0_i32, %c0_i32_0 : i32, i32
  }
  func.func @transform_15(%arg0: i32) -> (i32, i32, i32) {
    %c0_i32 = arith.constant 0 : i32
    %c0_i32_0 = arith.constant 0 : i32
    %c0_i32_1 = arith.constant 0 : i32
    return %arg0, %c0_i32, %c0_i32_0 : i32, i32, i32
  }
  func.func @transform_16(%arg0: i32) -> (i32, i32, i32) {
    %c0_i32 = arith.constant 0 : i32
    %c0_i32_0 = arith.constant 0 : i32
    %c0_i32_1 = arith.constant 0 : i32
    return %arg0, %c0_i32, %c0_i32_0 : i32, i32, i32
  }
  func.func @transform_17(%arg0: i32) -> (i32, i32, i32) {
    %c0_i32 = arith.constant 0 : i32
    %c0_i32_0 = arith.constant 0 : i32
    %c0_i32_1 = arith.constant 0 : i32
    return %arg0, %c0_i32, %c0_i32_0 : i32, i32, i32
  }
  func.func @transform_18(%arg0: i32) -> (i32, i32, i32) {
    %c0_i32 = arith.constant 0 : i32
    %c0_i32_0 = arith.constant 0 : i32
    %c0_i32_1 = arith.constant 0 : i32
    return %arg0, %c0_i32, %c0_i32_0 : i32, i32, i32
  }
  func.func @transform_19(%arg0: i32) -> (i32, i32, i32) {
    %c0_i32 = arith.constant 0 : i32
    %c0_i32_0 = arith.constant 0 : i32
    %c0_i32_1 = arith.constant 0 : i32
    return %arg0, %c0_i32, %c0_i32_0 : i32, i32, i32
  }
  func.func @transform_20(%arg0: i32) -> (i32, i32, i32) {
    %c0_i32 = arith.constant 0 : i32
    %c0_i32_0 = arith.constant 0 : i32
    %c0_i32_1 = arith.constant 0 : i32
    return %arg0, %c0_i32, %c0_i32_0 : i32, i32, i32
  }
  func.func @transform_21(%arg0: i32) -> (i32, i32, i32) {
    %c0_i32 = arith.constant 0 : i32
    %c0_i32_0 = arith.constant 0 : i32
    %c0_i32_1 = arith.constant 0 : i32
    return %arg0, %c0_i32, %c0_i32_0 : i32, i32, i32
  }
  func.func @transform_22(%arg0: i32) -> (i32, i32) {
    %c0_i32 = arith.constant 0 : i32
    %c0_i32_0 = arith.constant 0 : i32
    %c0_i32_1 = arith.constant 0 : i32
    return %c0_i32, %c0_i32_0 : i32, i32
  }
  func.func @transform_23(%arg0: i32) -> (i32, i32, i32) {
    %c0_i32 = arith.constant 0 : i32
    %c0_i32_0 = arith.constant 0 : i32
    %c0_i32_1 = arith.constant 0 : i32
    return %arg0, %c0_i32, %c0_i32_0 : i32, i32, i32
  }
  func.func @transform_24(%arg0: i32) -> (i32, i32, i32) {
    %c0_i32 = arith.constant 0 : i32
    %c0_i32_0 = arith.constant 0 : i32
    %c0_i32_1 = arith.constant 0 : i32
    return %arg0, %c0_i32, %c0_i32_0 : i32, i32, i32
  }
}

</mosaic_0001>

<llo_original>
// kernel: qwen3_prefill.1
$region0: #{qwen3_prefill.1}
  #allocation0 [shape = 'u32[]', space=smem, size = 0x4, offset = 0x4, fixed_abs, tag = 'smem constant byte address 0x4 - core index']
  #allocation1 [shape = 'u32[144,128]{1,0:T(1,128)}', space=vmem, size = 0x12000, scoped, tag = 'internal scratch']
  #allocation2 [shape = 'f32[8,32]{1,0:T(8,128)}', space=vmem, size = 0x1000, scoped, tag = 'scratch operand']
  %s0 = inlined_call_operand.vmem [shape: f32[8,32], index: 0, kind: input, shape index: {}]
  %s1 = inlined_call_operand.vmem [shape: f32[8,32], index: 1, kind: input, shape index: {}]
  %s2 = inlined_call_operand.vmem [shape: f32[8,32], index: 2, kind: input, shape index: {}]
  %s3 = inlined_call_operand.vmem [shape: f32[8,16], index: 3, kind: input, shape index: {}]
  %s4 = inlined_call_operand.vmem [shape: f32[8,16], index: 4, kind: input, shape index: {}]
  %s5 = inlined_call_operand.vmem [shape: f32[32,32], index: 5, kind: input, shape index: {}]
  %s6 = inlined_call_operand.vmem [shape: f32[16,16], index: 6, kind: input, shape index: {}]
  %s7 = inlined_call_operand.vmem [shape: f32[32,32], index: 7, kind: input, shape index: {}]
  %s8 = inlined_call_operand.vmem [shape: f32[16,16], index: 8, kind: input, shape index: {}]
  %s9 = inlined_call_operand.vmem [shape: f32[16,32], index: 9, kind: input, shape index: {}]
  %s10 = inlined_call_operand.vmem [shape: f32[8,64], index: 10, kind: input, shape index: {}]
  %s11 = inlined_call_operand.vmem [shape: f32[64,8], index: 11, kind: input, shape index: {}]
  %s12 = inlined_call_operand.vmem [shape: f32[32,64], index: 12, kind: input, shape index: {}]
  %s13 = inlined_call_operand.vmem [shape: f32[64,32], index: 13, kind: input, shape index: {}]
  %s14 = inlined_call_operand.vmem [shape: f32[64,64], index: 14, kind: input, shape index: {}]
  %s15 = inlined_call_operand.vmem [shape: f32[2,32,32], index: 15, kind: input, shape index: {}]
  %s16 = inlined_call_operand.vmem [shape: f32[2,32,16], index: 16, kind: input, shape index: {}]
  %s17 = inlined_call_operand.vmem [shape: f32[2,32,16], index: 17, kind: input, shape index: {}]
  %s18 = inlined_call_operand.vmem [shape: f32[2,32,32], index: 18, kind: input, shape index: {}]
  %s19 = inlined_call_operand.vmem [shape: f32[2,32,128], index: 19, kind: input, shape index: {}]
  %s20 = inlined_call_operand.vmem [shape: f32[2,32,128], index: 20, kind: input, shape index: {}]
  %s21 = inlined_call_operand.vmem [shape: f32[2,128,32], index: 21, kind: input, shape index: {}]
  %s22 = inlined_call_operand.hbm [shape: f32[8,32], index: 22, kind: output, shape index: {0}]
  %s23 = inlined_call_operand.vmem [shape: f32[2,8,16], index: 23, kind: output, shape index: {1}]
  %s24 = inlined_call_operand.vmem [shape: f32[2,8,16], index: 24, kind: output, shape index: {2}]
  %25 = xla_tuple %s22, %s23, %s24
  %s26 = sld [smem:[#allocation0]]
  $region145: #{qwen3_prefill.1} parent=0
    _
  %s28 = ssub.s32 1, %s26
  %s29 = scalar_select 0, %s28, %s26
  $region1: #{qwen3_prefill.1} parent=0
    #allocation3 [shape = 'u8[4096]{0}', space=vmem, size = 0x1000, scoped, tag = 'output window, operand 0, single buffered']
    #allocation4 [shape = 's32[2]{0}', space=sflag, size = 0x8, scoped, tag = 'scoped memory for qwen3_prefill.1']
    %30 = vsyncpa [#allocation4], 0
    loop: start=0, step=1, limit=4
    $region2: #{qwen3_prefill.1} parent=1 // loop_pre_header
      _
    $region3: #{qwen3_prefill.1} parent=1 // loop_header
      %s32 = sphi 0, %s36
      %p33 = scmp.ge.s32.totalorder %s32, 4
      %s40 = sphi 0, %s40
      %s42 = sphi 0, %s40
      %s43 = sphi 0, %s42
      %s57 = sphi 0, %s43
      %s61 = sphi 0, %s61
      %s63 = sphi 0, %s61
      %s64 = sphi 0, %s63
      %s78 = sphi 0, %s64
      %s82 = sphi 0, %s82
      %s84 = sphi 0, %s82
      %s85 = sphi 0, %s84
      %s99 = sphi 0, %s85
      %s103 = sphi 0, %s103
      %s105 = sphi 0, %s103
      %s106 = sphi 0, %s105
      %s120 = sphi 0, %s106
      %s124 = sphi 0, %s124
      %s126 = sphi 0, %s124
      %s127 = sphi 0, %s126
      %s141 = sphi 0, %s127
      %s145 = sphi 0, %s145
      %s147 = sphi 0, %s145
      %s148 = sphi 0, %s147
      %s162 = sphi 0, %s148
      %s166 = sphi 0, %s166
      %s168 = sphi 0, %s166
      %s169 = sphi 0, %s168
      %s183 = sphi 0, %s169
      %s187 = sphi 0, %s187
      %s189 = sphi 0, %s187
      %s190 = sphi 0, %s189
      %s204 = sphi 0, %s190
      %s208 = sphi 0, %s208
      %s210 = sphi 0, %s208
      %s211 = sphi 0, %s210
      %s225 = sphi 0, %s211
      %s229 = sphi 0, %s229
      %s231 = sphi 0, %s229
      %s232 = sphi 0, %s231
      %s246 = sphi 0, %s232
      %s250 = sphi 0, %s250
      %s252 = sphi 0, %s250
      %s253 = sphi 0, %s252
      %s267 = sphi 0, %s253
      %s271 = sphi 0, %s271
      %s273 = sphi 0, %s271
      %s274 = sphi 0, %s273
      %s288 = sphi 0, %s274
      %s292 = sphi 0, %s292
      %s294 = sphi 0, %s292
      %s295 = sphi 0, %s294
      %s309 = sphi 0, %s295
      %s313 = sphi 0, %s313
      %s315 = sphi 0, %s313
      %s316 = sphi 0, %s315
      %s330 = sphi 0, %s316
      %s334 = sphi 0, %s334
      %s336 = sphi 0, %s334
      %s337 = sphi 0, %s336
      %s351 = sphi 0, %s337
      %s357 = sphi 0, %s359
      %s360 = sphi 0, %s357
      %s361 = sphi 0, %s360
      %s377 = sphi 0, %s361
      %s383 = sphi 0, %s385
      %s386 = sphi 0, %s383
      %s387 = sphi 0, %s386
      %s403 = sphi 0, %s387
      %s409 = sphi 0, %s411
      %s412 = sphi 0, %s409
      %s413 = sphi 0, %s412
      %s429 = sphi 0, %s413
      %s435 = sphi 0, %s437
      %s438 = sphi 0, %s435
      %s439 = sphi 0, %s438
      %s455 = sphi 0, %s439
      %s461 = sphi 0, %s463
      %s464 = sphi 0, %s461
      %s465 = sphi 0, %s464
      %s481 = sphi 0, %s465
      %s487 = sphi 0, %s489
      %s490 = sphi 0, %s487
      %s491 = sphi 0, %s490
      %s507 = sphi 0, %s491
      %s513 = sphi 0, %s515
      %s516 = sphi 0, %s513
      %s517 = sphi 0, %s516
      %s533 = sphi 0, %s517
      %s537 = sphi 0, %s537
      %s539 = sphi 0, %s537
      %s540 = sphi 0, %s539
      %s554 = sphi 0, %s540
      %s560 = sphi 0, %s562
      %s563 = sphi 0, %s560
      %s564 = sphi 0, %s563
      %s580 = sphi 0, %s564
      %s586 = sphi 0, %s588
      %s589 = sphi 0, %s586
      %s590 = sphi 0, %s589
      %s606 = sphi 0, %s590
    $region4: #{qwen3_prefill.1} parent=1 // loop_header_branch
      %35 = sbr.rel (%p33) target = $region8
    $region5: #{qwen3_prefill.1} parent=1 // loop_body
      %s37 = ssub.s32 %s32, 1
      %s38 = ssub.s32 %s32, 2
      %s39 = sadd.s32 %s32, 1
      %s41 = sadd.s32 %s40, 1
      %p44 = scmp.eq.s32.totalorder %s32, 1
      %p45 = scmp.ne.s32.totalorder %s40, %s42
      %p46 = scmp.eq.s32.totalorder %s32, 0
      %p47 = por %p45, %p46
      %p48 = scmp.ne.s32.totalorder %s40, %s42
      %p49 = scmp.eq.s32.totalorder %s37, 1
      %p50 = por %p48, %p49
      %p51 = scmp.ne.s32.totalorder %s42, %s43
      %p52 = scmp.eq.s32.totalorder %s37, 0
      %p53 = por %p51, %p52
      %p54 = scmp.ne.s32.totalorder %s42, %s43
      %p55 = scmp.eq.s32.totalorder %s38, 1
      %p56 = por %p54, %p55
      %p58 = scmp.ne.s32.totalorder %s43, %s57
      %p59 = scmp.eq.s32.totalorder %s38, 0
      %p60 = por %p58, %p59
      %s62 = sadd.s32 %s61, 1
      %p65 = scmp.eq.s32.totalorder %s32, 1
      %p66 = scmp.ne.s32.totalorder %s61, %s63
      %p67 = scmp.eq.s32.totalorder %s32, 0
      %p68 = por %p66, %p67
      %p69 = scmp.ne.s32.totalorder %s61, %s63
      %p70 = scmp.eq.s32.totalorder %s37, 1
      %p71 = por %p69, %p70
      %p72 = scmp.ne.s32.totalorder %s63, %s64
      %p73 = scmp.eq.s32.totalorder %s37, 0
      %p74 = por %p72, %p73
      %p75 = scmp.ne.s32.totalorder %s63, %s64
      %p76 = scmp.eq.s32.totalorder %s38, 1
      %p77 = por %p75, %p76
      %p79 = scmp.ne.s32.totalorder %s64, %s78
      %p80 = scmp.eq.s32.totalorder %s38, 0
      %p81 = por %p79, %p80
      %s83 = sadd.s32 %s82, 1
      %p86 = scmp.eq.s32.totalorder %s32, 1
      %p87 = scmp.ne.s32.totalorder %s82, %s84
      %p88 = scmp.eq.s32.totalorder %s32, 0
      %p89 = por %p87, %p88
      %p90 = scmp.ne.s32.totalorder %s82, %s84
      %p91 = scmp.eq.s32.totalorder %s37, 1
      %p92 = por %p90, %p91
      %p93 = scmp.ne.s32.totalorder %s84, %s85
      %p94 = scmp.eq.s32.totalorder %s37, 0
      %p95 = por %p93, %p94
      %p96 = scmp.ne.s32.totalorder %s84, %s85
      %p97 = scmp.eq.s32.totalorder %s38, 1
      %p98 = por %p96, %p97
      %p100 = scmp.ne.s32.totalorder %s85, %s99
      %p101 = scmp.eq.s32.totalorder %s38, 0
      %p102 = por %p100, %p101
      %s104 = sadd.s32 %s103, 1
      %p107 = scmp.eq.s32.totalorder %s32, 1
      %p108 = scmp.ne.s32.totalorder %s103, %s105
      %p109 = scmp.eq.s32.totalorder %s32, 0
      %p110 = por %p108, %p109
      %p111 = scmp.ne.s32.totalorder %s103, %s105
      %p112 = scmp.eq.s32.totalorder %s37, 1
      %p113 = por %p111, %p112
      %p114 = scmp.ne.s32.totalorder %s105, %s106
      %p115 = scmp.eq.s32.totalorder %s37, 0
      %p116 = por %p114, %p115
      %p117 = scmp.ne.s32.totalorder %s105, %s106
      %p118 = scmp.eq.s32.totalorder %s38, 1
      %p119 = por %p117, %p118
      %p121 = scmp.ne.s32.totalorder %s106, %s120
      %p122 = scmp.eq.s32.totalorder %s38, 0
      %p123 = por %p121, %p122
      %s125 = sadd.s32 %s124, 1
      %p128 = scmp.eq.s32.totalorder %s32, 1
      %p129 = scmp.ne.s32.totalorder %s124, %s126
      %p130 = scmp.eq.s32.totalorder %s32, 0
      %p131 = por %p129, %p130
      %p132 = scmp.ne.s32.totalorder %s124, %s126
      %p133 = scmp.eq.s32.totalorder %s37, 1
      %p134 = por %p132, %p133
      %p135 = scmp.ne.s32.totalorder %s126, %s127
      %p136 = scmp.eq.s32.totalorder %s37, 0
      %p137 = por %p135, %p136
      %p138 = scmp.ne.s32.totalorder %s126, %s127
      %p139 = scmp.eq.s32.totalorder %s38, 1
      %p140 = por %p138, %p139
      %p142 = scmp.ne.s32.totalorder %s127, %s141
      %p143 = scmp.eq.s32.totalorder %s38, 0
      %p144 = por %p142, %p143
      %s146 = sadd.s32 %s145, 1
      %p149 = scmp.eq.s32.totalorder %s32, 1
      %p150 = scmp.ne.s32.totalorder %s145, %s147
      %p151 = scmp.eq.s32.totalorder %s32, 0
      %p152 = por %p150, %p151
      %p153 = scmp.ne.s32.totalorder %s145, %s147
      %p154 = scmp.eq.s32.totalorder %s37, 1
      %p155 = por %p153, %p154
      %p156 = scmp.ne.s32.totalorder %s147, %s148
      %p157 = scmp.eq.s32.totalorder %s37, 0
      %p158 = por %p156, %p157
      %p159 = scmp.ne.s32.totalorder %s147, %s148
      %p160 = scmp.eq.s32.totalorder %s38, 1
      %p161 = por %p159, %p160
      %p163 = scmp.ne.s32.totalorder %s148, %s162
      %p164 = scmp.eq.s32.totalorder %s38, 0
      %p165 = por %p163, %p164
      %s167 = sadd.s32 %s166, 1
      %p170 = scmp.eq.s32.totalorder %s32, 1
      %p171 = scmp.ne.s32.totalorder %s166, %s168
      %p172 = scmp.eq.s32.totalorder %s32, 0
      %p173 = por %p171, %p172
      %p174 = scmp.ne.s32.totalorder %s166, %s168
      %p175 = scmp.eq.s32.totalorder %s37, 1
      %p176 = por %p174, %p175
      %p177 = scmp.ne.s32.totalorder %s168, %s169
      %p178 = scmp.eq.s32.totalorder %s37, 0
      %p179 = por %p177, %p178
      %p180 = scmp.ne.s32.totalorder %s168, %s169
      %p181 = scmp.eq.s32.totalorder %s38, 1
      %p182 = por %p180, %p181
      %p184 = scmp.ne.s32.totalorder %s169, %s183
      %p185 = scmp.eq.s32.totalorder %s38, 0
      %p186 = por %p184, %p185
      %s188 = sadd.s32 %s187, 1
      %p191 = scmp.eq.s32.totalorder %s32, 1
      %p192 = scmp.ne.s32.totalorder %s187, %s189
      %p193 = scmp.eq.s32.totalorder %s32, 0
      %p194 = por %p192, %p193
      %p195 = scmp.ne.s32.totalorder %s187, %s189
      %p196 = scmp.eq.s32.totalorder %s37, 1
      %p197 = por %p195, %p196
      %p198 = scmp.ne.s32.totalorder %s189, %s190
      %p199 = scmp.eq.s32.totalorder %s37, 0
      %p200 = por %p198, %p199
      %p201 = scmp.ne.s32.totalorder %s189, %s190
      %p202 = scmp.eq.s32.totalorder %s38, 1
      %p203 = por %p201, %p202
      %p205 = scmp.ne.s32.totalorder %s190, %s204
      %p206 = scmp.eq.s32.totalorder %s38, 0
      %p207 = por %p205, %p206
      %s209 = sadd.s32 %s208, 1
      %p212 = scmp.eq.s32.totalorder %s32, 1
      %p213 = scmp.ne.s32.totalorder %s208, %s210
      %p214 = scmp.eq.s32.totalorder %s32, 0
      %p215 = por %p213, %p214
      %p216 = scmp.ne.s32.totalorder %s208, %s210
      %p217 = scmp.eq.s32.totalorder %s37, 1
      %p218 = por %p216, %p217
      %p219 = scmp.ne.s32.totalorder %s210, %s211
      %p220 = scmp.eq.s32.totalorder %s37, 0
      %p221 = por %p219, %p220
      %p222 = scmp.ne.s32.totalorder %s210, %s211
      %p223 = scmp.eq.s32.totalorder %s38, 1
      %p224 = por %p222, %p223
      %p226 = scmp.ne.s32.totalorder %s211, %s225
      %p227 = scmp.eq.s32.totalorder %s38, 0
      %p228 = por %p226, %p227
      %s230 = sadd.s32 %s229, 1
      %p233 = scmp.eq.s32.totalorder %s32, 1
      %p234 = scmp.ne.s32.totalorder %s229, %s231
      %p235 = scmp.eq.s32.totalorder %s32, 0
      %p236 = por %p234, %p235
      %p237 = scmp.ne.s32.totalorder %s229, %s231
      %p238 = scmp.eq.s32.totalorder %s37, 1
      %p239 = por %p237, %p238
      %p240 = scmp.ne.s32.totalorder %s231, %s232
      %p241 = scmp.eq.s32.totalorder %s37, 0
      %p242 = por %p240, %p241
      %p243 = scmp.ne.s32.totalorder %s231, %s232
      %p244 = scmp.eq.s32.totalorder %s38, 1
      %p245 = por %p243, %p244
      %p247 = scmp.ne.s32.totalorder %s232, %s246
      %p248 = scmp.eq.s32.totalorder %s38, 0
      %p249 = por %p247, %p248
      %s251 = sadd.s32 %s250, 1
      %p254 = scmp.eq.s32.totalorder %s32, 1
      %p255 = scmp.ne.s32.totalorder %s250, %s252
      %p256 = scmp.eq.s32.totalorder %s32, 0
      %p257 = por %p255, %p256
      %p258 = scmp.ne.s32.totalorder %s250, %s252
      %p259 = scmp.eq.s32.totalorder %s37, 1
      %p260 = por %p258, %p259
      %p261 = scmp.ne.s32.totalorder %s252, %s253
      %p262 = scmp.eq.s32.totalorder %s37, 0
      %p263 = por %p261, %p262
      %p264 = scmp.ne.s32.totalorder %s252, %s253
      %p265 = scmp.eq.s32.totalorder %s38, 1
      %p266 = por %p264, %p265
      %p268 = scmp.ne.s32.totalorder %s253, %s267
      %p269 = scmp.eq.s32.totalorder %s38, 0
      %p270 = por %p268, %p269
      %s272 = sadd.s32 %s271, 1
      %p275 = scmp.eq.s32.totalorder %s32, 1
      %p276 = scmp.ne.s32.totalorder %s271, %s273
      %p277 = scmp.eq.s32.totalorder %s32, 0
      %p278 = por %p276, %p277
      %p279 = scmp.ne.s32.totalorder %s271, %s273
      %p280 = scmp.eq.s32.totalorder %s37, 1
      %p281 = por %p279, %p280
      %p282 = scmp.ne.s32.totalorder %s273, %s274
      %p283 = scmp.eq.s32.totalorder %s37, 0
      %p284 = por %p282, %p283
      %p285 = scmp.ne.s32.totalorder %s273, %s274
      %p286 = scmp.eq.s32.totalorder %s38, 1
      %p287 = por %p285, %p286
      %p289 = scmp.ne.s32.totalorder %s274, %s288
      %p290 = scmp.eq.s32.totalorder %s38, 0
      %p291 = por %p289, %p290
      %s293 = sadd.s32 %s292, 1
      %p296 = scmp.eq.s32.totalorder %s32, 1
      %p297 = scmp.ne.s32.totalorder %s292, %s294
      %p298 = scmp.eq.s32.totalorder %s32, 0
      %p299 = por %p297, %p298
      %p300 = scmp.ne.s32.totalorder %s292, %s294
      %p301 = scmp.eq.s32.totalorder %s37, 1
      %p302 = por %p300, %p301
      %p303 = scmp.ne.s32.totalorder %s294, %s295
      %p304 = scmp.eq.s32.totalorder %s37, 0
      %p305 = por %p303, %p304
      %p306 = scmp.ne.s32.totalorder %s294, %s295
      %p307 = scmp.eq.s32.totalorder %s38, 1
      %p308 = por %p306, %p307
      %p310 = scmp.ne.s32.totalorder %s295, %s309
      %p311 = scmp.eq.s32.totalorder %s38, 0
      %p312 = por %p310, %p311
      %s314 = sadd.s32 %s313, 1
      %p317 = scmp.eq.s32.totalorder %s32, 1
      %p318 = scmp.ne.s32.totalorder %s313, %s315
      %p319 = scmp.eq.s32.totalorder %s32, 0
      %p320 = por %p318, %p319
      %p321 = scmp.ne.s32.totalorder %s313, %s315
      %p322 = scmp.eq.s32.totalorder %s37, 1
      %p323 = por %p321, %p322
      %p324 = scmp.ne.s32.totalorder %s315, %s316
      %p325 = scmp.eq.s32.totalorder %s37, 0
      %p326 = por %p324, %p325
      %p327 = scmp.ne.s32.totalorder %s315, %s316
      %p328 = scmp.eq.s32.totalorder %s38, 1
      %p329 = por %p327, %p328
      %p331 = scmp.ne.s32.totalorder %s316, %s330
      %p332 = scmp.eq.s32.totalorder %s38, 0
      %p333 = por %p331, %p332
      %s335 = sadd.s32 %s334, 1
      %p338 = scmp.eq.s32.totalorder %s32, 1
      %p339 = scmp.ne.s32.totalorder %s334, %s336
      %p340 = scmp.eq.s32.totalorder %s32, 0
      %p341 = por %p339, %p340
      %p342 = scmp.ne.s32.totalorder %s334, %s336
      %p343 = scmp.eq.s32.totalorder %s37, 1
      %p344 = por %p342, %p343
      %p345 = scmp.ne.s32.totalorder %s336, %s337
      %p346 = scmp.eq.s32.totalorder %s37, 0
      %p347 = por %p345, %p346
      %p348 = scmp.ne.s32.totalorder %s336, %s337
      %p349 = scmp.eq.s32.totalorder %s38, 1
      %p350 = por %p348, %p349
      %p352 = scmp.ne.s32.totalorder %s337, %s351
      %p353 = scmp.eq.s32.totalorder %s38, 0
      %p354 = por %p352, %p353
      %s355 = ssub.s32 %s32, %s39
      %p356 = scmp.eq.s32.totalorder %s355, 0
      %s358 = sadd.s32 %s357, 1
      %s359 = scalar_select %p356, %s357, %s358
      %p362 = pneg %p356
      %p363 = scmp.eq.s32.totalorder %s32, 1
      %p364 = por %p362, %p363
      %p365 = scmp.ne.s32.totalorder %s357, %s360
      %p366 = scmp.eq.s32.totalorder %s32, 0
      %p367 = por %p365, %p366
      %p368 = scmp.ne.s32.totalorder %s357, %s360
      %p369 = scmp.eq.s32.totalorder %s37, 1
      %p370 = por %p368, %p369
      %p371 = scmp.ne.s32.totalorder %s360, %s361
      %p372 = scmp.eq.s32.totalorder %s37, 0
      %p373 = por %p371, %p372
      %p374 = scmp.ne.s32.totalorder %s360, %s361
      %p375 = scmp.eq.s32.totalorder %s38, 1
      %p376 = por %p374, %p375
      %p378 = scmp.ne.s32.totalorder %s361, %s377
      %p379 = scmp.eq.s32.totalorder %s38, 0
      %p380 = por %p378, %p379
      %s381 = ssub.s32 %s32, %s39
      %p382 = scmp.eq.s32.totalorder %s381, 0
      %s384 = sadd.s32 %s383, 1
      %s385 = scalar_select %p382, %s383, %s384
      %p388 = pneg %p382
      %p389 = scmp.eq.s32.totalorder %s32, 1
      %p390 = por %p388, %p389
      %p391 = scmp.ne.s32.totalorder %s383, %s386
      %p392 = scmp.eq.s32.totalorder %s32, 0
      %p393 = por %p391, %p392
      %p394 = scmp.ne.s32.totalorder %s383, %s386
      %p395 = scmp.eq.s32.totalorder %s37, 1
      %p396 = por %p394, %p395
      %p397 = scmp.ne.s32.totalorder %s386, %s387
      %p398 = scmp.eq.s32.totalorder %s37, 0
      %p399 = por %p397, %p398
      %p400 = scmp.ne.s32.totalorder %s386, %s387
      %p401 = scmp.eq.s32.totalorder %s38, 1
      %p402 = por %p400, %p401
      %p404 = scmp.ne.s32.totalorder %s387, %s403
      %p405 = scmp.eq.s32.totalorder %s38, 0
      %p406 = por %p404, %p405
      %s407 = ssub.s32 %s32, %s39
      %p408 = scmp.eq.s32.totalorder %s407, 0
      %s410 = sadd.s32 %s409, 1
      %s411 = scalar_select %p408, %s409, %s410
      %p414 = pneg %p408
      %p415 = scmp.eq.s32.totalorder %s32, 1
      %p416 = por %p414, %p415
      %p417 = scmp.ne.s32.totalorder %s409, %s412
      %p418 = scmp.eq.s32.totalorder %s32, 0
      %p419 = por %p417, %p418
      %p420 = scmp.ne.s32.totalorder %s409, %s412
      %p421 = scmp.eq.s32.totalorder %s37, 1
      %p422 = por %p420, %p421
      %p423 = scmp.ne.s32.totalorder %s412, %s413
      %p424 = scmp.eq.s32.totalorder %s37, 0
      %p425 = por %p423, %p424
      %p426 = scmp.ne.s32.totalorder %s412, %s413
      %p427 = scmp.eq.s32.totalorder %s38, 1
      %p428 = por %p426, %p427
      %p430 = scmp.ne.s32.totalorder %s413, %s429
      %p431 = scmp.eq.s32.totalorder %s38, 0
      %p432 = por %p430, %p431
      %s433 = ssub.s32 %s32, %s39
      %p434 = scmp.eq.s32.totalorder %s433, 0
      %s436 = sadd.s32 %s435, 1
      %s437 = scalar_select %p434, %s435, %s436
      %p440 = pneg %p434
      %p441 = scmp.eq.s32.totalorder %s32, 1
      %p442 = por %p440, %p441
      %p443 = scmp.ne.s32.totalorder %s435, %s438
      %p444 = scmp.eq.s32.totalorder %s32, 0
      %p445 = por %p443, %p444
      %p446 = scmp.ne.s32.totalorder %s435, %s438
      %p447 = scmp.eq.s32.totalorder %s37, 1
      %p448 = por %p446, %p447
      %p449 = scmp.ne.s32.totalorder %s438, %s439
      %p450 = scmp.eq.s32.totalorder %s37, 0
      %p451 = por %p449, %p450
      %p452 = scmp.ne.s32.totalorder %s438, %s439
      %p453 = scmp.eq.s32.totalorder %s38, 1
      %p454 = por %p452, %p453
      %p456 = scmp.ne.s32.totalorder %s439, %s455
      %p457 = scmp.eq.s32.totalorder %s38, 0
      %p458 = por %p456, %p457
      %s459 = ssub.s32 %s32, %s39
      %p460 = scmp.eq.s32.totalorder %s459, 0
      %s462 = sadd.s32 %s461, 1
      %s463 = scalar_select %p460, %s461, %s462
      %p466 = pneg %p460
      %p467 = scmp.eq.s32.totalorder %s32, 1
      %p468 = por %p466, %p467
      %p469 = scmp.ne.s32.totalorder %s461, %s464
      %p470 = scmp.eq.s32.totalorder %s32, 0
      %p471 = por %p469, %p470
      %p472 = scmp.ne.s32.totalorder %s461, %s464
      %p473 = scmp.eq.s32.totalorder %s37, 1
      %p474 = por %p472, %p473
      %p475 = scmp.ne.s32.totalorder %s464, %s465
      %p476 = scmp.eq.s32.totalorder %s37, 0
      %p477 = por %p475, %p476
      %p478 = scmp.ne.s32.totalorder %s464, %s465
      %p479 = scmp.eq.s32.totalorder %s38, 1
      %p480 = por %p478, %p479
      %p482 = scmp.ne.s32.totalorder %s465, %s481
      %p483 = scmp.eq.s32.totalorder %s38, 0
      %p484 = por %p482, %p483
      %s485 = ssub.s32 %s32, %s39
      %p486 = scmp.eq.s32.totalorder %s485, 0
      %s488 = sadd.s32 %s487, 1
      %s489 = scalar_select %p486, %s487, %s488
      %p492 = pneg %p486
      %p493 = scmp.eq.s32.totalorder %s32, 1
      %p494 = por %p492, %p493
      %p495 = scmp.ne.s32.totalorder %s487, %s490
      %p496 = scmp.eq.s32.totalorder %s32, 0
      %p497 = por %p495, %p496
      %p498 = scmp.ne.s32.totalorder %s487, %s490
      %p499 = scmp.eq.s32.totalorder %s37, 1
      %p500 = por %p498, %p499
      %p501 = scmp.ne.s32.totalorder %s490, %s491
      %p502 = scmp.eq.s32.totalorder %s37, 0
      %p503 = por %p501, %p502
      %p504 = scmp.ne.s32.totalorder %s490, %s491
      %p505 = scmp.eq.s32.totalorder %s38, 1
      %p506 = por %p504, %p505
      %p508 = scmp.ne.s32.totalorder %s491, %s507
      %p509 = scmp.eq.s32.totalorder %s38, 0
      %p510 = por %p508, %p509
      %s511 = ssub.s32 %s32, %s39
      %p512 = scmp.eq.s32.totalorder %s511, 0
      %s514 = sadd.s32 %s513, 1
      %s515 = scalar_select %p512, %s513, %s514
      %p518 = pneg %p512
      %p519 = scmp.eq.s32.totalorder %s32, 1
      %p520 = por %p518, %p519
      %p521 = scmp.ne.s32.totalorder %s513, %s516
      %p522 = scmp.eq.s32.totalorder %s32, 0
      %p523 = por %p521, %p522
      %p524 = scmp.ne.s32.totalorder %s513, %s516
      %p525 = scmp.eq.s32.totalorder %s37, 1
      %p526 = por %p524, %p525
      %p527 = scmp.ne.s32.totalorder %s516, %s517
      %p528 = scmp.eq.s32.totalorder %s37, 0
      %p529 = por %p527, %p528
      %p530 = scmp.ne.s32.totalorder %s516, %s517
      %p531 = scmp.eq.s32.totalorder %s38, 1
      %p532 = por %p530, %p531
      %p534 = scmp.ne.s32.totalorder %s517, %s533
      %p535 = scmp.eq.s32.totalorder %s38, 0
      %p536 = por %p534, %p535
      %s538 = sadd.s32 %s537, 1
      %p541 = scmp.eq.s32.totalorder %s32, 1
      %p542 = scmp.ne.s32.totalorder %s537, %s539
      %p543 = scmp.eq.s32.totalorder %s32, 0
      %p544 = por %p542, %p543
      %p545 = scmp.ne.s32.totalorder %s537, %s539
      %p546 = scmp.eq.s32.totalorder %s37, 1
      %p547 = por %p545, %p546
      %p548 = scmp.ne.s32.totalorder %s539, %s540
      %p549 = scmp.eq.s32.totalorder %s37, 0
      %p550 = por %p548, %p549
      %p551 = scmp.ne.s32.totalorder %s539, %s540
      %p552 = scmp.eq.s32.totalorder %s38, 1
      %p553 = por %p551, %p552
      %p555 = scmp.ne.s32.totalorder %s540, %s554
      %p556 = scmp.eq.s32.totalorder %s38, 0
      %p557 = por %p555, %p556
      %s558 = ssub.s32 %s32, %s39
      %p559 = scmp.eq.s32.totalorder %s558, 0
      %s561 = sadd.s32 %s560, 1
      %s562 = scalar_select %p559, %s560, %s561
      %p565 = pneg %p559
      %p566 = scmp.eq.s32.totalorder %s32, 1
      %p567 = por %p565, %p566
      %p568 = scmp.ne.s32.totalorder %s560, %s563
      %p569 = scmp.eq.s32.totalorder %s32, 0
      %p570 = por %p568, %p569
      %p571 = scmp.ne.s32.totalorder %s560, %s563
      %p572 = scmp.eq.s32.totalorder %s37, 1
      %p573 = por %p571, %p572
      %p574 = scmp.ne.s32.totalorder %s563, %s564
      %p575 = scmp.eq.s32.totalorder %s37, 0
      %p576 = por %p574, %p575
      %p577 = scmp.ne.s32.totalorder %s563, %s564
      %p578 = scmp.eq.s32.totalorder %s38, 1
      %p579 = por %p577, %p578
      %p581 = scmp.ne.s32.totalorder %s564, %s580
      %p582 = scmp.eq.s32.totalorder %s38, 0
      %p583 = por %p581, %p582
      %s584 = ssub.s32 %s32, %s39
      %p585 = scmp.eq.s32.totalorder %s584, 0
      %s587 = sadd.s32 %s586, 1
      %s588 = scalar_select %p585, %s586, %s587
      %p591 = pneg %p585
      %p592 = scmp.eq.s32.totalorder %s32, 1
      %p593 = por %p591, %p592
      %p594 = scmp.ne.s32.totalorder %s586, %s589
      %p595 = scmp.eq.s32.totalorder %s32, 0
      %p596 = por %p594, %p595
      %p597 = scmp.ne.s32.totalorder %s586, %s589
      %p598 = scmp.eq.s32.totalorder %s37, 1
      %p599 = por %p597, %p598
      %p600 = scmp.ne.s32.totalorder %s589, %s590
      %p601 = scmp.eq.s32.totalorder %s37, 0
      %p602 = por %p600, %p601
      %p603 = scmp.ne.s32.totalorder %s589, %s590
      %p604 = scmp.eq.s32.totalorder %s38, 1
      %p605 = por %p603, %p604
      %p607 = scmp.ne.s32.totalorder %s590, %s606
      %p608 = scmp.eq.s32.totalorder %s38, 0
      %p609 = por %p607, %p608
      %p610 = scmp.le.s32.totalorder 1, %s32
      %p611 = scmp.lt.s32.totalorder %s32, 3
      %p612 = pnand %p610, %p611
      %p613 = pneg %p612
      // Predicated region
      $region9: #{qwen3_prefill.1} parent=5 // pred_check
        _
      $region10: #{qwen3_prefill.1} parent=5 // pred_check_branch
        %615 = sbr.rel (%p612) target = $region12
      $region11: #{qwen3_prefill.1} parent=5 // pred_region
        %s616 = ssub.s32 %s32, 1
        // Predicated region
        $region13: #{qwen3_prefill.1} parent=11 // pred_check
          %p617 = pneg %p53
        $region14: #{qwen3_prefill.1} parent=11 // pred_check_branch
          %619 = sbr.rel (%p617) target = $region16
        $region15: #{qwen3_prefill.1} parent=11 // pred_region
          _
        $region16: #{qwen3_prefill.1} parent=11 // pred_fallthru
          _
        // Predicated region
        $region17: #{qwen3_prefill.1} parent=11 // pred_check
          %p620 = pneg %p74
        $region18: #{qwen3_prefill.1} parent=11 // pred_check_branch
          %622 = sbr.rel (%p620) target = $region20
        $region19: #{qwen3_prefill.1} parent=11 // pred_region
          _
        $region20: #{qwen3_prefill.1} parent=11 // pred_fallthru
          _
        // Predicated region
        $region21: #{qwen3_prefill.1} parent=11 // pred_check
          %p623 = pneg %p95
        $region22: #{qwen3_prefill.1} parent=11 // pred_check_branch
          %625 = sbr.rel (%p623) target = $region24
        $region23: #{qwen3_prefill.1} parent=11 // pred_region
          _
        $region24: #{qwen3_prefill.1} parent=11 // pred_fallthru
          _
        // Predicated region
        $region25: #{qwen3_prefill.1} parent=11 // pred_check
          %p626 = pneg %p116
        $region26: #{qwen3_prefill.1} parent=11 // pred_check_branch
          %628 = sbr.rel (%p626) target = $region28
        $region27: #{qwen3_prefill.1} parent=11 // pred_region
          _
        $region28: #{qwen3_prefill.1} parent=11 // pred_fallthru
          _
        // Predicated region
        $region29: #{qwen3_prefill.1} parent=11 // pred_check
          %p629 = pneg %p137
        $region30: #{qwen3_prefill.1} parent=11 // pred_check_branch
          %631 = sbr.rel (%p629) target = $region32
        $region31: #{qwen3_prefill.1} parent=11 // pred_region
          _
        $region32: #{qwen3_prefill.1} parent=11 // pred_fallthru
          _
        // Predicated region
        $region33: #{qwen3_prefill.1} parent=11 // pred_check
          %p632 = pneg %p158
        $region34: #{qwen3_prefill.1} parent=11 // pred_check_branch
          %634 = sbr.rel (%p632) target = $region36
        $region35: #{qwen3_prefill.1} parent=11 // pred_region
          _
        $region36: #{qwen3_prefill.1} parent=11 // pred_fallthru
          _
        // Predicated region
        $region37: #{qwen3_prefill.1} parent=11 // pred_check
          %p635 = pneg %p179
        $region38: #{qwen3_prefill.1} parent=11 // pred_check_branch
          %637 = sbr.rel (%p635) target = $region40
        $region39: #{qwen3_prefill.1} parent=11 // pred_region
          _
        $region40: #{qwen3_prefill.1} parent=11 // pred_fallthru
          _
        // Predicated region
        $region41: #{qwen3_prefill.1} parent=11 // pred_check
          %p638 = pneg %p200
        $region42: #{qwen3_prefill.1} parent=11 // pred_check_branch
          %640 = sbr.rel (%p638) target = $region44
        $region43: #{qwen3_prefill.1} parent=11 // pred_region
          _
        $region44: #{qwen3_prefill.1} parent=11 // pred_fallthru
          _
        // Predicated region
        $region45: #{qwen3_prefill.1} parent=11 // pred_check
          %p641 = pneg %p221
        $region46: #{qwen3_prefill.1} parent=11 // pred_check_branch
          %643 = sbr.rel (%p641) target = $region48
        $region47: #{qwen3_prefill.1} parent=11 // pred_region
          _
        $region48: #{qwen3_prefill.1} parent=11 // pred_fallthru
          _
        // Predicated region
        $region49: #{qwen3_prefill.1} parent=11 // pred_check
          %p644 = pneg %p242
        $region50: #{qwen3_prefill.1} parent=11 // pred_check_branch
          %646 = sbr.rel (%p644) target = $region52
        $region51: #{qwen3_prefill.1} parent=11 // pred_region
          _
        $region52: #{qwen3_prefill.1} parent=11 // pred_fallthru
          _
        // Predicated region
        $region53: #{qwen3_prefill.1} parent=11 // pred_check
          %p647 = pneg %p263
        $region54: #{qwen3_prefill.1} parent=11 // pred_check_branch
          %649 = sbr.rel (%p647) target = $region56
        $region55: #{qwen3_prefill.1} parent=11 // pred_region
          _
        $region56: #{qwen3_prefill.1} parent=11 // pred_fallthru
          _
        // Predicated region
        $region57: #{qwen3_prefill.1} parent=11 // pred_check
          %p650 = pneg %p284
        $region58: #{qwen3_prefill.1} parent=11 // pred_check_branch
          %652 = sbr.rel (%p650) target = $region60
        $region59: #{qwen3_prefill.1} parent=11 // pred_region
          _
        $region60: #{qwen3_prefill.1} parent=11 // pred_fallthru
          _
        // Predicated region
        $region61: #{qwen3_prefill.1} parent=11 // pred_check
          %p653 = pneg %p305
        $region62: #{qwen3_prefill.1} parent=11 // pred_check_branch
          %655 = sbr.rel (%p653) target = $region64
        $region63: #{qwen3_prefill.1} parent=11 // pred_region
          _
        $region64: #{qwen3_prefill.1} parent=11 // pred_fallthru
          _
        // Predicated region
        $region65: #{qwen3_prefill.1} parent=11 // pred_check
          %p656 = pneg %p326
        $region66: #{qwen3_prefill.1} parent=11 // pred_check_branch
          %658 = sbr.rel (%p656) target = $region68
        $region67: #{qwen3_prefill.1} parent=11 // pred_region
          _
        $region68: #{qwen3_prefill.1} parent=11 // pred_fallthru
          _
        // Predicated region
        $region69: #{qwen3_prefill.1} parent=11 // pred_check
          %p659 = pneg %p347
        $region70: #{qwen3_prefill.1} parent=11 // pred_check_branch
          %661 = sbr.rel (%p659) target = $region72
        $region71: #{qwen3_prefill.1} parent=11 // pred_region
          _
        $region72: #{qwen3_prefill.1} parent=11 // pred_fallthru
          _
      $region12: #{qwen3_prefill.1} parent=5 // pred_fallthru
        _
      %p662 = scmp.lt.s32.totalorder %s32, 2
      // Predicated region
      $region73: #{qwen3_prefill.1} parent=5 // pred_check
        %p663 = pneg %p662
      $region74: #{qwen3_prefill.1} parent=5 // pred_check_branch
        %665 = sbr.rel (%p663) target = $region76
      $region75: #{qwen3_prefill.1} parent=5 // pred_region
        // Predicated region
        $region77: #{qwen3_prefill.1} parent=75 // pred_check
          %p666 = pneg %p367
        $region78: #{qwen3_prefill.1} parent=75 // pred_check_branch
          %668 = sbr.rel (%p666) target = $region80
        $region79: #{qwen3_prefill.1} parent=75 // pred_region
          %p669 = scmp.lt.s32.totalorder %s32, 1
          %s670 = scalar_select %p669, %s32, 1
          %s671 = smul.addr %s670, 4
          %s672 = smul.addr %s671, 8
          %s673 = scalar_lea.vmem %s15, %s672
        $region80: #{qwen3_prefill.1} parent=75 // pred_fallthru
          _
        // Predicated region
        $region81: #{qwen3_prefill.1} parent=75 // pred_check
          %p674 = pneg %p393
        $region82: #{qwen3_prefill.1} parent=75 // pred_check_branch
          %676 = sbr.rel (%p674) target = $region84
        $region83: #{qwen3_prefill.1} parent=75 // pred_region
          %p677 = scmp.lt.s32.totalorder %s32, 1
          %s678 = scalar_select %p677, %s32, 1
          %s679 = smul.addr %s678, 4
          %s680 = smul.addr %s679, 8
          %s681 = scalar_lea.vmem %s16, %s680
        $region84: #{qwen3_prefill.1} parent=75 // pred_fallthru
          _
        // Predicated region
        $region85: #{qwen3_prefill.1} parent=75 // pred_check
          %p682 = pneg %p419
        $region86: #{qwen3_prefill.1} parent=75 // pred_check_branch
          %684 = sbr.rel (%p682) target = $region88
        $region87: #{qwen3_prefill.1} parent=75 // pred_region
          %p685 = scmp.lt.s32.totalorder %s32, 1
          %s686 = scalar_select %p685, %s32, 1
          %s687 = smul.addr %s686, 4
          %s688 = smul.addr %s687, 8
          %s689 = scalar_lea.vmem %s17, %s688
        $region88: #{qwen3_prefill.1} parent=75 // pred_fallthru
          _
        // Predicated region
        $region89: #{qwen3_prefill.1} parent=75 // pred_check
          %p690 = pneg %p445
        $region90: #{qwen3_prefill.1} parent=75 // pred_check_branch
          %692 = sbr.rel (%p690) target = $region92
        $region91: #{qwen3_prefill.1} parent=75 // pred_region
          %p693 = scmp.lt.s32.totalorder %s32, 1
          %s694 = scalar_select %p693, %s32, 1
          %s695 = smul.addr %s694, 4
          %s696 = smul.addr %s695, 8
          %s697 = scalar_lea.vmem %s18, %s696
        $region92: #{qwen3_prefill.1} parent=75 // pred_fallthru
          _
        // Predicated region
        $region93: #{qwen3_prefill.1} parent=75 // pred_check
          %p698 = pneg %p471
        $region94: #{qwen3_prefill.1} parent=75 // pred_check_branch
          %700 = sbr.rel (%p698) target = $region96
        $region95: #{qwen3_prefill.1} parent=75 // pred_region
          %p701 = scmp.lt.s32.totalorder %s32, 1
          %s702 = scalar_select %p701, %s32, 1
          %s703 = smul.addr %s702, 4
          %s704 = smul.addr %s703, 8
          %s705 = scalar_lea.vmem %s19, %s704
        $region96: #{qwen3_prefill.1} parent=75 // pred_fallthru
          _
        // Predicated region
        $region97: #{qwen3_prefill.1} parent=75 // pred_check
          %p706 = pneg %p497
        $region98: #{qwen3_prefill.1} parent=75 // pred_check_branch
          %708 = sbr.rel (%p706) target = $region100
        $region99: #{qwen3_prefill.1} parent=75 // pred_region
          %p709 = scmp.lt.s32.totalorder %s32, 1
          %s710 = scalar_select %p709, %s32, 1
          %s711 = smul.addr %s710, 4
          %s712 = smul.addr %s711, 8
          %s713 = scalar_lea.vmem %s20, %s712
        $region100: #{qwen3_prefill.1} parent=75 // pred_fallthru
          _
        // Predicated region
        $region101: #{qwen3_prefill.1} parent=75 // pred_check
          %p714 = pneg %p523
        $region102: #{qwen3_prefill.1} parent=75 // pred_check_branch
          %716 = sbr.rel (%p714) target = $region104
        $region103: #{qwen3_prefill.1} parent=75 // pred_region
          %p717 = scmp.lt.s32.totalorder %s32, 1
          %s718 = scalar_select %p717, %s32, 1
          %s719 = smul.addr %s718, 16
          %s720 = smul.addr %s719, 8
          %s721 = scalar_lea.vmem %s21, %s720
        $region104: #{qwen3_prefill.1} parent=75 // pred_fallthru
          _
      $region76: #{qwen3_prefill.1} parent=5 // pred_fallthru
        _
      %p722 = scmp.le.s32.totalorder 1, %s32
      %p723 = scmp.lt.s32.totalorder %s32, 3
      %p724 = pnand %p722, %p723
      %p725 = pneg %p724
      // Predicated region
      $region105: #{qwen3_prefill.1} parent=5 // pred_check
        _
      $region106: #{qwen3_prefill.1} parent=5 // pred_check_branch
        %727 = sbr.rel (%p724) target = $region108
      $region107: #{qwen3_prefill.1} parent=5 // pred_region
        %s728 = ssub.s32 %s32, 1
        %p729 = pneg %p53
        %p730 = pneg %p50
        %p731 = pneg %p74
        %p732 = pneg %p71
        %p733 = pneg %p95
        %p734 = pneg %p92
        %p735 = pneg %p116
        %p736 = pneg %p113
        %p737 = pneg %p137
        %p738 = pneg %p134
        %p739 = pneg %p158
        %p740 = pneg %p155
        %p741 = pneg %p179
        %p742 = pneg %p176
        %p743 = pneg %p200
        %p744 = pneg %p197
        %p745 = pneg %p221
        %p746 = pneg %p218
        %p747 = pneg %p242
        %p748 = pneg %p239
        %p749 = pneg %p263
        %p750 = pneg %p260
        %p751 = pneg %p284
        %p752 = pneg %p281
        %p753 = pneg %p305
        %p754 = pneg %p302
        %p755 = pneg %p326
        %p756 = pneg %p323
        %p757 = pneg %p347
        %p758 = pneg %p344
        %p759 = scmp.lt.s32.totalorder %s37, 1
        %s760 = scalar_select %p759, %s37, 1
        %s761 = smul.addr %s760, 4
        %s762 = smul.addr %s761, 8
        %s763 = scalar_lea.vmem %s15, %s762
        %p764 = pneg %p373
        %p765 = pneg %p370
        %p766 = scmp.lt.s32.totalorder %s37, 1
        %s767 = scalar_select %p766, %s37, 1
        %s768 = smul.addr %s767, 4
        %s769 = smul.addr %s768, 8
        %s770 = scalar_lea.vmem %s16, %s769
        %p771 = pneg %p399
        %p772 = pneg %p396
        %p773 = scmp.lt.s32.totalorder %s37, 1
        %s774 = scalar_select %p773, %s37, 1
        %s775 = smul.addr %s774, 4
        %s776 = smul.addr %s775, 8
        %s777 = scalar_lea.vmem %s17, %s776
        %p778 = pneg %p425
        %p779 = pneg %p422
        %p780 = scmp.lt.s32.totalorder %s37, 1
        %s781 = scalar_select %p780, %s37, 1
        %s782 = smul.addr %s781, 4
        %s783 = smul.addr %s782, 8
        %s784 = scalar_lea.vmem %s18, %s783
        %p785 = pneg %p451
        %p786 = pneg %p448
        %p787 = scmp.lt.s32.totalorder %s37, 1
        %s788 = scalar_select %p787, %s37, 1
        %s789 = smul.addr %s788, 4
        %s790 = smul.addr %s789, 8
        %s791 = scalar_lea.vmem %s19, %s790
        %p792 = pneg %p477
        %p793 = pneg %p474
        %p794 = scmp.lt.s32.totalorder %s37, 1
        %s795 = scalar_select %p794, %s37, 1
        %s796 = smul.addr %s795, 4
        %s797 = smul.addr %s796, 8
        %s798 = scalar_lea.vmem %s20, %s797
        %p799 = pneg %p503
        %p800 = pneg %p500
        %p801 = scmp.lt.s32.totalorder %s37, 1
        %s802 = scalar_select %p801, %s37, 1
        %s803 = smul.addr %s802, 16
        %s804 = smul.addr %s803, 8
        %s805 = scalar_lea.vmem %s21, %s804
        %p806 = pneg %p529
        %p807 = pneg %p526
        %p808 = pneg %p550
        %p809 = pneg %p547
        %p810 = pneg %p576
        %p811 = pneg %p573
        %p812 = scmp.lt.s32.totalorder %s37, 1
        %s813 = scalar_select %p812, %s37, 1
        %s814 = smul.addr %s813, 8
        %s815 = scalar_lea.vmem %s23, %s814
        %p816 = pneg %p602
        %p817 = pneg %p599
        %p818 = scmp.lt.s32.totalorder %s37, 1
        %s819 = scalar_select %p818, %s37, 1
        %s820 = smul.addr %s819, 8
        %s821 = scalar_lea.vmem %s24, %s820
        %p822 = scmp.lt.s32.totalorder %s37, 1
        %s823 = scalar_select %p822, %s37, 1
        %s824 = smul.addr %s823, 4
        %s825 = smul.addr %s824, 8
        %s826 = scalar_lea.vmem %s15, %s825
        %p827 = scmp.lt.s32.totalorder %s37, 1
        %s828 = scalar_select %p827, %s37, 1
        %s829 = smul.addr %s828, 4
        %s830 = smul.addr %s829, 8
        %s831 = scalar_lea.vmem %s16, %s830
        %p832 = scmp.lt.s32.totalorder %s37, 1
        %s833 = scalar_select %p832, %s37, 1
        %s834 = smul.addr %s833, 4
        %s835 = smul.addr %s834, 8
        %s836 = scalar_lea.vmem %s17, %s835
        %p837 = scmp.lt.s32.totalorder %s37, 1
        %s838 = scalar_select %p837, %s37, 1
        %s839 = smul.addr %s838, 4
        %s840 = smul.addr %s839, 8
        %s841 = scalar_lea.vmem %s18, %s840
        %p842 = scmp.lt.s32.totalorder %s37, 1
        %s843 = scalar_select %p842, %s37, 1
        %s844 = smul.addr %s843, 4
        %s845 = smul.addr %s844, 8
        %s846 = scalar_lea.vmem %s19, %s845
        %p847 = scmp.lt.s32.totalorder %s37, 1
        %s848 = scalar_select %p847, %s37, 1
        %s849 = smul.addr %s848, 4
        %s850 = smul.addr %s849, 8
        %s851 = scalar_lea.vmem %s20, %s850
        %p852 = scmp.lt.s32.totalorder %s37, 1
        %s853 = scalar_select %p852, %s37, 1
        %s854 = smul.addr %s853, 16
        %s855 = smul.addr %s854, 8
        %s856 = scalar_lea.vmem %s21, %s855
        %p857 = scmp.lt.s32.totalorder %s37, 1
        %s858 = scalar_select %p857, %s37, 1
        %s859 = smul.addr %s858, 8
        %s860 = scalar_lea.vmem %s23, %s859
        %p861 = scmp.lt.s32.totalorder %s37, 1
        %s862 = scalar_select %p861, %s37, 1
        %s863 = smul.addr %s862, 8
        %s864 = scalar_lea.vmem %s24, %s863
        %p865 = scmp.eq.s32.totalorder %s37, 0
        // Predicated region
        $region109: #{qwen3_prefill.1} parent=107 // pred_check
          %p866 = pneg %p865
        $region110: #{qwen3_prefill.1} parent=107 // pred_check_branch
          %868 = sbr.rel (%p866) target = $region112
        $region111: #{qwen3_prefill.1} parent=107 // pred_region
          %v869 = vld [vmem:[%s0] sm:$0xff]
          %vm870 = vcmask 261120
          %871 = vst.msk [vmem:[#allocation2] sm:$0xff] %vm870, %v869
        $region112: #{qwen3_prefill.1} parent=107 // pred_fallthru
          _
        %v872 = vld [vmem:[#allocation2] sm:$0xff]
        %v873 = vmul.f32 %v872, %v872
        %vm874 = vcmask 261120
        %v875 = vsel %vm874, %v873, 0.0
        %876 = vadd.xlane.f32.xlu0 %v875
        %v877 = vpop.xlane.xlu0 %876
        %v878 = vrcp.pop 32.0
        %v879 = vmul.f32 %v877, %v878
        %v880 = vadd.f32 %v879, 1e-06
        %v881 = vrsqrt.pop %v880
        %v882 = vmul.f32 %v872, %v881
        %v883 = vld [vmem:[%s826] sm:$0xff]
        %v884 = vld [vmem:[%s826 + $0x8] sm:$0xff]
        %v885 = vld [vmem:[%s826 + $0x10] sm:$0xff]
        %v886 = vld [vmem:[%s826 + $0x18] sm:$0xff]
        %v888 = vsel %vm874, %v882, 0
        %890 = vmatprep.subr.mxu0 0.0
        %891 = vmatpush1.msra.mxu0 0.0
        %892 = vmatprep.subr.mxu0 0.0
        %893 = vmatpush1.msra.mxu0 0.0
        %894 = vmatprep.subr.mxu0 0.0
        %895 = vmatpush1.msra.mxu0 0.0
        %896 = vmatprep.subr.mxu0 0.0
        %897 = vmatpush1.msra.mxu0 0.0
        %898 = vmatprep.subr.mxu0 0.0
        %899 = vmatpush1.msra.mxu0 0.0
        %900 = vmatprep.subr.mxu0 0.0
        %901 = vmatpush1.msra.mxu0 0.0
        %902 = vmatprep.subr.mxu0 0.0
        %903 = vmatpush1.msra.mxu0 0.0
        %904 = vmatprep.subr.mxu0 0.0
        %905 = vmatpush1.msra.mxu0 0.0
        %906 = vmatprep.subr.mxu0 0.0
        %907 = vmatpush1.msra.mxu0 0.0
        %908 = vmatprep.subr.mxu0 0.0
        %909 = vmatpush1.msra.mxu0 0.0
        %910 = vmatprep.subr.mxu0 0.0
        %911 = vmatpush1.msra.mxu0 0.0
        %912 = vmatprep.subr.mxu0 0.0
        %913 = vmatpush1.msra.mxu0 0.0
        %914 = vmatprep.subr.mxu0 0.0
        %v915 = vand.u32 %v886, 4294901760
        %916 = vmatpush1.msra.mxu0 %v915
        %917 = vmatprep.subr.mxu0 0.0
        %v918 = vand.u32 %v885, 4294901760
        %919 = vmatpush1.msra.mxu0 %v918
        %920 = vmatprep.subr.mxu0 0.0
        %v921 = vand.u32 %v884, 4294901760
        %922 = vmatpush1.msra.mxu0 %v921
        %923 = vmatprep.subr.mxu0 0.0
        %v924 = vand.u32 %v883, 4294901760
        %925 = vmatpush1.msra.mxu0 %v924
        %926 = vmatprep.subr.mxu0 0.0
        %927 = vmatpush2.msra.mxu0 0.0
        %928 = vmatprep.subr.mxu0 0.0
        %929 = vmatpush2.msra.mxu0 0.0
        %930 = vmatprep.subr.mxu0 0.0
        %931 = vmatpush2.msra.mxu0 0.0
        %932 = vmatprep.subr.mxu0 0.0
        %933 = vmatpush2.msra.mxu0 0.0
        %934 = vmatprep.subr.mxu0 0.0
        %935 = vmatpush2.msra.mxu0 0.0
        %936 = vmatprep.subr.mxu0 0.0
        %937 = vmatpush2.msra.mxu0 0.0
        %938 = vmatprep.subr.mxu0 0.0
        %939 = vmatpush2.msra.mxu0 0.0
        %940 = vmatprep.subr.mxu0 0.0
        %941 = vmatpush2.msra.mxu0 0.0
        %942 = vmatprep.subr.mxu0 0.0
        %943 = vmatpush2.msra.mxu0 0.0
        %944 = vmatprep.subr.mxu0 0.0
        %945 = vmatpush2.msra.mxu0 0.0
        %946 = vmatprep.subr.mxu0 0.0
        %947 = vmatpush2.msra.mxu0 0.0
        %948 = vmatprep.subr.mxu0 0.0
        %949 = vmatpush2.msra.mxu0 0.0
        %950 = vmatprep.subr.mxu0 0.0
        %951 = vmatpush2.msra.mxu0 0.0
        %952 = vmatprep.subr.mxu0 0.0
        %953 = vmatpush2.msra.mxu0 0.0
        %954 = vmatprep.subr.mxu0 0.0
        %955 = vmatpush2.msra.mxu0 0.0
        %956 = vmatprep.subr.mxu0 0.0
        %957 = vmatpush2.msra.mxu0 0.0
        %958 = vmatprep.mubr.f32.mxu0 0.0
        %v959 = vand.u32 %v888, 4294901760
        %v960 = vsub.f32 %v888, %v959
        %v961 = vand.u32 %v960, 4294901760
        %v962 = vsub.f32 %v960, %v961
        %v963 = vand.u32 %v962, 4294901760
        %964 = vmatmul.mubr.f32.gmra.mxu0 %v963
        %v965 = vpop.f32.mrf.mxu0
        %v966 = vadd.f32 0.0, %v965
        %v967 = vpop.f32.mrf.mxu0
        %968 = vdwg.mxu0
        %969 = vmatprep.subr.mxu0 0.0
        %970 = vmatpush1.msra.mxu0 0.0
        %971 = vmatprep.subr.mxu0 0.0
        %972 = vmatpush1.msra.mxu0 0.0
        %973 = vmatprep.subr.mxu0 0.0
        %974 = vmatpush1.msra.mxu0 0.0
        %975 = vmatprep.subr.mxu0 0.0
        %976 = vmatpush1.msra.mxu0 0.0
        %977 = vmatprep.subr.mxu0 0.0
        %978 = vmatpush1.msra.mxu0 0.0
        %979 = vmatprep.subr.mxu0 0.0
        %980 = vmatpush1.msra.mxu0 0.0
        %981 = vmatprep.subr.mxu0 0.0
        %982 = vmatpush1.msra.mxu0 0.0
        %983 = vmatprep.subr.mxu0 0.0
        %984 = vmatpush1.msra.mxu0 0.0
        %985 = vmatprep.subr.mxu0 0.0
        %986 = vmatpush1.msra.mxu0 0.0
        %987 = vmatprep.subr.mxu0 0.0
        %988 = vmatpush1.msra.mxu0 0.0
        %989 = vmatprep.subr.mxu0 0.0
        %990 = vmatpush1.msra.mxu0 0.0
        %991 = vmatprep.subr.mxu0 0.0
        %992 = vmatpush1.msra.mxu0 0.0
        %993 = vmatprep.subr.mxu0 0.0
        %v994 = vand.u32 %v886, 4294901760
        %v995 = vsub.f32 %v886, %v994
        %v996 = vand.u32 %v995, 4294901760
        %v997 = vsub.f32 %v995, %v996
        %v998 = vand.u32 %v997, 4294901760
        %999 = vmatpush1.msra.mxu0 %v998
        %1000 = vmatprep.subr.mxu0 0.0
        %v1001 = vand.u32 %v885, 4294901760
        %v1002 = vsub.f32 %v885, %v1001
        %v1003 = vand.u32 %v1002, 4294901760
        %v1004 = vsub.f32 %v1002, %v1003
        %v1005 = vand.u32 %v1004, 4294901760
        %1006 = vmatpush1.msra.mxu0 %v1005
        %1007 = vmatprep.subr.mxu0 0.0
        %v1008 = vand.u32 %v884, 4294901760
        %v1009 = vsub.f32 %v884, %v1008
        %v1010 = vand.u32 %v1009, 4294901760
        %v1011 = vsub.f32 %v1009, %v1010
        %v1012 = vand.u32 %v1011, 4294901760
        %1013 = vmatpush1.msra.mxu0 %v1012
        %1014 = vmatprep.subr.mxu0 0.0
        %v1015 = vand.u32 %v883, 4294901760
        %v1016 = vsub.f32 %v883, %v1015
        %v1017 = vand.u32 %v1016, 4294901760
        %v1018 = vsub.f32 %v1016, %v1017
        %v1019 = vand.u32 %v1018, 4294901760
        %1020 = vmatpush1.msra.mxu0 %v1019
        %1021 = vmatprep.subr.mxu0 0.0
        %1022 = vmatpush2.msra.mxu0 0.0
        %1023 = vmatprep.subr.mxu0 0.0
        %1024 = vmatpush2.msra.mxu0 0.0
        %1025 = vmatprep.subr.mxu0 0.0
        %1026 = vmatpush2.msra.mxu0 0.0
        %1027 = vmatprep.subr.mxu0 0.0
        %1028 = vmatpush2.msra.mxu0 0.0
        %1029 = vmatprep.subr.mxu0 0.0
        %1030 = vmatpush2.msra.mxu0 0.0
        %1031 = vmatprep.subr.mxu0 0.0
        %1032 = vmatpush2.msra.mxu0 0.0
        %1033 = vmatprep.subr.mxu0 0.0
        %1034 = vmatpush2.msra.mxu0 0.0
        %1035 = vmatprep.subr.mxu0 0.0
        %1036 = vmatpush2.msra.mxu0 0.0
        %1037 = vmatprep.subr.mxu0 0.0
        %1038 = vmatpush2.msra.mxu0 0.0
        %1039 = vmatprep.subr.mxu0 0.0
        %1040 = vmatpush2.msra.mxu0 0.0
        %1041 = vmatprep.subr.mxu0 0.0
        %1042 = vmatpush2.msra.mxu0 0.0
        %1043 = vmatprep.subr.mxu0 0.0
        %1044 = vmatpush2.msra.mxu0 0.0
        %1045 = vmatprep.subr.mxu0 0.0
        %1046 = vmatpush2.msra.mxu0 0.0
        %1047 = vmatprep.subr.mxu0 0.0
        %1048 = vmatpush2.msra.mxu0 0.0
        %1049 = vmatprep.subr.mxu0 0.0
        %1050 = vmatpush2.msra.mxu0 0.0
        %1051 = vmatprep.subr.mxu0 0.0
        %1052 = vmatpush2.msra.mxu0 0.0
        %1053 = vmatprep.mubr.f32.mxu0 0.0
        %v1054 = vand.u32 %v888, 4294901760
        %1055 = vmatmul.mubr.f32.gmra.mxu0 %v1054
        %v1056 = vpop.f32.mrf.mxu0
        %v1057 = vadd.f32 %v966, %v1056
        %v1058 = vpop.f32.mrf.mxu0
        %1059 = vdwg.mxu0
        %1060 = vmatprep.subr.mxu0 0.0
        %1061 = vmatpush1.msra.mxu0 0.0
        %1062 = vmatprep.subr.mxu0 0.0
        %1063 = vmatpush1.msra.mxu0 0.0
        %1064 = vmatprep.subr.mxu0 0.0
        %1065 = vmatpush1.msra.mxu0 0.0
        %1066 = vmatprep.subr.mxu0 0.0
        %1067 = vmatpush1.msra.mxu0 0.0
        %1068 = vmatprep.subr.mxu0 0.0
        %1069 = vmatpush1.msra.mxu0 0.0
        %1070 = vmatprep.subr.mxu0 0.0
        %1071 = vmatpush1.msra.mxu0 0.0
        %1072 = vmatprep.subr.mxu0 0.0
        %1073 = vmatpush1.msra.mxu0 0.0
        %1074 = vmatprep.subr.mxu0 0.0
        %1075 = vmatpush1.msra.mxu0 0.0
        %1076 = vmatprep.subr.mxu0 0.0
        %1077 = vmatpush1.msra.mxu0 0.0
        %1078 = vmatprep.subr.mxu0 0.0
        %1079 = vmatpush1.msra.mxu0 0.0
        %1080 = vmatprep.subr.mxu0 0.0
        %1081 = vmatpush1.msra.mxu0 0.0
        %1082 = vmatprep.subr.mxu0 0.0
        %1083 = vmatpush1.msra.mxu0 0.0
        %1084 = vmatprep.subr.mxu0 0.0
        %v1085 = vand.u32 %v886, 4294901760
        %v1086 = vsub.f32 %v886, %v1085
        %1087 = vmatpush1.msra.mxu0 %v1086
        %1088 = vmatprep.subr.mxu0 0.0
        %v1089 = vand.u32 %v885, 4294901760
        %v1090 = vsub.f32 %v885, %v1089
        %1091 = vmatpush1.msra.mxu0 %v1090
        %1092 = vmatprep.subr.mxu0 0.0
        %v1093 = vand.u32 %v884, 4294901760
        %v1094 = vsub.f32 %v884, %v1093
        %1095 = vmatpush1.msra.mxu0 %v1094
        %1096 = vmatprep.subr.mxu0 0.0
        %v1097 = vand.u32 %v883, 4294901760
        %v1098 = vsub.f32 %v883, %v1097
        %1099 = vmatpush1.msra.mxu0 %v1098
        %1100 = vmatprep.subr.mxu0 0.0
        %1101 = vmatpush2.msra.mxu0 0.0
        %1102 = vmatprep.subr.mxu0 0.0
        %1103 = vmatpush2.msra.mxu0 0.0
        %1104 = vmatprep.subr.mxu0 0.0
        %1105 = vmatpush2.msra.mxu0 0.0
        %1106 = vmatprep.subr.mxu0 0.0
        %1107 = vmatpush2.msra.mxu0 0.0
        %1108 = vmatprep.subr.mxu0 0.0
        %1109 = vmatpush2.msra.mxu0 0.0
        %1110 = vmatprep.subr.mxu0 0.0
        %1111 = vmatpush2.msra.mxu0 0.0
        %1112 = vmatprep.subr.mxu0 0.0
        %1113 = vmatpush2.msra.mxu0 0.0
        %1114 = vmatprep.subr.mxu0 0.0
        %1115 = vmatpush2.msra.mxu0 0.0
        %1116 = vmatprep.subr.mxu0 0.0
        %1117 = vmatpush2.msra.mxu0 0.0
        %1118 = vmatprep.subr.mxu0 0.0
        %1119 = vmatpush2.msra.mxu0 0.0
        %1120 = vmatprep.subr.mxu0 0.0
        %1121 = vmatpush2.msra.mxu0 0.0
        %1122 = vmatprep.subr.mxu0 0.0
        %1123 = vmatpush2.msra.mxu0 0.0
        %1124 = vmatprep.subr.mxu0 0.0
        %1125 = vmatpush2.msra.mxu0 0.0
        %1126 = vmatprep.subr.mxu0 0.0
        %1127 = vmatpush2.msra.mxu0 0.0
        %1128 = vmatprep.subr.mxu0 0.0
        %1129 = vmatpush2.msra.mxu0 0.0
        %1130 = vmatprep.subr.mxu0 0.0
        %1131 = vmatpush2.msra.mxu0 0.0
        %1132 = vmatprep.mubr.f32.mxu0 0.0
        %v1133 = vand.u32 %v888, 4294901760
        %v1134 = vsub.f32 %v888, %v1133
        %1135 = vmatmul.mubr.f32.gmra.mxu0 %v1134
        %v1136 = vpop.f32.mrf.mxu0
        %v1137 = vadd.f32 %v1057, %v1136
        %v1138 = vpop.f32.mrf.mxu0
        %1139 = vdwg.mxu0
        %1140 = vmatprep.subr.mxu0 0.0
        %1141 = vmatpush1.msra.mxu0 0.0
        %1142 = vmatprep.subr.mxu0 0.0
        %1143 = vmatpush1.msra.mxu0 0.0
        %1144 = vmatprep.subr.mxu0 0.0
        %1145 = vmatpush1.msra.mxu0 0.0
        %1146 = vmatprep.subr.mxu0 0.0
        %1147 = vmatpush1.msra.mxu0 0.0
        %1148 = vmatprep.subr.mxu0 0.0
        %1149 = vmatpush1.msra.mxu0 0.0
        %1150 = vmatprep.subr.mxu0 0.0
        %1151 = vmatpush1.msra.mxu0 0.0
        %1152 = vmatprep.subr.mxu0 0.0
        %1153 = vmatpush1.msra.mxu0 0.0
        %1154 = vmatprep.subr.mxu0 0.0
        %1155 = vmatpush1.msra.mxu0 0.0
        %1156 = vmatprep.subr.mxu0 0.0
        %1157 = vmatpush1.msra.mxu0 0.0
        %1158 = vmatprep.subr.mxu0 0.0
        %1159 = vmatpush1.msra.mxu0 0.0
        %1160 = vmatprep.subr.mxu0 0.0
        %1161 = vmatpush1.msra.mxu0 0.0
        %1162 = vmatprep.subr.mxu0 0.0
        %1163 = vmatpush1.msra.mxu0 0.0
        %1164 = vmatprep.subr.mxu0 0.0
        %v1165 = vand.u32 %v886, 4294901760
        %1166 = vmatpush1.msra.mxu0 %v1165
        %1167 = vmatprep.subr.mxu0 0.0
        %v1168 = vand.u32 %v885, 4294901760
        %1169 = vmatpush1.msra.mxu0 %v1168
        %1170 = vmatprep.subr.mxu0 0.0
        %v1171 = vand.u32 %v884, 4294901760
        %1172 = vmatpush1.msra.mxu0 %v1171
        %1173 = vmatprep.subr.mxu0 0.0
        %v1174 = vand.u32 %v883, 4294901760
        %1175 = vmatpush1.msra.mxu0 %v1174
        %1176 = vmatprep.subr.mxu0 0.0
        %1177 = vmatpush2.msra.mxu0 0.0
        %1178 = vmatprep.subr.mxu0 0.0
        %1179 = vmatpush2.msra.mxu0 0.0
        %1180 = vmatprep.subr.mxu0 0.0
        %1181 = vmatpush2.msra.mxu0 0.0
        %1182 = vmatprep.subr.mxu0 0.0
        %1183 = vmatpush2.msra.mxu0 0.0
        %1184 = vmatprep.subr.mxu0 0.0
        %1185 = vmatpush2.msra.mxu0 0.0
        %1186 = vmatprep.subr.mxu0 0.0
        %1187 = vmatpush2.msra.mxu0 0.0
        %1188 = vmatprep.subr.mxu0 0.0
        %1189 = vmatpush2.msra.mxu0 0.0
        %1190 = vmatprep.subr.mxu0 0.0
        %1191 = vmatpush2.msra.mxu0 0.0
        %1192 = vmatprep.subr.mxu0 0.0
        %1193 = vmatpush2.msra.mxu0 0.0
        %1194 = vmatprep.subr.mxu0 0.0
        %1195 = vmatpush2.msra.mxu0 0.0
        %1196 = vmatprep.subr.mxu0 0.0
        %1197 = vmatpush2.msra.mxu0 0.0
        %1198 = vmatprep.subr.mxu0 0.0
        %1199 = vmatpush2.msra.mxu0 0.0
        %1200 = vmatprep.subr.mxu0 0.0
        %1201 = vmatpush2.msra.mxu0 0.0
        %1202 = vmatprep.subr.mxu0 0.0
        %1203 = vmatpush2.msra.mxu0 0.0
        %1204 = vmatprep.subr.mxu0 0.0
        %1205 = vmatpush2.msra.mxu0 0.0
        %1206 = vmatprep.subr.mxu0 0.0
        %1207 = vmatpush2.msra.mxu0 0.0
        %1208 = vmatprep.mubr.f32.mxu0 0.0
        %v1209 = vand.u32 %v888, 4294901760
        %v1210 = vsub.f32 %v888, %v1209
        %v1211 = vand.u32 %v1210, 4294901760
        %1212 = vmatmul.mubr.f32.gmra.mxu0 %v1211
        %v1213 = vpop.f32.mrf.mxu0
        %v1214 = vadd.f32 %v1137, %v1213
        %v1215 = vpop.f32.mrf.mxu0
        %1216 = vdwg.mxu0
        %1217 = vmatprep.subr.mxu0 0.0
        %1218 = vmatpush1.msra.mxu0 0.0
        %1219 = vmatprep.subr.mxu0 0.0
        %1220 = vmatpush1.msra.mxu0 0.0
        %1221 = vmatprep.subr.mxu0 0.0
        %1222 = vmatpush1.msra.mxu0 0.0
        %1223 = vmatprep.subr.mxu0 0.0
        %1224 = vmatpush1.msra.mxu0 0.0
        %1225 = vmatprep.subr.mxu0 0.0
        %1226 = vmatpush1.msra.mxu0 0.0
        %1227 = vmatprep.subr.mxu0 0.0
        %1228 = vmatpush1.msra.mxu0 0.0
        %1229 = vmatprep.subr.mxu0 0.0
        %1230 = vmatpush1.msra.mxu0 0.0
        %1231 = vmatprep.subr.mxu0 0.0
        %1232 = vmatpush1.msra.mxu0 0.0
        %1233 = vmatprep.subr.mxu0 0.0
        %1234 = vmatpush1.msra.mxu0 0.0
        %1235 = vmatprep.subr.mxu0 0.0
        %1236 = vmatpush1.msra.mxu0 0.0
        %1237 = vmatprep.subr.mxu0 0.0
        %1238 = vmatpush1.msra.mxu0 0.0
        %1239 = vmatprep.subr.mxu0 0.0
        %1240 = vmatpush1.msra.mxu0 0.0
        %1241 = vmatprep.subr.mxu0 0.0
        %v1242 = vand.u32 %v886, 4294901760
        %v1243 = vsub.f32 %v886, %v1242
        %v1244 = vand.u32 %v1243, 4294901760
        %1245 = vmatpush1.msra.mxu0 %v1244
        %1246 = vmatprep.subr.mxu0 0.0
        %v1247 = vand.u32 %v885, 4294901760
        %v1248 = vsub.f32 %v885, %v1247
        %v1249 = vand.u32 %v1248, 4294901760
        %1250 = vmatpush1.msra.mxu0 %v1249
        %1251 = vmatprep.subr.mxu0 0.0
        %v1252 = vand.u32 %v884, 4294901760
        %v1253 = vsub.f32 %v884, %v1252
        %v1254 = vand.u32 %v1253, 4294901760
        %1255 = vmatpush1.msra.mxu0 %v1254
        %1256 = vmatprep.subr.mxu0 0.0
        %v1257 = vand.u32 %v883, 4294901760
        %v1258 = vsub.f32 %v883, %v1257
        %v1259 = vand.u32 %v1258, 4294901760
        %1260 = vmatpush1.msra.mxu0 %v1259
        %1261 = vmatprep.subr.mxu0 0.0
        %1262 = vmatpush2.msra.mxu0 0.0
        %1263 = vmatprep.subr.mxu0 0.0
        %1264 = vmatpush2.msra.mxu0 0.0
        %1265 = vmatprep.subr.mxu0 0.0
        %1266 = vmatpush2.msra.mxu0 0.0
        %1267 = vmatprep.subr.mxu0 0.0
        %1268 = vmatpush2.msra.mxu0 0.0
        %1269 = vmatprep.subr.mxu0 0.0
        %1270 = vmatpush2.msra.mxu0 0.0
        %1271 = vmatprep.subr.mxu0 0.0
        %1272 = vmatpush2.msra.mxu0 0.0
        %1273 = vmatprep.subr.mxu0 0.0
        %1274 = vmatpush2.msra.mxu0 0.0
        %1275 = vmatprep.subr.mxu0 0.0
        %1276 = vmatpush2.msra.mxu0 0.0
        %1277 = vmatprep.subr.mxu0 0.0
        %1278 = vmatpush2.msra.mxu0 0.0
        %1279 = vmatprep.subr.mxu0 0.0
        %1280 = vmatpush2.msra.mxu0 0.0
        %1281 = vmatprep.subr.mxu0 0.0
        %1282 = vmatpush2.msra.mxu0 0.0
        %1283 = vmatprep.subr.mxu0 0.0
        %1284 = vmatpush2.msra.mxu0 0.0
        %1285 = vmatprep.subr.mxu0 0.0
        %1286 = vmatpush2.msra.mxu0 0.0
        %1287 = vmatprep.subr.mxu0 0.0
        %1288 = vmatpush2.msra.mxu0 0.0
        %1289 = vmatprep.subr.mxu0 0.0
        %1290 = vmatpush2.msra.mxu0 0.0
        %1291 = vmatprep.subr.mxu0 0.0
        %1292 = vmatpush2.msra.mxu0 0.0
        %1293 = vmatprep.mubr.f32.mxu0 0.0
        %v1294 = vand.u32 %v888, 4294901760
        %1295 = vmatmul.mubr.f32.gmra.mxu0 %v1294
        %v1296 = vpop.f32.mrf.mxu0
        %v1297 = vadd.f32 %v1214, %v1296
        %v1298 = vpop.f32.mrf.mxu0
        %1299 = vdwg.mxu0
        %1300 = vmatprep.subr.mxu0 0.0
        %1301 = vmatpush1.msra.mxu0 0.0
        %1302 = vmatprep.subr.mxu0 0.0
        %1303 = vmatpush1.msra.mxu0 0.0
        %1304 = vmatprep.subr.mxu0 0.0
        %1305 = vmatpush1.msra.mxu0 0.0
        %1306 = vmatprep.subr.mxu0 0.0
        %1307 = vmatpush1.msra.mxu0 0.0
        %1308 = vmatprep.subr.mxu0 0.0
        %1309 = vmatpush1.msra.mxu0 0.0
        %1310 = vmatprep.subr.mxu0 0.0
        %1311 = vmatpush1.msra.mxu0 0.0
        %1312 = vmatprep.subr.mxu0 0.0
        %1313 = vmatpush1.msra.mxu0 0.0
        %1314 = vmatprep.subr.mxu0 0.0
        %1315 = vmatpush1.msra.mxu0 0.0
        %1316 = vmatprep.subr.mxu0 0.0
        %1317 = vmatpush1.msra.mxu0 0.0
        %1318 = vmatprep.subr.mxu0 0.0
        %1319 = vmatpush1.msra.mxu0 0.0
        %1320 = vmatprep.subr.mxu0 0.0
        %1321 = vmatpush1.msra.mxu0 0.0
        %1322 = vmatprep.subr.mxu0 0.0
        %1323 = vmatpush1.msra.mxu0 0.0
        %1324 = vmatprep.subr.mxu0 0.0
        %v1325 = vand.u32 %v886, 4294901760
        %1326 = vmatpush1.msra.mxu0 %v1325
        %1327 = vmatprep.subr.mxu0 0.0
        %v1328 = vand.u32 %v885, 4294901760
        %1329 = vmatpush1.msra.mxu0 %v1328
        %1330 = vmatprep.subr.mxu0 0.0
        %v1331 = vand.u32 %v884, 4294901760
        %1332 = vmatpush1.msra.mxu0 %v1331
        %1333 = vmatprep.subr.mxu0 0.0
        %v1334 = vand.u32 %v883, 4294901760
        %1335 = vmatpush1.msra.mxu0 %v1334
        %1336 = vmatprep.subr.mxu0 0.0
        %1337 = vmatpush2.msra.mxu0 0.0
        %1338 = vmatprep.subr.mxu0 0.0
        %1339 = vmatpush2.msra.mxu0 0.0
        %1340 = vmatprep.subr.mxu0 0.0
        %1341 = vmatpush2.msra.mxu0 0.0
        %1342 = vmatprep.subr.mxu0 0.0
        %1343 = vmatpush2.msra.mxu0 0.0
        %1344 = vmatprep.subr.mxu0 0.0
        %1345 = vmatpush2.msra.mxu0 0.0
        %1346 = vmatprep.subr.mxu0 0.0
        %1347 = vmatpush2.msra.mxu0 0.0
        %1348 = vmatprep.subr.mxu0 0.0
        %1349 = vmatpush2.msra.mxu0 0.0
        %1350 = vmatprep.subr.mxu0 0.0
        %1351 = vmatpush2.msra.mxu0 0.0
        %1352 = vmatprep.subr.mxu0 0.0
        %1353 = vmatpush2.msra.mxu0 0.0
        %1354 = vmatprep.subr.mxu0 0.0
        %1355 = vmatpush2.msra.mxu0 0.0
        %1356 = vmatprep.subr.mxu0 0.0
        %1357 = vmatpush2.msra.mxu0 0.0
        %1358 = vmatprep.subr.mxu0 0.0
        %1359 = vmatpush2.msra.mxu0 0.0
        %1360 = vmatprep.subr.mxu0 0.0
        %1361 = vmatpush2.msra.mxu0 0.0
        %1362 = vmatprep.subr.mxu0 0.0
        %1363 = vmatpush2.msra.mxu0 0.0
        %1364 = vmatprep.subr.mxu0 0.0
        %1365 = vmatpush2.msra.mxu0 0.0
        %1366 = vmatprep.subr.mxu0 0.0
        %1367 = vmatpush2.msra.mxu0 0.0
        %1368 = vmatprep.mubr.f32.mxu0 0.0
        %v1369 = vand.u32 %v888, 4294901760
        %1370 = vmatmul.mubr.f32.gmra.mxu0 %v1369
        %v1371 = vpop.f32.mrf.mxu0
        %v1372 = vadd.f32 %v1297, %v1371
        %v1373 = vpop.f32.mrf.mxu0
        %1374 = vdwg.mxu0
        %v1375 = vld [vmem:[%s831] sm:$0xff]
        %v1376 = vld [vmem:[%s831 + $0x8] sm:$0xff]
        %v1377 = vld [vmem:[%s831 + $0x10] sm:$0xff]
        %v1378 = vld [vmem:[%s831 + $0x18] sm:$0xff]
        %1379 = vmatprep.subr.mxu0 0.0
        %1380 = vmatpush1.msra.mxu0 0.0
        %1381 = vmatprep.subr.mxu0 0.0
        %1382 = vmatpush1.msra.mxu0 0.0
        %1383 = vmatprep.subr.mxu0 0.0
        %1384 = vmatpush1.msra.mxu0 0.0
        %1385 = vmatprep.subr.mxu0 0.0
        %1386 = vmatpush1.msra.mxu0 0.0
        %1387 = vmatprep.subr.mxu0 0.0
        %1388 = vmatpush1.msra.mxu0 0.0
        %1389 = vmatprep.subr.mxu0 0.0
        %1390 = vmatpush1.msra.mxu0 0.0
        %1391 = vmatprep.subr.mxu0 0.0
        %1392 = vmatpush1.msra.mxu0 0.0
        %1393 = vmatprep.subr.mxu0 0.0
        %1394 = vmatpush1.msra.mxu0 0.0
        %1395 = vmatprep.subr.mxu0 0.0
        %1396 = vmatpush1.msra.mxu0 0.0
        %1397 = vmatprep.subr.mxu0 0.0
        %1398 = vmatpush1.msra.mxu0 0.0
        %1399 = vmatprep.subr.mxu0 0.0
        %1400 = vmatpush1.msra.mxu0 0.0
        %1401 = vmatprep.subr.mxu0 0.0
        %1402 = vmatpush1.msra.mxu0 0.0
        %1403 = vmatprep.subr.mxu0 0.0
        %v1404 = vand.u32 %v1378, 4294901760
        %1405 = vmatpush1.msra.mxu0 %v1404
        %1406 = vmatprep.subr.mxu0 0.0
        %v1407 = vand.u32 %v1377, 4294901760
        %1408 = vmatpush1.msra.mxu0 %v1407
        %1409 = vmatprep.subr.mxu0 0.0
        %v1410 = vand.u32 %v1376, 4294901760
        %1411 = vmatpush1.msra.mxu0 %v1410
        %1412 = vmatprep.subr.mxu0 0.0
        %v1413 = vand.u32 %v1375, 4294901760
        %1414 = vmatpush1.msra.mxu0 %v1413
        %1415 = vmatprep.subr.mxu0 0.0
        %1416 = vmatpush2.msra.mxu0 0.0
        %1417 = vmatprep.subr.mxu0 0.0
        %1418 = vmatpush2.msra.mxu0 0.0
        %1419 = vmatprep.subr.mxu0 0.0
        %1420 = vmatpush2.msra.mxu0 0.0
        %1421 = vmatprep.subr.mxu0 0.0
        %1422 = vmatpush2.msra.mxu0 0.0
        %1423 = vmatprep.subr.mxu0 0.0
        %1424 = vmatpush2.msra.mxu0 0.0
        %1425 = vmatprep.subr.mxu0 0.0
        %1426 = vmatpush2.msra.mxu0 0.0
        %1427 = vmatprep.subr.mxu0 0.0
        %1428 = vmatpush2.msra.mxu0 0.0
        %1429 = vmatprep.subr.mxu0 0.0
        %1430 = vmatpush2.msra.mxu0 0.0
        %1431 = vmatprep.subr.mxu0 0.0
        %1432 = vmatpush2.msra.mxu0 0.0
        %1433 = vmatprep.subr.mxu0 0.0
        %1434 = vmatpush2.msra.mxu0 0.0
        %1435 = vmatprep.subr.mxu0 0.0
        %1436 = vmatpush2.msra.mxu0 0.0
        %1437 = vmatprep.subr.mxu0 0.0
        %1438 = vmatpush2.msra.mxu0 0.0
        %1439 = vmatprep.subr.mxu0 0.0
        %1440 = vmatpush2.msra.mxu0 0.0
        %1441 = vmatprep.subr.mxu0 0.0
        %1442 = vmatpush2.msra.mxu0 0.0
        %1443 = vmatprep.subr.mxu0 0.0
        %1444 = vmatpush2.msra.mxu0 0.0
        %1445 = vmatprep.subr.mxu0 0.0
        %1446 = vmatpush2.msra.mxu0 0.0
        %1447 = vmatprep.mubr.f32.mxu0 0.0
        %v1448 = vand.u32 %v888, 4294901760
        %v1449 = vsub.f32 %v888, %v1448
        %v1450 = vand.u32 %v1449, 4294901760
        %v1451 = vsub.f32 %v1449, %v1450
        %v1452 = vand.u32 %v1451, 4294901760
        %1453 = vmatmul.mubr.f32.gmra.mxu0 %v1452
        %v1454 = vpop.f32.mrf.mxu0
        %v1455 = vadd.f32 0.0, %v1454
        %v1456 = vpop.f32.mrf.mxu0
        %1457 = vdwg.mxu0
        %1458 = vmatprep.subr.mxu0 0.0
        %1459 = vmatpush1.msra.mxu0 0.0
        %1460 = vmatprep.subr.mxu0 0.0
        %1461 = vmatpush1.msra.mxu0 0.0
        %1462 = vmatprep.subr.mxu0 0.0
        %1463 = vmatpush1.msra.mxu0 0.0
        %1464 = vmatprep.subr.mxu0 0.0
        %1465 = vmatpush1.msra.mxu0 0.0
        %1466 = vmatprep.subr.mxu0 0.0
        %1467 = vmatpush1.msra.mxu0 0.0
        %1468 = vmatprep.subr.mxu0 0.0
        %1469 = vmatpush1.msra.mxu0 0.0
        %1470 = vmatprep.subr.mxu0 0.0
        %1471 = vmatpush1.msra.mxu0 0.0
        %1472 = vmatprep.subr.mxu0 0.0
        %1473 = vmatpush1.msra.mxu0 0.0
        %1474 = vmatprep.subr.mxu0 0.0
        %1475 = vmatpush1.msra.mxu0 0.0
        %1476 = vmatprep.subr.mxu0 0.0
        %1477 = vmatpush1.msra.mxu0 0.0
        %1478 = vmatprep.subr.mxu0 0.0
        %1479 = vmatpush1.msra.mxu0 0.0
        %1480 = vmatprep.subr.mxu0 0.0
        %1481 = vmatpush1.msra.mxu0 0.0
        %1482 = vmatprep.subr.mxu0 0.0
        %v1483 = vand.u32 %v1378, 4294901760
        %v1484 = vsub.f32 %v1378, %v1483
        %v1485 = vand.u32 %v1484, 4294901760
        %v1486 = vsub.f32 %v1484, %v1485
        %v1487 = vand.u32 %v1486, 4294901760
        %1488 = vmatpush1.msra.mxu0 %v1487
        %1489 = vmatprep.subr.mxu0 0.0
        %v1490 = vand.u32 %v1377, 4294901760
        %v1491 = vsub.f32 %v1377, %v1490
        %v1492 = vand.u32 %v1491, 4294901760
        %v1493 = vsub.f32 %v1491, %v1492
        %v1494 = vand.u32 %v1493, 4294901760
        %1495 = vmatpush1.msra.mxu0 %v1494
        %1496 = vmatprep.subr.mxu0 0.0
        %v1497 = vand.u32 %v1376, 4294901760
        %v1498 = vsub.f32 %v1376, %v1497
        %v1499 = vand.u32 %v1498, 4294901760
        %v1500 = vsub.f32 %v1498, %v1499
        %v1501 = vand.u32 %v1500, 4294901760
        %1502 = vmatpush1.msra.mxu0 %v1501
        %1503 = vmatprep.subr.mxu0 0.0
        %v1504 = vand.u32 %v1375, 4294901760
        %v1505 = vsub.f32 %v1375, %v1504
        %v1506 = vand.u32 %v1505, 4294901760
        %v1507 = vsub.f32 %v1505, %v1506
        %v1508 = vand.u32 %v1507, 4294901760
        %1509 = vmatpush1.msra.mxu0 %v1508
        %1510 = vmatprep.subr.mxu0 0.0
        %1511 = vmatpush2.msra.mxu0 0.0
        %1512 = vmatprep.subr.mxu0 0.0
        %1513 = vmatpush2.msra.mxu0 0.0
        %1514 = vmatprep.subr.mxu0 0.0
        %1515 = vmatpush2.msra.mxu0 0.0
        %1516 = vmatprep.subr.mxu0 0.0
        %1517 = vmatpush2.msra.mxu0 0.0
        %1518 = vmatprep.subr.mxu0 0.0
        %1519 = vmatpush2.msra.mxu0 0.0
        %1520 = vmatprep.subr.mxu0 0.0
        %1521 = vmatpush2.msra.mxu0 0.0
        %1522 = vmatprep.subr.mxu0 0.0
        %1523 = vmatpush2.msra.mxu0 0.0
        %1524 = vmatprep.subr.mxu0 0.0
        %1525 = vmatpush2.msra.mxu0 0.0
        %1526 = vmatprep.subr.mxu0 0.0
        %1527 = vmatpush2.msra.mxu0 0.0
        %1528 = vmatprep.subr.mxu0 0.0
        %1529 = vmatpush2.msra.mxu0 0.0
        %1530 = vmatprep.subr.mxu0 0.0
        %1531 = vmatpush2.msra.mxu0 0.0
        %1532 = vmatprep.subr.mxu0 0.0
        %1533 = vmatpush2.msra.mxu0 0.0
        %1534 = vmatprep.subr.mxu0 0.0
        %1535 = vmatpush2.msra.mxu0 0.0
        %1536 = vmatprep.subr.mxu0 0.0
        %1537 = vmatpush2.msra.mxu0 0.0
        %1538 = vmatprep.subr.mxu0 0.0
        %1539 = vmatpush2.msra.mxu0 0.0
        %1540 = vmatprep.subr.mxu0 0.0
        %1541 = vmatpush2.msra.mxu0 0.0
        %1542 = vmatprep.mubr.f32.mxu0 0.0
        %v1543 = vand.u32 %v888, 4294901760
        %1544 = vmatmul.mubr.f32.gmra.mxu0 %v1543
        %v1545 = vpop.f32.mrf.mxu0
        %v1546 = vadd.f32 %v1455, %v1545
        %v1547 = vpop.f32.mrf.mxu0
        %1548 = vdwg.mxu0
        %1549 = vmatprep.subr.mxu0 0.0
        %1550 = vmatpush1.msra.mxu0 0.0
        %1551 = vmatprep.subr.mxu0 0.0
        %1552 = vmatpush1.msra.mxu0 0.0
        %1553 = vmatprep.subr.mxu0 0.0
        %1554 = vmatpush1.msra.mxu0 0.0
        %1555 = vmatprep.subr.mxu0 0.0
        %1556 = vmatpush1.msra.mxu0 0.0
        %1557 = vmatprep.subr.mxu0 0.0
        %1558 = vmatpush1.msra.mxu0 0.0
        %1559 = vmatprep.subr.mxu0 0.0
        %1560 = vmatpush1.msra.mxu0 0.0
        %1561 = vmatprep.subr.mxu0 0.0
        %1562 = vmatpush1.msra.mxu0 0.0
        %1563 = vmatprep.subr.mxu0 0.0
        %1564 = vmatpush1.msra.mxu0 0.0
        %1565 = vmatprep.subr.mxu0 0.0
        %1566 = vmatpush1.msra.mxu0 0.0
        %1567 = vmatprep.subr.mxu0 0.0
        %1568 = vmatpush1.msra.mxu0 0.0
        %1569 = vmatprep.subr.mxu0 0.0
        %1570 = vmatpush1.msra.mxu0 0.0
        %1571 = vmatprep.subr.mxu0 0.0
        %1572 = vmatpush1.msra.mxu0 0.0
        %1573 = vmatprep.subr.mxu0 0.0
        %v1574 = vand.u32 %v1378, 4294901760
        %v1575 = vsub.f32 %v1378, %v1574
        %1576 = vmatpush1.msra.mxu0 %v1575
        %1577 = vmatprep.subr.mxu0 0.0
        %v1578 = vand.u32 %v1377, 4294901760
        %v1579 = vsub.f32 %v1377, %v1578
        %1580 = vmatpush1.msra.mxu0 %v1579
        %1581 = vmatprep.subr.mxu0 0.0
        %v1582 = vand.u32 %v1376, 4294901760
        %v1583 = vsub.f32 %v1376, %v1582
        %1584 = vmatpush1.msra.mxu0 %v1583
        %1585 = vmatprep.subr.mxu0 0.0
        %v1586 = vand.u32 %v1375, 4294901760
        %v1587 = vsub.f32 %v1375, %v1586
        %1588 = vmatpush1.msra.mxu0 %v1587
        %1589 = vmatprep.subr.mxu0 0.0
        %1590 = vmatpush2.msra.mxu0 0.0
        %1591 = vmatprep.subr.mxu0 0.0
        %1592 = vmatpush2.msra.mxu0 0.0
        %1593 = vmatprep.subr.mxu0 0.0
        %1594 = vmatpush2.msra.mxu0 0.0
        %1595 = vmatprep.subr.mxu0 0.0
        %1596 = vmatpush2.msra.mxu0 0.0
        %1597 = vmatprep.subr.mxu0 0.0
        %1598 = vmatpush2.msra.mxu0 0.0
        %1599 = vmatprep.subr.mxu0 0.0
        %1600 = vmatpush2.msra.mxu0 0.0
        %1601 = vmatprep.subr.mxu0 0.0
        %1602 = vmatpush2.msra.mxu0 0.0
        %1603 = vmatprep.subr.mxu0 0.0
        %1604 = vmatpush2.msra.mxu0 0.0
        %1605 = vmatprep.subr.mxu0 0.0
        %1606 = vmatpush2.msra.mxu0 0.0
        %1607 = vmatprep.subr.mxu0 0.0
        %1608 = vmatpush2.msra.mxu0 0.0
        %1609 = vmatprep.subr.mxu0 0.0
        %1610 = vmatpush2.msra.mxu0 0.0
        %1611 = vmatprep.subr.mxu0 0.0
        %1612 = vmatpush2.msra.mxu0 0.0
        %1613 = vmatprep.subr.mxu0 0.0
        %1614 = vmatpush2.msra.mxu0 0.0
        %1615 = vmatprep.subr.mxu0 0.0
        %1616 = vmatpush2.msra.mxu0 0.0
        %1617 = vmatprep.subr.mxu0 0.0
        %1618 = vmatpush2.msra.mxu0 0.0
        %1619 = vmatprep.subr.mxu0 0.0
        %1620 = vmatpush2.msra.mxu0 0.0
        %1621 = vmatprep.mubr.f32.mxu0 0.0
        %v1622 = vand.u32 %v888, 4294901760
        %v1623 = vsub.f32 %v888, %v1622
        %1624 = vmatmul.mubr.f32.gmra.mxu0 %v1623
        %v1625 = vpop.f32.mrf.mxu0
        %v1626 = vadd.f32 %v1546, %v1625
        %v1627 = vpop.f32.mrf.mxu0
        %1628 = vdwg.mxu0
        %1629 = vmatprep.subr.mxu0 0.0
        %1630 = vmatpush1.msra.mxu0 0.0
        %1631 = vmatprep.subr.mxu0 0.0
        %1632 = vmatpush1.msra.mxu0 0.0
        %1633 = vmatprep.subr.mxu0 0.0
        %1634 = vmatpush1.msra.mxu0 0.0
        %1635 = vmatprep.subr.mxu0 0.0
        %1636 = vmatpush1.msra.mxu0 0.0
        %1637 = vmatprep.subr.mxu0 0.0
        %1638 = vmatpush1.msra.mxu0 0.0
        %1639 = vmatprep.subr.mxu0 0.0
        %1640 = vmatpush1.msra.mxu0 0.0
        %1641 = vmatprep.subr.mxu0 0.0
        %1642 = vmatpush1.msra.mxu0 0.0
        %1643 = vmatprep.subr.mxu0 0.0
        %1644 = vmatpush1.msra.mxu0 0.0
        %1645 = vmatprep.subr.mxu0 0.0
        %1646 = vmatpush1.msra.mxu0 0.0
        %1647 = vmatprep.subr.mxu0 0.0
        %1648 = vmatpush1.msra.mxu0 0.0
        %1649 = vmatprep.subr.mxu0 0.0
        %1650 = vmatpush1.msra.mxu0 0.0
        %1651 = vmatprep.subr.mxu0 0.0
        %1652 = vmatpush1.msra.mxu0 0.0
        %1653 = vmatprep.subr.mxu0 0.0
        %v1654 = vand.u32 %v1378, 4294901760
        %1655 = vmatpush1.msra.mxu0 %v1654
        %1656 = vmatprep.subr.mxu0 0.0
        %v1657 = vand.u32 %v1377, 4294901760
        %1658 = vmatpush1.msra.mxu0 %v1657
        %1659 = vmatprep.subr.mxu0 0.0
        %v1660 = vand.u32 %v1376, 4294901760
        %1661 = vmatpush1.msra.mxu0 %v1660
        %1662 = vmatprep.subr.mxu0 0.0
        %v1663 = vand.u32 %v1375, 4294901760
        %1664 = vmatpush1.msra.mxu0 %v1663
        %1665 = vmatprep.subr.mxu0 0.0
        %1666 = vmatpush2.msra.mxu0 0.0
        %1667 = vmatprep.subr.mxu0 0.0
        %1668 = vmatpush2.msra.mxu0 0.0
        %1669 = vmatprep.subr.mxu0 0.0
        %1670 = vmatpush2.msra.mxu0 0.0
        %1671 = vmatprep.subr.mxu0 0.0
        %1672 = vmatpush2.msra.mxu0 0.0
        %1673 = vmatprep.subr.mxu0 0.0
        %1674 = vmatpush2.msra.mxu0 0.0
        %1675 = vmatprep.subr.mxu0 0.0
        %1676 = vmatpush2.msra.mxu0 0.0
        %1677 = vmatprep.subr.mxu0 0.0
        %1678 = vmatpush2.msra.mxu0 0.0
        %1679 = vmatprep.subr.mxu0 0.0
        %1680 = vmatpush2.msra.mxu0 0.0
        %1681 = vmatprep.subr.mxu0 0.0
        %1682 = vmatpush2.msra.mxu0 0.0
        %1683 = vmatprep.subr.mxu0 0.0
        %1684 = vmatpush2.msra.mxu0 0.0
        %1685 = vmatprep.subr.mxu0 0.0
        %1686 = vmatpush2.msra.mxu0 0.0
        %1687 = vmatprep.subr.mxu0 0.0
        %1688 = vmatpush2.msra.mxu0 0.0
        %1689 = vmatprep.subr.mxu0 0.0
        %1690 = vmatpush2.msra.mxu0 0.0
        %1691 = vmatprep.subr.mxu0 0.0
        %1692 = vmatpush2.msra.mxu0 0.0
        %1693 = vmatprep.subr.mxu0 0.0
        %1694 = vmatpush2.msra.mxu0 0.0
        %1695 = vmatprep.subr.mxu0 0.0
        %1696 = vmatpush2.msra.mxu0 0.0
        %1697 = vmatprep.mubr.f32.mxu0 0.0
        %v1698 = vand.u32 %v888, 4294901760
        %v1699 = vsub.f32 %v888, %v1698
        %v1700 = vand.u32 %v1699, 4294901760
        %1701 = vmatmul.mubr.f32.gmra.mxu0 %v1700
        %v1702 = vpop.f32.mrf.mxu0
        %v1703 = vadd.f32 %v1626, %v1702
        %v1704 = vpop.f32.mrf.mxu0
        %1705 = vdwg.mxu0
        %1706 = vmatprep.subr.mxu0 0.0
        %1707 = vmatpush1.msra.mxu0 0.0
        %1708 = vmatprep.subr.mxu0 0.0
        %1709 = vmatpush1.msra.mxu0 0.0
        %1710 = vmatprep.subr.mxu0 0.0
        %1711 = vmatpush1.msra.mxu0 0.0
        %1712 = vmatprep.subr.mxu0 0.0
        %1713 = vmatpush1.msra.mxu0 0.0
        %1714 = vmatprep.subr.mxu0 0.0
        %1715 = vmatpush1.msra.mxu0 0.0
        %1716 = vmatprep.subr.mxu0 0.0
        %1717 = vmatpush1.msra.mxu0 0.0
        %1718 = vmatprep.subr.mxu0 0.0
        %1719 = vmatpush1.msra.mxu0 0.0
        %1720 = vmatprep.subr.mxu0 0.0
        %1721 = vmatpush1.msra.mxu0 0.0
        %1722 = vmatprep.subr.mxu0 0.0
        %1723 = vmatpush1.msra.mxu0 0.0
        %1724 = vmatprep.subr.mxu0 0.0
        %1725 = vmatpush1.msra.mxu0 0.0
        %1726 = vmatprep.subr.mxu0 0.0
        %1727 = vmatpush1.msra.mxu0 0.0
        %1728 = vmatprep.subr.mxu0 0.0
        %1729 = vmatpush1.msra.mxu0 0.0
        %1730 = vmatprep.subr.mxu0 0.0
        %v1731 = vand.u32 %v1378, 4294901760
        %v1732 = vsub.f32 %v1378, %v1731
        %v1733 = vand.u32 %v1732, 4294901760
        %1734 = vmatpush1.msra.mxu0 %v1733
        %1735 = vmatprep.subr.mxu0 0.0
        %v1736 = vand.u32 %v1377, 4294901760
        %v1737 = vsub.f32 %v1377, %v1736
        %v1738 = vand.u32 %v1737, 4294901760
        %1739 = vmatpush1.msra.mxu0 %v1738
        %1740 = vmatprep.subr.mxu0 0.0
        %v1741 = vand.u32 %v1376, 4294901760
        %v1742 = vsub.f32 %v1376, %v1741
        %v1743 = vand.u32 %v1742, 4294901760
        %1744 = vmatpush1.msra.mxu0 %v1743
        %1745 = vmatprep.subr.mxu0 0.0
        %v1746 = vand.u32 %v1375, 4294901760
        %v1747 = vsub.f32 %v1375, %v1746
        %v1748 = vand.u32 %v1747, 4294901760
        %1749 = vmatpush1.msra.mxu0 %v1748
        %1750 = vmatprep.subr.mxu0 0.0
        %1751 = vmatpush2.msra.mxu0 0.0
        %1752 = vmatprep.subr.mxu0 0.0
        %1753 = vmatpush2.msra.mxu0 0.0
        %1754 = vmatprep.subr.mxu0 0.0
        %1755 = vmatpush2.msra.mxu0 0.0
        %1756 = vmatprep.subr.mxu0 0.0
        %1757 = vmatpush2.msra.mxu0 0.0
        %1758 = vmatprep.subr.mxu0 0.0
        %1759 = vmatpush2.msra.mxu0 0.0
        %1760 = vmatprep.subr.mxu0 0.0
        %1761 = vmatpush2.msra.mxu0 0.0
        %1762 = vmatprep.subr.mxu0 0.0
        %1763 = vmatpush2.msra.mxu0 0.0
        %1764 = vmatprep.subr.mxu0 0.0
        %1765 = vmatpush2.msra.mxu0 0.0
        %1766 = vmatprep.subr.mxu0 0.0
        %1767 = vmatpush2.msra.mxu0 0.0
        %1768 = vmatprep.subr.mxu0 0.0
        %1769 = vmatpush2.msra.mxu0 0.0
        %1770 = vmatprep.subr.mxu0 0.0
        %1771 = vmatpush2.msra.mxu0 0.0
        %1772 = vmatprep.subr.mxu0 0.0
        %1773 = vmatpush2.msra.mxu0 0.0
        %1774 = vmatprep.subr.mxu0 0.0
        %1775 = vmatpush2.msra.mxu0 0.0
        %1776 = vmatprep.subr.mxu0 0.0
        %1777 = vmatpush2.msra.mxu0 0.0
        %1778 = vmatprep.subr.mxu0 0.0
        %1779 = vmatpush2.msra.mxu0 0.0
        %1780 = vmatprep.subr.mxu0 0.0
        %1781 = vmatpush2.msra.mxu0 0.0
        %1782 = vmatprep.mubr.f32.mxu0 0.0
        %v1783 = vand.u32 %v888, 4294901760
        %1784 = vmatmul.mubr.f32.gmra.mxu0 %v1783
        %v1785 = vpop.f32.mrf.mxu0
        %v1786 = vadd.f32 %v1703, %v1785
        %v1787 = vpop.f32.mrf.mxu0
        %1788 = vdwg.mxu0
        %1789 = vmatprep.subr.mxu0 0.0
        %1790 = vmatpush1.msra.mxu0 0.0
        %1791 = vmatprep.subr.mxu0 0.0
        %1792 = vmatpush1.msra.mxu0 0.0
        %1793 = vmatprep.subr.mxu0 0.0
        %1794 = vmatpush1.msra.mxu0 0.0
        %1795 = vmatprep.subr.mxu0 0.0
        %1796 = vmatpush1.msra.mxu0 0.0
        %1797 = vmatprep.subr.mxu0 0.0
        %1798 = vmatpush1.msra.mxu0 0.0
        %1799 = vmatprep.subr.mxu0 0.0
        %1800 = vmatpush1.msra.mxu0 0.0
        %1801 = vmatprep.subr.mxu0 0.0
        %1802 = vmatpush1.msra.mxu0 0.0
        %1803 = vmatprep.subr.mxu0 0.0
        %1804 = vmatpush1.msra.mxu0 0.0
        %1805 = vmatprep.subr.mxu0 0.0
        %1806 = vmatpush1.msra.mxu0 0.0
        %1807 = vmatprep.subr.mxu0 0.0
        %1808 = vmatpush1.msra.mxu0 0.0
        %1809 = vmatprep.subr.mxu0 0.0
        %1810 = vmatpush1.msra.mxu0 0.0
        %1811 = vmatprep.subr.mxu0 0.0
        %1812 = vmatpush1.msra.mxu0 0.0
        %1813 = vmatprep.subr.mxu0 0.0
        %v1814 = vand.u32 %v1378, 4294901760
        %1815 = vmatpush1.msra.mxu0 %v1814
        %1816 = vmatprep.subr.mxu0 0.0
        %v1817 = vand.u32 %v1377, 4294901760
        %1818 = vmatpush1.msra.mxu0 %v1817
        %1819 = vmatprep.subr.mxu0 0.0
        %v1820 = vand.u32 %v1376, 4294901760
        %1821 = vmatpush1.msra.mxu0 %v1820
        %1822 = vmatprep.subr.mxu0 0.0
        %v1823 = vand.u32 %v1375, 4294901760
        %1824 = vmatpush1.msra.mxu0 %v1823
        %1825 = vmatprep.subr.mxu0 0.0
        %1826 = vmatpush2.msra.mxu0 0.0
        %1827 = vmatprep.subr.mxu0 0.0
        %1828 = vmatpush2.msra.mxu0 0.0
        %1829 = vmatprep.subr.mxu0 0.0
        %1830 = vmatpush2.msra.mxu0 0.0
        %1831 = vmatprep.subr.mxu0 0.0
        %1832 = vmatpush2.msra.mxu0 0.0
        %1833 = vmatprep.subr.mxu0 0.0
        %1834 = vmatpush2.msra.mxu0 0.0
        %1835 = vmatprep.subr.mxu0 0.0
        %1836 = vmatpush2.msra.mxu0 0.0
        %1837 = vmatprep.subr.mxu0 0.0
        %1838 = vmatpush2.msra.mxu0 0.0
        %1839 = vmatprep.subr.mxu0 0.0
        %1840 = vmatpush2.msra.mxu0 0.0
        %1841 = vmatprep.subr.mxu0 0.0
        %1842 = vmatpush2.msra.mxu0 0.0
        %1843 = vmatprep.subr.mxu0 0.0
        %1844 = vmatpush2.msra.mxu0 0.0
        %1845 = vmatprep.subr.mxu0 0.0
        %1846 = vmatpush2.msra.mxu0 0.0
        %1847 = vmatprep.subr.mxu0 0.0
        %1848 = vmatpush2.msra.mxu0 0.0
        %1849 = vmatprep.subr.mxu0 0.0
        %1850 = vmatpush2.msra.mxu0 0.0
        %1851 = vmatprep.subr.mxu0 0.0
        %1852 = vmatpush2.msra.mxu0 0.0
        %1853 = vmatprep.subr.mxu0 0.0
        %1854 = vmatpush2.msra.mxu0 0.0
        %1855 = vmatprep.subr.mxu0 0.0
        %1856 = vmatpush2.msra.mxu0 0.0
        %1857 = vmatprep.mubr.f32.mxu0 0.0
        %v1858 = vand.u32 %v888, 4294901760
        %1859 = vmatmul.mubr.f32.gmra.mxu0 %v1858
        %v1860 = vpop.f32.mrf.mxu0
        %v1861 = vadd.f32 %v1786, %v1860
        %v1862 = vpop.f32.mrf.mxu0
        %1863 = vdwg.mxu0
        %v1864 = vld [vmem:[%s836] sm:$0xff]
        %v1865 = vld [vmem:[%s836 + $0x8] sm:$0xff]
        %v1866 = vld [vmem:[%s836 + $0x10] sm:$0xff]
        %v1867 = vld [vmem:[%s836 + $0x18] sm:$0xff]
        %1868 = vmatprep.subr.mxu0 0.0
        %1869 = vmatpush1.msra.mxu0 0.0
        %1870 = vmatprep.subr.mxu0 0.0
        %1871 = vmatpush1.msra.mxu0 0.0
        %1872 = vmatprep.subr.mxu0 0.0
        %1873 = vmatpush1.msra.mxu0 0.0
        %1874 = vmatprep.subr.mxu0 0.0
        %1875 = vmatpush1.msra.mxu0 0.0
        %1876 = vmatprep.subr.mxu0 0.0
        %1877 = vmatpush1.msra.mxu0 0.0
        %1878 = vmatprep.subr.mxu0 0.0
        %1879 = vmatpush1.msra.mxu0 0.0
        %1880 = vmatprep.subr.mxu0 0.0
        %1881 = vmatpush1.msra.mxu0 0.0
        %1882 = vmatprep.subr.mxu0 0.0
        %1883 = vmatpush1.msra.mxu0 0.0
        %1884 = vmatprep.subr.mxu0 0.0
        %1885 = vmatpush1.msra.mxu0 0.0
        %1886 = vmatprep.subr.mxu0 0.0
        %1887 = vmatpush1.msra.mxu0 0.0
        %1888 = vmatprep.subr.mxu0 0.0
        %1889 = vmatpush1.msra.mxu0 0.0
        %1890 = vmatprep.subr.mxu0 0.0
        %1891 = vmatpush1.msra.mxu0 0.0
        %1892 = vmatprep.subr.mxu0 0.0
        %v1893 = vand.u32 %v1867, 4294901760
        %1894 = vmatpush1.msra.mxu0 %v1893
        %1895 = vmatprep.subr.mxu0 0.0
        %v1896 = vand.u32 %v1866, 4294901760
        %1897 = vmatpush1.msra.mxu0 %v1896
        %1898 = vmatprep.subr.mxu0 0.0
        %v1899 = vand.u32 %v1865, 4294901760
        %1900 = vmatpush1.msra.mxu0 %v1899
        %1901 = vmatprep.subr.mxu0 0.0
        %v1902 = vand.u32 %v1864, 4294901760
        %1903 = vmatpush1.msra.mxu0 %v1902
        %1904 = vmatprep.subr.mxu0 0.0
        %1905 = vmatpush2.msra.mxu0 0.0
        %1906 = vmatprep.subr.mxu0 0.0
        %1907 = vmatpush2.msra.mxu0 0.0
        %1908 = vmatprep.subr.mxu0 0.0
        %1909 = vmatpush2.msra.mxu0 0.0
        %1910 = vmatprep.subr.mxu0 0.0
        %1911 = vmatpush2.msra.mxu0 0.0
        %1912 = vmatprep.subr.mxu0 0.0
        %1913 = vmatpush2.msra.mxu0 0.0
        %1914 = vmatprep.subr.mxu0 0.0
        %1915 = vmatpush2.msra.mxu0 0.0
        %1916 = vmatprep.subr.mxu0 0.0
        %1917 = vmatpush2.msra.mxu0 0.0
        %1918 = vmatprep.subr.mxu0 0.0
        %1919 = vmatpush2.msra.mxu0 0.0
        %1920 = vmatprep.subr.mxu0 0.0
        %1921 = vmatpush2.msra.mxu0 0.0
        %1922 = vmatprep.subr.mxu0 0.0
        %1923 = vmatpush2.msra.mxu0 0.0
        %1924 = vmatprep.subr.mxu0 0.0
        %1925 = vmatpush2.msra.mxu0 0.0
        %1926 = vmatprep.subr.mxu0 0.0
        %1927 = vmatpush2.msra.mxu0 0.0
        %1928 = vmatprep.subr.mxu0 0.0
        %1929 = vmatpush2.msra.mxu0 0.0
        %1930 = vmatprep.subr.mxu0 0.0
        %1931 = vmatpush2.msra.mxu0 0.0
        %1932 = vmatprep.subr.mxu0 0.0
        %1933 = vmatpush2.msra.mxu0 0.0
        %1934 = vmatprep.subr.mxu0 0.0
        %1935 = vmatpush2.msra.mxu0 0.0
        %1936 = vmatprep.mubr.f32.mxu0 0.0
        %v1937 = vand.u32 %v888, 4294901760
        %v1938 = vsub.f32 %v888, %v1937
        %v1939 = vand.u32 %v1938, 4294901760
        %v1940 = vsub.f32 %v1938, %v1939
        %v1941 = vand.u32 %v1940, 4294901760
        %1942 = vmatmul.mubr.f32.gmra.mxu0 %v1941
        %v1943 = vpop.f32.mrf.mxu0
        %v1944 = vadd.f32 0.0, %v1943
        %v1945 = vpop.f32.mrf.mxu0
        %1946 = vdwg.mxu0
        %1947 = vmatprep.subr.mxu0 0.0
        %1948 = vmatpush1.msra.mxu0 0.0
        %1949 = vmatprep.subr.mxu0 0.0
        %1950 = vmatpush1.msra.mxu0 0.0
        %1951 = vmatprep.subr.mxu0 0.0
        %1952 = vmatpush1.msra.mxu0 0.0
        %1953 = vmatprep.subr.mxu0 0.0
        %1954 = vmatpush1.msra.mxu0 0.0
        %1955 = vmatprep.subr.mxu0 0.0
        %1956 = vmatpush1.msra.mxu0 0.0
        %1957 = vmatprep.subr.mxu0 0.0
        %1958 = vmatpush1.msra.mxu0 0.0
        %1959 = vmatprep.subr.mxu0 0.0
        %1960 = vmatpush1.msra.mxu0 0.0
        %1961 = vmatprep.subr.mxu0 0.0
        %1962 = vmatpush1.msra.mxu0 0.0
        %1963 = vmatprep.subr.mxu0 0.0
        %1964 = vmatpush1.msra.mxu0 0.0
        %1965 = vmatprep.subr.mxu0 0.0
        %1966 = vmatpush1.msra.mxu0 0.0
        %1967 = vmatprep.subr.mxu0 0.0
        %1968 = vmatpush1.msra.mxu0 0.0
        %1969 = vmatprep.subr.mxu0 0.0
        %1970 = vmatpush1.msra.mxu0 0.0
        %1971 = vmatprep.subr.mxu0 0.0
        %v1972 = vand.u32 %v1867, 4294901760
        %v1973 = vsub.f32 %v1867, %v1972
        %v1974 = vand.u32 %v1973, 4294901760
        %v1975 = vsub.f32 %v1973, %v1974
        %v1976 = vand.u32 %v1975, 4294901760
        %1977 = vmatpush1.msra.mxu0 %v1976
        %1978 = vmatprep.subr.mxu0 0.0
        %v1979 = vand.u32 %v1866, 4294901760
        %v1980 = vsub.f32 %v1866, %v1979
        %v1981 = vand.u32 %v1980, 4294901760
        %v1982 = vsub.f32 %v1980, %v1981
        %v1983 = vand.u32 %v1982, 4294901760
        %1984 = vmatpush1.msra.mxu0 %v1983
        %1985 = vmatprep.subr.mxu0 0.0
        %v1986 = vand.u32 %v1865, 4294901760
        %v1987 = vsub.f32 %v1865, %v1986
        %v1988 = vand.u32 %v1987, 4294901760
        %v1989 = vsub.f32 %v1987, %v1988
        %v1990 = vand.u32 %v1989, 4294901760
        %1991 = vmatpush1.msra.mxu0 %v1990
        %1992 = vmatprep.subr.mxu0 0.0
        %v1993 = vand.u32 %v1864, 4294901760
        %v1994 = vsub.f32 %v1864, %v1993
        %v1995 = vand.u32 %v1994, 4294901760
        %v1996 = vsub.f32 %v1994, %v1995
        %v1997 = vand.u32 %v1996, 4294901760
        %1998 = vmatpush1.msra.mxu0 %v1997
        %1999 = vmatprep.subr.mxu0 0.0
        %2000 = vmatpush2.msra.mxu0 0.0
        %2001 = vmatprep.subr.mxu0 0.0
        %2002 = vmatpush2.msra.mxu0 0.0
        %2003 = vmatprep.subr.mxu0 0.0
        %2004 = vmatpush2.msra.mxu0 0.0
        %2005 = vmatprep.subr.mxu0 0.0
        %2006 = vmatpush2.msra.mxu0 0.0
        %2007 = vmatprep.subr.mxu0 0.0
        %2008 = vmatpush2.msra.mxu0 0.0
        %2009 = vmatprep.subr.mxu0 0.0
        %2010 = vmatpush2.msra.mxu0 0.0
        %2011 = vmatprep.subr.mxu0 0.0
        %2012 = vmatpush2.msra.mxu0 0.0
        %2013 = vmatprep.subr.mxu0 0.0
        %2014 = vmatpush2.msra.mxu0 0.0
        %2015 = vmatprep.subr.mxu0 0.0
        %2016 = vmatpush2.msra.mxu0 0.0
        %2017 = vmatprep.subr.mxu0 0.0
        %2018 = vmatpush2.msra.mxu0 0.0
        %2019 = vmatprep.subr.mxu0 0.0
        %2020 = vmatpush2.msra.mxu0 0.0
        %2021 = vmatprep.subr.mxu0 0.0
        %2022 = vmatpush2.msra.mxu0 0.0
        %2023 = vmatprep.subr.mxu0 0.0
        %2024 = vmatpush2.msra.mxu0 0.0
        %2025 = vmatprep.subr.mxu0 0.0
        %2026 = vmatpush2.msra.mxu0 0.0
        %2027 = vmatprep.subr.mxu0 0.0
        %2028 = vmatpush2.msra.mxu0 0.0
        %2029 = vmatprep.subr.mxu0 0.0
        %2030 = vmatpush2.msra.mxu0 0.0
        %2031 = vmatprep.mubr.f32.mxu0 0.0
        %v2032 = vand.u32 %v888, 4294901760
        %2033 = vmatmul.mubr.f32.gmra.mxu0 %v2032
        %v2034 = vpop.f32.mrf.mxu0
        %v2035 = vadd.f32 %v1944, %v2034
        %v2036 = vpop.f32.mrf.mxu0
        %2037 = vdwg.mxu0
        %2038 = vmatprep.subr.mxu0 0.0
        %2039 = vmatpush1.msra.mxu0 0.0
        %2040 = vmatprep.subr.mxu0 0.0
        %2041 = vmatpush1.msra.mxu0 0.0
        %2042 = vmatprep.subr.mxu0 0.0
        %2043 = vmatpush1.msra.mxu0 0.0
        %2044 = vmatprep.subr.mxu0 0.0
        %2045 = vmatpush1.msra.mxu0 0.0
        %2046 = vmatprep.subr.mxu0 0.0
        %2047 = vmatpush1.msra.mxu0 0.0
        %2048 = vmatprep.subr.mxu0 0.0
        %2049 = vmatpush1.msra.mxu0 0.0
        %2050 = vmatprep.subr.mxu0 0.0
        %2051 = vmatpush1.msra.mxu0 0.0
        %2052 = vmatprep.subr.mxu0 0.0
        %2053 = vmatpush1.msra.mxu0 0.0
        %2054 = vmatprep.subr.mxu0 0.0
        %2055 = vmatpush1.msra.mxu0 0.0
        %2056 = vmatprep.subr.mxu0 0.0
        %2057 = vmatpush1.msra.mxu0 0.0
        %2058 = vmatprep.subr.mxu0 0.0
        %2059 = vmatpush1.msra.mxu0 0.0
        %2060 = vmatprep.subr.mxu0 0.0
        %2061 = vmatpush1.msra.mxu0 0.0
        %2062 = vmatprep.subr.mxu0 0.0
        %v2063 = vand.u32 %v1867, 4294901760
        %v2064 = vsub.f32 %v1867, %v2063
        %2065 = vmatpush1.msra.mxu0 %v2064
        %2066 = vmatprep.subr.mxu0 0.0
        %v2067 = vand.u32 %v1866, 4294901760
        %v2068 = vsub.f32 %v1866, %v2067
        %2069 = vmatpush1.msra.mxu0 %v2068
        %2070 = vmatprep.subr.mxu0 0.0
        %v2071 = vand.u32 %v1865, 4294901760
        %v2072 = vsub.f32 %v1865, %v2071
        %2073 = vmatpush1.msra.mxu0 %v2072
        %2074 = vmatprep.subr.mxu0 0.0
        %v2075 = vand.u32 %v1864, 4294901760
        %v2076 = vsub.f32 %v1864, %v2075
        %2077 = vmatpush1.msra.mxu0 %v2076
        %2078 = vmatprep.subr.mxu0 0.0
        %2079 = vmatpush2.msra.mxu0 0.0
        %2080 = vmatprep.subr.mxu0 0.0
        %2081 = vmatpush2.msra.mxu0 0.0
        %2082 = vmatprep.subr.mxu0 0.0
        %2083 = vmatpush2.msra.mxu0 0.0
        %2084 = vmatprep.subr.mxu0 0.0
        %2085 = vmatpush2.msra.mxu0 0.0
        %2086 = vmatprep.subr.mxu0 0.0
        %2087 = vmatpush2.msra.mxu0 0.0
        %2088 = vmatprep.subr.mxu0 0.0
        %2089 = vmatpush2.msra.mxu0 0.0
        %2090 = vmatprep.subr.mxu0 0.0
        %2091 = vmatpush2.msra.mxu0 0.0
        %2092 = vmatprep.subr.mxu0 0.0
        %2093 = vmatpush2.msra.mxu0 0.0
        %2094 = vmatprep.subr.mxu0 0.0
        %2095 = vmatpush2.msra.mxu0 0.0
        %2096 = vmatprep.subr.mxu0 0.0
        %2097 = vmatpush2.msra.mxu0 0.0
        %2098 = vmatprep.subr.mxu0 0.0
        %2099 = vmatpush2.msra.mxu0 0.0
        %2100 = vmatprep.subr.mxu0 0.0
        %2101 = vmatpush2.msra.mxu0 0.0
        %2102 = vmatprep.subr.mxu0 0.0
        %2103 = vmatpush2.msra.mxu0 0.0
        %2104 = vmatprep.subr.mxu0 0.0
        %2105 = vmatpush2.msra.mxu0 0.0
        %2106 = vmatprep.subr.mxu0 0.0
        %2107 = vmatpush2.msra.mxu0 0.0
        %2108 = vmatprep.subr.mxu0 0.0
        %2109 = vmatpush2.msra.mxu0 0.0
        %2110 = vmatprep.mubr.f32.mxu0 0.0
        %v2111 = vand.u32 %v888, 4294901760
        %v2112 = vsub.f32 %v888, %v2111
        %2113 = vmatmul.mubr.f32.gmra.mxu0 %v2112
        %v2114 = vpop.f32.mrf.mxu0
        %v2115 = vadd.f32 %v2035, %v2114
        %v2116 = vpop.f32.mrf.mxu0
        %2117 = vdwg.mxu0
        %2118 = vmatprep.subr.mxu0 0.0
        %2119 = vmatpush1.msra.mxu0 0.0
        %2120 = vmatprep.subr.mxu0 0.0
        %2121 = vmatpush1.msra.mxu0 0.0
        %2122 = vmatprep.subr.mxu0 0.0
        %2123 = vmatpush1.msra.mxu0 0.0
        %2124 = vmatprep.subr.mxu0 0.0
        %2125 = vmatpush1.msra.mxu0 0.0
        %2126 = vmatprep.subr.mxu0 0.0
        %2127 = vmatpush1.msra.mxu0 0.0
        %2128 = vmatprep.subr.mxu0 0.0
        %2129 = vmatpush1.msra.mxu0 0.0
        %2130 = vmatprep.subr.mxu0 0.0
        %2131 = vmatpush1.msra.mxu0 0.0
        %2132 = vmatprep.subr.mxu0 0.0
        %2133 = vmatpush1.msra.mxu0 0.0
        %2134 = vmatprep.subr.mxu0 0.0
        %2135 = vmatpush1.msra.mxu0 0.0
        %2136 = vmatprep.subr.mxu0 0.0
        %2137 = vmatpush1.msra.mxu0 0.0
        %2138 = vmatprep.subr.mxu0 0.0
        %2139 = vmatpush1.msra.mxu0 0.0
        %2140 = vmatprep.subr.mxu0 0.0
        %2141 = vmatpush1.msra.mxu0 0.0
        %2142 = vmatprep.subr.mxu0 0.0
        %v2143 = vand.u32 %v1867, 4294901760
        %2144 = vmatpush1.msra.mxu0 %v2143
        %2145 = vmatprep.subr.mxu0 0.0
        %v2146 = vand.u32 %v1866, 4294901760
        %2147 = vmatpush1.msra.mxu0 %v2146
        %2148 = vmatprep.subr.mxu0 0.0
        %v2149 = vand.u32 %v1865, 4294901760
        %2150 = vmatpush1.msra.mxu0 %v2149
        %2151 = vmatprep.subr.mxu0 0.0
        %v2152 = vand.u32 %v1864, 4294901760
        %2153 = vmatpush1.msra.mxu0 %v2152
        %2154 = vmatprep.subr.mxu0 0.0
        %2155 = vmatpush2.msra.mxu0 0.0
        %2156 = vmatprep.subr.mxu0 0.0
        %2157 = vmatpush2.msra.mxu0 0.0
        %2158 = vmatprep.subr.mxu0 0.0
        %2159 = vmatpush2.msra.mxu0 0.0
        %2160 = vmatprep.subr.mxu0 0.0
        %2161 = vmatpush2.msra.mxu0 0.0
        %2162 = vmatprep.subr.mxu0 0.0
        %2163 = vmatpush2.msra.mxu0 0.0
        %2164 = vmatprep.subr.mxu0 0.0
        %2165 = vmatpush2.msra.mxu0 0.0
        %2166 = vmatprep.subr.mxu0 0.0
        %2167 = vmatpush2.msra.mxu0 0.0
        %2168 = vmatprep.subr.mxu0 0.0
        %2169 = vmatpush2.msra.mxu0 0.0
        %2170 = vmatprep.subr.mxu0 0.0
        %2171 = vmatpush2.msra.mxu0 0.0
        %2172 = vmatprep.subr.mxu0 0.0
        %2173 = vmatpush2.msra.mxu0 0.0
        %2174 = vmatprep.subr.mxu0 0.0
        %2175 = vmatpush2.msra.mxu0 0.0
        %2176 = vmatprep.subr.mxu0 0.0
        %2177 = vmatpush2.msra.mxu0 0.0
        %2178 = vmatprep.subr.mxu0 0.0
        %2179 = vmatpush2.msra.mxu0 0.0
        %2180 = vmatprep.subr.mxu0 0.0
        %2181 = vmatpush2.msra.mxu0 0.0
        %2182 = vmatprep.subr.mxu0 0.0
        %2183 = vmatpush2.msra.mxu0 0.0
        %2184 = vmatprep.subr.mxu0 0.0
        %2185 = vmatpush2.msra.mxu0 0.0
        %2186 = vmatprep.mubr.f32.mxu0 0.0
        %v2187 = vand.u32 %v888, 4294901760
        %v2188 = vsub.f32 %v888, %v2187
        %v2189 = vand.u32 %v2188, 4294901760
        %2190 = vmatmul.mubr.f32.gmra.mxu0 %v2189
        %v2191 = vpop.f32.mrf.mxu0
        %v2192 = vadd.f32 %v2115, %v2191
        %v2193 = vpop.f32.mrf.mxu0
        %2194 = vdwg.mxu0
        %2195 = vmatprep.subr.mxu0 0.0
        %2196 = vmatpush1.msra.mxu0 0.0
        %2197 = vmatprep.subr.mxu0 0.0
        %2198 = vmatpush1.msra.mxu0 0.0
        %2199 = vmatprep.subr.mxu0 0.0
        %2200 = vmatpush1.msra.mxu0 0.0
        %2201 = vmatprep.subr.mxu0 0.0
        %2202 = vmatpush1.msra.mxu0 0.0
        %2203 = vmatprep.subr.mxu0 0.0
        %2204 = vmatpush1.msra.mxu0 0.0
        %2205 = vmatprep.subr.mxu0 0.0
        %2206 = vmatpush1.msra.mxu0 0.0
        %2207 = vmatprep.subr.mxu0 0.0
        %2208 = vmatpush1.msra.mxu0 0.0
        %2209 = vmatprep.subr.mxu0 0.0
        %2210 = vmatpush1.msra.mxu0 0.0
        %2211 = vmatprep.subr.mxu0 0.0
        %2212 = vmatpush1.msra.mxu0 0.0
        %2213 = vmatprep.subr.mxu0 0.0
        %2214 = vmatpush1.msra.mxu0 0.0
        %2215 = vmatprep.subr.mxu0 0.0
        %2216 = vmatpush1.msra.mxu0 0.0
        %2217 = vmatprep.subr.mxu0 0.0
        %2218 = vmatpush1.msra.mxu0 0.0
        %2219 = vmatprep.subr.mxu0 0.0
        %v2220 = vand.u32 %v1867, 4294901760
        %v2221 = vsub.f32 %v1867, %v2220
        %v2222 = vand.u32 %v2221, 4294901760
        %2223 = vmatpush1.msra.mxu0 %v2222
        %2224 = vmatprep.subr.mxu0 0.0
        %v2225 = vand.u32 %v1866, 4294901760
        %v2226 = vsub.f32 %v1866, %v2225
        %v2227 = vand.u32 %v2226, 4294901760
        %2228 = vmatpush1.msra.mxu0 %v2227
        %2229 = vmatprep.subr.mxu0 0.0
        %v2230 = vand.u32 %v1865, 4294901760
        %v2231 = vsub.f32 %v1865, %v2230
        %v2232 = vand.u32 %v2231, 4294901760
        %2233 = vmatpush1.msra.mxu0 %v2232
        %2234 = vmatprep.subr.mxu0 0.0
        %v2235 = vand.u32 %v1864, 4294901760
        %v2236 = vsub.f32 %v1864, %v2235
        %v2237 = vand.u32 %v2236, 4294901760
        %2238 = vmatpush1.msra.mxu0 %v2237
        %2239 = vmatprep.subr.mxu0 0.0
        %2240 = vmatpush2.msra.mxu0 0.0
        %2241 = vmatprep.subr.mxu0 0.0
        %2242 = vmatpush2.msra.mxu0 0.0
        %2243 = vmatprep.subr.mxu0 0.0
        %2244 = vmatpush2.msra.mxu0 0.0
        %2245 = vmatprep.subr.mxu0 0.0
        %2246 = vmatpush2.msra.mxu0 0.0
        %2247 = vmatprep.subr.mxu0 0.0
        %2248 = vmatpush2.msra.mxu0 0.0
        %2249 = vmatprep.subr.mxu0 0.0
        %2250 = vmatpush2.msra.mxu0 0.0
        %2251 = vmatprep.subr.mxu0 0.0
        %2252 = vmatpush2.msra.mxu0 0.0
        %2253 = vmatprep.subr.mxu0 0.0
        %2254 = vmatpush2.msra.mxu0 0.0
        %2255 = vmatprep.subr.mxu0 0.0
        %2256 = vmatpush2.msra.mxu0 0.0
        %2257 = vmatprep.subr.mxu0 0.0
        %2258 = vmatpush2.msra.mxu0 0.0
        %2259 = vmatprep.subr.mxu0 0.0
        %2260 = vmatpush2.msra.mxu0 0.0
        %2261 = vmatprep.subr.mxu0 0.0
        %2262 = vmatpush2.msra.mxu0 0.0
        %2263 = vmatprep.subr.mxu0 0.0
        %2264 = vmatpush2.msra.mxu0 0.0
        %2265 = vmatprep.subr.mxu0 0.0
        %2266 = vmatpush2.msra.mxu0 0.0
        %2267 = vmatprep.subr.mxu0 0.0
        %2268 = vmatpush2.msra.mxu0 0.0
        %2269 = vmatprep.subr.mxu0 0.0
        %2270 = vmatpush2.msra.mxu0 0.0
        %2271 = vmatprep.mubr.f32.mxu0 0.0
        %v2272 = vand.u32 %v888, 4294901760
        %2273 = vmatmul.mubr.f32.gmra.mxu0 %v2272
        %v2274 = vpop.f32.mrf.mxu0
        %v2275 = vadd.f32 %v2192, %v2274
        %v2276 = vpop.f32.mrf.mxu0
        %2277 = vdwg.mxu0
        %2278 = vmatprep.subr.mxu0 0.0
        %2279 = vmatpush1.msra.mxu0 0.0
        %2280 = vmatprep.subr.mxu0 0.0
        %2281 = vmatpush1.msra.mxu0 0.0
        %2282 = vmatprep.subr.mxu0 0.0
        %2283 = vmatpush1.msra.mxu0 0.0
        %2284 = vmatprep.subr.mxu0 0.0
        %2285 = vmatpush1.msra.mxu0 0.0
        %2286 = vmatprep.subr.mxu0 0.0
        %2287 = vmatpush1.msra.mxu0 0.0
        %2288 = vmatprep.subr.mxu0 0.0
        %2289 = vmatpush1.msra.mxu0 0.0
        %2290 = vmatprep.subr.mxu0 0.0
        %2291 = vmatpush1.msra.mxu0 0.0
        %2292 = vmatprep.subr.mxu0 0.0
        %2293 = vmatpush1.msra.mxu0 0.0
        %2294 = vmatprep.subr.mxu0 0.0
        %2295 = vmatpush1.msra.mxu0 0.0
        %2296 = vmatprep.subr.mxu0 0.0
        %2297 = vmatpush1.msra.mxu0 0.0
        %2298 = vmatprep.subr.mxu0 0.0
        %2299 = vmatpush1.msra.mxu0 0.0
        %2300 = vmatprep.subr.mxu0 0.0
        %2301 = vmatpush1.msra.mxu0 0.0
        %2302 = vmatprep.subr.mxu0 0.0
        %v2303 = vand.u32 %v1867, 4294901760
        %2304 = vmatpush1.msra.mxu0 %v2303
        %2305 = vmatprep.subr.mxu0 0.0
        %v2306 = vand.u32 %v1866, 4294901760
        %2307 = vmatpush1.msra.mxu0 %v2306
        %2308 = vmatprep.subr.mxu0 0.0
        %v2309 = vand.u32 %v1865, 4294901760
        %2310 = vmatpush1.msra.mxu0 %v2309
        %2311 = vmatprep.subr.mxu0 0.0
        %v2312 = vand.u32 %v1864, 4294901760
        %2313 = vmatpush1.msra.mxu0 %v2312
        %2314 = vmatprep.subr.mxu0 0.0
        %2315 = vmatpush2.msra.mxu0 0.0
        %2316 = vmatprep.subr.mxu0 0.0
        %2317 = vmatpush2.msra.mxu0 0.0
        %2318 = vmatprep.subr.mxu0 0.0
        %2319 = vmatpush2.msra.mxu0 0.0
        %2320 = vmatprep.subr.mxu0 0.0
        %2321 = vmatpush2.msra.mxu0 0.0
        %2322 = vmatprep.subr.mxu0 0.0
        %2323 = vmatpush2.msra.mxu0 0.0
        %2324 = vmatprep.subr.mxu0 0.0
        %2325 = vmatpush2.msra.mxu0 0.0
        %2326 = vmatprep.subr.mxu0 0.0
        %2327 = vmatpush2.msra.mxu0 0.0
        %2328 = vmatprep.subr.mxu0 0.0
        %2329 = vmatpush2.msra.mxu0 0.0
        %2330 = vmatprep.subr.mxu0 0.0
        %2331 = vmatpush2.msra.mxu0 0.0
        %2332 = vmatprep.subr.mxu0 0.0
        %2333 = vmatpush2.msra.mxu0 0.0
        %2334 = vmatprep.subr.mxu0 0.0
        %2335 = vmatpush2.msra.mxu0 0.0
        %2336 = vmatprep.subr.mxu0 0.0
        %2337 = vmatpush2.msra.mxu0 0.0
        %2338 = vmatprep.subr.mxu0 0.0
        %2339 = vmatpush2.msra.mxu0 0.0
        %2340 = vmatprep.subr.mxu0 0.0
        %2341 = vmatpush2.msra.mxu0 0.0
        %2342 = vmatprep.subr.mxu0 0.0
        %2343 = vmatpush2.msra.mxu0 0.0
        %2344 = vmatprep.subr.mxu0 0.0
        %2345 = vmatpush2.msra.mxu0 0.0
        %2346 = vmatprep.mubr.f32.mxu0 0.0
        %v2347 = vand.u32 %v888, 4294901760
        %2348 = vmatmul.mubr.f32.gmra.mxu0 %v2347
        %v2349 = vpop.f32.mrf.mxu0
        %v2350 = vadd.f32 %v2275, %v2349
        %v2351 = vpop.f32.mrf.mxu0
        %2352 = vdwg.mxu0
        %v2353 = vmul.f32 %v1372, %v1372
        %v2354 = vld [vmem:[%s5] sm:$0xff]
        %v2355 = vld [vmem:[%s5 + $0x8] sm:$0xff]
        %v2356 = vld [vmem:[%s5 + $0x10] sm:$0xff]
        %v2357 = vld [vmem:[%s5 + $0x18] sm:$0xff]
        %v2359 = vsel %vm874, %v2353, 0
        %2361 = vmatprep.subr.mxu0 0.0
        %2362 = vmatpush1.msra.mxu0 0.0
        %2363 = vmatprep.subr.mxu0 0.0
        %2364 = vmatpush1.msra.mxu0 0.0
        %2365 = vmatprep.subr.mxu0 0.0
        %2366 = vmatpush1.msra.mxu0 0.0
        %2367 = vmatprep.subr.mxu0 0.0
        %2368 = vmatpush1.msra.mxu0 0.0
        %2369 = vmatprep.subr.mxu0 0.0
        %2370 = vmatpush1.msra.mxu0 0.0
        %2371 = vmatprep.subr.mxu0 0.0
        %2372 = vmatpush1.msra.mxu0 0.0
        %2373 = vmatprep.subr.mxu0 0.0
        %2374 = vmatpush1.msra.mxu0 0.0
        %2375 = vmatprep.subr.mxu0 0.0
        %2376 = vmatpush1.msra.mxu0 0.0
        %2377 = vmatprep.subr.mxu0 0.0
        %2378 = vmatpush1.msra.mxu0 0.0
        %2379 = vmatprep.subr.mxu0 0.0
        %2380 = vmatpush1.msra.mxu0 0.0
        %2381 = vmatprep.subr.mxu0 0.0
        %2382 = vmatpush1.msra.mxu0 0.0
        %2383 = vmatprep.subr.mxu0 0.0
        %2384 = vmatpush1.msra.mxu0 0.0
        %2385 = vmatprep.subr.mxu0 0.0
        %v2386 = vand.u32 %v2357, 4294901760
        %2387 = vmatpush1.msra.mxu0 %v2386
        %2388 = vmatprep.subr.mxu0 0.0
        %v2389 = vand.u32 %v2356, 4294901760
        %2390 = vmatpush1.msra.mxu0 %v2389
        %2391 = vmatprep.subr.mxu0 0.0
        %v2392 = vand.u32 %v2355, 4294901760
        %2393 = vmatpush1.msra.mxu0 %v2392
        %2394 = vmatprep.subr.mxu0 0.0
        %v2395 = vand.u32 %v2354, 4294901760
        %2396 = vmatpush1.msra.mxu0 %v2395
        %2397 = vmatprep.subr.mxu0 0.0
        %2398 = vmatpush2.msra.mxu0 0.0
        %2399 = vmatprep.subr.mxu0 0.0
        %2400 = vmatpush2.msra.mxu0 0.0
        %2401 = vmatprep.subr.mxu0 0.0
        %2402 = vmatpush2.msra.mxu0 0.0
        %2403 = vmatprep.subr.mxu0 0.0
        %2404 = vmatpush2.msra.mxu0 0.0
        %2405 = vmatprep.subr.mxu0 0.0
        %2406 = vmatpush2.msra.mxu0 0.0
        %2407 = vmatprep.subr.mxu0 0.0
        %2408 = vmatpush2.msra.mxu0 0.0
        %2409 = vmatprep.subr.mxu0 0.0
        %2410 = vmatpush2.msra.mxu0 0.0
        %2411 = vmatprep.subr.mxu0 0.0
        %2412 = vmatpush2.msra.mxu0 0.0
        %2413 = vmatprep.subr.mxu0 0.0
        %2414 = vmatpush2.msra.mxu0 0.0
        %2415 = vmatprep.subr.mxu0 0.0
        %2416 = vmatpush2.msra.mxu0 0.0
        %2417 = vmatprep.subr.mxu0 0.0
        %2418 = vmatpush2.msra.mxu0 0.0
        %2419 = vmatprep.subr.mxu0 0.0
        %2420 = vmatpush2.msra.mxu0 0.0
        %2421 = vmatprep.subr.mxu0 0.0
        %2422 = vmatpush2.msra.mxu0 0.0
        %2423 = vmatprep.subr.mxu0 0.0
        %2424 = vmatpush2.msra.mxu0 0.0
        %2425 = vmatprep.subr.mxu0 0.0
        %2426 = vmatpush2.msra.mxu0 0.0
        %2427 = vmatprep.subr.mxu0 0.0
        %2428 = vmatpush2.msra.mxu0 0.0
        %2429 = vmatprep.mubr.f32.mxu0 0.0
        %v2430 = vand.u32 %v2359, 4294901760
        %v2431 = vsub.f32 %v2359, %v2430
        %v2432 = vand.u32 %v2431, 4294901760
        %v2433 = vsub.f32 %v2431, %v2432
        %v2434 = vand.u32 %v2433, 4294901760
        %2435 = vmatmul.mubr.f32.gmra.mxu0 %v2434
        %v2436 = vpop.f32.mrf.mxu0
        %v2437 = vadd.f32 1e-06, %v2436
        %v2438 = vpop.f32.mrf.mxu0
        %2439 = vdwg.mxu0
        %2440 = vmatprep.subr.mxu0 0.0
        %2441 = vmatpush1.msra.mxu0 0.0
        %2442 = vmatprep.subr.mxu0 0.0
        %2443 = vmatpush1.msra.mxu0 0.0
        %2444 = vmatprep.subr.mxu0 0.0
        %2445 = vmatpush1.msra.mxu0 0.0
        %2446 = vmatprep.subr.mxu0 0.0
        %2447 = vmatpush1.msra.mxu0 0.0
        %2448 = vmatprep.subr.mxu0 0.0
        %2449 = vmatpush1.msra.mxu0 0.0
        %2450 = vmatprep.subr.mxu0 0.0
        %2451 = vmatpush1.msra.mxu0 0.0
        %2452 = vmatprep.subr.mxu0 0.0
        %2453 = vmatpush1.msra.mxu0 0.0
        %2454 = vmatprep.subr.mxu0 0.0
        %2455 = vmatpush1.msra.mxu0 0.0
        %2456 = vmatprep.subr.mxu0 0.0
        %2457 = vmatpush1.msra.mxu0 0.0
        %2458 = vmatprep.subr.mxu0 0.0
        %2459 = vmatpush1.msra.mxu0 0.0
        %2460 = vmatprep.subr.mxu0 0.0
        %2461 = vmatpush1.msra.mxu0 0.0
        %2462 = vmatprep.subr.mxu0 0.0
        %2463 = vmatpush1.msra.mxu0 0.0
        %2464 = vmatprep.subr.mxu0 0.0
        %v2465 = vand.u32 %v2357, 4294901760
        %v2466 = vsub.f32 %v2357, %v2465
        %v2467 = vand.u32 %v2466, 4294901760
        %v2468 = vsub.f32 %v2466, %v2467
        %v2469 = vand.u32 %v2468, 4294901760
        %2470 = vmatpush1.msra.mxu0 %v2469
        %2471 = vmatprep.subr.mxu0 0.0
        %v2472 = vand.u32 %v2356, 4294901760
        %v2473 = vsub.f32 %v2356, %v2472
        %v2474 = vand.u32 %v2473, 4294901760
        %v2475 = vsub.f32 %v2473, %v2474
        %v2476 = vand.u32 %v2475, 4294901760
        %2477 = vmatpush1.msra.mxu0 %v2476
        %2478 = vmatprep.subr.mxu0 0.0
        %v2479 = vand.u32 %v2355, 4294901760
        %v2480 = vsub.f32 %v2355, %v2479
        %v2481 = vand.u32 %v2480, 4294901760
        %v2482 = vsub.f32 %v2480, %v2481
        %v2483 = vand.u32 %v2482, 4294901760
        %2484 = vmatpush1.msra.mxu0 %v2483
        %2485 = vmatprep.subr.mxu0 0.0
        %v2486 = vand.u32 %v2354, 4294901760
        %v2487 = vsub.f32 %v2354, %v2486
        %v2488 = vand.u32 %v2487, 4294901760
        %v2489 = vsub.f32 %v2487, %v2488
        %v2490 = vand.u32 %v2489, 4294901760
        %2491 = vmatpush1.msra.mxu0 %v2490
        %2492 = vmatprep.subr.mxu0 0.0
        %2493 = vmatpush2.msra.mxu0 0.0
        %2494 = vmatprep.subr.mxu0 0.0
        %2495 = vmatpush2.msra.mxu0 0.0
        %2496 = vmatprep.subr.mxu0 0.0
        %2497 = vmatpush2.msra.mxu0 0.0
        %2498 = vmatprep.subr.mxu0 0.0
        %2499 = vmatpush2.msra.mxu0 0.0
        %2500 = vmatprep.subr.mxu0 0.0
        %2501 = vmatpush2.msra.mxu0 0.0
        %2502 = vmatprep.subr.mxu0 0.0
        %2503 = vmatpush2.msra.mxu0 0.0
        %2504 = vmatprep.subr.mxu0 0.0
        %2505 = vmatpush2.msra.mxu0 0.0
        %2506 = vmatprep.subr.mxu0 0.0
        %2507 = vmatpush2.msra.mxu0 0.0
        %2508 = vmatprep.subr.mxu0 0.0
        %2509 = vmatpush2.msra.mxu0 0.0
        %2510 = vmatprep.subr.mxu0 0.0
        %2511 = vmatpush2.msra.mxu0 0.0
        %2512 = vmatprep.subr.mxu0 0.0
        %2513 = vmatpush2.msra.mxu0 0.0
        %2514 = vmatprep.subr.mxu0 0.0
        %2515 = vmatpush2.msra.mxu0 0.0
        %2516 = vmatprep.subr.mxu0 0.0
        %2517 = vmatpush2.msra.mxu0 0.0
        %2518 = vmatprep.subr.mxu0 0.0
        %2519 = vmatpush2.msra.mxu0 0.0
        %2520 = vmatprep.subr.mxu0 0.0
        %2521 = vmatpush2.msra.mxu0 0.0
        %2522 = vmatprep.subr.mxu0 0.0
        %2523 = vmatpush2.msra.mxu0 0.0
        %2524 = vmatprep.mubr.f32.mxu0 0.0
        %v2525 = vand.u32 %v2359, 4294901760
        %2526 = vmatmul.mubr.f32.gmra.mxu0 %v2525
        %v2527 = vpop.f32.mrf.mxu0
        %v2528 = vadd.f32 %v2437, %v2527
        %v2529 = vpop.f32.mrf.mxu0
        %2530 = vdwg.mxu0
        %2531 = vmatprep.subr.mxu0 0.0
        %2532 = vmatpush1.msra.mxu0 0.0
        %2533 = vmatprep.subr.mxu0 0.0
        %2534 = vmatpush1.msra.mxu0 0.0
        %2535 = vmatprep.subr.mxu0 0.0
        %2536 = vmatpush1.msra.mxu0 0.0
        %2537 = vmatprep.subr.mxu0 0.0
        %2538 = vmatpush1.msra.mxu0 0.0
        %2539 = vmatprep.subr.mxu0 0.0
        %2540 = vmatpush1.msra.mxu0 0.0
        %2541 = vmatprep.subr.mxu0 0.0
        %2542 = vmatpush1.msra.mxu0 0.0
        %2543 = vmatprep.subr.mxu0 0.0
        %2544 = vmatpush1.msra.mxu0 0.0
        %2545 = vmatprep.subr.mxu0 0.0
        %2546 = vmatpush1.msra.mxu0 0.0
        %2547 = vmatprep.subr.mxu0 0.0
        %2548 = vmatpush1.msra.mxu0 0.0
        %2549 = vmatprep.subr.mxu0 0.0
        %2550 = vmatpush1.msra.mxu0 0.0
        %2551 = vmatprep.subr.mxu0 0.0
        %2552 = vmatpush1.msra.mxu0 0.0
        %2553 = vmatprep.subr.mxu0 0.0
        %2554 = vmatpush1.msra.mxu0 0.0
        %2555 = vmatprep.subr.mxu0 0.0
        %v2556 = vand.u32 %v2357, 4294901760
        %v2557 = vsub.f32 %v2357, %v2556
        %2558 = vmatpush1.msra.mxu0 %v2557
        %2559 = vmatprep.subr.mxu0 0.0
        %v2560 = vand.u32 %v2356, 4294901760
        %v2561 = vsub.f32 %v2356, %v2560
        %2562 = vmatpush1.msra.mxu0 %v2561
        %2563 = vmatprep.subr.mxu0 0.0
        %v2564 = vand.u32 %v2355, 4294901760
        %v2565 = vsub.f32 %v2355, %v2564
        %2566 = vmatpush1.msra.mxu0 %v2565
        %2567 = vmatprep.subr.mxu0 0.0
        %v2568 = vand.u32 %v2354, 4294901760
        %v2569 = vsub.f32 %v2354, %v2568
        %2570 = vmatpush1.msra.mxu0 %v2569
        %2571 = vmatprep.subr.mxu0 0.0
        %2572 = vmatpush2.msra.mxu0 0.0
        %2573 = vmatprep.subr.mxu0 0.0
        %2574 = vmatpush2.msra.mxu0 0.0
        %2575 = vmatprep.subr.mxu0 0.0
        %2576 = vmatpush2.msra.mxu0 0.0
        %2577 = vmatprep.subr.mxu0 0.0
        %2578 = vmatpush2.msra.mxu0 0.0
        %2579 = vmatprep.subr.mxu0 0.0
        %2580 = vmatpush2.msra.mxu0 0.0
        %2581 = vmatprep.subr.mxu0 0.0
        %2582 = vmatpush2.msra.mxu0 0.0
        %2583 = vmatprep.subr.mxu0 0.0
        %2584 = vmatpush2.msra.mxu0 0.0
        %2585 = vmatprep.subr.mxu0 0.0
        %2586 = vmatpush2.msra.mxu0 0.0
        %2587 = vmatprep.subr.mxu0 0.0
        %2588 = vmatpush2.msra.mxu0 0.0
        %2589 = vmatprep.subr.mxu0 0.0
        %2590 = vmatpush2.msra.mxu0 0.0
        %2591 = vmatprep.subr.mxu0 0.0
        %2592 = vmatpush2.msra.mxu0 0.0
        %2593 = vmatprep.subr.mxu0 0.0
        %2594 = vmatpush2.msra.mxu0 0.0
        %2595 = vmatprep.subr.mxu0 0.0
        %2596 = vmatpush2.msra.mxu0 0.0
        %2597 = vmatprep.subr.mxu0 0.0
        %2598 = vmatpush2.msra.mxu0 0.0
        %2599 = vmatprep.subr.mxu0 0.0
        %2600 = vmatpush2.msra.mxu0 0.0
        %2601 = vmatprep.subr.mxu0 0.0
        %2602 = vmatpush2.msra.mxu0 0.0
        %2603 = vmatprep.mubr.f32.mxu0 0.0
        %v2604 = vand.u32 %v2359, 4294901760
        %v2605 = vsub.f32 %v2359, %v2604
        %2606 = vmatmul.mubr.f32.gmra.mxu0 %v2605
        %v2607 = vpop.f32.mrf.mxu0
        %v2608 = vadd.f32 %v2528, %v2607
        %v2609 = vpop.f32.mrf.mxu0
        %2610 = vdwg.mxu0
        %2611 = vmatprep.subr.mxu0 0.0
        %2612 = vmatpush1.msra.mxu0 0.0
        %2613 = vmatprep.subr.mxu0 0.0
        %2614 = vmatpush1.msra.mxu0 0.0
        %2615 = vmatprep.subr.mxu0 0.0
        %2616 = vmatpush1.msra.mxu0 0.0
        %2617 = vmatprep.subr.mxu0 0.0
        %2618 = vmatpush1.msra.mxu0 0.0
        %2619 = vmatprep.subr.mxu0 0.0
        %2620 = vmatpush1.msra.mxu0 0.0
        %2621 = vmatprep.subr.mxu0 0.0
        %2622 = vmatpush1.msra.mxu0 0.0
        %2623 = vmatprep.subr.mxu0 0.0
        %2624 = vmatpush1.msra.mxu0 0.0
        %2625 = vmatprep.subr.mxu0 0.0
        %2626 = vmatpush1.msra.mxu0 0.0
        %2627 = vmatprep.subr.mxu0 0.0
        %2628 = vmatpush1.msra.mxu0 0.0
        %2629 = vmatprep.subr.mxu0 0.0
        %2630 = vmatpush1.msra.mxu0 0.0
        %2631 = vmatprep.subr.mxu0 0.0
        %2632 = vmatpush1.msra.mxu0 0.0
        %2633 = vmatprep.subr.mxu0 0.0
        %2634 = vmatpush1.msra.mxu0 0.0
        %2635 = vmatprep.subr.mxu0 0.0
        %v2636 = vand.u32 %v2357, 4294901760
        %2637 = vmatpush1.msra.mxu0 %v2636
        %2638 = vmatprep.subr.mxu0 0.0
        %v2639 = vand.u32 %v2356, 4294901760
        %2640 = vmatpush1.msra.mxu0 %v2639
        %2641 = vmatprep.subr.mxu0 0.0
        %v2642 = vand.u32 %v2355, 4294901760
        %2643 = vmatpush1.msra.mxu0 %v2642
        %2644 = vmatprep.subr.mxu0 0.0
        %v2645 = vand.u32 %v2354, 4294901760
        %2646 = vmatpush1.msra.mxu0 %v2645
        %2647 = vmatprep.subr.mxu0 0.0
        %2648 = vmatpush2.msra.mxu0 0.0
        %2649 = vmatprep.subr.mxu0 0.0
        %2650 = vmatpush2.msra.mxu0 0.0
        %2651 = vmatprep.subr.mxu0 0.0
        %2652 = vmatpush2.msra.mxu0 0.0
        %2653 = vmatprep.subr.mxu0 0.0
        %2654 = vmatpush2.msra.mxu0 0.0
        %2655 = vmatprep.subr.mxu0 0.0
        %2656 = vmatpush2.msra.mxu0 0.0
        %2657 = vmatprep.subr.mxu0 0.0
        %2658 = vmatpush2.msra.mxu0 0.0
        %2659 = vmatprep.subr.mxu0 0.0
        %2660 = vmatpush2.msra.mxu0 0.0
        %2661 = vmatprep.subr.mxu0 0.0
        %2662 = vmatpush2.msra.mxu0 0.0
        %2663 = vmatprep.subr.mxu0 0.0
        %2664 = vmatpush2.msra.mxu0 0.0
        %2665 = vmatprep.subr.mxu0 0.0
        %2666 = vmatpush2.msra.mxu0 0.0
        %2667 = vmatprep.subr.mxu0 0.0
        %2668 = vmatpush2.msra.mxu0 0.0
        %2669 = vmatprep.subr.mxu0 0.0
        %2670 = vmatpush2.msra.mxu0 0.0
        %2671 = vmatprep.subr.mxu0 0.0
        %2672 = vmatpush2.msra.mxu0 0.0
        %2673 = vmatprep.subr.mxu0 0.0
        %2674 = vmatpush2.msra.mxu0 0.0
        %2675 = vmatprep.subr.mxu0 0.0
        %2676 = vmatpush2.msra.mxu0 0.0
        %2677 = vmatprep.subr.mxu0 0.0
        %2678 = vmatpush2.msra.mxu0 0.0
        %2679 = vmatprep.mubr.f32.mxu0 0.0
        %v2680 = vand.u32 %v2359, 4294901760
        %v2681 = vsub.f32 %v2359, %v2680
        %v2682 = vand.u32 %v2681, 4294901760
        %2683 = vmatmul.mubr.f32.gmra.mxu0 %v2682
        %v2684 = vpop.f32.mrf.mxu0
        %v2685 = vadd.f32 %v2608, %v2684
        %v2686 = vpop.f32.mrf.mxu0
        %2687 = vdwg.mxu0
        %2688 = vmatprep.subr.mxu0 0.0
        %2689 = vmatpush1.msra.mxu0 0.0
        %2690 = vmatprep.subr.mxu0 0.0
        %2691 = vmatpush1.msra.mxu0 0.0
        %2692 = vmatprep.subr.mxu0 0.0
        %2693 = vmatpush1.msra.mxu0 0.0
        %2694 = vmatprep.subr.mxu0 0.0
        %2695 = vmatpush1.msra.mxu0 0.0
        %2696 = vmatprep.subr.mxu0 0.0
        %2697 = vmatpush1.msra.mxu0 0.0
        %2698 = vmatprep.subr.mxu0 0.0
        %2699 = vmatpush1.msra.mxu0 0.0
        %2700 = vmatprep.subr.mxu0 0.0
        %2701 = vmatpush1.msra.mxu0 0.0
        %2702 = vmatprep.subr.mxu0 0.0
        %2703 = vmatpush1.msra.mxu0 0.0
        %2704 = vmatprep.subr.mxu0 0.0
        %2705 = vmatpush1.msra.mxu0 0.0
        %2706 = vmatprep.subr.mxu0 0.0
        %2707 = vmatpush1.msra.mxu0 0.0
        %2708 = vmatprep.subr.mxu0 0.0
        %2709 = vmatpush1.msra.mxu0 0.0
        %2710 = vmatprep.subr.mxu0 0.0
        %2711 = vmatpush1.msra.mxu0 0.0
        %2712 = vmatprep.subr.mxu0 0.0
        %v2713 = vand.u32 %v2357, 4294901760
        %v2714 = vsub.f32 %v2357, %v2713
        %v2715 = vand.u32 %v2714, 4294901760
        %2716 = vmatpush1.msra.mxu0 %v2715
        %2717 = vmatprep.subr.mxu0 0.0
        %v2718 = vand.u32 %v2356, 4294901760
        %v2719 = vsub.f32 %v2356, %v2718
        %v2720 = vand.u32 %v2719, 4294901760
        %2721 = vmatpush1.msra.mxu0 %v2720
        %2722 = vmatprep.subr.mxu0 0.0
        %v2723 = vand.u32 %v2355, 4294901760
        %v2724 = vsub.f32 %v2355, %v2723
        %v2725 = vand.u32 %v2724, 4294901760
        %2726 = vmatpush1.msra.mxu0 %v2725
        %2727 = vmatprep.subr.mxu0 0.0
        %v2728 = vand.u32 %v2354, 4294901760
        %v2729 = vsub.f32 %v2354, %v2728
        %v2730 = vand.u32 %v2729, 4294901760
        %2731 = vmatpush1.msra.mxu0 %v2730
        %2732 = vmatprep.subr.mxu0 0.0
        %2733 = vmatpush2.msra.mxu0 0.0
        %2734 = vmatprep.subr.mxu0 0.0
        %2735 = vmatpush2.msra.mxu0 0.0
        %2736 = vmatprep.subr.mxu0 0.0
        %2737 = vmatpush2.msra.mxu0 0.0
        %2738 = vmatprep.subr.mxu0 0.0
        %2739 = vmatpush2.msra.mxu0 0.0
        %2740 = vmatprep.subr.mxu0 0.0
        %2741 = vmatpush2.msra.mxu0 0.0
        %2742 = vmatprep.subr.mxu0 0.0
        %2743 = vmatpush2.msra.mxu0 0.0
        %2744 = vmatprep.subr.mxu0 0.0
        %2745 = vmatpush2.msra.mxu0 0.0
        %2746 = vmatprep.subr.mxu0 0.0
        %2747 = vmatpush2.msra.mxu0 0.0
        %2748 = vmatprep.subr.mxu0 0.0
        %2749 = vmatpush2.msra.mxu0 0.0
        %2750 = vmatprep.subr.mxu0 0.0
        %2751 = vmatpush2.msra.mxu0 0.0
        %2752 = vmatprep.subr.mxu0 0.0
        %2753 = vmatpush2.msra.mxu0 0.0
        %2754 = vmatprep.subr.mxu0 0.0
        %2755 = vmatpush2.msra.mxu0 0.0
        %2756 = vmatprep.subr.mxu0 0.0
        %2757 = vmatpush2.msra.mxu0 0.0
        %2758 = vmatprep.subr.mxu0 0.0
        %2759 = vmatpush2.msra.mxu0 0.0
        %2760 = vmatprep.subr.mxu0 0.0
        %2761 = vmatpush2.msra.mxu0 0.0
        %2762 = vmatprep.subr.mxu0 0.0
        %2763 = vmatpush2.msra.mxu0 0.0
        %2764 = vmatprep.mubr.f32.mxu0 0.0
        %v2765 = vand.u32 %v2359, 4294901760
        %2766 = vmatmul.mubr.f32.gmra.mxu0 %v2765
        %v2767 = vpop.f32.mrf.mxu0
        %v2768 = vadd.f32 %v2685, %v2767
        %v2769 = vpop.f32.mrf.mxu0
        %2770 = vdwg.mxu0
        %2771 = vmatprep.subr.mxu0 0.0
        %2772 = vmatpush1.msra.mxu0 0.0
        %2773 = vmatprep.subr.mxu0 0.0
        %2774 = vmatpush1.msra.mxu0 0.0
        %2775 = vmatprep.subr.mxu0 0.0
        %2776 = vmatpush1.msra.mxu0 0.0
        %2777 = vmatprep.subr.mxu0 0.0
        %2778 = vmatpush1.msra.mxu0 0.0
        %2779 = vmatprep.subr.mxu0 0.0
        %2780 = vmatpush1.msra.mxu0 0.0
        %2781 = vmatprep.subr.mxu0 0.0
        %2782 = vmatpush1.msra.mxu0 0.0
        %2783 = vmatprep.subr.mxu0 0.0
        %2784 = vmatpush1.msra.mxu0 0.0
        %2785 = vmatprep.subr.mxu0 0.0
        %2786 = vmatpush1.msra.mxu0 0.0
        %2787 = vmatprep.subr.mxu0 0.0
        %2788 = vmatpush1.msra.mxu0 0.0
        %2789 = vmatprep.subr.mxu0 0.0
        %2790 = vmatpush1.msra.mxu0 0.0
        %2791 = vmatprep.subr.mxu0 0.0
        %2792 = vmatpush1.msra.mxu0 0.0
        %2793 = vmatprep.subr.mxu0 0.0
        %2794 = vmatpush1.msra.mxu0 0.0
        %2795 = vmatprep.subr.mxu0 0.0
        %v2796 = vand.u32 %v2357, 4294901760
        %2797 = vmatpush1.msra.mxu0 %v2796
        %2798 = vmatprep.subr.mxu0 0.0
        %v2799 = vand.u32 %v2356, 4294901760
        %2800 = vmatpush1.msra.mxu0 %v2799
        %2801 = vmatprep.subr.mxu0 0.0
        %v2802 = vand.u32 %v2355, 4294901760
        %2803 = vmatpush1.msra.mxu0 %v2802
        %2804 = vmatprep.subr.mxu0 0.0
        %v2805 = vand.u32 %v2354, 4294901760
        %2806 = vmatpush1.msra.mxu0 %v2805
        %2807 = vmatprep.subr.mxu0 0.0
        %2808 = vmatpush2.msra.mxu0 0.0
        %2809 = vmatprep.subr.mxu0 0.0
        %2810 = vmatpush2.msra.mxu0 0.0
        %2811 = vmatprep.subr.mxu0 0.0
        %2812 = vmatpush2.msra.mxu0 0.0
        %2813 = vmatprep.subr.mxu0 0.0
        %2814 = vmatpush2.msra.mxu0 0.0
        %2815 = vmatprep.subr.mxu0 0.0
        %2816 = vmatpush2.msra.mxu0 0.0
        %2817 = vmatprep.subr.mxu0 0.0
        %2818 = vmatpush2.msra.mxu0 0.0
        %2819 = vmatprep.subr.mxu0 0.0
        %2820 = vmatpush2.msra.mxu0 0.0
        %2821 = vmatprep.subr.mxu0 0.0
        %2822 = vmatpush2.msra.mxu0 0.0
        %2823 = vmatprep.subr.mxu0 0.0
        %2824 = vmatpush2.msra.mxu0 0.0
        %2825 = vmatprep.subr.mxu0 0.0
        %2826 = vmatpush2.msra.mxu0 0.0
        %2827 = vmatprep.subr.mxu0 0.0
        %2828 = vmatpush2.msra.mxu0 0.0
        %2829 = vmatprep.subr.mxu0 0.0
        %2830 = vmatpush2.msra.mxu0 0.0
        %2831 = vmatprep.subr.mxu0 0.0
        %2832 = vmatpush2.msra.mxu0 0.0
        %2833 = vmatprep.subr.mxu0 0.0
        %2834 = vmatpush2.msra.mxu0 0.0
        %2835 = vmatprep.subr.mxu0 0.0
        %2836 = vmatpush2.msra.mxu0 0.0
        %2837 = vmatprep.subr.mxu0 0.0
        %2838 = vmatpush2.msra.mxu0 0.0
        %2839 = vmatprep.mubr.f32.mxu0 0.0
        %v2840 = vand.u32 %v2359, 4294901760
        %2841 = vmatmul.mubr.f32.gmra.mxu0 %v2840
        %v2842 = vpop.f32.mrf.mxu0
        %v2843 = vadd.f32 %v2768, %v2842
        %v2844 = vpop.f32.mrf.mxu0
        %2845 = vdwg.mxu0
        %v2846 = vrsqrt.pop %v2843
        %v2847 = vmul.f32 %v1372, %v2846
        %v2848 = vmul.f32 %v1861, %v1861
        %v2849 = vld [vmem:[%s6] sm:$0xff]
        %v2850 = vld [vmem:[%s6 + $0x8] sm:$0xff]
        %vm2851 = vcmask 130048
        %v2853 = vsel %vm2851, %v2848, 0
        %2855 = vmatprep.subr.mxu0 0.0
        %2856 = vmatpush1.msra.mxu0 0.0
        %2857 = vmatprep.subr.mxu0 0.0
        %2858 = vmatpush1.msra.mxu0 0.0
        %2859 = vmatprep.subr.mxu0 0.0
        %2860 = vmatpush1.msra.mxu0 0.0
        %2861 = vmatprep.subr.mxu0 0.0
        %2862 = vmatpush1.msra.mxu0 0.0
        %2863 = vmatprep.subr.mxu0 0.0
        %2864 = vmatpush1.msra.mxu0 0.0
        %2865 = vmatprep.subr.mxu0 0.0
        %2866 = vmatpush1.msra.mxu0 0.0
        %2867 = vmatprep.subr.mxu0 0.0
        %2868 = vmatpush1.msra.mxu0 0.0
        %2869 = vmatprep.subr.mxu0 0.0
        %2870 = vmatpush1.msra.mxu0 0.0
        %2871 = vmatprep.subr.mxu0 0.0
        %2872 = vmatpush1.msra.mxu0 0.0
        %2873 = vmatprep.subr.mxu0 0.0
        %2874 = vmatpush1.msra.mxu0 0.0
        %2875 = vmatprep.subr.mxu0 0.0
        %2876 = vmatpush1.msra.mxu0 0.0
        %2877 = vmatprep.subr.mxu0 0.0
        %2878 = vmatpush1.msra.mxu0 0.0
        %2879 = vmatprep.subr.mxu0 0.0
        %2880 = vmatpush1.msra.mxu0 0.0
        %2881 = vmatprep.subr.mxu0 0.0
        %2882 = vmatpush1.msra.mxu0 0.0
        %2883 = vmatprep.subr.mxu0 0.0
        %v2884 = vand.u32 %v2850, 4294901760
        %2885 = vmatpush1.msra.mxu0 %v2884
        %2886 = vmatprep.subr.mxu0 0.0
        %v2887 = vand.u32 %v2849, 4294901760
        %2888 = vmatpush1.msra.mxu0 %v2887
        %2889 = vmatprep.subr.mxu0 0.0
        %2890 = vmatpush2.msra.mxu0 0.0
        %2891 = vmatprep.subr.mxu0 0.0
        %2892 = vmatpush2.msra.mxu0 0.0
        %2893 = vmatprep.subr.mxu0 0.0
        %2894 = vmatpush2.msra.mxu0 0.0
        %2895 = vmatprep.subr.mxu0 0.0
        %2896 = vmatpush2.msra.mxu0 0.0
        %2897 = vmatprep.subr.mxu0 0.0
        %2898 = vmatpush2.msra.mxu0 0.0
        %2899 = vmatprep.subr.mxu0 0.0
        %2900 = vmatpush2.msra.mxu0 0.0
        %2901 = vmatprep.subr.mxu0 0.0
        %2902 = vmatpush2.msra.mxu0 0.0
        %2903 = vmatprep.subr.mxu0 0.0
        %2904 = vmatpush2.msra.mxu0 0.0
        %2905 = vmatprep.subr.mxu0 0.0
        %2906 = vmatpush2.msra.mxu0 0.0
        %2907 = vmatprep.subr.mxu0 0.0
        %2908 = vmatpush2.msra.mxu0 0.0
        %2909 = vmatprep.subr.mxu0 0.0
        %2910 = vmatpush2.msra.mxu0 0.0
        %2911 = vmatprep.subr.mxu0 0.0
        %2912 = vmatpush2.msra.mxu0 0.0
        %2913 = vmatprep.subr.mxu0 0.0
        %2914 = vmatpush2.msra.mxu0 0.0
        %2915 = vmatprep.subr.mxu0 0.0
        %2916 = vmatpush2.msra.mxu0 0.0
        %2917 = vmatprep.subr.mxu0 0.0
        %2918 = vmatpush2.msra.mxu0 0.0
        %2919 = vmatprep.subr.mxu0 0.0
        %2920 = vmatpush2.msra.mxu0 0.0
        %2921 = vmatprep.mubr.f32.mxu0 0.0
        %v2922 = vand.u32 %v2853, 4294901760
        %v2923 = vsub.f32 %v2853, %v2922
        %v2924 = vand.u32 %v2923, 4294901760
        %v2925 = vsub.f32 %v2923, %v2924
        %v2926 = vand.u32 %v2925, 4294901760
        %2927 = vmatmul.mubr.f32.gmra.mxu0 %v2926
        %v2928 = vpop.f32.mrf.mxu0
        %v2929 = vadd.f32 1e-06, %v2928
        %v2930 = vpop.f32.mrf.mxu0
        %2931 = vdwg.mxu0
        %2932 = vmatprep.subr.mxu0 0.0
        %2933 = vmatpush1.msra.mxu0 0.0
        %2934 = vmatprep.subr.mxu0 0.0
        %2935 = vmatpush1.msra.mxu0 0.0
        %2936 = vmatprep.subr.mxu0 0.0
        %2937 = vmatpush1.msra.mxu0 0.0
        %2938 = vmatprep.subr.mxu0 0.0
        %2939 = vmatpush1.msra.mxu0 0.0
        %2940 = vmatprep.subr.mxu0 0.0
        %2941 = vmatpush1.msra.mxu0 0.0
        %2942 = vmatprep.subr.mxu0 0.0
        %2943 = vmatpush1.msra.mxu0 0.0
        %2944 = vmatprep.subr.mxu0 0.0
        %2945 = vmatpush1.msra.mxu0 0.0
        %2946 = vmatprep.subr.mxu0 0.0
        %2947 = vmatpush1.msra.mxu0 0.0
        %2948 = vmatprep.subr.mxu0 0.0
        %2949 = vmatpush1.msra.mxu0 0.0
        %2950 = vmatprep.subr.mxu0 0.0
        %2951 = vmatpush1.msra.mxu0 0.0
        %2952 = vmatprep.subr.mxu0 0.0
        %2953 = vmatpush1.msra.mxu0 0.0
        %2954 = vmatprep.subr.mxu0 0.0
        %2955 = vmatpush1.msra.mxu0 0.0
        %2956 = vmatprep.subr.mxu0 0.0
        %2957 = vmatpush1.msra.mxu0 0.0
        %2958 = vmatprep.subr.mxu0 0.0
        %2959 = vmatpush1.msra.mxu0 0.0
        %2960 = vmatprep.subr.mxu0 0.0
        %v2961 = vand.u32 %v2850, 4294901760
        %v2962 = vsub.f32 %v2850, %v2961
        %v2963 = vand.u32 %v2962, 4294901760
        %v2964 = vsub.f32 %v2962, %v2963
        %v2965 = vand.u32 %v2964, 4294901760
        %2966 = vmatpush1.msra.mxu0 %v2965
        %2967 = vmatprep.subr.mxu0 0.0
        %v2968 = vand.u32 %v2849, 4294901760
        %v2969 = vsub.f32 %v2849, %v2968
        %v2970 = vand.u32 %v2969, 4294901760
        %v2971 = vsub.f32 %v2969, %v2970
        %v2972 = vand.u32 %v2971, 4294901760
        %2973 = vmatpush1.msra.mxu0 %v2972
        %2974 = vmatprep.subr.mxu0 0.0
        %2975 = vmatpush2.msra.mxu0 0.0
        %2976 = vmatprep.subr.mxu0 0.0
        %2977 = vmatpush2.msra.mxu0 0.0
        %2978 = vmatprep.subr.mxu0 0.0
        %2979 = vmatpush2.msra.mxu0 0.0
        %2980 = vmatprep.subr.mxu0 0.0
        %2981 = vmatpush2.msra.mxu0 0.0
        %2982 = vmatprep.subr.mxu0 0.0
        %2983 = vmatpush2.msra.mxu0 0.0
        %2984 = vmatprep.subr.mxu0 0.0
        %2985 = vmatpush2.msra.mxu0 0.0
        %2986 = vmatprep.subr.mxu0 0.0
        %2987 = vmatpush2.msra.mxu0 0.0
        %2988 = vmatprep.subr.mxu0 0.0
        %2989 = vmatpush2.msra.mxu0 0.0
        %2990 = vmatprep.subr.mxu0 0.0
        %2991 = vmatpush2.msra.mxu0 0.0
        %2992 = vmatprep.subr.mxu0 0.0
        %2993 = vmatpush2.msra.mxu0 0.0
        %2994 = vmatprep.subr.mxu0 0.0
        %2995 = vmatpush2.msra.mxu0 0.0
        %2996 = vmatprep.subr.mxu0 0.0
        %2997 = vmatpush2.msra.mxu0 0.0
        %2998 = vmatprep.subr.mxu0 0.0
        %2999 = vmatpush2.msra.mxu0 0.0
        %3000 = vmatprep.subr.mxu0 0.0
        %3001 = vmatpush2.msra.mxu0 0.0
        %3002 = vmatprep.subr.mxu0 0.0
        %3003 = vmatpush2.msra.mxu0 0.0
        %3004 = vmatprep.subr.mxu0 0.0
        %3005 = vmatpush2.msra.mxu0 0.0
        %3006 = vmatprep.mubr.f32.mxu0 0.0
        %v3007 = vand.u32 %v2853, 4294901760
        %3008 = vmatmul.mubr.f32.gmra.mxu0 %v3007
        %v3009 = vpop.f32.mrf.mxu0
        %v3010 = vadd.f32 %v2929, %v3009
        %v3011 = vpop.f32.mrf.mxu0
        %3012 = vdwg.mxu0
        %3013 = vmatprep.subr.mxu0 0.0
        %3014 = vmatpush1.msra.mxu0 0.0
        %3015 = vmatprep.subr.mxu0 0.0
        %3016 = vmatpush1.msra.mxu0 0.0
        %3017 = vmatprep.subr.mxu0 0.0
        %3018 = vmatpush1.msra.mxu0 0.0
        %3019 = vmatprep.subr.mxu0 0.0
        %3020 = vmatpush1.msra.mxu0 0.0
        %3021 = vmatprep.subr.mxu0 0.0
        %3022 = vmatpush1.msra.mxu0 0.0
        %3023 = vmatprep.subr.mxu0 0.0
        %3024 = vmatpush1.msra.mxu0 0.0
        %3025 = vmatprep.subr.mxu0 0.0
        %3026 = vmatpush1.msra.mxu0 0.0
        %3027 = vmatprep.subr.mxu0 0.0
        %3028 = vmatpush1.msra.mxu0 0.0
        %3029 = vmatprep.subr.mxu0 0.0
        %3030 = vmatpush1.msra.mxu0 0.0
        %3031 = vmatprep.subr.mxu0 0.0
        %3032 = vmatpush1.msra.mxu0 0.0
        %3033 = vmatprep.subr.mxu0 0.0
        %3034 = vmatpush1.msra.mxu0 0.0
        %3035 = vmatprep.subr.mxu0 0.0
        %3036 = vmatpush1.msra.mxu0 0.0
        %3037 = vmatprep.subr.mxu0 0.0
        %3038 = vmatpush1.msra.mxu0 0.0
        %3039 = vmatprep.subr.mxu0 0.0
        %3040 = vmatpush1.msra.mxu0 0.0
        %3041 = vmatprep.subr.mxu0 0.0
        %v3042 = vand.u32 %v2850, 4294901760
        %v3043 = vsub.f32 %v2850, %v3042
        %3044 = vmatpush1.msra.mxu0 %v3043
        %3045 = vmatprep.subr.mxu0 0.0
        %v3046 = vand.u32 %v2849, 4294901760
        %v3047 = vsub.f32 %v2849, %v3046
        %3048 = vmatpush1.msra.mxu0 %v3047
        %3049 = vmatprep.subr.mxu0 0.0
        %3050 = vmatpush2.msra.mxu0 0.0
        %3051 = vmatprep.subr.mxu0 0.0
        %3052 = vmatpush2.msra.mxu0 0.0
        %3053 = vmatprep.subr.mxu0 0.0
        %3054 = vmatpush2.msra.mxu0 0.0
        %3055 = vmatprep.subr.mxu0 0.0
        %3056 = vmatpush2.msra.mxu0 0.0
        %3057 = vmatprep.subr.mxu0 0.0
        %3058 = vmatpush2.msra.mxu0 0.0
        %3059 = vmatprep.subr.mxu0 0.0
        %3060 = vmatpush2.msra.mxu0 0.0
        %3061 = vmatprep.subr.mxu0 0.0
        %3062 = vmatpush2.msra.mxu0 0.0
        %3063 = vmatprep.subr.mxu0 0.0
        %3064 = vmatpush2.msra.mxu0 0.0
        %3065 = vmatprep.subr.mxu0 0.0
        %3066 = vmatpush2.msra.mxu0 0.0
        %3067 = vmatprep.subr.mxu0 0.0
        %3068 = vmatpush2.msra.mxu0 0.0
        %3069 = vmatprep.subr.mxu0 0.0
        %3070 = vmatpush2.msra.mxu0 0.0
        %3071 = vmatprep.subr.mxu0 0.0
        %3072 = vmatpush2.msra.mxu0 0.0
        %3073 = vmatprep.subr.mxu0 0.0
        %3074 = vmatpush2.msra.mxu0 0.0
        %3075 = vmatprep.subr.mxu0 0.0
        %3076 = vmatpush2.msra.mxu0 0.0
        %3077 = vmatprep.subr.mxu0 0.0
        %3078 = vmatpush2.msra.mxu0 0.0
        %3079 = vmatprep.subr.mxu0 0.0
        %3080 = vmatpush2.msra.mxu0 0.0
        %3081 = vmatprep.mubr.f32.mxu0 0.0
        %v3082 = vand.u32 %v2853, 4294901760
        %v3083 = vsub.f32 %v2853, %v3082
        %3084 = vmatmul.mubr.f32.gmra.mxu0 %v3083
        %v3085 = vpop.f32.mrf.mxu0
        %v3086 = vadd.f32 %v3010, %v3085
        %v3087 = vpop.f32.mrf.mxu0
        %3088 = vdwg.mxu0
        %3089 = vmatprep.subr.mxu0 0.0
        %3090 = vmatpush1.msra.mxu0 0.0
        %3091 = vmatprep.subr.mxu0 0.0
        %3092 = vmatpush1.msra.mxu0 0.0
        %3093 = vmatprep.subr.mxu0 0.0
        %3094 = vmatpush1.msra.mxu0 0.0
        %3095 = vmatprep.subr.mxu0 0.0
        %3096 = vmatpush1.msra.mxu0 0.0
        %3097 = vmatprep.subr.mxu0 0.0
        %3098 = vmatpush1.msra.mxu0 0.0
        %3099 = vmatprep.subr.mxu0 0.0
        %3100 = vmatpush1.msra.mxu0 0.0
        %3101 = vmatprep.subr.mxu0 0.0
        %3102 = vmatpush1.msra.mxu0 0.0
        %3103 = vmatprep.subr.mxu0 0.0
        %3104 = vmatpush1.msra.mxu0 0.0
        %3105 = vmatprep.subr.mxu0 0.0
        %3106 = vmatpush1.msra.mxu0 0.0
        %3107 = vmatprep.subr.mxu0 0.0
        %3108 = vmatpush1.msra.mxu0 0.0
        %3109 = vmatprep.subr.mxu0 0.0
        %3110 = vmatpush1.msra.mxu0 0.0
        %3111 = vmatprep.subr.mxu0 0.0
        %3112 = vmatpush1.msra.mxu0 0.0
        %3113 = vmatprep.subr.mxu0 0.0
        %3114 = vmatpush1.msra.mxu0 0.0
        %3115 = vmatprep.subr.mxu0 0.0
        %3116 = vmatpush1.msra.mxu0 0.0
        %3117 = vmatprep.subr.mxu0 0.0
        %v3118 = vand.u32 %v2850, 4294901760
        %3119 = vmatpush1.msra.mxu0 %v3118
        %3120 = vmatprep.subr.mxu0 0.0
        %v3121 = vand.u32 %v2849, 4294901760
        %3122 = vmatpush1.msra.mxu0 %v3121
        %3123 = vmatprep.subr.mxu0 0.0
        %3124 = vmatpush2.msra.mxu0 0.0
        %3125 = vmatprep.subr.mxu0 0.0
        %3126 = vmatpush2.msra.mxu0 0.0
        %3127 = vmatprep.subr.mxu0 0.0
        %3128 = vmatpush2.msra.mxu0 0.0
        %3129 = vmatprep.subr.mxu0 0.0
        %3130 = vmatpush2.msra.mxu0 0.0
        %3131 = vmatprep.subr.mxu0 0.0
        %3132 = vmatpush2.msra.mxu0 0.0
        %3133 = vmatprep.subr.mxu0 0.0
        %3134 = vmatpush2.msra.mxu0 0.0
        %3135 = vmatprep.subr.mxu0 0.0
        %3136 = vmatpush2.msra.mxu0 0.0
        %3137 = vmatprep.subr.mxu0 0.0
        %3138 = vmatpush2.msra.mxu0 0.0
        %3139 = vmatprep.subr.mxu0 0.0
        %3140 = vmatpush2.msra.mxu0 0.0
        %3141 = vmatprep.subr.mxu0 0.0
        %3142 = vmatpush2.msra.mxu0 0.0
        %3143 = vmatprep.subr.mxu0 0.0
        %3144 = vmatpush2.msra.mxu0 0.0
        %3145 = vmatprep.subr.mxu0 0.0
        %3146 = vmatpush2.msra.mxu0 0.0
        %3147 = vmatprep.subr.mxu0 0.0
        %3148 = vmatpush2.msra.mxu0 0.0
        %3149 = vmatprep.subr.mxu0 0.0
        %3150 = vmatpush2.msra.mxu0 0.0
        %3151 = vmatprep.subr.mxu0 0.0
        %3152 = vmatpush2.msra.mxu0 0.0
        %3153 = vmatprep.subr.mxu0 0.0
        %3154 = vmatpush2.msra.mxu0 0.0
        %3155 = vmatprep.mubr.f32.mxu0 0.0
        %v3156 = vand.u32 %v2853, 4294901760
        %v3157 = vsub.f32 %v2853, %v3156
        %v3158 = vand.u32 %v3157, 4294901760
        %3159 = vmatmul.mubr.f32.gmra.mxu0 %v3158
        %v3160 = vpop.f32.mrf.mxu0
        %v3161 = vadd.f32 %v3086, %v3160
        %v3162 = vpop.f32.mrf.mxu0
        %3163 = vdwg.mxu0
        %3164 = vmatprep.subr.mxu0 0.0
        %3165 = vmatpush1.msra.mxu0 0.0
        %3166 = vmatprep.subr.mxu0 0.0
        %3167 = vmatpush1.msra.mxu0 0.0
        %3168 = vmatprep.subr.mxu0 0.0
        %3169 = vmatpush1.msra.mxu0 0.0
        %3170 = vmatprep.subr.mxu0 0.0
        %3171 = vmatpush1.msra.mxu0 0.0
        %3172 = vmatprep.subr.mxu0 0.0
        %3173 = vmatpush1.msra.mxu0 0.0
        %3174 = vmatprep.subr.mxu0 0.0
        %3175 = vmatpush1.msra.mxu0 0.0
        %3176 = vmatprep.subr.mxu0 0.0
        %3177 = vmatpush1.msra.mxu0 0.0
        %3178 = vmatprep.subr.mxu0 0.0
        %3179 = vmatpush1.msra.mxu0 0.0
        %3180 = vmatprep.subr.mxu0 0.0
        %3181 = vmatpush1.msra.mxu0 0.0
        %3182 = vmatprep.subr.mxu0 0.0
        %3183 = vmatpush1.msra.mxu0 0.0
        %3184 = vmatprep.subr.mxu0 0.0
        %3185 = vmatpush1.msra.mxu0 0.0
        %3186 = vmatprep.subr.mxu0 0.0
        %3187 = vmatpush1.msra.mxu0 0.0
        %3188 = vmatprep.subr.mxu0 0.0
        %3189 = vmatpush1.msra.mxu0 0.0
        %3190 = vmatprep.subr.mxu0 0.0
        %3191 = vmatpush1.msra.mxu0 0.0
        %3192 = vmatprep.subr.mxu0 0.0
        %v3193 = vand.u32 %v2850, 4294901760
        %v3194 = vsub.f32 %v2850, %v3193
        %v3195 = vand.u32 %v3194, 4294901760
        %3196 = vmatpush1.msra.mxu0 %v3195
        %3197 = vmatprep.subr.mxu0 0.0
        %v3198 = vand.u32 %v2849, 4294901760
        %v3199 = vsub.f32 %v2849, %v3198
        %v3200 = vand.u32 %v3199, 4294901760
        %3201 = vmatpush1.msra.mxu0 %v3200
        %3202 = vmatprep.subr.mxu0 0.0
        %3203 = vmatpush2.msra.mxu0 0.0
        %3204 = vmatprep.subr.mxu0 0.0
        %3205 = vmatpush2.msra.mxu0 0.0
        %3206 = vmatprep.subr.mxu0 0.0
        %3207 = vmatpush2.msra.mxu0 0.0
        %3208 = vmatprep.subr.mxu0 0.0
        %3209 = vmatpush2.msra.mxu0 0.0
        %3210 = vmatprep.subr.mxu0 0.0
        %3211 = vmatpush2.msra.mxu0 0.0
        %3212 = vmatprep.subr.mxu0 0.0
        %3213 = vmatpush2.msra.mxu0 0.0
        %3214 = vmatprep.subr.mxu0 0.0
        %3215 = vmatpush2.msra.mxu0 0.0
        %3216 = vmatprep.subr.mxu0 0.0
        %3217 = vmatpush2.msra.mxu0 0.0
        %3218 = vmatprep.subr.mxu0 0.0
        %3219 = vmatpush2.msra.mxu0 0.0
        %3220 = vmatprep.subr.mxu0 0.0
        %3221 = vmatpush2.msra.mxu0 0.0
        %3222 = vmatprep.subr.mxu0 0.0
        %3223 = vmatpush2.msra.mxu0 0.0
        %3224 = vmatprep.subr.mxu0 0.0
        %3225 = vmatpush2.msra.mxu0 0.0
        %3226 = vmatprep.subr.mxu0 0.0
        %3227 = vmatpush2.msra.mxu0 0.0
        %3228 = vmatprep.subr.mxu0 0.0
        %3229 = vmatpush2.msra.mxu0 0.0
        %3230 = vmatprep.subr.mxu0 0.0
        %3231 = vmatpush2.msra.mxu0 0.0
        %3232 = vmatprep.subr.mxu0 0.0
        %3233 = vmatpush2.msra.mxu0 0.0
        %3234 = vmatprep.mubr.f32.mxu0 0.0
        %v3235 = vand.u32 %v2853, 4294901760
        %3236 = vmatmul.mubr.f32.gmra.mxu0 %v3235
        %v3237 = vpop.f32.mrf.mxu0
        %v3238 = vadd.f32 %v3161, %v3237
        %v3239 = vpop.f32.mrf.mxu0
        %3240 = vdwg.mxu0
        %3241 = vmatprep.subr.mxu0 0.0
        %3242 = vmatpush1.msra.mxu0 0.0
        %3243 = vmatprep.subr.mxu0 0.0
        %3244 = vmatpush1.msra.mxu0 0.0
        %3245 = vmatprep.subr.mxu0 0.0
        %3246 = vmatpush1.msra.mxu0 0.0
        %3247 = vmatprep.subr.mxu0 0.0
        %3248 = vmatpush1.msra.mxu0 0.0
        %3249 = vmatprep.subr.mxu0 0.0
        %3250 = vmatpush1.msra.mxu0 0.0
        %3251 = vmatprep.subr.mxu0 0.0
        %3252 = vmatpush1.msra.mxu0 0.0
        %3253 = vmatprep.subr.mxu0 0.0
        %3254 = vmatpush1.msra.mxu0 0.0
        %3255 = vmatprep.subr.mxu0 0.0
        %3256 = vmatpush1.msra.mxu0 0.0
        %3257 = vmatprep.subr.mxu0 0.0
        %3258 = vmatpush1.msra.mxu0 0.0
        %3259 = vmatprep.subr.mxu0 0.0
        %3260 = vmatpush1.msra.mxu0 0.0
        %3261 = vmatprep.subr.mxu0 0.0
        %3262 = vmatpush1.msra.mxu0 0.0
        %3263 = vmatprep.subr.mxu0 0.0
        %3264 = vmatpush1.msra.mxu0 0.0
        %3265 = vmatprep.subr.mxu0 0.0
        %3266 = vmatpush1.msra.mxu0 0.0
        %3267 = vmatprep.subr.mxu0 0.0
        %3268 = vmatpush1.msra.mxu0 0.0
        %3269 = vmatprep.subr.mxu0 0.0
        %v3270 = vand.u32 %v2850, 4294901760
        %3271 = vmatpush1.msra.mxu0 %v3270
        %3272 = vmatprep.subr.mxu0 0.0
        %v3273 = vand.u32 %v2849, 4294901760
        %3274 = vmatpush1.msra.mxu0 %v3273
        %3275 = vmatprep.subr.mxu0 0.0
        %3276 = vmatpush2.msra.mxu0 0.0
        %3277 = vmatprep.subr.mxu0 0.0
        %3278 = vmatpush2.msra.mxu0 0.0
        %3279 = vmatprep.subr.mxu0 0.0
        %3280 = vmatpush2.msra.mxu0 0.0
        %3281 = vmatprep.subr.mxu0 0.0
        %3282 = vmatpush2.msra.mxu0 0.0
        %3283 = vmatprep.subr.mxu0 0.0
        %3284 = vmatpush2.msra.mxu0 0.0
        %3285 = vmatprep.subr.mxu0 0.0
        %3286 = vmatpush2.msra.mxu0 0.0
        %3287 = vmatprep.subr.mxu0 0.0
        %3288 = vmatpush2.msra.mxu0 0.0
        %3289 = vmatprep.subr.mxu0 0.0
        %3290 = vmatpush2.msra.mxu0 0.0
        %3291 = vmatprep.subr.mxu0 0.0
        %3292 = vmatpush2.msra.mxu0 0.0
        %3293 = vmatprep.subr.mxu0 0.0
        %3294 = vmatpush2.msra.mxu0 0.0
        %3295 = vmatprep.subr.mxu0 0.0
        %3296 = vmatpush2.msra.mxu0 0.0
        %3297 = vmatprep.subr.mxu0 0.0
        %3298 = vmatpush2.msra.mxu0 0.0
        %3299 = vmatprep.subr.mxu0 0.0
        %3300 = vmatpush2.msra.mxu0 0.0
        %3301 = vmatprep.subr.mxu0 0.0
        %3302 = vmatpush2.msra.mxu0 0.0
        %3303 = vmatprep.subr.mxu0 0.0
        %3304 = vmatpush2.msra.mxu0 0.0
        %3305 = vmatprep.subr.mxu0 0.0
        %3306 = vmatpush2.msra.mxu0 0.0
        %3307 = vmatprep.mubr.f32.mxu0 0.0
        %v3308 = vand.u32 %v2853, 4294901760
        %3309 = vmatmul.mubr.f32.gmra.mxu0 %v3308
        %v3310 = vpop.f32.mrf.mxu0
        %v3311 = vadd.f32 %v3238, %v3310
        %v3312 = vpop.f32.mrf.mxu0
        %3313 = vdwg.mxu0
        %v3314 = vrsqrt.pop %v3311
        %v3315 = vmul.f32 %v1861, %v3314
        %v3316 = vld [vmem:[%s1] sm:$0xff]
        %v3317 = vmul.f32 %v2847, %v3316
        %v3318 = vld [vmem:[%s7] sm:$0xff]
        %v3319 = vld [vmem:[%s7 + $0x8] sm:$0xff]
        %v3320 = vld [vmem:[%s7 + $0x10] sm:$0xff]
        %v3321 = vld [vmem:[%s7 + $0x18] sm:$0xff]
        %v3323 = vsel %vm874, %v2847, 0
        %3325 = vmatprep.subr.mxu0 0.0
        %3326 = vmatpush1.msra.mxu0 0.0
        %3327 = vmatprep.subr.mxu0 0.0
        %3328 = vmatpush1.msra.mxu0 0.0
        %3329 = vmatprep.subr.mxu0 0.0
        %3330 = vmatpush1.msra.mxu0 0.0
        %3331 = vmatprep.subr.mxu0 0.0
        %3332 = vmatpush1.msra.mxu0 0.0
        %3333 = vmatprep.subr.mxu0 0.0
        %3334 = vmatpush1.msra.mxu0 0.0
        %3335 = vmatprep.subr.mxu0 0.0
        %3336 = vmatpush1.msra.mxu0 0.0
        %3337 = vmatprep.subr.mxu0 0.0
        %3338 = vmatpush1.msra.mxu0 0.0
        %3339 = vmatprep.subr.mxu0 0.0
        %3340 = vmatpush1.msra.mxu0 0.0
        %3341 = vmatprep.subr.mxu0 0.0
        %3342 = vmatpush1.msra.mxu0 0.0
        %3343 = vmatprep.subr.mxu0 0.0
        %3344 = vmatpush1.msra.mxu0 0.0
        %3345 = vmatprep.subr.mxu0 0.0
        %3346 = vmatpush1.msra.mxu0 0.0
        %3347 = vmatprep.subr.mxu0 0.0
        %3348 = vmatpush1.msra.mxu0 0.0
        %3349 = vmatprep.subr.mxu0 0.0
        %v3350 = vand.u32 %v3321, 4294901760
        %3351 = vmatpush1.msra.mxu0 %v3350
        %3352 = vmatprep.subr.mxu0 0.0
        %v3353 = vand.u32 %v3320, 4294901760
        %3354 = vmatpush1.msra.mxu0 %v3353
        %3355 = vmatprep.subr.mxu0 0.0
        %v3356 = vand.u32 %v3319, 4294901760
        %3357 = vmatpush1.msra.mxu0 %v3356
        %3358 = vmatprep.subr.mxu0 0.0
        %v3359 = vand.u32 %v3318, 4294901760
        %3360 = vmatpush1.msra.mxu0 %v3359
        %3361 = vmatprep.subr.mxu0 0.0
        %3362 = vmatpush2.msra.mxu0 0.0
        %3363 = vmatprep.subr.mxu0 0.0
        %3364 = vmatpush2.msra.mxu0 0.0
        %3365 = vmatprep.subr.mxu0 0.0
        %3366 = vmatpush2.msra.mxu0 0.0
        %3367 = vmatprep.subr.mxu0 0.0
        %3368 = vmatpush2.msra.mxu0 0.0
        %3369 = vmatprep.subr.mxu0 0.0
        %3370 = vmatpush2.msra.mxu0 0.0
        %3371 = vmatprep.subr.mxu0 0.0
        %3372 = vmatpush2.msra.mxu0 0.0
        %3373 = vmatprep.subr.mxu0 0.0
        %3374 = vmatpush2.msra.mxu0 0.0
        %3375 = vmatprep.subr.mxu0 0.0
        %3376 = vmatpush2.msra.mxu0 0.0
        %3377 = vmatprep.subr.mxu0 0.0
        %3378 = vmatpush2.msra.mxu0 0.0
        %3379 = vmatprep.subr.mxu0 0.0
        %3380 = vmatpush2.msra.mxu0 0.0
        %3381 = vmatprep.subr.mxu0 0.0
        %3382 = vmatpush2.msra.mxu0 0.0
        %3383 = vmatprep.subr.mxu0 0.0
        %3384 = vmatpush2.msra.mxu0 0.0
        %3385 = vmatprep.subr.mxu0 0.0
        %3386 = vmatpush2.msra.mxu0 0.0
        %3387 = vmatprep.subr.mxu0 0.0
        %3388 = vmatpush2.msra.mxu0 0.0
        %3389 = vmatprep.subr.mxu0 0.0
        %3390 = vmatpush2.msra.mxu0 0.0
        %3391 = vmatprep.subr.mxu0 0.0
        %3392 = vmatpush2.msra.mxu0 0.0
        %3393 = vmatprep.mubr.f32.mxu0 0.0
        %v3394 = vand.u32 %v3323, 4294901760
        %v3395 = vsub.f32 %v3323, %v3394
        %v3396 = vand.u32 %v3395, 4294901760
        %v3397 = vsub.f32 %v3395, %v3396
        %v3398 = vand.u32 %v3397, 4294901760
        %3399 = vmatmul.mubr.f32.gmra.mxu0 %v3398
        %v3400 = vpop.f32.mrf.mxu0
        %v3401 = vadd.f32 0.0, %v3400
        %v3402 = vpop.f32.mrf.mxu0
        %3403 = vdwg.mxu0
        %3404 = vmatprep.subr.mxu0 0.0
        %3405 = vmatpush1.msra.mxu0 0.0
        %3406 = vmatprep.subr.mxu0 0.0
        %3407 = vmatpush1.msra.mxu0 0.0
        %3408 = vmatprep.subr.mxu0 0.0
        %3409 = vmatpush1.msra.mxu0 0.0
        %3410 = vmatprep.subr.mxu0 0.0
        %3411 = vmatpush1.msra.mxu0 0.0
        %3412 = vmatprep.subr.mxu0 0.0
        %3413 = vmatpush1.msra.mxu0 0.0
        %3414 = vmatprep.subr.mxu0 0.0
        %3415 = vmatpush1.msra.mxu0 0.0
        %3416 = vmatprep.subr.mxu0 0.0
        %3417 = vmatpush1.msra.mxu0 0.0
        %3418 = vmatprep.subr.mxu0 0.0
        %3419 = vmatpush1.msra.mxu0 0.0
        %3420 = vmatprep.subr.mxu0 0.0
        %3421 = vmatpush1.msra.mxu0 0.0
        %3422 = vmatprep.subr.mxu0 0.0
        %3423 = vmatpush1.msra.mxu0 0.0
        %3424 = vmatprep.subr.mxu0 0.0
        %3425 = vmatpush1.msra.mxu0 0.0
        %3426 = vmatprep.subr.mxu0 0.0
        %3427 = vmatpush1.msra.mxu0 0.0
        %3428 = vmatprep.subr.mxu0 0.0
        %v3429 = vand.u32 %v3321, 4294901760
        %v3430 = vsub.f32 %v3321, %v3429
        %v3431 = vand.u32 %v3430, 4294901760
        %v3432 = vsub.f32 %v3430, %v3431
        %v3433 = vand.u32 %v3432, 4294901760
        %3434 = vmatpush1.msra.mxu0 %v3433
        %3435 = vmatprep.subr.mxu0 0.0
        %v3436 = vand.u32 %v3320, 4294901760
        %v3437 = vsub.f32 %v3320, %v3436
        %v3438 = vand.u32 %v3437, 4294901760
        %v3439 = vsub.f32 %v3437, %v3438
        %v3440 = vand.u32 %v3439, 4294901760
        %3441 = vmatpush1.msra.mxu0 %v3440
        %3442 = vmatprep.subr.mxu0 0.0
        %v3443 = vand.u32 %v3319, 4294901760
        %v3444 = vsub.f32 %v3319, %v3443
        %v3445 = vand.u32 %v3444, 4294901760
        %v3446 = vsub.f32 %v3444, %v3445
        %v3447 = vand.u32 %v3446, 4294901760
        %3448 = vmatpush1.msra.mxu0 %v3447
        %3449 = vmatprep.subr.mxu0 0.0
        %v3450 = vand.u32 %v3318, 4294901760
        %v3451 = vsub.f32 %v3318, %v3450
        %v3452 = vand.u32 %v3451, 4294901760
        %v3453 = vsub.f32 %v3451, %v3452
        %v3454 = vand.u32 %v3453, 4294901760
        %3455 = vmatpush1.msra.mxu0 %v3454
        %3456 = vmatprep.subr.mxu0 0.0
        %3457 = vmatpush2.msra.mxu0 0.0
        %3458 = vmatprep.subr.mxu0 0.0
        %3459 = vmatpush2.msra.mxu0 0.0
        %3460 = vmatprep.subr.mxu0 0.0
        %3461 = vmatpush2.msra.mxu0 0.0
        %3462 = vmatprep.subr.mxu0 0.0
        %3463 = vmatpush2.msra.mxu0 0.0
        %3464 = vmatprep.subr.mxu0 0.0
        %3465 = vmatpush2.msra.mxu0 0.0
        %3466 = vmatprep.subr.mxu0 0.0
        %3467 = vmatpush2.msra.mxu0 0.0
        %3468 = vmatprep.subr.mxu0 0.0
        %3469 = vmatpush2.msra.mxu0 0.0
        %3470 = vmatprep.subr.mxu0 0.0
        %3471 = vmatpush2.msra.mxu0 0.0
        %3472 = vmatprep.subr.mxu0 0.0
        %3473 = vmatpush2.msra.mxu0 0.0
        %3474 = vmatprep.subr.mxu0 0.0
        %3475 = vmatpush2.msra.mxu0 0.0
        %3476 = vmatprep.subr.mxu0 0.0
        %3477 = vmatpush2.msra.mxu0 0.0
        %3478 = vmatprep.subr.mxu0 0.0
        %3479 = vmatpush2.msra.mxu0 0.0
        %3480 = vmatprep.subr.mxu0 0.0
        %3481 = vmatpush2.msra.mxu0 0.0
        %3482 = vmatprep.subr.mxu0 0.0
        %3483 = vmatpush2.msra.mxu0 0.0
        %3484 = vmatprep.subr.mxu0 0.0
        %3485 = vmatpush2.msra.mxu0 0.0
        %3486 = vmatprep.subr.mxu0 0.0
        %3487 = vmatpush2.msra.mxu0 0.0
        %3488 = vmatprep.mubr.f32.mxu0 0.0
        %v3489 = vand.u32 %v3323, 4294901760
        %3490 = vmatmul.mubr.f32.gmra.mxu0 %v3489
        %v3491 = vpop.f32.mrf.mxu0
        %v3492 = vadd.f32 %v3401, %v3491
        %v3493 = vpop.f32.mrf.mxu0
        %3494 = vdwg.mxu0
        %3495 = vmatprep.subr.mxu0 0.0
        %3496 = vmatpush1.msra.mxu0 0.0
        %3497 = vmatprep.subr.mxu0 0.0
        %3498 = vmatpush1.msra.mxu0 0.0
        %3499 = vmatprep.subr.mxu0 0.0
        %3500 = vmatpush1.msra.mxu0 0.0
        %3501 = vmatprep.subr.mxu0 0.0
        %3502 = vmatpush1.msra.mxu0 0.0
        %3503 = vmatprep.subr.mxu0 0.0
        %3504 = vmatpush1.msra.mxu0 0.0
        %3505 = vmatprep.subr.mxu0 0.0
        %3506 = vmatpush1.msra.mxu0 0.0
        %3507 = vmatprep.subr.mxu0 0.0
        %3508 = vmatpush1.msra.mxu0 0.0
        %3509 = vmatprep.subr.mxu0 0.0
        %3510 = vmatpush1.msra.mxu0 0.0
        %3511 = vmatprep.subr.mxu0 0.0
        %3512 = vmatpush1.msra.mxu0 0.0
        %3513 = vmatprep.subr.mxu0 0.0
        %3514 = vmatpush1.msra.mxu0 0.0
        %3515 = vmatprep.subr.mxu0 0.0
        %3516 = vmatpush1.msra.mxu0 0.0
        %3517 = vmatprep.subr.mxu0 0.0
        %3518 = vmatpush1.msra.mxu0 0.0
        %3519 = vmatprep.subr.mxu0 0.0
        %v3520 = vand.u32 %v3321, 4294901760
        %v3521 = vsub.f32 %v3321, %v3520
        %3522 = vmatpush1.msra.mxu0 %v3521
        %3523 = vmatprep.subr.mxu0 0.0
        %v3524 = vand.u32 %v3320, 4294901760
        %v3525 = vsub.f32 %v3320, %v3524
        %3526 = vmatpush1.msra.mxu0 %v3525
        %3527 = vmatprep.subr.mxu0 0.0
        %v3528 = vand.u32 %v3319, 4294901760
        %v3529 = vsub.f32 %v3319, %v3528
        %3530 = vmatpush1.msra.mxu0 %v3529
        %3531 = vmatprep.subr.mxu0 0.0
        %v3532 = vand.u32 %v3318, 4294901760
        %v3533 = vsub.f32 %v3318, %v3532
        %3534 = vmatpush1.msra.mxu0 %v3533
        %3535 = vmatprep.subr.mxu0 0.0
        %3536 = vmatpush2.msra.mxu0 0.0
        %3537 = vmatprep.subr.mxu0 0.0
        %3538 = vmatpush2.msra.mxu0 0.0
        %3539 = vmatprep.subr.mxu0 0.0
        %3540 = vmatpush2.msra.mxu0 0.0
        %3541 = vmatprep.subr.mxu0 0.0
        %3542 = vmatpush2.msra.mxu0 0.0
        %3543 = vmatprep.subr.mxu0 0.0
        %3544 = vmatpush2.msra.mxu0 0.0
        %3545 = vmatprep.subr.mxu0 0.0
        %3546 = vmatpush2.msra.mxu0 0.0
        %3547 = vmatprep.subr.mxu0 0.0
        %3548 = vmatpush2.msra.mxu0 0.0
        %3549 = vmatprep.subr.mxu0 0.0
        %3550 = vmatpush2.msra.mxu0 0.0
        %3551 = vmatprep.subr.mxu0 0.0
        %3552 = vmatpush2.msra.mxu0 0.0
        %3553 = vmatprep.subr.mxu0 0.0
        %3554 = vmatpush2.msra.mxu0 0.0
        %3555 = vmatprep.subr.mxu0 0.0
        %3556 = vmatpush2.msra.mxu0 0.0
        %3557 = vmatprep.subr.mxu0 0.0
        %3558 = vmatpush2.msra.mxu0 0.0
        %3559 = vmatprep.subr.mxu0 0.0
        %3560 = vmatpush2.msra.mxu0 0.0
        %3561 = vmatprep.subr.mxu0 0.0
        %3562 = vmatpush2.msra.mxu0 0.0
        %3563 = vmatprep.subr.mxu0 0.0
        %3564 = vmatpush2.msra.mxu0 0.0
        %3565 = vmatprep.subr.mxu0 0.0
        %3566 = vmatpush2.msra.mxu0 0.0
        %3567 = vmatprep.mubr.f32.mxu0 0.0
        %v3568 = vand.u32 %v3323, 4294901760
        %v3569 = vsub.f32 %v3323, %v3568
        %3570 = vmatmul.mubr.f32.gmra.mxu0 %v3569
        %v3571 = vpop.f32.mrf.mxu0
        %v3572 = vadd.f32 %v3492, %v3571
        %v3573 = vpop.f32.mrf.mxu0
        %3574 = vdwg.mxu0
        %3575 = vmatprep.subr.mxu0 0.0
        %3576 = vmatpush1.msra.mxu0 0.0
        %3577 = vmatprep.subr.mxu0 0.0
        %3578 = vmatpush1.msra.mxu0 0.0
        %3579 = vmatprep.subr.mxu0 0.0
        %3580 = vmatpush1.msra.mxu0 0.0
        %3581 = vmatprep.subr.mxu0 0.0
        %3582 = vmatpush1.msra.mxu0 0.0
        %3583 = vmatprep.subr.mxu0 0.0
        %3584 = vmatpush1.msra.mxu0 0.0
        %3585 = vmatprep.subr.mxu0 0.0
        %3586 = vmatpush1.msra.mxu0 0.0
        %3587 = vmatprep.subr.mxu0 0.0
        %3588 = vmatpush1.msra.mxu0 0.0
        %3589 = vmatprep.subr.mxu0 0.0
        %3590 = vmatpush1.msra.mxu0 0.0
        %3591 = vmatprep.subr.mxu0 0.0
        %3592 = vmatpush1.msra.mxu0 0.0
        %3593 = vmatprep.subr.mxu0 0.0
        %3594 = vmatpush1.msra.mxu0 0.0
        %3595 = vmatprep.subr.mxu0 0.0
        %3596 = vmatpush1.msra.mxu0 0.0
        %3597 = vmatprep.subr.mxu0 0.0
        %3598 = vmatpush1.msra.mxu0 0.0
        %3599 = vmatprep.subr.mxu0 0.0
        %v3600 = vand.u32 %v3321, 4294901760
        %3601 = vmatpush1.msra.mxu0 %v3600
        %3602 = vmatprep.subr.mxu0 0.0
        %v3603 = vand.u32 %v3320, 4294901760
        %3604 = vmatpush1.msra.mxu0 %v3603
        %3605 = vmatprep.subr.mxu0 0.0
        %v3606 = vand.u32 %v3319, 4294901760
        %3607 = vmatpush1.msra.mxu0 %v3606
        %3608 = vmatprep.subr.mxu0 0.0
        %v3609 = vand.u32 %v3318, 4294901760
        %3610 = vmatpush1.msra.mxu0 %v3609
        %3611 = vmatprep.subr.mxu0 0.0
        %3612 = vmatpush2.msra.mxu0 0.0
        %3613 = vmatprep.subr.mxu0 0.0
        %3614 = vmatpush2.msra.mxu0 0.0
        %3615 = vmatprep.subr.mxu0 0.0
        %3616 = vmatpush2.msra.mxu0 0.0
        %3617 = vmatprep.subr.mxu0 0.0
        %3618 = vmatpush2.msra.mxu0 0.0
        %3619 = vmatprep.subr.mxu0 0.0
        %3620 = vmatpush2.msra.mxu0 0.0
        %3621 = vmatprep.subr.mxu0 0.0
        %3622 = vmatpush2.msra.mxu0 0.0
        %3623 = vmatprep.subr.mxu0 0.0
        %3624 = vmatpush2.msra.mxu0 0.0
        %3625 = vmatprep.subr.mxu0 0.0
        %3626 = vmatpush2.msra.mxu0 0.0
        %3627 = vmatprep.subr.mxu0 0.0
        %3628 = vmatpush2.msra.mxu0 0.0
        %3629 = vmatprep.subr.mxu0 0.0
        %3630 = vmatpush2.msra.mxu0 0.0
        %3631 = vmatprep.subr.mxu0 0.0
        %3632 = vmatpush2.msra.mxu0 0.0
        %3633 = vmatprep.subr.mxu0 0.0
        %3634 = vmatpush2.msra.mxu0 0.0
        %3635 = vmatprep.subr.mxu0 0.0
        %3636 = vmatpush2.msra.mxu0 0.0
        %3637 = vmatprep.subr.mxu0 0.0
        %3638 = vmatpush2.msra.mxu0 0.0
        %3639 = vmatprep.subr.mxu0 0.0
        %3640 = vmatpush2.msra.mxu0 0.0
        %3641 = vmatprep.subr.mxu0 0.0
        %3642 = vmatpush2.msra.mxu0 0.0
        %3643 = vmatprep.mubr.f32.mxu0 0.0
        %v3644 = vand.u32 %v3323, 4294901760
        %v3645 = vsub.f32 %v3323, %v3644
        %v3646 = vand.u32 %v3645, 4294901760
        %3647 = vmatmul.mubr.f32.gmra.mxu0 %v3646
        %v3648 = vpop.f32.mrf.mxu0
        %v3649 = vadd.f32 %v3572, %v3648
        %v3650 = vpop.f32.mrf.mxu0
        %3651 = vdwg.mxu0
        %3652 = vmatprep.subr.mxu0 0.0
        %3653 = vmatpush1.msra.mxu0 0.0
        %3654 = vmatprep.subr.mxu0 0.0
        %3655 = vmatpush1.msra.mxu0 0.0
        %3656 = vmatprep.subr.mxu0 0.0
        %3657 = vmatpush1.msra.mxu0 0.0
        %3658 = vmatprep.subr.mxu0 0.0
        %3659 = vmatpush1.msra.mxu0 0.0
        %3660 = vmatprep.subr.mxu0 0.0
        %3661 = vmatpush1.msra.mxu0 0.0
        %3662 = vmatprep.subr.mxu0 0.0
        %3663 = vmatpush1.msra.mxu0 0.0
        %3664 = vmatprep.subr.mxu0 0.0
        %3665 = vmatpush1.msra.mxu0 0.0
        %3666 = vmatprep.subr.mxu0 0.0
        %3667 = vmatpush1.msra.mxu0 0.0
        %3668 = vmatprep.subr.mxu0 0.0
        %3669 = vmatpush1.msra.mxu0 0.0
        %3670 = vmatprep.subr.mxu0 0.0
        %3671 = vmatpush1.msra.mxu0 0.0
        %3672 = vmatprep.subr.mxu0 0.0
        %3673 = vmatpush1.msra.mxu0 0.0
        %3674 = vmatprep.subr.mxu0 0.0
        %3675 = vmatpush1.msra.mxu0 0.0
        %3676 = vmatprep.subr.mxu0 0.0
        %v3677 = vand.u32 %v3321, 4294901760
        %v3678 = vsub.f32 %v3321, %v3677
        %v3679 = vand.u32 %v3678, 4294901760
        %3680 = vmatpush1.msra.mxu0 %v3679
        %3681 = vmatprep.subr.mxu0 0.0
        %v3682 = vand.u32 %v3320, 4294901760
        %v3683 = vsub.f32 %v3320, %v3682
        %v3684 = vand.u32 %v3683, 4294901760
        %3685 = vmatpush1.msra.mxu0 %v3684
        %3686 = vmatprep.subr.mxu0 0.0
        %v3687 = vand.u32 %v3319, 4294901760
        %v3688 = vsub.f32 %v3319, %v3687
        %v3689 = vand.u32 %v3688, 4294901760
        %3690 = vmatpush1.msra.mxu0 %v3689
        %3691 = vmatprep.subr.mxu0 0.0
        %v3692 = vand.u32 %v3318, 4294901760
        %v3693 = vsub.f32 %v3318, %v3692
        %v3694 = vand.u32 %v3693, 4294901760
        %3695 = vmatpush1.msra.mxu0 %v3694
        %3696 = vmatprep.subr.mxu0 0.0
        %3697 = vmatpush2.msra.mxu0 0.0
        %3698 = vmatprep.subr.mxu0 0.0
        %3699 = vmatpush2.msra.mxu0 0.0
        %3700 = vmatprep.subr.mxu0 0.0
        %3701 = vmatpush2.msra.mxu0 0.0
        %3702 = vmatprep.subr.mxu0 0.0
        %3703 = vmatpush2.msra.mxu0 0.0
        %3704 = vmatprep.subr.mxu0 0.0
        %3705 = vmatpush2.msra.mxu0 0.0
        %3706 = vmatprep.subr.mxu0 0.0
        %3707 = vmatpush2.msra.mxu0 0.0
        %3708 = vmatprep.subr.mxu0 0.0
        %3709 = vmatpush2.msra.mxu0 0.0
        %3710 = vmatprep.subr.mxu0 0.0
        %3711 = vmatpush2.msra.mxu0 0.0
        %3712 = vmatprep.subr.mxu0 0.0
        %3713 = vmatpush2.msra.mxu0 0.0
        %3714 = vmatprep.subr.mxu0 0.0
        %3715 = vmatpush2.msra.mxu0 0.0
        %3716 = vmatprep.subr.mxu0 0.0
        %3717 = vmatpush2.msra.mxu0 0.0
        %3718 = vmatprep.subr.mxu0 0.0
        %3719 = vmatpush2.msra.mxu0 0.0
        %3720 = vmatprep.subr.mxu0 0.0
        %3721 = vmatpush2.msra.mxu0 0.0
        %3722 = vmatprep.subr.mxu0 0.0
        %3723 = vmatpush2.msra.mxu0 0.0
        %3724 = vmatprep.subr.mxu0 0.0
        %3725 = vmatpush2.msra.mxu0 0.0
        %3726 = vmatprep.subr.mxu0 0.0
        %3727 = vmatpush2.msra.mxu0 0.0
        %3728 = vmatprep.mubr.f32.mxu0 0.0
        %v3729 = vand.u32 %v3323, 4294901760
        %3730 = vmatmul.mubr.f32.gmra.mxu0 %v3729
        %v3731 = vpop.f32.mrf.mxu0
        %v3732 = vadd.f32 %v3649, %v3731
        %v3733 = vpop.f32.mrf.mxu0
        %3734 = vdwg.mxu0
        %3735 = vmatprep.subr.mxu0 0.0
        %3736 = vmatpush1.msra.mxu0 0.0
        %3737 = vmatprep.subr.mxu0 0.0
        %3738 = vmatpush1.msra.mxu0 0.0
        %3739 = vmatprep.subr.mxu0 0.0
        %3740 = vmatpush1.msra.mxu0 0.0
        %3741 = vmatprep.subr.mxu0 0.0
        %3742 = vmatpush1.msra.mxu0 0.0
        %3743 = vmatprep.subr.mxu0 0.0
        %3744 = vmatpush1.msra.mxu0 0.0
        %3745 = vmatprep.subr.mxu0 0.0
        %3746 = vmatpush1.msra.mxu0 0.0
        %3747 = vmatprep.subr.mxu0 0.0
        %3748 = vmatpush1.msra.mxu0 0.0
        %3749 = vmatprep.subr.mxu0 0.0
        %3750 = vmatpush1.msra.mxu0 0.0
        %3751 = vmatprep.subr.mxu0 0.0
        %3752 = vmatpush1.msra.mxu0 0.0
        %3753 = vmatprep.subr.mxu0 0.0
        %3754 = vmatpush1.msra.mxu0 0.0
        %3755 = vmatprep.subr.mxu0 0.0
        %3756 = vmatpush1.msra.mxu0 0.0
        %3757 = vmatprep.subr.mxu0 0.0
        %3758 = vmatpush1.msra.mxu0 0.0
        %3759 = vmatprep.subr.mxu0 0.0
        %v3760 = vand.u32 %v3321, 4294901760
        %3761 = vmatpush1.msra.mxu0 %v3760
        %3762 = vmatprep.subr.mxu0 0.0
        %v3763 = vand.u32 %v3320, 4294901760
        %3764 = vmatpush1.msra.mxu0 %v3763
        %3765 = vmatprep.subr.mxu0 0.0
        %v3766 = vand.u32 %v3319, 4294901760
        %3767 = vmatpush1.msra.mxu0 %v3766
        %3768 = vmatprep.subr.mxu0 0.0
        %v3769 = vand.u32 %v3318, 4294901760
        %3770 = vmatpush1.msra.mxu0 %v3769
        %3771 = vmatprep.subr.mxu0 0.0
        %3772 = vmatpush2.msra.mxu0 0.0
        %3773 = vmatprep.subr.mxu0 0.0
        %3774 = vmatpush2.msra.mxu0 0.0
        %3775 = vmatprep.subr.mxu0 0.0
        %3776 = vmatpush2.msra.mxu0 0.0
        %3777 = vmatprep.subr.mxu0 0.0
        %3778 = vmatpush2.msra.mxu0 0.0
        %3779 = vmatprep.subr.mxu0 0.0
        %3780 = vmatpush2.msra.mxu0 0.0
        %3781 = vmatprep.subr.mxu0 0.0
        %3782 = vmatpush2.msra.mxu0 0.0
        %3783 = vmatprep.subr.mxu0 0.0
        %3784 = vmatpush2.msra.mxu0 0.0
        %3785 = vmatprep.subr.mxu0 0.0
        %3786 = vmatpush2.msra.mxu0 0.0
        %3787 = vmatprep.subr.mxu0 0.0
        %3788 = vmatpush2.msra.mxu0 0.0
        %3789 = vmatprep.subr.mxu0 0.0
        %3790 = vmatpush2.msra.mxu0 0.0
        %3791 = vmatprep.subr.mxu0 0.0
        %3792 = vmatpush2.msra.mxu0 0.0
        %3793 = vmatprep.subr.mxu0 0.0
        %3794 = vmatpush2.msra.mxu0 0.0
        %3795 = vmatprep.subr.mxu0 0.0
        %3796 = vmatpush2.msra.mxu0 0.0
        %3797 = vmatprep.subr.mxu0 0.0
        %3798 = vmatpush2.msra.mxu0 0.0
        %3799 = vmatprep.subr.mxu0 0.0
        %3800 = vmatpush2.msra.mxu0 0.0
        %3801 = vmatprep.subr.mxu0 0.0
        %3802 = vmatpush2.msra.mxu0 0.0
        %3803 = vmatprep.mubr.f32.mxu0 0.0
        %v3804 = vand.u32 %v3323, 4294901760
        %3805 = vmatmul.mubr.f32.gmra.mxu0 %v3804
        %v3806 = vpop.f32.mrf.mxu0
        %v3807 = vadd.f32 %v3732, %v3806
        %v3808 = vpop.f32.mrf.mxu0
        %3809 = vdwg.mxu0
        %v3810 = vld [vmem:[%s2] sm:$0xff]
        %v3811 = vmul.f32 %v3807, %v3810
        %v3812 = vadd.f32 %v3317, %v3811
        %v3813 = vld [vmem:[%s3] sm:$0xff]
        %v3814 = vmul.f32 %v3315, %v3813
        %v3815 = vld [vmem:[%s8] sm:$0xff]
        %v3816 = vld [vmem:[%s8 + $0x8] sm:$0xff]
        %v3818 = vsel %vm2851, %v3315, 0
        %3820 = vmatprep.subr.mxu0 0.0
        %3821 = vmatpush1.msra.mxu0 0.0
        %3822 = vmatprep.subr.mxu0 0.0
        %3823 = vmatpush1.msra.mxu0 0.0
        %3824 = vmatprep.subr.mxu0 0.0
        %3825 = vmatpush1.msra.mxu0 0.0
        %3826 = vmatprep.subr.mxu0 0.0
        %3827 = vmatpush1.msra.mxu0 0.0
        %3828 = vmatprep.subr.mxu0 0.0
        %3829 = vmatpush1.msra.mxu0 0.0
        %3830 = vmatprep.subr.mxu0 0.0
        %3831 = vmatpush1.msra.mxu0 0.0
        %3832 = vmatprep.subr.mxu0 0.0
        %3833 = vmatpush1.msra.mxu0 0.0
        %3834 = vmatprep.subr.mxu0 0.0
        %3835 = vmatpush1.msra.mxu0 0.0
        %3836 = vmatprep.subr.mxu0 0.0
        %3837 = vmatpush1.msra.mxu0 0.0
        %3838 = vmatprep.subr.mxu0 0.0
        %3839 = vmatpush1.msra.mxu0 0.0
        %3840 = vmatprep.subr.mxu0 0.0
        %3841 = vmatpush1.msra.mxu0 0.0
        %3842 = vmatprep.subr.mxu0 0.0
        %3843 = vmatpush1.msra.mxu0 0.0
        %3844 = vmatprep.subr.mxu0 0.0
        %3845 = vmatpush1.msra.mxu0 0.0
        %3846 = vmatprep.subr.mxu0 0.0
        %3847 = vmatpush1.msra.mxu0 0.0
        %3848 = vmatprep.subr.mxu0 0.0
        %v3849 = vand.u32 %v3816, 4294901760
        %3850 = vmatpush1.msra.mxu0 %v3849
        %3851 = vmatprep.subr.mxu0 0.0
        %v3852 = vand.u32 %v3815, 4294901760
        %3853 = vmatpush1.msra.mxu0 %v3852
        %3854 = vmatprep.subr.mxu0 0.0
        %3855 = vmatpush2.msra.mxu0 0.0
        %3856 = vmatprep.subr.mxu0 0.0
        %3857 = vmatpush2.msra.mxu0 0.0
        %3858 = vmatprep.subr.mxu0 0.0
        %3859 = vmatpush2.msra.mxu0 0.0
        %3860 = vmatprep.subr.mxu0 0.0
        %3861 = vmatpush2.msra.mxu0 0.0
        %3862 = vmatprep.subr.mxu0 0.0
        %3863 = vmatpush2.msra.mxu0 0.0
        %3864 = vmatprep.subr.mxu0 0.0
        %3865 = vmatpush2.msra.mxu0 0.0
        %3866 = vmatprep.subr.mxu0 0.0
        %3867 = vmatpush2.msra.mxu0 0.0
        %3868 = vmatprep.subr.mxu0 0.0
        %3869 = vmatpush2.msra.mxu0 0.0
        %3870 = vmatprep.subr.mxu0 0.0
        %3871 = vmatpush2.msra.mxu0 0.0
        %3872 = vmatprep.subr.mxu0 0.0
        %3873 = vmatpush2.msra.mxu0 0.0
        %3874 = vmatprep.subr.mxu0 0.0
        %3875 = vmatpush2.msra.mxu0 0.0
        %3876 = vmatprep.subr.mxu0 0.0
        %3877 = vmatpush2.msra.mxu0 0.0
        %3878 = vmatprep.subr.mxu0 0.0
        %3879 = vmatpush2.msra.mxu0 0.0
        %3880 = vmatprep.subr.mxu0 0.0
        %3881 = vmatpush2.msra.mxu0 0.0
        %3882 = vmatprep.subr.mxu0 0.0
        %3883 = vmatpush2.msra.mxu0 0.0
        %3884 = vmatprep.subr.mxu0 0.0
        %3885 = vmatpush2.msra.mxu0 0.0
        %3886 = vmatprep.mubr.f32.mxu0 0.0
        %v3887 = vand.u32 %v3818, 4294901760
        %v3888 = vsub.f32 %v3818, %v3887
        %v3889 = vand.u32 %v3888, 4294901760
        %v3890 = vsub.f32 %v3888, %v3889
        %v3891 = vand.u32 %v3890, 4294901760
        %3892 = vmatmul.mubr.f32.gmra.mxu0 %v3891
        %v3893 = vpop.f32.mrf.mxu0
        %v3894 = vadd.f32 0.0, %v3893
        %v3895 = vpop.f32.mrf.mxu0
        %3896 = vdwg.mxu0
        %3897 = vmatprep.subr.mxu0 0.0
        %3898 = vmatpush1.msra.mxu0 0.0
        %3899 = vmatprep.subr.mxu0 0.0
        %3900 = vmatpush1.msra.mxu0 0.0
        %3901 = vmatprep.subr.mxu0 0.0
        %3902 = vmatpush1.msra.mxu0 0.0
        %3903 = vmatprep.subr.mxu0 0.0
        %3904 = vmatpush1.msra.mxu0 0.0
        %3905 = vmatprep.subr.mxu0 0.0
        %3906 = vmatpush1.msra.mxu0 0.0
        %3907 = vmatprep.subr.mxu0 0.0
        %3908 = vmatpush1.msra.mxu0 0.0
        %3909 = vmatprep.subr.mxu0 0.0
        %3910 = vmatpush1.msra.mxu0 0.0
        %3911 = vmatprep.subr.mxu0 0.0
        %3912 = vmatpush1.msra.mxu0 0.0
        %3913 = vmatprep.subr.mxu0 0.0
        %3914 = vmatpush1.msra.mxu0 0.0
        %3915 = vmatprep.subr.mxu0 0.0
        %3916 = vmatpush1.msra.mxu0 0.0
        %3917 = vmatprep.subr.mxu0 0.0
        %3918 = vmatpush1.msra.mxu0 0.0
        %3919 = vmatprep.subr.mxu0 0.0
        %3920 = vmatpush1.msra.mxu0 0.0
        %3921 = vmatprep.subr.mxu0 0.0
        %3922 = vmatpush1.msra.mxu0 0.0
        %3923 = vmatprep.subr.mxu0 0.0
        %3924 = vmatpush1.msra.mxu0 0.0
        %3925 = vmatprep.subr.mxu0 0.0
        %v3926 = vand.u32 %v3816, 4294901760
        %v3927 = vsub.f32 %v3816, %v3926
        %v3928 = vand.u32 %v3927, 4294901760
        %v3929 = vsub.f32 %v3927, %v3928
        %v3930 = vand.u32 %v3929, 4294901760
        %3931 = vmatpush1.msra.mxu0 %v3930
        %3932 = vmatprep.subr.mxu0 0.0
        %v3933 = vand.u32 %v3815, 4294901760
        %v3934 = vsub.f32 %v3815, %v3933
        %v3935 = vand.u32 %v3934, 4294901760
        %v3936 = vsub.f32 %v3934, %v3935
        %v3937 = vand.u32 %v3936, 4294901760
        %3938 = vmatpush1.msra.mxu0 %v3937
        %3939 = vmatprep.subr.mxu0 0.0
        %3940 = vmatpush2.msra.mxu0 0.0
        %3941 = vmatprep.subr.mxu0 0.0
        %3942 = vmatpush2.msra.mxu0 0.0
        %3943 = vmatprep.subr.mxu0 0.0
        %3944 = vmatpush2.msra.mxu0 0.0
        %3945 = vmatprep.subr.mxu0 0.0
        %3946 = vmatpush2.msra.mxu0 0.0
        %3947 = vmatprep.subr.mxu0 0.0
        %3948 = vmatpush2.msra.mxu0 0.0
        %3949 = vmatprep.subr.mxu0 0.0
        %3950 = vmatpush2.msra.mxu0 0.0
        %3951 = vmatprep.subr.mxu0 0.0
        %3952 = vmatpush2.msra.mxu0 0.0
        %3953 = vmatprep.subr.mxu0 0.0
        %3954 = vmatpush2.msra.mxu0 0.0
        %3955 = vmatprep.subr.mxu0 0.0
        %3956 = vmatpush2.msra.mxu0 0.0
        %3957 = vmatprep.subr.mxu0 0.0
        %3958 = vmatpush2.msra.mxu0 0.0
        %3959 = vmatprep.subr.mxu0 0.0
        %3960 = vmatpush2.msra.mxu0 0.0
        %3961 = vmatprep.subr.mxu0 0.0
        %3962 = vmatpush2.msra.mxu0 0.0
        %3963 = vmatprep.subr.mxu0 0.0
        %3964 = vmatpush2.msra.mxu0 0.0
        %3965 = vmatprep.subr.mxu0 0.0
        %3966 = vmatpush2.msra.mxu0 0.0
        %3967 = vmatprep.subr.mxu0 0.0
        %3968 = vmatpush2.msra.mxu0 0.0
        %3969 = vmatprep.subr.mxu0 0.0
        %3970 = vmatpush2.msra.mxu0 0.0
        %3971 = vmatprep.mubr.f32.mxu0 0.0
        %v3972 = vand.u32 %v3818, 4294901760
        %3973 = vmatmul.mubr.f32.gmra.mxu0 %v3972
        %v3974 = vpop.f32.mrf.mxu0
        %v3975 = vadd.f32 %v3894, %v3974
        %v3976 = vpop.f32.mrf.mxu0
        %3977 = vdwg.mxu0
        %3978 = vmatprep.subr.mxu0 0.0
        %3979 = vmatpush1.msra.mxu0 0.0
        %3980 = vmatprep.subr.mxu0 0.0
        %3981 = vmatpush1.msra.mxu0 0.0
        %3982 = vmatprep.subr.mxu0 0.0
        %3983 = vmatpush1.msra.mxu0 0.0
        %3984 = vmatprep.subr.mxu0 0.0
        %3985 = vmatpush1.msra.mxu0 0.0
        %3986 = vmatprep.subr.mxu0 0.0
        %3987 = vmatpush1.msra.mxu0 0.0
        %3988 = vmatprep.subr.mxu0 0.0
        %3989 = vmatpush1.msra.mxu0 0.0
        %3990 = vmatprep.subr.mxu0 0.0
        %3991 = vmatpush1.msra.mxu0 0.0
        %3992 = vmatprep.subr.mxu0 0.0
        %3993 = vmatpush1.msra.mxu0 0.0
        %3994 = vmatprep.subr.mxu0 0.0
        %3995 = vmatpush1.msra.mxu0 0.0
        %3996 = vmatprep.subr.mxu0 0.0
        %3997 = vmatpush1.msra.mxu0 0.0
        %3998 = vmatprep.subr.mxu0 0.0
        %3999 = vmatpush1.msra.mxu0 0.0
        %4000 = vmatprep.subr.mxu0 0.0
        %4001 = vmatpush1.msra.mxu0 0.0
        %4002 = vmatprep.subr.mxu0 0.0
        %4003 = vmatpush1.msra.mxu0 0.0
        %4004 = vmatprep.subr.mxu0 0.0
        %4005 = vmatpush1.msra.mxu0 0.0
        %4006 = vmatprep.subr.mxu0 0.0
        %v4007 = vand.u32 %v3816, 4294901760
        %v4008 = vsub.f32 %v3816, %v4007
        %4009 = vmatpush1.msra.mxu0 %v4008
        %4010 = vmatprep.subr.mxu0 0.0
        %v4011 = vand.u32 %v3815, 4294901760
        %v4012 = vsub.f32 %v3815, %v4011
        %4013 = vmatpush1.msra.mxu0 %v4012
        %4014 = vmatprep.subr.mxu0 0.0
        %4015 = vmatpush2.msra.mxu0 0.0
        %4016 = vmatprep.subr.mxu0 0.0
        %4017 = vmatpush2.msra.mxu0 0.0
        %4018 = vmatprep.subr.mxu0 0.0
        %4019 = vmatpush2.msra.mxu0 0.0
        %4020 = vmatprep.subr.mxu0 0.0
        %4021 = vmatpush2.msra.mxu0 0.0
        %4022 = vmatprep.subr.mxu0 0.0
        %4023 = vmatpush2.msra.mxu0 0.0
        %4024 = vmatprep.subr.mxu0 0.0
        %4025 = vmatpush2.msra.mxu0 0.0
        %4026 = vmatprep.subr.mxu0 0.0
        %4027 = vmatpush2.msra.mxu0 0.0
        %4028 = vmatprep.subr.mxu0 0.0
        %4029 = vmatpush2.msra.mxu0 0.0
        %4030 = vmatprep.subr.mxu0 0.0
        %4031 = vmatpush2.msra.mxu0 0.0
        %4032 = vmatprep.subr.mxu0 0.0
        %4033 = vmatpush2.msra.mxu0 0.0
        %4034 = vmatprep.subr.mxu0 0.0
        %4035 = vmatpush2.msra.mxu0 0.0
        %4036 = vmatprep.subr.mxu0 0.0
        %4037 = vmatpush2.msra.mxu0 0.0
        %4038 = vmatprep.subr.mxu0 0.0
        %4039 = vmatpush2.msra.mxu0 0.0
        %4040 = vmatprep.subr.mxu0 0.0
        %4041 = vmatpush2.msra.mxu0 0.0
        %4042 = vmatprep.subr.mxu0 0.0
        %4043 = vmatpush2.msra.mxu0 0.0
        %4044 = vmatprep.subr.mxu0 0.0
        %4045 = vmatpush2.msra.mxu0 0.0
        %4046 = vmatprep.mubr.f32.mxu0 0.0
        %v4047 = vand.u32 %v3818, 4294901760
        %v4048 = vsub.f32 %v3818, %v4047
        %4049 = vmatmul.mubr.f32.gmra.mxu0 %v4048
        %v4050 = vpop.f32.mrf.mxu0
        %v4051 = vadd.f32 %v3975, %v4050
        %v4052 = vpop.f32.mrf.mxu0
        %4053 = vdwg.mxu0
        %4054 = vmatprep.subr.mxu0 0.0
        %4055 = vmatpush1.msra.mxu0 0.0
        %4056 = vmatprep.subr.mxu0 0.0
        %4057 = vmatpush1.msra.mxu0 0.0
        %4058 = vmatprep.subr.mxu0 0.0
        %4059 = vmatpush1.msra.mxu0 0.0
        %4060 = vmatprep.subr.mxu0 0.0
        %4061 = vmatpush1.msra.mxu0 0.0
        %4062 = vmatprep.subr.mxu0 0.0
        %4063 = vmatpush1.msra.mxu0 0.0
        %4064 = vmatprep.subr.mxu0 0.0
        %4065 = vmatpush1.msra.mxu0 0.0
        %4066 = vmatprep.subr.mxu0 0.0
        %4067 = vmatpush1.msra.mxu0 0.0
        %4068 = vmatprep.subr.mxu0 0.0
        %4069 = vmatpush1.msra.mxu0 0.0
        %4070 = vmatprep.subr.mxu0 0.0
        %4071 = vmatpush1.msra.mxu0 0.0
        %4072 = vmatprep.subr.mxu0 0.0
        %4073 = vmatpush1.msra.mxu0 0.0
        %4074 = vmatprep.subr.mxu0 0.0
        %4075 = vmatpush1.msra.mxu0 0.0
        %4076 = vmatprep.subr.mxu0 0.0
        %4077 = vmatpush1.msra.mxu0 0.0
        %4078 = vmatprep.subr.mxu0 0.0
        %4079 = vmatpush1.msra.mxu0 0.0
        %4080 = vmatprep.subr.mxu0 0.0
        %4081 = vmatpush1.msra.mxu0 0.0
        %4082 = vmatprep.subr.mxu0 0.0
        %v4083 = vand.u32 %v3816, 4294901760
        %4084 = vmatpush1.msra.mxu0 %v4083
        %4085 = vmatprep.subr.mxu0 0.0
        %v4086 = vand.u32 %v3815, 4294901760
        %4087 = vmatpush1.msra.mxu0 %v4086
        %4088 = vmatprep.subr.mxu0 0.0
        %4089 = vmatpush2.msra.mxu0 0.0
        %4090 = vmatprep.subr.mxu0 0.0
        %4091 = vmatpush2.msra.mxu0 0.0
        %4092 = vmatprep.subr.mxu0 0.0
        %4093 = vmatpush2.msra.mxu0 0.0
        %4094 = vmatprep.subr.mxu0 0.0
        %4095 = vmatpush2.msra.mxu0 0.0
        %4096 = vmatprep.subr.mxu0 0.0
        %4097 = vmatpush2.msra.mxu0 0.0
        %4098 = vmatprep.subr.mxu0 0.0
        %4099 = vmatpush2.msra.mxu0 0.0
        %4100 = vmatprep.subr.mxu0 0.0
        %4101 = vmatpush2.msra.mxu0 0.0
        %4102 = vmatprep.subr.mxu0 0.0
        %4103 = vmatpush2.msra.mxu0 0.0
        %4104 = vmatprep.subr.mxu0 0.0
        %4105 = vmatpush2.msra.mxu0 0.0
        %4106 = vmatprep.subr.mxu0 0.0
        %4107 = vmatpush2.msra.mxu0 0.0
        %4108 = vmatprep.subr.mxu0 0.0
        %4109 = vmatpush2.msra.mxu0 0.0
        %4110 = vmatprep.subr.mxu0 0.0
        %4111 = vmatpush2.msra.mxu0 0.0
        %4112 = vmatprep.subr.mxu0 0.0
        %4113 = vmatpush2.msra.mxu0 0.0
        %4114 = vmatprep.subr.mxu0 0.0
        %4115 = vmatpush2.msra.mxu0 0.0
        %4116 = vmatprep.subr.mxu0 0.0
        %4117 = vmatpush2.msra.mxu0 0.0
        %4118 = vmatprep.subr.mxu0 0.0
        %4119 = vmatpush2.msra.mxu0 0.0
        %4120 = vmatprep.mubr.f32.mxu0 0.0
        %v4121 = vand.u32 %v3818, 4294901760
        %v4122 = vsub.f32 %v3818, %v4121
        %v4123 = vand.u32 %v4122, 4294901760
        %4124 = vmatmul.mubr.f32.gmra.mxu0 %v4123
        %v4125 = vpop.f32.mrf.mxu0
        %v4126 = vadd.f32 %v4051, %v4125
        %v4127 = vpop.f32.mrf.mxu0
        %4128 = vdwg.mxu0
        %4129 = vmatprep.subr.mxu0 0.0
        %4130 = vmatpush1.msra.mxu0 0.0
        %4131 = vmatprep.subr.mxu0 0.0
        %4132 = vmatpush1.msra.mxu0 0.0
        %4133 = vmatprep.subr.mxu0 0.0
        %4134 = vmatpush1.msra.mxu0 0.0
        %4135 = vmatprep.subr.mxu0 0.0
        %4136 = vmatpush1.msra.mxu0 0.0
        %4137 = vmatprep.subr.mxu0 0.0
        %4138 = vmatpush1.msra.mxu0 0.0
        %4139 = vmatprep.subr.mxu0 0.0
        %4140 = vmatpush1.msra.mxu0 0.0
        %4141 = vmatprep.subr.mxu0 0.0
        %4142 = vmatpush1.msra.mxu0 0.0
        %4143 = vmatprep.subr.mxu0 0.0
        %4144 = vmatpush1.msra.mxu0 0.0
        %4145 = vmatprep.subr.mxu0 0.0
        %4146 = vmatpush1.msra.mxu0 0.0
        %4147 = vmatprep.subr.mxu0 0.0
        %4148 = vmatpush1.msra.mxu0 0.0
        %4149 = vmatprep.subr.mxu0 0.0
        %4150 = vmatpush1.msra.mxu0 0.0
        %4151 = vmatprep.subr.mxu0 0.0
        %4152 = vmatpush1.msra.mxu0 0.0
        %4153 = vmatprep.subr.mxu0 0.0
        %4154 = vmatpush1.msra.mxu0 0.0
        %4155 = vmatprep.subr.mxu0 0.0
        %4156 = vmatpush1.msra.mxu0 0.0
        %4157 = vmatprep.subr.mxu0 0.0
        %v4158 = vand.u32 %v3816, 4294901760
        %v4159 = vsub.f32 %v3816, %v4158
        %v4160 = vand.u32 %v4159, 4294901760
        %4161 = vmatpush1.msra.mxu0 %v4160
        %4162 = vmatprep.subr.mxu0 0.0
        %v4163 = vand.u32 %v3815, 4294901760
        %v4164 = vsub.f32 %v3815, %v4163
        %v4165 = vand.u32 %v4164, 4294901760
        %4166 = vmatpush1.msra.mxu0 %v4165
        %4167 = vmatprep.subr.mxu0 0.0
        %4168 = vmatpush2.msra.mxu0 0.0
        %4169 = vmatprep.subr.mxu0 0.0
        %4170 = vmatpush2.msra.mxu0 0.0
        %4171 = vmatprep.subr.mxu0 0.0
        %4172 = vmatpush2.msra.mxu0 0.0
        %4173 = vmatprep.subr.mxu0 0.0
        %4174 = vmatpush2.msra.mxu0 0.0
        %4175 = vmatprep.subr.mxu0 0.0
        %4176 = vmatpush2.msra.mxu0 0.0
        %4177 = vmatprep.subr.mxu0 0.0
        %4178 = vmatpush2.msra.mxu0 0.0
        %4179 = vmatprep.subr.mxu0 0.0
        %4180 = vmatpush2.msra.mxu0 0.0
        %4181 = vmatprep.subr.mxu0 0.0
        %4182 = vmatpush2.msra.mxu0 0.0
        %4183 = vmatprep.subr.mxu0 0.0
        %4184 = vmatpush2.msra.mxu0 0.0
        %4185 = vmatprep.subr.mxu0 0.0
        %4186 = vmatpush2.msra.mxu0 0.0
        %4187 = vmatprep.subr.mxu0 0.0
        %4188 = vmatpush2.msra.mxu0 0.0
        %4189 = vmatprep.subr.mxu0 0.0
        %4190 = vmatpush2.msra.mxu0 0.0
        %4191 = vmatprep.subr.mxu0 0.0
        %4192 = vmatpush2.msra.mxu0 0.0
        %4193 = vmatprep.subr.mxu0 0.0
        %4194 = vmatpush2.msra.mxu0 0.0
        %4195 = vmatprep.subr.mxu0 0.0
        %4196 = vmatpush2.msra.mxu0 0.0
        %4197 = vmatprep.subr.mxu0 0.0
        %4198 = vmatpush2.msra.mxu0 0.0
        %4199 = vmatprep.mubr.f32.mxu0 0.0
        %v4200 = vand.u32 %v3818, 4294901760
        %4201 = vmatmul.mubr.f32.gmra.mxu0 %v4200
        %v4202 = vpop.f32.mrf.mxu0
        %v4203 = vadd.f32 %v4126, %v4202
        %v4204 = vpop.f32.mrf.mxu0
        %4205 = vdwg.mxu0
        %4206 = vmatprep.subr.mxu0 0.0
        %4207 = vmatpush1.msra.mxu0 0.0
        %4208 = vmatprep.subr.mxu0 0.0
        %4209 = vmatpush1.msra.mxu0 0.0
        %4210 = vmatprep.subr.mxu0 0.0
        %4211 = vmatpush1.msra.mxu0 0.0
        %4212 = vmatprep.subr.mxu0 0.0
        %4213 = vmatpush1.msra.mxu0 0.0
        %4214 = vmatprep.subr.mxu0 0.0
        %4215 = vmatpush1.msra.mxu0 0.0
        %4216 = vmatprep.subr.mxu0 0.0
        %4217 = vmatpush1.msra.mxu0 0.0
        %4218 = vmatprep.subr.mxu0 0.0
        %4219 = vmatpush1.msra.mxu0 0.0
        %4220 = vmatprep.subr.mxu0 0.0
        %4221 = vmatpush1.msra.mxu0 0.0
        %4222 = vmatprep.subr.mxu0 0.0
        %4223 = vmatpush1.msra.mxu0 0.0
        %4224 = vmatprep.subr.mxu0 0.0
        %4225 = vmatpush1.msra.mxu0 0.0
        %4226 = vmatprep.subr.mxu0 0.0
        %4227 = vmatpush1.msra.mxu0 0.0
        %4228 = vmatprep.subr.mxu0 0.0
        %4229 = vmatpush1.msra.mxu0 0.0
        %4230 = vmatprep.subr.mxu0 0.0
        %4231 = vmatpush1.msra.mxu0 0.0
        %4232 = vmatprep.subr.mxu0 0.0
        %4233 = vmatpush1.msra.mxu0 0.0
        %4234 = vmatprep.subr.mxu0 0.0
        %v4235 = vand.u32 %v3816, 4294901760
        %4236 = vmatpush1.msra.mxu0 %v4235
        %4237 = vmatprep.subr.mxu0 0.0
        %v4238 = vand.u32 %v3815, 4294901760
        %4239 = vmatpush1.msra.mxu0 %v4238
        %4240 = vmatprep.subr.mxu0 0.0
        %4241 = vmatpush2.msra.mxu0 0.0
        %4242 = vmatprep.subr.mxu0 0.0
        %4243 = vmatpush2.msra.mxu0 0.0
        %4244 = vmatprep.subr.mxu0 0.0
        %4245 = vmatpush2.msra.mxu0 0.0
        %4246 = vmatprep.subr.mxu0 0.0
        %4247 = vmatpush2.msra.mxu0 0.0
        %4248 = vmatprep.subr.mxu0 0.0
        %4249 = vmatpush2.msra.mxu0 0.0
        %4250 = vmatprep.subr.mxu0 0.0
        %4251 = vmatpush2.msra.mxu0 0.0
        %4252 = vmatprep.subr.mxu0 0.0
        %4253 = vmatpush2.msra.mxu0 0.0
        %4254 = vmatprep.subr.mxu0 0.0
        %4255 = vmatpush2.msra.mxu0 0.0
        %4256 = vmatprep.subr.mxu0 0.0
        %4257 = vmatpush2.msra.mxu0 0.0
        %4258 = vmatprep.subr.mxu0 0.0
        %4259 = vmatpush2.msra.mxu0 0.0
        %4260 = vmatprep.subr.mxu0 0.0
        %4261 = vmatpush2.msra.mxu0 0.0
        %4262 = vmatprep.subr.mxu0 0.0
        %4263 = vmatpush2.msra.mxu0 0.0
        %4264 = vmatprep.subr.mxu0 0.0
        %4265 = vmatpush2.msra.mxu0 0.0
        %4266 = vmatprep.subr.mxu0 0.0
        %4267 = vmatpush2.msra.mxu0 0.0
        %4268 = vmatprep.subr.mxu0 0.0
        %4269 = vmatpush2.msra.mxu0 0.0
        %4270 = vmatprep.subr.mxu0 0.0
        %4271 = vmatpush2.msra.mxu0 0.0
        %4272 = vmatprep.mubr.f32.mxu0 0.0
        %v4273 = vand.u32 %v3818, 4294901760
        %4274 = vmatmul.mubr.f32.gmra.mxu0 %v4273
        %v4275 = vpop.f32.mrf.mxu0
        %v4276 = vadd.f32 %v4203, %v4275
        %v4277 = vpop.f32.mrf.mxu0
        %4278 = vdwg.mxu0
        %v4279 = vld [vmem:[%s4] sm:$0xff]
        %v4280 = vmul.f32 %v4276, %v4279
        %v4281 = vadd.f32 %v3814, %v4280
        %4282 = vst.msk [vmem:[%s860] sm:$0xff] %vm2851, %v4281
        %4283 = vst.msk [vmem:[%s864] sm:$0xff] %vm2851, %v2350
        %v4284 = vmul.f32 %v3812, 2.0
        %v4285 = vld [vmem:[%s9] sm:$0xff]
        %v4286 = vld [vmem:[%s9 + $0x8] sm:$0xff]
        %v4288 = vsel %vm2851, %v4281, 0
        %4290 = vmatprep.subr.mxu0 0.0
        %4291 = vmatpush1.msra.mxu0 0.0
        %4292 = vmatprep.subr.mxu0 0.0
        %4293 = vmatpush1.msra.mxu0 0.0
        %4294 = vmatprep.subr.mxu0 0.0
        %4295 = vmatpush1.msra.mxu0 0.0
        %4296 = vmatprep.subr.mxu0 0.0
        %4297 = vmatpush1.msra.mxu0 0.0
        %4298 = vmatprep.subr.mxu0 0.0
        %4299 = vmatpush1.msra.mxu0 0.0
        %4300 = vmatprep.subr.mxu0 0.0
        %4301 = vmatpush1.msra.mxu0 0.0
        %4302 = vmatprep.subr.mxu0 0.0
        %4303 = vmatpush1.msra.mxu0 0.0
        %4304 = vmatprep.subr.mxu0 0.0
        %4305 = vmatpush1.msra.mxu0 0.0
        %4306 = vmatprep.subr.mxu0 0.0
        %4307 = vmatpush1.msra.mxu0 0.0
        %4308 = vmatprep.subr.mxu0 0.0
        %4309 = vmatpush1.msra.mxu0 0.0
        %4310 = vmatprep.subr.mxu0 0.0
        %4311 = vmatpush1.msra.mxu0 0.0
        %4312 = vmatprep.subr.mxu0 0.0
        %4313 = vmatpush1.msra.mxu0 0.0
        %4314 = vmatprep.subr.mxu0 0.0
        %4315 = vmatpush1.msra.mxu0 0.0
        %4316 = vmatprep.subr.mxu0 0.0
        %4317 = vmatpush1.msra.mxu0 0.0
        %4318 = vmatprep.subr.mxu0 0.0
        %v4319 = vand.u32 %v4286, 4294901760
        %4320 = vmatpush1.msra.mxu0 %v4319
        %4321 = vmatprep.subr.mxu0 0.0
        %v4322 = vand.u32 %v4285, 4294901760
        %4323 = vmatpush1.msra.mxu0 %v4322
        %4324 = vmatprep.subr.mxu0 0.0
        %4325 = vmatpush2.msra.mxu0 0.0
        %4326 = vmatprep.subr.mxu0 0.0
        %4327 = vmatpush2.msra.mxu0 0.0
        %4328 = vmatprep.subr.mxu0 0.0
        %4329 = vmatpush2.msra.mxu0 0.0
        %4330 = vmatprep.subr.mxu0 0.0
        %4331 = vmatpush2.msra.mxu0 0.0
        %4332 = vmatprep.subr.mxu0 0.0
        %4333 = vmatpush2.msra.mxu0 0.0
        %4334 = vmatprep.subr.mxu0 0.0
        %4335 = vmatpush2.msra.mxu0 0.0
        %4336 = vmatprep.subr.mxu0 0.0
        %4337 = vmatpush2.msra.mxu0 0.0
        %4338 = vmatprep.subr.mxu0 0.0
        %4339 = vmatpush2.msra.mxu0 0.0
        %4340 = vmatprep.subr.mxu0 0.0
        %4341 = vmatpush2.msra.mxu0 0.0
        %4342 = vmatprep.subr.mxu0 0.0
        %4343 = vmatpush2.msra.mxu0 0.0
        %4344 = vmatprep.subr.mxu0 0.0
        %4345 = vmatpush2.msra.mxu0 0.0
        %4346 = vmatprep.subr.mxu0 0.0
        %4347 = vmatpush2.msra.mxu0 0.0
        %4348 = vmatprep.subr.mxu0 0.0
        %4349 = vmatpush2.msra.mxu0 0.0
        %4350 = vmatprep.subr.mxu0 0.0
        %4351 = vmatpush2.msra.mxu0 0.0
        %4352 = vmatprep.subr.mxu0 0.0
        %4353 = vmatpush2.msra.mxu0 0.0
        %4354 = vmatprep.subr.mxu0 0.0
        %4355 = vmatpush2.msra.mxu0 0.0
        %4356 = vmatprep.mubr.f32.mxu0 0.0
        %v4357 = vand.u32 %v4288, 4294901760
        %v4358 = vsub.f32 %v4288, %v4357
        %v4359 = vand.u32 %v4358, 4294901760
        %v4360 = vsub.f32 %v4358, %v4359
        %v4361 = vand.u32 %v4360, 4294901760
        %4362 = vmatmul.mubr.f32.gmra.mxu0 %v4361
        %v4363 = vpop.f32.mrf.mxu0
        %v4364 = vadd.f32 0.0, %v4363
        %v4365 = vpop.f32.mrf.mxu0
        %4366 = vdwg.mxu0
        %4367 = vmatprep.subr.mxu0 0.0
        %4368 = vmatpush1.msra.mxu0 0.0
        %4369 = vmatprep.subr.mxu0 0.0
        %4370 = vmatpush1.msra.mxu0 0.0
        %4371 = vmatprep.subr.mxu0 0.0
        %4372 = vmatpush1.msra.mxu0 0.0
        %4373 = vmatprep.subr.mxu0 0.0
        %4374 = vmatpush1.msra.mxu0 0.0
        %4375 = vmatprep.subr.mxu0 0.0
        %4376 = vmatpush1.msra.mxu0 0.0
        %4377 = vmatprep.subr.mxu0 0.0
        %4378 = vmatpush1.msra.mxu0 0.0
        %4379 = vmatprep.subr.mxu0 0.0
        %4380 = vmatpush1.msra.mxu0 0.0
        %4381 = vmatprep.subr.mxu0 0.0
        %4382 = vmatpush1.msra.mxu0 0.0
        %4383 = vmatprep.subr.mxu0 0.0
        %4384 = vmatpush1.msra.mxu0 0.0
        %4385 = vmatprep.subr.mxu0 0.0
        %4386 = vmatpush1.msra.mxu0 0.0
        %4387 = vmatprep.subr.mxu0 0.0
        %4388 = vmatpush1.msra.mxu0 0.0
        %4389 = vmatprep.subr.mxu0 0.0
        %4390 = vmatpush1.msra.mxu0 0.0
        %4391 = vmatprep.subr.mxu0 0.0
        %4392 = vmatpush1.msra.mxu0 0.0
        %4393 = vmatprep.subr.mxu0 0.0
        %4394 = vmatpush1.msra.mxu0 0.0
        %4395 = vmatprep.subr.mxu0 0.0
        %v4396 = vand.u32 %v4286, 4294901760
        %v4397 = vsub.f32 %v4286, %v4396
        %v4398 = vand.u32 %v4397, 4294901760
        %v4399 = vsub.f32 %v4397, %v4398
        %v4400 = vand.u32 %v4399, 4294901760
        %4401 = vmatpush1.msra.mxu0 %v4400
        %4402 = vmatprep.subr.mxu0 0.0
        %v4403 = vand.u32 %v4285, 4294901760
        %v4404 = vsub.f32 %v4285, %v4403
        %v4405 = vand.u32 %v4404, 4294901760
        %v4406 = vsub.f32 %v4404, %v4405
        %v4407 = vand.u32 %v4406, 4294901760
        %4408 = vmatpush1.msra.mxu0 %v4407
        %4409 = vmatprep.subr.mxu0 0.0
        %4410 = vmatpush2.msra.mxu0 0.0
        %4411 = vmatprep.subr.mxu0 0.0
        %4412 = vmatpush2.msra.mxu0 0.0
        %4413 = vmatprep.subr.mxu0 0.0
        %4414 = vmatpush2.msra.mxu0 0.0
        %4415 = vmatprep.subr.mxu0 0.0
        %4416 = vmatpush2.msra.mxu0 0.0
        %4417 = vmatprep.subr.mxu0 0.0
        %4418 = vmatpush2.msra.mxu0 0.0
        %4419 = vmatprep.subr.mxu0 0.0
        %4420 = vmatpush2.msra.mxu0 0.0
        %4421 = vmatprep.subr.mxu0 0.0
        %4422 = vmatpush2.msra.mxu0 0.0
        %4423 = vmatprep.subr.mxu0 0.0
        %4424 = vmatpush2.msra.mxu0 0.0
        %4425 = vmatprep.subr.mxu0 0.0
        %4426 = vmatpush2.msra.mxu0 0.0
        %4427 = vmatprep.subr.mxu0 0.0
        %4428 = vmatpush2.msra.mxu0 0.0
        %4429 = vmatprep.subr.mxu0 0.0
        %4430 = vmatpush2.msra.mxu0 0.0
        %4431 = vmatprep.subr.mxu0 0.0
        %4432 = vmatpush2.msra.mxu0 0.0
        %4433 = vmatprep.subr.mxu0 0.0
        %4434 = vmatpush2.msra.mxu0 0.0
        %4435 = vmatprep.subr.mxu0 0.0
        %4436 = vmatpush2.msra.mxu0 0.0
        %4437 = vmatprep.subr.mxu0 0.0
        %4438 = vmatpush2.msra.mxu0 0.0
        %4439 = vmatprep.subr.mxu0 0.0
        %4440 = vmatpush2.msra.mxu0 0.0
        %4441 = vmatprep.mubr.f32.mxu0 0.0
        %v4442 = vand.u32 %v4288, 4294901760
        %4443 = vmatmul.mubr.f32.gmra.mxu0 %v4442
        %v4444 = vpop.f32.mrf.mxu0
        %v4445 = vadd.f32 %v4364, %v4444
        %v4446 = vpop.f32.mrf.mxu0
        %4447 = vdwg.mxu0
        %4448 = vmatprep.subr.mxu0 0.0
        %4449 = vmatpush1.msra.mxu0 0.0
        %4450 = vmatprep.subr.mxu0 0.0
        %4451 = vmatpush1.msra.mxu0 0.0
        %4452 = vmatprep.subr.mxu0 0.0
        %4453 = vmatpush1.msra.mxu0 0.0
        %4454 = vmatprep.subr.mxu0 0.0
        %4455 = vmatpush1.msra.mxu0 0.0
        %4456 = vmatprep.subr.mxu0 0.0
        %4457 = vmatpush1.msra.mxu0 0.0
        %4458 = vmatprep.subr.mxu0 0.0
        %4459 = vmatpush1.msra.mxu0 0.0
        %4460 = vmatprep.subr.mxu0 0.0
        %4461 = vmatpush1.msra.mxu0 0.0
        %4462 = vmatprep.subr.mxu0 0.0
        %4463 = vmatpush1.msra.mxu0 0.0
        %4464 = vmatprep.subr.mxu0 0.0
        %4465 = vmatpush1.msra.mxu0 0.0
        %4466 = vmatprep.subr.mxu0 0.0
        %4467 = vmatpush1.msra.mxu0 0.0
        %4468 = vmatprep.subr.mxu0 0.0
        %4469 = vmatpush1.msra.mxu0 0.0
        %4470 = vmatprep.subr.mxu0 0.0
        %4471 = vmatpush1.msra.mxu0 0.0
        %4472 = vmatprep.subr.mxu0 0.0
        %4473 = vmatpush1.msra.mxu0 0.0
        %4474 = vmatprep.subr.mxu0 0.0
        %4475 = vmatpush1.msra.mxu0 0.0
        %4476 = vmatprep.subr.mxu0 0.0
        %v4477 = vand.u32 %v4286, 4294901760
        %v4478 = vsub.f32 %v4286, %v4477
        %4479 = vmatpush1.msra.mxu0 %v4478
        %4480 = vmatprep.subr.mxu0 0.0
        %v4481 = vand.u32 %v4285, 4294901760
        %v4482 = vsub.f32 %v4285, %v4481
        %4483 = vmatpush1.msra.mxu0 %v4482
        %4484 = vmatprep.subr.mxu0 0.0
        %4485 = vmatpush2.msra.mxu0 0.0
        %4486 = vmatprep.subr.mxu0 0.0
        %4487 = vmatpush2.msra.mxu0 0.0
        %4488 = vmatprep.subr.mxu0 0.0
        %4489 = vmatpush2.msra.mxu0 0.0
        %4490 = vmatprep.subr.mxu0 0.0
        %4491 = vmatpush2.msra.mxu0 0.0
        %4492 = vmatprep.subr.mxu0 0.0
        %4493 = vmatpush2.msra.mxu0 0.0
        %4494 = vmatprep.subr.mxu0 0.0
        %4495 = vmatpush2.msra.mxu0 0.0
        %4496 = vmatprep.subr.mxu0 0.0
        %4497 = vmatpush2.msra.mxu0 0.0
        %4498 = vmatprep.subr.mxu0 0.0
        %4499 = vmatpush2.msra.mxu0 0.0
        %4500 = vmatprep.subr.mxu0 0.0
        %4501 = vmatpush2.msra.mxu0 0.0
        %4502 = vmatprep.subr.mxu0 0.0
        %4503 = vmatpush2.msra.mxu0 0.0
        %4504 = vmatprep.subr.mxu0 0.0
        %4505 = vmatpush2.msra.mxu0 0.0
        %4506 = vmatprep.subr.mxu0 0.0
        %4507 = vmatpush2.msra.mxu0 0.0
        %4508 = vmatprep.subr.mxu0 0.0
        %4509 = vmatpush2.msra.mxu0 0.0
        %4510 = vmatprep.subr.mxu0 0.0
        %4511 = vmatpush2.msra.mxu0 0.0
        %4512 = vmatprep.subr.mxu0 0.0
        %4513 = vmatpush2.msra.mxu0 0.0
        %4514 = vmatprep.subr.mxu0 0.0
        %4515 = vmatpush2.msra.mxu0 0.0
        %4516 = vmatprep.mubr.f32.mxu0 0.0
        %v4517 = vand.u32 %v4288, 4294901760
        %v4518 = vsub.f32 %v4288, %v4517
        %4519 = vmatmul.mubr.f32.gmra.mxu0 %v4518
        %v4520 = vpop.f32.mrf.mxu0
        %v4521 = vadd.f32 %v4445, %v4520
        %v4522 = vpop.f32.mrf.mxu0
        %4523 = vdwg.mxu0
        %4524 = vmatprep.subr.mxu0 0.0
        %4525 = vmatpush1.msra.mxu0 0.0
        %4526 = vmatprep.subr.mxu0 0.0
        %4527 = vmatpush1.msra.mxu0 0.0
        %4528 = vmatprep.subr.mxu0 0.0
        %4529 = vmatpush1.msra.mxu0 0.0
        %4530 = vmatprep.subr.mxu0 0.0
        %4531 = vmatpush1.msra.mxu0 0.0
        %4532 = vmatprep.subr.mxu0 0.0
        %4533 = vmatpush1.msra.mxu0 0.0
        %4534 = vmatprep.subr.mxu0 0.0
        %4535 = vmatpush1.msra.mxu0 0.0
        %4536 = vmatprep.subr.mxu0 0.0
        %4537 = vmatpush1.msra.mxu0 0.0
        %4538 = vmatprep.subr.mxu0 0.0
        %4539 = vmatpush1.msra.mxu0 0.0
        %4540 = vmatprep.subr.mxu0 0.0
        %4541 = vmatpush1.msra.mxu0 0.0
        %4542 = vmatprep.subr.mxu0 0.0
        %4543 = vmatpush1.msra.mxu0 0.0
        %4544 = vmatprep.subr.mxu0 0.0
        %4545 = vmatpush1.msra.mxu0 0.0
        %4546 = vmatprep.subr.mxu0 0.0
        %4547 = vmatpush1.msra.mxu0 0.0
        %4548 = vmatprep.subr.mxu0 0.0
        %4549 = vmatpush1.msra.mxu0 0.0
        %4550 = vmatprep.subr.mxu0 0.0
        %4551 = vmatpush1.msra.mxu0 0.0
        %4552 = vmatprep.subr.mxu0 0.0
        %v4553 = vand.u32 %v4286, 4294901760
        %4554 = vmatpush1.msra.mxu0 %v4553
        %4555 = vmatprep.subr.mxu0 0.0
        %v4556 = vand.u32 %v4285, 4294901760
        %4557 = vmatpush1.msra.mxu0 %v4556
        %4558 = vmatprep.subr.mxu0 0.0
        %4559 = vmatpush2.msra.mxu0 0.0
        %4560 = vmatprep.subr.mxu0 0.0
        %4561 = vmatpush2.msra.mxu0 0.0
        %4562 = vmatprep.subr.mxu0 0.0
        %4563 = vmatpush2.msra.mxu0 0.0
        %4564 = vmatprep.subr.mxu0 0.0
        %4565 = vmatpush2.msra.mxu0 0.0
        %4566 = vmatprep.subr.mxu0 0.0
        %4567 = vmatpush2.msra.mxu0 0.0
        %4568 = vmatprep.subr.mxu0 0.0
        %4569 = vmatpush2.msra.mxu0 0.0
        %4570 = vmatprep.subr.mxu0 0.0
        %4571 = vmatpush2.msra.mxu0 0.0
        %4572 = vmatprep.subr.mxu0 0.0
        %4573 = vmatpush2.msra.mxu0 0.0
        %4574 = vmatprep.subr.mxu0 0.0
        %4575 = vmatpush2.msra.mxu0 0.0
        %4576 = vmatprep.subr.mxu0 0.0
        %4577 = vmatpush2.msra.mxu0 0.0
        %4578 = vmatprep.subr.mxu0 0.0
        %4579 = vmatpush2.msra.mxu0 0.0
        %4580 = vmatprep.subr.mxu0 0.0
        %4581 = vmatpush2.msra.mxu0 0.0
        %4582 = vmatprep.subr.mxu0 0.0
        %4583 = vmatpush2.msra.mxu0 0.0
        %4584 = vmatprep.subr.mxu0 0.0
        %4585 = vmatpush2.msra.mxu0 0.0
        %4586 = vmatprep.subr.mxu0 0.0
        %4587 = vmatpush2.msra.mxu0 0.0
        %4588 = vmatprep.subr.mxu0 0.0
        %4589 = vmatpush2.msra.mxu0 0.0
        %4590 = vmatprep.mubr.f32.mxu0 0.0
        %v4591 = vand.u32 %v4288, 4294901760
        %v4592 = vsub.f32 %v4288, %v4591
        %v4593 = vand.u32 %v4592, 4294901760
        %4594 = vmatmul.mubr.f32.gmra.mxu0 %v4593
        %v4595 = vpop.f32.mrf.mxu0
        %v4596 = vadd.f32 %v4521, %v4595
        %v4597 = vpop.f32.mrf.mxu0
        %4598 = vdwg.mxu0
        %4599 = vmatprep.subr.mxu0 0.0
        %4600 = vmatpush1.msra.mxu0 0.0
        %4601 = vmatprep.subr.mxu0 0.0
        %4602 = vmatpush1.msra.mxu0 0.0
        %4603 = vmatprep.subr.mxu0 0.0
        %4604 = vmatpush1.msra.mxu0 0.0
        %4605 = vmatprep.subr.mxu0 0.0
        %4606 = vmatpush1.msra.mxu0 0.0
        %4607 = vmatprep.subr.mxu0 0.0
        %4608 = vmatpush1.msra.mxu0 0.0
        %4609 = vmatprep.subr.mxu0 0.0
        %4610 = vmatpush1.msra.mxu0 0.0
        %4611 = vmatprep.subr.mxu0 0.0
        %4612 = vmatpush1.msra.mxu0 0.0
        %4613 = vmatprep.subr.mxu0 0.0
        %4614 = vmatpush1.msra.mxu0 0.0
        %4615 = vmatprep.subr.mxu0 0.0
        %4616 = vmatpush1.msra.mxu0 0.0
        %4617 = vmatprep.subr.mxu0 0.0
        %4618 = vmatpush1.msra.mxu0 0.0
        %4619 = vmatprep.subr.mxu0 0.0
        %4620 = vmatpush1.msra.mxu0 0.0
        %4621 = vmatprep.subr.mxu0 0.0
        %4622 = vmatpush1.msra.mxu0 0.0
        %4623 = vmatprep.subr.mxu0 0.0
        %4624 = vmatpush1.msra.mxu0 0.0
        %4625 = vmatprep.subr.mxu0 0.0
        %4626 = vmatpush1.msra.mxu0 0.0
        %4627 = vmatprep.subr.mxu0 0.0
        %v4628 = vand.u32 %v4286, 4294901760
        %v4629 = vsub.f32 %v4286, %v4628
        %v4630 = vand.u32 %v4629, 4294901760
        %4631 = vmatpush1.msra.mxu0 %v4630
        %4632 = vmatprep.subr.mxu0 0.0
        %v4633 = vand.u32 %v4285, 4294901760
        %v4634 = vsub.f32 %v4285, %v4633
        %v4635 = vand.u32 %v4634, 4294901760
        %4636 = vmatpush1.msra.mxu0 %v4635
        %4637 = vmatprep.subr.mxu0 0.0
        %4638 = vmatpush2.msra.mxu0 0.0
        %4639 = vmatprep.subr.mxu0 0.0
        %4640 = vmatpush2.msra.mxu0 0.0
        %4641 = vmatprep.subr.mxu0 0.0
        %4642 = vmatpush2.msra.mxu0 0.0
        %4643 = vmatprep.subr.mxu0 0.0
        %4644 = vmatpush2.msra.mxu0 0.0
        %4645 = vmatprep.subr.mxu0 0.0
        %4646 = vmatpush2.msra.mxu0 0.0
        %4647 = vmatprep.subr.mxu0 0.0
        %4648 = vmatpush2.msra.mxu0 0.0
        %4649 = vmatprep.subr.mxu0 0.0
        %4650 = vmatpush2.msra.mxu0 0.0
        %4651 = vmatprep.subr.mxu0 0.0
        %4652 = vmatpush2.msra.mxu0 0.0
        %4653 = vmatprep.subr.mxu0 0.0
        %4654 = vmatpush2.msra.mxu0 0.0
        %4655 = vmatprep.subr.mxu0 0.0
        %4656 = vmatpush2.msra.mxu0 0.0
        %4657 = vmatprep.subr.mxu0 0.0
        %4658 = vmatpush2.msra.mxu0 0.0
        %4659 = vmatprep.subr.mxu0 0.0
        %4660 = vmatpush2.msra.mxu0 0.0
        %4661 = vmatprep.subr.mxu0 0.0
        %4662 = vmatpush2.msra.mxu0 0.0
        %4663 = vmatprep.subr.mxu0 0.0
        %4664 = vmatpush2.msra.mxu0 0.0
        %4665 = vmatprep.subr.mxu0 0.0
        %4666 = vmatpush2.msra.mxu0 0.0
        %4667 = vmatprep.subr.mxu0 0.0
        %4668 = vmatpush2.msra.mxu0 0.0
        %4669 = vmatprep.mubr.f32.mxu0 0.0
        %v4670 = vand.u32 %v4288, 4294901760
        %4671 = vmatmul.mubr.f32.gmra.mxu0 %v4670
        %v4672 = vpop.f32.mrf.mxu0
        %v4673 = vadd.f32 %v4596, %v4672
        %v4674 = vpop.f32.mrf.mxu0
        %4675 = vdwg.mxu0
        %4676 = vmatprep.subr.mxu0 0.0
        %4677 = vmatpush1.msra.mxu0 0.0
        %4678 = vmatprep.subr.mxu0 0.0
        %4679 = vmatpush1.msra.mxu0 0.0
        %4680 = vmatprep.subr.mxu0 0.0
        %4681 = vmatpush1.msra.mxu0 0.0
        %4682 = vmatprep.subr.mxu0 0.0
        %4683 = vmatpush1.msra.mxu0 0.0
        %4684 = vmatprep.subr.mxu0 0.0
        %4685 = vmatpush1.msra.mxu0 0.0
        %4686 = vmatprep.subr.mxu0 0.0
        %4687 = vmatpush1.msra.mxu0 0.0
        %4688 = vmatprep.subr.mxu0 0.0
        %4689 = vmatpush1.msra.mxu0 0.0
        %4690 = vmatprep.subr.mxu0 0.0
        %4691 = vmatpush1.msra.mxu0 0.0
        %4692 = vmatprep.subr.mxu0 0.0
        %4693 = vmatpush1.msra.mxu0 0.0
        %4694 = vmatprep.subr.mxu0 0.0
        %4695 = vmatpush1.msra.mxu0 0.0
        %4696 = vmatprep.subr.mxu0 0.0
        %4697 = vmatpush1.msra.mxu0 0.0
        %4698 = vmatprep.subr.mxu0 0.0
        %4699 = vmatpush1.msra.mxu0 0.0
        %4700 = vmatprep.subr.mxu0 0.0
        %4701 = vmatpush1.msra.mxu0 0.0
        %4702 = vmatprep.subr.mxu0 0.0
        %4703 = vmatpush1.msra.mxu0 0.0
        %4704 = vmatprep.subr.mxu0 0.0
        %v4705 = vand.u32 %v4286, 4294901760
        %4706 = vmatpush1.msra.mxu0 %v4705
        %4707 = vmatprep.subr.mxu0 0.0
        %v4708 = vand.u32 %v4285, 4294901760
        %4709 = vmatpush1.msra.mxu0 %v4708
        %4710 = vmatprep.subr.mxu0 0.0
        %4711 = vmatpush2.msra.mxu0 0.0
        %4712 = vmatprep.subr.mxu0 0.0
        %4713 = vmatpush2.msra.mxu0 0.0
        %4714 = vmatprep.subr.mxu0 0.0
        %4715 = vmatpush2.msra.mxu0 0.0
        %4716 = vmatprep.subr.mxu0 0.0
        %4717 = vmatpush2.msra.mxu0 0.0
        %4718 = vmatprep.subr.mxu0 0.0
        %4719 = vmatpush2.msra.mxu0 0.0
        %4720 = vmatprep.subr.mxu0 0.0
        %4721 = vmatpush2.msra.mxu0 0.0
        %4722 = vmatprep.subr.mxu0 0.0
        %4723 = vmatpush2.msra.mxu0 0.0
        %4724 = vmatprep.subr.mxu0 0.0
        %4725 = vmatpush2.msra.mxu0 0.0
        %4726 = vmatprep.subr.mxu0 0.0
        %4727 = vmatpush2.msra.mxu0 0.0
        %4728 = vmatprep.subr.mxu0 0.0
        %4729 = vmatpush2.msra.mxu0 0.0
        %4730 = vmatprep.subr.mxu0 0.0
        %4731 = vmatpush2.msra.mxu0 0.0
        %4732 = vmatprep.subr.mxu0 0.0
        %4733 = vmatpush2.msra.mxu0 0.0
        %4734 = vmatprep.subr.mxu0 0.0
        %4735 = vmatpush2.msra.mxu0 0.0
        %4736 = vmatprep.subr.mxu0 0.0
        %4737 = vmatpush2.msra.mxu0 0.0
        %4738 = vmatprep.subr.mxu0 0.0
        %4739 = vmatpush2.msra.mxu0 0.0
        %4740 = vmatprep.subr.mxu0 0.0
        %4741 = vmatpush2.msra.mxu0 0.0
        %4742 = vmatprep.mubr.f32.mxu0 0.0
        %v4743 = vand.u32 %v4288, 4294901760
        %4744 = vmatmul.mubr.f32.gmra.mxu0 %v4743
        %v4745 = vpop.f32.mrf.mxu0
        %v4746 = vadd.f32 %v4673, %v4745
        %v4747 = vpop.f32.mrf.mxu0
        %4748 = vdwg.mxu0
        %v4750 = vsel %vm2851, %v2350, 0
        %4752 = vmatprep.subr.mxu0 0.0
        %4753 = vmatpush1.msra.mxu0 0.0
        %4754 = vmatprep.subr.mxu0 0.0
        %4755 = vmatpush1.msra.mxu0 0.0
        %4756 = vmatprep.subr.mxu0 0.0
        %4757 = vmatpush1.msra.mxu0 0.0
        %4758 = vmatprep.subr.mxu0 0.0
        %4759 = vmatpush1.msra.mxu0 0.0
        %4760 = vmatprep.subr.mxu0 0.0
        %4761 = vmatpush1.msra.mxu0 0.0
        %4762 = vmatprep.subr.mxu0 0.0
        %4763 = vmatpush1.msra.mxu0 0.0
        %4764 = vmatprep.subr.mxu0 0.0
        %4765 = vmatpush1.msra.mxu0 0.0
        %4766 = vmatprep.subr.mxu0 0.0
        %4767 = vmatpush1.msra.mxu0 0.0
        %4768 = vmatprep.subr.mxu0 0.0
        %4769 = vmatpush1.msra.mxu0 0.0
        %4770 = vmatprep.subr.mxu0 0.0
        %4771 = vmatpush1.msra.mxu0 0.0
        %4772 = vmatprep.subr.mxu0 0.0
        %4773 = vmatpush1.msra.mxu0 0.0
        %4774 = vmatprep.subr.mxu0 0.0
        %4775 = vmatpush1.msra.mxu0 0.0
        %4776 = vmatprep.subr.mxu0 0.0
        %4777 = vmatpush1.msra.mxu0 0.0
        %4778 = vmatprep.subr.mxu0 0.0
        %4779 = vmatpush1.msra.mxu0 0.0
        %4780 = vmatprep.subr.mxu0 0.0
        %v4781 = vand.u32 %v4286, 4294901760
        %4782 = vmatpush1.msra.mxu0 %v4781
        %4783 = vmatprep.subr.mxu0 0.0
        %v4784 = vand.u32 %v4285, 4294901760
        %4785 = vmatpush1.msra.mxu0 %v4784
        %4786 = vmatprep.subr.mxu0 0.0
        %4787 = vmatpush2.msra.mxu0 0.0
        %4788 = vmatprep.subr.mxu0 0.0
        %4789 = vmatpush2.msra.mxu0 0.0
        %4790 = vmatprep.subr.mxu0 0.0
        %4791 = vmatpush2.msra.mxu0 0.0
        %4792 = vmatprep.subr.mxu0 0.0
        %4793 = vmatpush2.msra.mxu0 0.0
        %4794 = vmatprep.subr.mxu0 0.0
        %4795 = vmatpush2.msra.mxu0 0.0
        %4796 = vmatprep.subr.mxu0 0.0
        %4797 = vmatpush2.msra.mxu0 0.0
        %4798 = vmatprep.subr.mxu0 0.0
        %4799 = vmatpush2.msra.mxu0 0.0
        %4800 = vmatprep.subr.mxu0 0.0
        %4801 = vmatpush2.msra.mxu0 0.0
        %4802 = vmatprep.subr.mxu0 0.0
        %4803 = vmatpush2.msra.mxu0 0.0
        %4804 = vmatprep.subr.mxu0 0.0
        %4805 = vmatpush2.msra.mxu0 0.0
        %4806 = vmatprep.subr.mxu0 0.0
        %4807 = vmatpush2.msra.mxu0 0.0
        %4808 = vmatprep.subr.mxu0 0.0
        %4809 = vmatpush2.msra.mxu0 0.0
        %4810 = vmatprep.subr.mxu0 0.0
        %4811 = vmatpush2.msra.mxu0 0.0
        %4812 = vmatprep.subr.mxu0 0.0
        %4813 = vmatpush2.msra.mxu0 0.0
        %4814 = vmatprep.subr.mxu0 0.0
        %4815 = vmatpush2.msra.mxu0 0.0
        %4816 = vmatprep.subr.mxu0 0.0
        %4817 = vmatpush2.msra.mxu0 0.0
        %4818 = vmatprep.mubr.f32.mxu0 0.0
        %v4819 = vand.u32 %v4750, 4294901760
        %v4820 = vsub.f32 %v4750, %v4819
        %v4821 = vand.u32 %v4820, 4294901760
        %v4822 = vsub.f32 %v4820, %v4821
        %v4823 = vand.u32 %v4822, 4294901760
        %4824 = vmatmul.mubr.f32.gmra.mxu0 %v4823
        %v4825 = vpop.f32.mrf.mxu0
        %v4826 = vadd.f32 0.0, %v4825
        %v4827 = vpop.f32.mrf.mxu0
        %4828 = vdwg.mxu0
        %4829 = vmatprep.subr.mxu0 0.0
        %4830 = vmatpush1.msra.mxu0 0.0
        %4831 = vmatprep.subr.mxu0 0.0
        %4832 = vmatpush1.msra.mxu0 0.0
        %4833 = vmatprep.subr.mxu0 0.0
        %4834 = vmatpush1.msra.mxu0 0.0
        %4835 = vmatprep.subr.mxu0 0.0
        %4836 = vmatpush1.msra.mxu0 0.0
        %4837 = vmatprep.subr.mxu0 0.0
        %4838 = vmatpush1.msra.mxu0 0.0
        %4839 = vmatprep.subr.mxu0 0.0
        %4840 = vmatpush1.msra.mxu0 0.0
        %4841 = vmatprep.subr.mxu0 0.0
        %4842 = vmatpush1.msra.mxu0 0.0
        %4843 = vmatprep.subr.mxu0 0.0
        %4844 = vmatpush1.msra.mxu0 0.0
        %4845 = vmatprep.subr.mxu0 0.0
        %4846 = vmatpush1.msra.mxu0 0.0
        %4847 = vmatprep.subr.mxu0 0.0
        %4848 = vmatpush1.msra.mxu0 0.0
        %4849 = vmatprep.subr.mxu0 0.0
        %4850 = vmatpush1.msra.mxu0 0.0
        %4851 = vmatprep.subr.mxu0 0.0
        %4852 = vmatpush1.msra.mxu0 0.0
        %4853 = vmatprep.subr.mxu0 0.0
        %4854 = vmatpush1.msra.mxu0 0.0
        %4855 = vmatprep.subr.mxu0 0.0
        %4856 = vmatpush1.msra.mxu0 0.0
        %4857 = vmatprep.subr.mxu0 0.0
        %v4858 = vand.u32 %v4286, 4294901760
        %v4859 = vsub.f32 %v4286, %v4858
        %v4860 = vand.u32 %v4859, 4294901760
        %v4861 = vsub.f32 %v4859, %v4860
        %v4862 = vand.u32 %v4861, 4294901760
        %4863 = vmatpush1.msra.mxu0 %v4862
        %4864 = vmatprep.subr.mxu0 0.0
        %v4865 = vand.u32 %v4285, 4294901760
        %v4866 = vsub.f32 %v4285, %v4865
        %v4867 = vand.u32 %v4866, 4294901760
        %v4868 = vsub.f32 %v4866, %v4867
        %v4869 = vand.u32 %v4868, 4294901760
        %4870 = vmatpush1.msra.mxu0 %v4869
        %4871 = vmatprep.subr.mxu0 0.0
        %4872 = vmatpush2.msra.mxu0 0.0
        %4873 = vmatprep.subr.mxu0 0.0
        %4874 = vmatpush2.msra.mxu0 0.0
        %4875 = vmatprep.subr.mxu0 0.0
        %4876 = vmatpush2.msra.mxu0 0.0
        %4877 = vmatprep.subr.mxu0 0.0
        %4878 = vmatpush2.msra.mxu0 0.0
        %4879 = vmatprep.subr.mxu0 0.0
        %4880 = vmatpush2.msra.mxu0 0.0
        %4881 = vmatprep.subr.mxu0 0.0
        %4882 = vmatpush2.msra.mxu0 0.0
        %4883 = vmatprep.subr.mxu0 0.0
        %4884 = vmatpush2.msra.mxu0 0.0
        %4885 = vmatprep.subr.mxu0 0.0
        %4886 = vmatpush2.msra.mxu0 0.0
        %4887 = vmatprep.subr.mxu0 0.0
        %4888 = vmatpush2.msra.mxu0 0.0
        %4889 = vmatprep.subr.mxu0 0.0
        %4890 = vmatpush2.msra.mxu0 0.0
        %4891 = vmatprep.subr.mxu0 0.0
        %4892 = vmatpush2.msra.mxu0 0.0
        %4893 = vmatprep.subr.mxu0 0.0
        %4894 = vmatpush2.msra.mxu0 0.0
        %4895 = vmatprep.subr.mxu0 0.0
        %4896 = vmatpush2.msra.mxu0 0.0
        %4897 = vmatprep.subr.mxu0 0.0
        %4898 = vmatpush2.msra.mxu0 0.0
        %4899 = vmatprep.subr.mxu0 0.0
        %4900 = vmatpush2.msra.mxu0 0.0
        %4901 = vmatprep.subr.mxu0 0.0
        %4902 = vmatpush2.msra.mxu0 0.0
        %4903 = vmatprep.mubr.f32.mxu0 0.0
        %v4904 = vand.u32 %v4750, 4294901760
        %4905 = vmatmul.mubr.f32.gmra.mxu0 %v4904
        %v4906 = vpop.f32.mrf.mxu0
        %v4907 = vadd.f32 %v4826, %v4906
        %v4908 = vpop.f32.mrf.mxu0
        %4909 = vdwg.mxu0
        %4910 = vmatprep.subr.mxu0 0.0
        %4911 = vmatpush1.msra.mxu0 0.0
        %4912 = vmatprep.subr.mxu0 0.0
        %4913 = vmatpush1.msra.mxu0 0.0
        %4914 = vmatprep.subr.mxu0 0.0
        %4915 = vmatpush1.msra.mxu0 0.0
        %4916 = vmatprep.subr.mxu0 0.0
        %4917 = vmatpush1.msra.mxu0 0.0
        %4918 = vmatprep.subr.mxu0 0.0
        %4919 = vmatpush1.msra.mxu0 0.0
        %4920 = vmatprep.subr.mxu0 0.0
        %4921 = vmatpush1.msra.mxu0 0.0
        %4922 = vmatprep.subr.mxu0 0.0
        %4923 = vmatpush1.msra.mxu0 0.0
        %4924 = vmatprep.subr.mxu0 0.0
        %4925 = vmatpush1.msra.mxu0 0.0
        %4926 = vmatprep.subr.mxu0 0.0
        %4927 = vmatpush1.msra.mxu0 0.0
        %4928 = vmatprep.subr.mxu0 0.0
        %4929 = vmatpush1.msra.mxu0 0.0
        %4930 = vmatprep.subr.mxu0 0.0
        %4931 = vmatpush1.msra.mxu0 0.0
        %4932 = vmatprep.subr.mxu0 0.0
        %4933 = vmatpush1.msra.mxu0 0.0
        %4934 = vmatprep.subr.mxu0 0.0
        %4935 = vmatpush1.msra.mxu0 0.0
        %4936 = vmatprep.subr.mxu0 0.0
        %4937 = vmatpush1.msra.mxu0 0.0
        %4938 = vmatprep.subr.mxu0 0.0
        %v4939 = vand.u32 %v4286, 4294901760
        %v4940 = vsub.f32 %v4286, %v4939
        %4941 = vmatpush1.msra.mxu0 %v4940
        %4942 = vmatprep.subr.mxu0 0.0
        %v4943 = vand.u32 %v4285, 4294901760
        %v4944 = vsub.f32 %v4285, %v4943
        %4945 = vmatpush1.msra.mxu0 %v4944
        %4946 = vmatprep.subr.mxu0 0.0
        %4947 = vmatpush2.msra.mxu0 0.0
        %4948 = vmatprep.subr.mxu0 0.0
        %4949 = vmatpush2.msra.mxu0 0.0
        %4950 = vmatprep.subr.mxu0 0.0
        %4951 = vmatpush2.msra.mxu0 0.0
        %4952 = vmatprep.subr.mxu0 0.0
        %4953 = vmatpush2.msra.mxu0 0.0
        %4954 = vmatprep.subr.mxu0 0.0
        %4955 = vmatpush2.msra.mxu0 0.0
        %4956 = vmatprep.subr.mxu0 0.0
        %4957 = vmatpush2.msra.mxu0 0.0
        %4958 = vmatprep.subr.mxu0 0.0
        %4959 = vmatpush2.msra.mxu0 0.0
        %4960 = vmatprep.subr.mxu0 0.0
        %4961 = vmatpush2.msra.mxu0 0.0
        %4962 = vmatprep.subr.mxu0 0.0
        %4963 = vmatpush2.msra.mxu0 0.0
        %4964 = vmatprep.subr.mxu0 0.0
        %4965 = vmatpush2.msra.mxu0 0.0
        %4966 = vmatprep.subr.mxu0 0.0
        %4967 = vmatpush2.msra.mxu0 0.0
        %4968 = vmatprep.subr.mxu0 0.0
        %4969 = vmatpush2.msra.mxu0 0.0
        %4970 = vmatprep.subr.mxu0 0.0
        %4971 = vmatpush2.msra.mxu0 0.0
        %4972 = vmatprep.subr.mxu0 0.0
        %4973 = vmatpush2.msra.mxu0 0.0
        %4974 = vmatprep.subr.mxu0 0.0
        %4975 = vmatpush2.msra.mxu0 0.0
        %4976 = vmatprep.subr.mxu0 0.0
        %4977 = vmatpush2.msra.mxu0 0.0
        %4978 = vmatprep.mubr.f32.mxu0 0.0
        %v4979 = vand.u32 %v4750, 4294901760
        %v4980 = vsub.f32 %v4750, %v4979
        %4981 = vmatmul.mubr.f32.gmra.mxu0 %v4980
        %v4982 = vpop.f32.mrf.mxu0
        %v4983 = vadd.f32 %v4907, %v4982
        %v4984 = vpop.f32.mrf.mxu0
        %4985 = vdwg.mxu0
        %4986 = vmatprep.subr.mxu0 0.0
        %4987 = vmatpush1.msra.mxu0 0.0
        %4988 = vmatprep.subr.mxu0 0.0
        %4989 = vmatpush1.msra.mxu0 0.0
        %4990 = vmatprep.subr.mxu0 0.0
        %4991 = vmatpush1.msra.mxu0 0.0
        %4992 = vmatprep.subr.mxu0 0.0
        %4993 = vmatpush1.msra.mxu0 0.0
        %4994 = vmatprep.subr.mxu0 0.0
        %4995 = vmatpush1.msra.mxu0 0.0
        %4996 = vmatprep.subr.mxu0 0.0
        %4997 = vmatpush1.msra.mxu0 0.0
        %4998 = vmatprep.subr.mxu0 0.0
        %4999 = vmatpush1.msra.mxu0 0.0
        %5000 = vmatprep.subr.mxu0 0.0
        %5001 = vmatpush1.msra.mxu0 0.0
        %5002 = vmatprep.subr.mxu0 0.0
        %5003 = vmatpush1.msra.mxu0 0.0
        %5004 = vmatprep.subr.mxu0 0.0
        %5005 = vmatpush1.msra.mxu0 0.0
        %5006 = vmatprep.subr.mxu0 0.0
        %5007 = vmatpush1.msra.mxu0 0.0
        %5008 = vmatprep.subr.mxu0 0.0
        %5009 = vmatpush1.msra.mxu0 0.0
        %5010 = vmatprep.subr.mxu0 0.0
        %5011 = vmatpush1.msra.mxu0 0.0
        %5012 = vmatprep.subr.mxu0 0.0
        %5013 = vmatpush1.msra.mxu0 0.0
        %5014 = vmatprep.subr.mxu0 0.0
        %v5015 = vand.u32 %v4286, 4294901760
        %5016 = vmatpush1.msra.mxu0 %v5015
        %5017 = vmatprep.subr.mxu0 0.0
        %v5018 = vand.u32 %v4285, 4294901760
        %5019 = vmatpush1.msra.mxu0 %v5018
        %5020 = vmatprep.subr.mxu0 0.0
        %5021 = vmatpush2.msra.mxu0 0.0
        %5022 = vmatprep.subr.mxu0 0.0
        %5023 = vmatpush2.msra.mxu0 0.0
        %5024 = vmatprep.subr.mxu0 0.0
        %5025 = vmatpush2.msra.mxu0 0.0
        %5026 = vmatprep.subr.mxu0 0.0
        %5027 = vmatpush2.msra.mxu0 0.0
        %5028 = vmatprep.subr.mxu0 0.0
        %5029 = vmatpush2.msra.mxu0 0.0
        %5030 = vmatprep.subr.mxu0 0.0
        %5031 = vmatpush2.msra.mxu0 0.0
        %5032 = vmatprep.subr.mxu0 0.0
        %5033 = vmatpush2.msra.mxu0 0.0
        %5034 = vmatprep.subr.mxu0 0.0
        %5035 = vmatpush2.msra.mxu0 0.0
        %5036 = vmatprep.subr.mxu0 0.0
        %5037 = vmatpush2.msra.mxu0 0.0
        %5038 = vmatprep.subr.mxu0 0.0
        %5039 = vmatpush2.msra.mxu0 0.0
        %5040 = vmatprep.subr.mxu0 0.0
        %5041 = vmatpush2.msra.mxu0 0.0
        %5042 = vmatprep.subr.mxu0 0.0
        %5043 = vmatpush2.msra.mxu0 0.0
        %5044 = vmatprep.subr.mxu0 0.0
        %5045 = vmatpush2.msra.mxu0 0.0
        %5046 = vmatprep.subr.mxu0 0.0
        %5047 = vmatpush2.msra.mxu0 0.0
        %5048 = vmatprep.subr.mxu0 0.0
        %5049 = vmatpush2.msra.mxu0 0.0
        %5050 = vmatprep.subr.mxu0 0.0
        %5051 = vmatpush2.msra.mxu0 0.0
        %5052 = vmatprep.mubr.f32.mxu0 0.0
        %v5053 = vand.u32 %v4750, 4294901760
        %v5054 = vsub.f32 %v4750, %v5053
        %v5055 = vand.u32 %v5054, 4294901760
        %5056 = vmatmul.mubr.f32.gmra.mxu0 %v5055
        %v5057 = vpop.f32.mrf.mxu0
        %v5058 = vadd.f32 %v4983, %v5057
        %v5059 = vpop.f32.mrf.mxu0
        %5060 = vdwg.mxu0
        %5061 = vmatprep.subr.mxu0 0.0
        %5062 = vmatpush1.msra.mxu0 0.0
        %5063 = vmatprep.subr.mxu0 0.0
        %5064 = vmatpush1.msra.mxu0 0.0
        %5065 = vmatprep.subr.mxu0 0.0
        %5066 = vmatpush1.msra.mxu0 0.0
        %5067 = vmatprep.subr.mxu0 0.0
        %5068 = vmatpush1.msra.mxu0 0.0
        %5069 = vmatprep.subr.mxu0 0.0
        %5070 = vmatpush1.msra.mxu0 0.0
        %5071 = vmatprep.subr.mxu0 0.0
        %5072 = vmatpush1.msra.mxu0 0.0
        %5073 = vmatprep.subr.mxu0 0.0
        %5074 = vmatpush1.msra.mxu0 0.0
        %5075 = vmatprep.subr.mxu0 0.0
        %5076 = vmatpush1.msra.mxu0 0.0
        %5077 = vmatprep.subr.mxu0 0.0
        %5078 = vmatpush1.msra.mxu0 0.0
        %5079 = vmatprep.subr.mxu0 0.0
        %5080 = vmatpush1.msra.mxu0 0.0
        %5081 = vmatprep.subr.mxu0 0.0
        %5082 = vmatpush1.msra.mxu0 0.0
        %5083 = vmatprep.subr.mxu0 0.0
        %5084 = vmatpush1.msra.mxu0 0.0
        %5085 = vmatprep.subr.mxu0 0.0
        %5086 = vmatpush1.msra.mxu0 0.0
        %5087 = vmatprep.subr.mxu0 0.0
        %5088 = vmatpush1.msra.mxu0 0.0
        %5089 = vmatprep.subr.mxu0 0.0
        %v5090 = vand.u32 %v4286, 4294901760
        %v5091 = vsub.f32 %v4286, %v5090
        %v5092 = vand.u32 %v5091, 4294901760
        %5093 = vmatpush1.msra.mxu0 %v5092
        %5094 = vmatprep.subr.mxu0 0.0
        %v5095 = vand.u32 %v4285, 4294901760
        %v5096 = vsub.f32 %v4285, %v5095
        %v5097 = vand.u32 %v5096, 4294901760
        %5098 = vmatpush1.msra.mxu0 %v5097
        %5099 = vmatprep.subr.mxu0 0.0
        %5100 = vmatpush2.msra.mxu0 0.0
        %5101 = vmatprep.subr.mxu0 0.0
        %5102 = vmatpush2.msra.mxu0 0.0
        %5103 = vmatprep.subr.mxu0 0.0
        %5104 = vmatpush2.msra.mxu0 0.0
        %5105 = vmatprep.subr.mxu0 0.0
        %5106 = vmatpush2.msra.mxu0 0.0
        %5107 = vmatprep.subr.mxu0 0.0
        %5108 = vmatpush2.msra.mxu0 0.0
        %5109 = vmatprep.subr.mxu0 0.0
        %5110 = vmatpush2.msra.mxu0 0.0
        %5111 = vmatprep.subr.mxu0 0.0
        %5112 = vmatpush2.msra.mxu0 0.0
        %5113 = vmatprep.subr.mxu0 0.0
        %5114 = vmatpush2.msra.mxu0 0.0
        %5115 = vmatprep.subr.mxu0 0.0
        %5116 = vmatpush2.msra.mxu0 0.0
        %5117 = vmatprep.subr.mxu0 0.0
        %5118 = vmatpush2.msra.mxu0 0.0
        %5119 = vmatprep.subr.mxu0 0.0
        %5120 = vmatpush2.msra.mxu0 0.0
        %5121 = vmatprep.subr.mxu0 0.0
        %5122 = vmatpush2.msra.mxu0 0.0
        %5123 = vmatprep.subr.mxu0 0.0
        %5124 = vmatpush2.msra.mxu0 0.0
        %5125 = vmatprep.subr.mxu0 0.0
        %5126 = vmatpush2.msra.mxu0 0.0
        %5127 = vmatprep.subr.mxu0 0.0
        %5128 = vmatpush2.msra.mxu0 0.0
        %5129 = vmatprep.subr.mxu0 0.0
        %5130 = vmatpush2.msra.mxu0 0.0
        %5131 = vmatprep.mubr.f32.mxu0 0.0
        %v5132 = vand.u32 %v4750, 4294901760
        %5133 = vmatmul.mubr.f32.gmra.mxu0 %v5132
        %v5134 = vpop.f32.mrf.mxu0
        %v5135 = vadd.f32 %v5058, %v5134
        %v5136 = vpop.f32.mrf.mxu0
        %5137 = vdwg.mxu0
        %5138 = vmatprep.subr.mxu0 0.0
        %5139 = vmatpush1.msra.mxu0 0.0
        %5140 = vmatprep.subr.mxu0 0.0
        %5141 = vmatpush1.msra.mxu0 0.0
        %5142 = vmatprep.subr.mxu0 0.0
        %5143 = vmatpush1.msra.mxu0 0.0
        %5144 = vmatprep.subr.mxu0 0.0
        %5145 = vmatpush1.msra.mxu0 0.0
        %5146 = vmatprep.subr.mxu0 0.0
        %5147 = vmatpush1.msra.mxu0 0.0
        %5148 = vmatprep.subr.mxu0 0.0
        %5149 = vmatpush1.msra.mxu0 0.0
        %5150 = vmatprep.subr.mxu0 0.0
        %5151 = vmatpush1.msra.mxu0 0.0
        %5152 = vmatprep.subr.mxu0 0.0
        %5153 = vmatpush1.msra.mxu0 0.0
        %5154 = vmatprep.subr.mxu0 0.0
        %5155 = vmatpush1.msra.mxu0 0.0
        %5156 = vmatprep.subr.mxu0 0.0
        %5157 = vmatpush1.msra.mxu0 0.0
        %5158 = vmatprep.subr.mxu0 0.0
        %5159 = vmatpush1.msra.mxu0 0.0
        %5160 = vmatprep.subr.mxu0 0.0
        %5161 = vmatpush1.msra.mxu0 0.0
        %5162 = vmatprep.subr.mxu0 0.0
        %5163 = vmatpush1.msra.mxu0 0.0
        %5164 = vmatprep.subr.mxu0 0.0
        %5165 = vmatpush1.msra.mxu0 0.0
        %5166 = vmatprep.subr.mxu0 0.0
        %v5167 = vand.u32 %v4286, 4294901760
        %5168 = vmatpush1.msra.mxu0 %v5167
        %5169 = vmatprep.subr.mxu0 0.0
        %v5170 = vand.u32 %v4285, 4294901760
        %5171 = vmatpush1.msra.mxu0 %v5170
        %5172 = vmatprep.subr.mxu0 0.0
        %5173 = vmatpush2.msra.mxu0 0.0
        %5174 = vmatprep.subr.mxu0 0.0
        %5175 = vmatpush2.msra.mxu0 0.0
        %5176 = vmatprep.subr.mxu0 0.0
        %5177 = vmatpush2.msra.mxu0 0.0
        %5178 = vmatprep.subr.mxu0 0.0
        %5179 = vmatpush2.msra.mxu0 0.0
        %5180 = vmatprep.subr.mxu0 0.0
        %5181 = vmatpush2.msra.mxu0 0.0
        %5182 = vmatprep.subr.mxu0 0.0
        %5183 = vmatpush2.msra.mxu0 0.0
        %5184 = vmatprep.subr.mxu0 0.0
        %5185 = vmatpush2.msra.mxu0 0.0
        %5186 = vmatprep.subr.mxu0 0.0
        %5187 = vmatpush2.msra.mxu0 0.0
        %5188 = vmatprep.subr.mxu0 0.0
        %5189 = vmatpush2.msra.mxu0 0.0
        %5190 = vmatprep.subr.mxu0 0.0
        %5191 = vmatpush2.msra.mxu0 0.0
        %5192 = vmatprep.subr.mxu0 0.0
        %5193 = vmatpush2.msra.mxu0 0.0
        %5194 = vmatprep.subr.mxu0 0.0
        %5195 = vmatpush2.msra.mxu0 0.0
        %5196 = vmatprep.subr.mxu0 0.0
        %5197 = vmatpush2.msra.mxu0 0.0
        %5198 = vmatprep.subr.mxu0 0.0
        %5199 = vmatpush2.msra.mxu0 0.0
        %5200 = vmatprep.subr.mxu0 0.0
        %5201 = vmatpush2.msra.mxu0 0.0
        %5202 = vmatprep.subr.mxu0 0.0
        %5203 = vmatpush2.msra.mxu0 0.0
        %5204 = vmatprep.mubr.f32.mxu0 0.0
        %v5205 = vand.u32 %v4750, 4294901760
        %5206 = vmatmul.mubr.f32.gmra.mxu0 %v5205
        %v5207 = vpop.f32.mrf.mxu0
        %v5208 = vadd.f32 %v5135, %v5207
        %v5209 = vpop.f32.mrf.mxu0
        %5210 = vdwg.mxu0
        %5211 = vxpose.xlu0.b32.start [1/16] %v4746, 128
        %5212 = vxpose.xlu0.b32.cont [2/16] 0.0, 128
        %5213 = vxpose.xlu0.b32.cont [3/16] 0.0, 128
        %5214 = vxpose.xlu0.b32.cont [4/16] 0.0, 128
        %5215 = vxpose.xlu0.b32.cont [5/16] 0.0, 128
        %5216 = vxpose.xlu0.b32.cont [6/16] 0.0, 128
        %5217 = vxpose.xlu0.b32.cont [7/16] 0.0, 128
        %5218 = vxpose.xlu0.b32.cont [8/16] 0.0, 128
        %5219 = vxpose.xlu0.b32.cont [9/16] 0.0, 128
        %5220 = vxpose.xlu0.b32.cont [10/16] 0.0, 128
        %5221 = vxpose.xlu0.b32.cont [11/16] 0.0, 128
        %5222 = vxpose.xlu0.b32.cont [12/16] 0.0, 128
        %5223 = vxpose.xlu0.b32.cont [13/16] 0.0, 128
        %5224 = vxpose.xlu0.b32.cont [14/16] 0.0, 128
        %5225 = vxpose.xlu0.b32.cont [15/16] 0.0, 128
        %5226 = vxpose.xlu0.b32.end [16/16] 0.0, 128
        %v5227 = vpop.trf.xlu0
        %v5228 = vpop.trf.xlu0
        %v5229 = vpop.trf.xlu0
        %v5230 = vpop.trf.xlu0
        %v5231 = vpop.trf.xlu0
        %v5232 = vpop.trf.xlu0
        %v5233 = vpop.trf.xlu0
        %v5234 = vpop.trf.xlu0
        %v5235 = vpop.trf.xlu0
        %v5236 = vpop.trf.xlu0
        %v5237 = vpop.trf.xlu0
        %v5238 = vpop.trf.xlu0
        %v5239 = vpop.trf.xlu0
        %v5240 = vpop.trf.xlu0
        %v5241 = vpop.trf.xlu0
        %v5242 = vpop.trf.xlu0
        %v5243 = vld [vmem:[%s10] sm:$0xff]
        %vm5244 = vcmask 64512
        %v5246 = vsel %vm5244, %v5227, 0
        %v5249 = vsel %vm5244, %v5228, 0
        %v5252 = vsel %vm5244, %v5229, 0
        %v5255 = vsel %vm5244, %v5230, 0
        %5257 = vmatprep.subr.mxu0 0.0
        %5258 = vmatpush1.msra.mxu0 0.0
        %5259 = vmatprep.subr.mxu0 0.0
        %5260 = vmatpush1.msra.mxu0 0.0
        %5261 = vmatprep.subr.mxu0 0.0
        %5262 = vmatpush1.msra.mxu0 0.0
        %5263 = vmatprep.subr.mxu0 0.0
        %5264 = vmatpush1.msra.mxu0 0.0
        %5265 = vmatprep.subr.mxu0 0.0
        %5266 = vmatpush1.msra.mxu0 0.0
        %5267 = vmatprep.subr.mxu0 0.0
        %5268 = vmatpush1.msra.mxu0 0.0
        %5269 = vmatprep.subr.mxu0 0.0
        %5270 = vmatpush1.msra.mxu0 0.0
        %5271 = vmatprep.subr.mxu0 0.0
        %5272 = vmatpush1.msra.mxu0 0.0
        %5273 = vmatprep.subr.mxu0 0.0
        %5274 = vmatpush1.msra.mxu0 0.0
        %5275 = vmatprep.subr.mxu0 0.0
        %5276 = vmatpush1.msra.mxu0 0.0
        %5277 = vmatprep.subr.mxu0 0.0
        %5278 = vmatpush1.msra.mxu0 0.0
        %5279 = vmatprep.subr.mxu0 0.0
        %5280 = vmatpush1.msra.mxu0 0.0
        %5281 = vmatprep.subr.mxu0 0.0
        %5282 = vmatpush1.msra.mxu0 0.0
        %5283 = vmatprep.subr.mxu0 0.0
        %5284 = vmatpush1.msra.mxu0 0.0
        %5285 = vmatprep.subr.mxu0 0.0
        %5286 = vmatpush1.msra.mxu0 0.0
        %5287 = vmatprep.subr.mxu0 0.0
        %v5288 = vand.u32 %v5243, 4294901760
        %5289 = vmatpush1.msra.mxu0 %v5288
        %5290 = vmatprep.subr.mxu0 0.0
        %5291 = vmatpush2.msra.mxu0 0.0
        %5292 = vmatprep.subr.mxu0 0.0
        %5293 = vmatpush2.msra.mxu0 0.0
        %5294 = vmatprep.subr.mxu0 0.0
        %5295 = vmatpush2.msra.mxu0 0.0
        %5296 = vmatprep.subr.mxu0 0.0
        %5297 = vmatpush2.msra.mxu0 0.0
        %5298 = vmatprep.subr.mxu0 0.0
        %5299 = vmatpush2.msra.mxu0 0.0
        %5300 = vmatprep.subr.mxu0 0.0
        %5301 = vmatpush2.msra.mxu0 0.0
        %5302 = vmatprep.subr.mxu0 0.0
        %5303 = vmatpush2.msra.mxu0 0.0
        %5304 = vmatprep.subr.mxu0 0.0
        %5305 = vmatpush2.msra.mxu0 0.0
        %5306 = vmatprep.subr.mxu0 0.0
        %5307 = vmatpush2.msra.mxu0 0.0
        %5308 = vmatprep.subr.mxu0 0.0
        %5309 = vmatpush2.msra.mxu0 0.0
        %5310 = vmatprep.subr.mxu0 0.0
        %5311 = vmatpush2.msra.mxu0 0.0
        %5312 = vmatprep.subr.mxu0 0.0
        %5313 = vmatpush2.msra.mxu0 0.0
        %5314 = vmatprep.subr.mxu0 0.0
        %5315 = vmatpush2.msra.mxu0 0.0
        %5316 = vmatprep.subr.mxu0 0.0
        %5317 = vmatpush2.msra.mxu0 0.0
        %5318 = vmatprep.subr.mxu0 0.0
        %5319 = vmatpush2.msra.mxu0 0.0
        %5320 = vmatprep.subr.mxu0 0.0
        %5321 = vmatpush2.msra.mxu0 0.0
        %5322 = vmatprep.mubr.f32.mxu0 0.0
        %v5323 = vand.u32 %v5246, 4294901760
        %v5324 = vsub.f32 %v5246, %v5323
        %v5325 = vand.u32 %v5324, 4294901760
        %v5326 = vsub.f32 %v5324, %v5325
        %v5327 = vand.u32 %v5326, 4294901760
        %5328 = vmatmul.mubr.f32.gmra.mxu0 %v5327
        %v5329 = vpop.f32.mrf.mxu0
        %v5330 = vadd.f32 0.0, %v5329
        %v5331 = vpop.f32.mrf.mxu0
        %5332 = vmatprep.mubr.f32.mxu0 0.0
        %v5333 = vand.u32 %v5249, 4294901760
        %v5334 = vsub.f32 %v5249, %v5333
        %v5335 = vand.u32 %v5334, 4294901760
        %v5336 = vsub.f32 %v5334, %v5335
        %v5337 = vand.u32 %v5336, 4294901760
        %5338 = vmatmul.mubr.f32.gmra.mxu0 %v5337
        %v5339 = vpop.f32.mrf.mxu0
        %v5340 = vadd.f32 0.0, %v5339
        %v5341 = vpop.f32.mrf.mxu0
        %5342 = vmatprep.mubr.f32.mxu0 0.0
        %v5343 = vand.u32 %v5252, 4294901760
        %v5344 = vsub.f32 %v5252, %v5343
        %v5345 = vand.u32 %v5344, 4294901760
        %v5346 = vsub.f32 %v5344, %v5345
        %v5347 = vand.u32 %v5346, 4294901760
        %5348 = vmatmul.mubr.f32.gmra.mxu0 %v5347
        %v5349 = vpop.f32.mrf.mxu0
        %v5350 = vadd.f32 0.0, %v5349
        %v5351 = vpop.f32.mrf.mxu0
        %5352 = vmatprep.mubr.f32.mxu0 0.0
        %v5353 = vand.u32 %v5255, 4294901760
        %v5354 = vsub.f32 %v5255, %v5353
        %v5355 = vand.u32 %v5354, 4294901760
        %v5356 = vsub.f32 %v5354, %v5355
        %v5357 = vand.u32 %v5356, 4294901760
        %5358 = vmatmul.mubr.f32.gmra.mxu0 %v5357
        %v5359 = vpop.f32.mrf.mxu0
        %v5360 = vadd.f32 0.0, %v5359
        %v5361 = vpop.f32.mrf.mxu0
        %5362 = vdwg.mxu0
        %5363 = vmatprep.subr.mxu0 0.0
        %5364 = vmatpush1.msra.mxu0 0.0
        %5365 = vmatprep.subr.mxu0 0.0
        %5366 = vmatpush1.msra.mxu0 0.0
        %5367 = vmatprep.subr.mxu0 0.0
        %5368 = vmatpush1.msra.mxu0 0.0
        %5369 = vmatprep.subr.mxu0 0.0
        %5370 = vmatpush1.msra.mxu0 0.0
        %5371 = vmatprep.subr.mxu0 0.0
        %5372 = vmatpush1.msra.mxu0 0.0
        %5373 = vmatprep.subr.mxu0 0.0
        %5374 = vmatpush1.msra.mxu0 0.0
        %5375 = vmatprep.subr.mxu0 0.0
        %5376 = vmatpush1.msra.mxu0 0.0
        %5377 = vmatprep.subr.mxu0 0.0
        %5378 = vmatpush1.msra.mxu0 0.0
        %5379 = vmatprep.subr.mxu0 0.0
        %5380 = vmatpush1.msra.mxu0 0.0
        %5381 = vmatprep.subr.mxu0 0.0
        %5382 = vmatpush1.msra.mxu0 0.0
        %5383 = vmatprep.subr.mxu0 0.0
        %5384 = vmatpush1.msra.mxu0 0.0
        %5385 = vmatprep.subr.mxu0 0.0
        %5386 = vmatpush1.msra.mxu0 0.0
        %5387 = vmatprep.subr.mxu0 0.0
        %5388 = vmatpush1.msra.mxu0 0.0
        %5389 = vmatprep.subr.mxu0 0.0
        %5390 = vmatpush1.msra.mxu0 0.0
        %5391 = vmatprep.subr.mxu0 0.0
        %5392 = vmatpush1.msra.mxu0 0.0
        %5393 = vmatprep.subr.mxu0 0.0
        %v5394 = vand.u32 %v5243, 4294901760
        %v5395 = vsub.f32 %v5243, %v5394
        %v5396 = vand.u32 %v5395, 4294901760
        %v5397 = vsub.f32 %v5395, %v5396
        %v5398 = vand.u32 %v5397, 4294901760
        %5399 = vmatpush1.msra.mxu0 %v5398
        %5400 = vmatprep.subr.mxu0 0.0
        %5401 = vmatpush2.msra.mxu0 0.0
        %5402 = vmatprep.subr.mxu0 0.0
        %5403 = vmatpush2.msra.mxu0 0.0
        %5404 = vmatprep.subr.mxu0 0.0
        %5405 = vmatpush2.msra.mxu0 0.0
        %5406 = vmatprep.subr.mxu0 0.0
        %5407 = vmatpush2.msra.mxu0 0.0
        %5408 = vmatprep.subr.mxu0 0.0
        %5409 = vmatpush2.msra.mxu0 0.0
        %5410 = vmatprep.subr.mxu0 0.0
        %5411 = vmatpush2.msra.mxu0 0.0
        %5412 = vmatprep.subr.mxu0 0.0
        %5413 = vmatpush2.msra.mxu0 0.0
        %5414 = vmatprep.subr.mxu0 0.0
        %5415 = vmatpush2.msra.mxu0 0.0
        %5416 = vmatprep.subr.mxu0 0.0
        %5417 = vmatpush2.msra.mxu0 0.0
        %5418 = vmatprep.subr.mxu0 0.0
        %5419 = vmatpush2.msra.mxu0 0.0
        %5420 = vmatprep.subr.mxu0 0.0
        %5421 = vmatpush2.msra.mxu0 0.0
        %5422 = vmatprep.subr.mxu0 0.0
        %5423 = vmatpush2.msra.mxu0 0.0
        %5424 = vmatprep.subr.mxu0 0.0
        %5425 = vmatpush2.msra.mxu0 0.0
        %5426 = vmatprep.subr.mxu0 0.0
        %5427 = vmatpush2.msra.mxu0 0.0
        %5428 = vmatprep.subr.mxu0 0.0
        %5429 = vmatpush2.msra.mxu0 0.0
        %5430 = vmatprep.subr.mxu0 0.0
        %5431 = vmatpush2.msra.mxu0 0.0
        %5432 = vmatprep.mubr.f32.mxu0 0.0
        %v5433 = vand.u32 %v5246, 4294901760
        %5434 = vmatmul.mubr.f32.gmra.mxu0 %v5433
        %v5435 = vpop.f32.mrf.mxu0
        %v5436 = vadd.f32 %v5330, %v5435
        %v5437 = vpop.f32.mrf.mxu0
        %5438 = vmatprep.mubr.f32.mxu0 0.0
        %v5439 = vand.u32 %v5249, 4294901760
        %5440 = vmatmul.mubr.f32.gmra.mxu0 %v5439
        %v5441 = vpop.f32.mrf.mxu0
        %v5442 = vadd.f32 %v5340, %v5441
        %v5443 = vpop.f32.mrf.mxu0
        %5444 = vmatprep.mubr.f32.mxu0 0.0
        %v5445 = vand.u32 %v5252, 4294901760
        %5446 = vmatmul.mubr.f32.gmra.mxu0 %v5445
        %v5447 = vpop.f32.mrf.mxu0
        %v5448 = vadd.f32 %v5350, %v5447
        %v5449 = vpop.f32.mrf.mxu0
        %5450 = vmatprep.mubr.f32.mxu0 0.0
        %v5451 = vand.u32 %v5255, 4294901760
        %5452 = vmatmul.mubr.f32.gmra.mxu0 %v5451
        %v5453 = vpop.f32.mrf.mxu0
        %v5454 = vadd.f32 %v5360, %v5453
        %v5455 = vpop.f32.mrf.mxu0
        %5456 = vdwg.mxu0
        %5457 = vmatprep.subr.mxu0 0.0
        %5458 = vmatpush1.msra.mxu0 0.0
        %5459 = vmatprep.subr.mxu0 0.0
        %5460 = vmatpush1.msra.mxu0 0.0
        %5461 = vmatprep.subr.mxu0 0.0
        %5462 = vmatpush1.msra.mxu0 0.0
        %5463 = vmatprep.subr.mxu0 0.0
        %5464 = vmatpush1.msra.mxu0 0.0
        %5465 = vmatprep.subr.mxu0 0.0
        %5466 = vmatpush1.msra.mxu0 0.0
        %5467 = vmatprep.subr.mxu0 0.0
        %5468 = vmatpush1.msra.mxu0 0.0
        %5469 = vmatprep.subr.mxu0 0.0
        %5470 = vmatpush1.msra.mxu0 0.0
        %5471 = vmatprep.subr.mxu0 0.0
        %5472 = vmatpush1.msra.mxu0 0.0
        %5473 = vmatprep.subr.mxu0 0.0
        %5474 = vmatpush1.msra.mxu0 0.0
        %5475 = vmatprep.subr.mxu0 0.0
        %5476 = vmatpush1.msra.mxu0 0.0
        %5477 = vmatprep.subr.mxu0 0.0
        %5478 = vmatpush1.msra.mxu0 0.0
        %5479 = vmatprep.subr.mxu0 0.0
        %5480 = vmatpush1.msra.mxu0 0.0
        %5481 = vmatprep.subr.mxu0 0.0
        %5482 = vmatpush1.msra.mxu0 0.0
        %5483 = vmatprep.subr.mxu0 0.0
        %5484 = vmatpush1.msra.mxu0 0.0
        %5485 = vmatprep.subr.mxu0 0.0
        %5486 = vmatpush1.msra.mxu0 0.0
        %5487 = vmatprep.subr.mxu0 0.0
        %v5488 = vand.u32 %v5243, 4294901760
        %v5489 = vsub.f32 %v5243, %v5488
        %5490 = vmatpush1.msra.mxu0 %v5489
        %5491 = vmatprep.subr.mxu0 0.0
        %5492 = vmatpush2.msra.mxu0 0.0
        %5493 = vmatprep.subr.mxu0 0.0
        %5494 = vmatpush2.msra.mxu0 0.0
        %5495 = vmatprep.subr.mxu0 0.0
        %5496 = vmatpush2.msra.mxu0 0.0
        %5497 = vmatprep.subr.mxu0 0.0
        %5498 = vmatpush2.msra.mxu0 0.0
        %5499 = vmatprep.subr.mxu0 0.0
        %5500 = vmatpush2.msra.mxu0 0.0
        %5501 = vmatprep.subr.mxu0 0.0
        %5502 = vmatpush2.msra.mxu0 0.0
        %5503 = vmatprep.subr.mxu0 0.0
        %5504 = vmatpush2.msra.mxu0 0.0
        %5505 = vmatprep.subr.mxu0 0.0
        %5506 = vmatpush2.msra.mxu0 0.0
        %5507 = vmatprep.subr.mxu0 0.0
        %5508 = vmatpush2.msra.mxu0 0.0
        %5509 = vmatprep.subr.mxu0 0.0
        %5510 = vmatpush2.msra.mxu0 0.0
        %5511 = vmatprep.subr.mxu0 0.0
        %5512 = vmatpush2.msra.mxu0 0.0
        %5513 = vmatprep.subr.mxu0 0.0
        %5514 = vmatpush2.msra.mxu0 0.0
        %5515 = vmatprep.subr.mxu0 0.0
        %5516 = vmatpush2.msra.mxu0 0.0
        %5517 = vmatprep.subr.mxu0 0.0
        %5518 = vmatpush2.msra.mxu0 0.0
        %5519 = vmatprep.subr.mxu0 0.0
        %5520 = vmatpush2.msra.mxu0 0.0
        %5521 = vmatprep.subr.mxu0 0.0
        %5522 = vmatpush2.msra.mxu0 0.0
        %5523 = vmatprep.mubr.f32.mxu0 0.0
        %v5524 = vand.u32 %v5246, 4294901760
        %v5525 = vsub.f32 %v5246, %v5524
        %5526 = vmatmul.mubr.f32.gmra.mxu0 %v5525
        %v5527 = vpop.f32.mrf.mxu0
        %v5528 = vadd.f32 %v5436, %v5527
        %v5529 = vpop.f32.mrf.mxu0
        %5530 = vmatprep.mubr.f32.mxu0 0.0
        %v5531 = vand.u32 %v5249, 4294901760
        %v5532 = vsub.f32 %v5249, %v5531
        %5533 = vmatmul.mubr.f32.gmra.mxu0 %v5532
        %v5534 = vpop.f32.mrf.mxu0
        %v5535 = vadd.f32 %v5442, %v5534
        %v5536 = vpop.f32.mrf.mxu0
        %5537 = vmatprep.mubr.f32.mxu0 0.0
        %v5538 = vand.u32 %v5252, 4294901760
        %v5539 = vsub.f32 %v5252, %v5538
        %5540 = vmatmul.mubr.f32.gmra.mxu0 %v5539
        %v5541 = vpop.f32.mrf.mxu0
        %v5542 = vadd.f32 %v5448, %v5541
        %v5543 = vpop.f32.mrf.mxu0
        %5544 = vmatprep.mubr.f32.mxu0 0.0
        %v5545 = vand.u32 %v5255, 4294901760
        %v5546 = vsub.f32 %v5255, %v5545
        %5547 = vmatmul.mubr.f32.gmra.mxu0 %v5546
        %v5548 = vpop.f32.mrf.mxu0
        %v5549 = vadd.f32 %v5454, %v5548
        %v5550 = vpop.f32.mrf.mxu0
        %5551 = vdwg.mxu0
        %5552 = vmatprep.subr.mxu0 0.0
        %5553 = vmatpush1.msra.mxu0 0.0
        %5554 = vmatprep.subr.mxu0 0.0
        %5555 = vmatpush1.msra.mxu0 0.0
        %5556 = vmatprep.subr.mxu0 0.0
        %5557 = vmatpush1.msra.mxu0 0.0
        %5558 = vmatprep.subr.mxu0 0.0
        %5559 = vmatpush1.msra.mxu0 0.0
        %5560 = vmatprep.subr.mxu0 0.0
        %5561 = vmatpush1.msra.mxu0 0.0
        %5562 = vmatprep.subr.mxu0 0.0
        %5563 = vmatpush1.msra.mxu0 0.0
        %5564 = vmatprep.subr.mxu0 0.0
        %5565 = vmatpush1.msra.mxu0 0.0
        %5566 = vmatprep.subr.mxu0 0.0
        %5567 = vmatpush1.msra.mxu0 0.0
        %5568 = vmatprep.subr.mxu0 0.0
        %5569 = vmatpush1.msra.mxu0 0.0
        %5570 = vmatprep.subr.mxu0 0.0
        %5571 = vmatpush1.msra.mxu0 0.0
        %5572 = vmatprep.subr.mxu0 0.0
        %5573 = vmatpush1.msra.mxu0 0.0
        %5574 = vmatprep.subr.mxu0 0.0
        %5575 = vmatpush1.msra.mxu0 0.0
        %5576 = vmatprep.subr.mxu0 0.0
        %5577 = vmatpush1.msra.mxu0 0.0
        %5578 = vmatprep.subr.mxu0 0.0
        %5579 = vmatpush1.msra.mxu0 0.0
        %5580 = vmatprep.subr.mxu0 0.0
        %5581 = vmatpush1.msra.mxu0 0.0
        %5582 = vmatprep.subr.mxu0 0.0
        %v5583 = vand.u32 %v5243, 4294901760
        %5584 = vmatpush1.msra.mxu0 %v5583
        %5585 = vmatprep.subr.mxu0 0.0
        %5586 = vmatpush2.msra.mxu0 0.0
        %5587 = vmatprep.subr.mxu0 0.0
        %5588 = vmatpush2.msra.mxu0 0.0
        %5589 = vmatprep.subr.mxu0 0.0
        %5590 = vmatpush2.msra.mxu0 0.0
        %5591 = vmatprep.subr.mxu0 0.0
        %5592 = vmatpush2.msra.mxu0 0.0
        %5593 = vmatprep.subr.mxu0 0.0
        %5594 = vmatpush2.msra.mxu0 0.0
        %5595 = vmatprep.subr.mxu0 0.0
        %5596 = vmatpush2.msra.mxu0 0.0
        %5597 = vmatprep.subr.mxu0 0.0
        %5598 = vmatpush2.msra.mxu0 0.0
        %5599 = vmatprep.subr.mxu0 0.0
        %5600 = vmatpush2.msra.mxu0 0.0
        %5601 = vmatprep.subr.mxu0 0.0
        %5602 = vmatpush2.msra.mxu0 0.0
        %5603 = vmatprep.subr.mxu0 0.0
        %5604 = vmatpush2.msra.mxu0 0.0
        %5605 = vmatprep.subr.mxu0 0.0
        %5606 = vmatpush2.msra.mxu0 0.0
        %5607 = vmatprep.subr.mxu0 0.0
        %5608 = vmatpush2.msra.mxu0 0.0
        %5609 = vmatprep.subr.mxu0 0.0
        %5610 = vmatpush2.msra.mxu0 0.0
        %5611 = vmatprep.subr.mxu0 0.0
        %5612 = vmatpush2.msra.mxu0 0.0
        %5613 = vmatprep.subr.mxu0 0.0
        %5614 = vmatpush2.msra.mxu0 0.0
        %5615 = vmatprep.subr.mxu0 0.0
        %5616 = vmatpush2.msra.mxu0 0.0
        %5617 = vmatprep.mubr.f32.mxu0 0.0
        %v5618 = vand.u32 %v5246, 4294901760
        %v5619 = vsub.f32 %v5246, %v5618
        %v5620 = vand.u32 %v5619, 4294901760
        %5621 = vmatmul.mubr.f32.gmra.mxu0 %v5620
        %v5622 = vpop.f32.mrf.mxu0
        %v5623 = vadd.f32 %v5528, %v5622
        %v5624 = vpop.f32.mrf.mxu0
        %5625 = vmatprep.mubr.f32.mxu0 0.0
        %v5626 = vand.u32 %v5249, 4294901760
        %v5627 = vsub.f32 %v5249, %v5626
        %v5628 = vand.u32 %v5627, 4294901760
        %5629 = vmatmul.mubr.f32.gmra.mxu0 %v5628
        %v5630 = vpop.f32.mrf.mxu0
        %v5631 = vadd.f32 %v5535, %v5630
        %v5632 = vpop.f32.mrf.mxu0
        %5633 = vmatprep.mubr.f32.mxu0 0.0
        %v5634 = vand.u32 %v5252, 4294901760
        %v5635 = vsub.f32 %v5252, %v5634
        %v5636 = vand.u32 %v5635, 4294901760
        %5637 = vmatmul.mubr.f32.gmra.mxu0 %v5636
        %v5638 = vpop.f32.mrf.mxu0
        %v5639 = vadd.f32 %v5542, %v5638
        %v5640 = vpop.f32.mrf.mxu0
        %5641 = vmatprep.mubr.f32.mxu0 0.0
        %v5642 = vand.u32 %v5255, 4294901760
        %v5643 = vsub.f32 %v5255, %v5642
        %v5644 = vand.u32 %v5643, 4294901760
        %5645 = vmatmul.mubr.f32.gmra.mxu0 %v5644
        %v5646 = vpop.f32.mrf.mxu0
        %v5647 = vadd.f32 %v5549, %v5646
        %v5648 = vpop.f32.mrf.mxu0
        %5649 = vdwg.mxu0
        %5650 = vmatprep.subr.mxu0 0.0
        %5651 = vmatpush1.msra.mxu0 0.0
        %5652 = vmatprep.subr.mxu0 0.0
        %5653 = vmatpush1.msra.mxu0 0.0
        %5654 = vmatprep.subr.mxu0 0.0
        %5655 = vmatpush1.msra.mxu0 0.0
        %5656 = vmatprep.subr.mxu0 0.0
        %5657 = vmatpush1.msra.mxu0 0.0
        %5658 = vmatprep.subr.mxu0 0.0
        %5659 = vmatpush1.msra.mxu0 0.0
        %5660 = vmatprep.subr.mxu0 0.0
        %5661 = vmatpush1.msra.mxu0 0.0
        %5662 = vmatprep.subr.mxu0 0.0
        %5663 = vmatpush1.msra.mxu0 0.0
        %5664 = vmatprep.subr.mxu0 0.0
        %5665 = vmatpush1.msra.mxu0 0.0
        %5666 = vmatprep.subr.mxu0 0.0
        %5667 = vmatpush1.msra.mxu0 0.0
        %5668 = vmatprep.subr.mxu0 0.0
        %5669 = vmatpush1.msra.mxu0 0.0
        %5670 = vmatprep.subr.mxu0 0.0
        %5671 = vmatpush1.msra.mxu0 0.0
        %5672 = vmatprep.subr.mxu0 0.0
        %5673 = vmatpush1.msra.mxu0 0.0
        %5674 = vmatprep.subr.mxu0 0.0
        %5675 = vmatpush1.msra.mxu0 0.0
        %5676 = vmatprep.subr.mxu0 0.0
        %5677 = vmatpush1.msra.mxu0 0.0
        %5678 = vmatprep.subr.mxu0 0.0
        %5679 = vmatpush1.msra.mxu0 0.0
        %5680 = vmatprep.subr.mxu0 0.0
        %v5681 = vand.u32 %v5243, 4294901760
        %v5682 = vsub.f32 %v5243, %v5681
        %v5683 = vand.u32 %v5682, 4294901760
        %5684 = vmatpush1.msra.mxu0 %v5683
        %5685 = vmatprep.subr.mxu0 0.0
        %5686 = vmatpush2.msra.mxu0 0.0
        %5687 = vmatprep.subr.mxu0 0.0
        %5688 = vmatpush2.msra.mxu0 0.0
        %5689 = vmatprep.subr.mxu0 0.0
        %5690 = vmatpush2.msra.mxu0 0.0
        %5691 = vmatprep.subr.mxu0 0.0
        %5692 = vmatpush2.msra.mxu0 0.0
        %5693 = vmatprep.subr.mxu0 0.0
        %5694 = vmatpush2.msra.mxu0 0.0
        %5695 = vmatprep.subr.mxu0 0.0
        %5696 = vmatpush2.msra.mxu0 0.0
        %5697 = vmatprep.subr.mxu0 0.0
        %5698 = vmatpush2.msra.mxu0 0.0
        %5699 = vmatprep.subr.mxu0 0.0
        %5700 = vmatpush2.msra.mxu0 0.0
        %5701 = vmatprep.subr.mxu0 0.0
        %5702 = vmatpush2.msra.mxu0 0.0
        %5703 = vmatprep.subr.mxu0 0.0
        %5704 = vmatpush2.msra.mxu0 0.0
        %5705 = vmatprep.subr.mxu0 0.0
        %5706 = vmatpush2.msra.mxu0 0.0
        %5707 = vmatprep.subr.mxu0 0.0
        %5708 = vmatpush2.msra.mxu0 0.0
        %5709 = vmatprep.subr.mxu0 0.0
        %5710 = vmatpush2.msra.mxu0 0.0
        %5711 = vmatprep.subr.mxu0 0.0
        %5712 = vmatpush2.msra.mxu0 0.0
        %5713 = vmatprep.subr.mxu0 0.0
        %5714 = vmatpush2.msra.mxu0 0.0
        %5715 = vmatprep.subr.mxu0 0.0
        %5716 = vmatpush2.msra.mxu0 0.0
        %5717 = vmatprep.mubr.f32.mxu0 0.0
        %v5718 = vand.u32 %v5246, 4294901760
        %5719 = vmatmul.mubr.f32.gmra.mxu0 %v5718
        %v5720 = vpop.f32.mrf.mxu0
        %v5721 = vadd.f32 %v5623, %v5720
        %v5722 = vpop.f32.mrf.mxu0
        %5723 = vmatprep.mubr.f32.mxu0 0.0
        %v5724 = vand.u32 %v5249, 4294901760
        %5725 = vmatmul.mubr.f32.gmra.mxu0 %v5724
        %v5726 = vpop.f32.mrf.mxu0
        %v5727 = vadd.f32 %v5631, %v5726
        %v5728 = vpop.f32.mrf.mxu0
        %5729 = vmatprep.mubr.f32.mxu0 0.0
        %v5730 = vand.u32 %v5252, 4294901760
        %5731 = vmatmul.mubr.f32.gmra.mxu0 %v5730
        %v5732 = vpop.f32.mrf.mxu0
        %v5733 = vadd.f32 %v5639, %v5732
        %v5734 = vpop.f32.mrf.mxu0
        %5735 = vmatprep.mubr.f32.mxu0 0.0
        %v5736 = vand.u32 %v5255, 4294901760
        %5737 = vmatmul.mubr.f32.gmra.mxu0 %v5736
        %v5738 = vpop.f32.mrf.mxu0
        %v5739 = vadd.f32 %v5647, %v5738
        %v5740 = vpop.f32.mrf.mxu0
        %5741 = vdwg.mxu0
        %5742 = vmatprep.subr.mxu0 0.0
        %5743 = vmatpush1.msra.mxu0 0.0
        %5744 = vmatprep.subr.mxu0 0.0
        %5745 = vmatpush1.msra.mxu0 0.0
        %5746 = vmatprep.subr.mxu0 0.0
        %5747 = vmatpush1.msra.mxu0 0.0
        %5748 = vmatprep.subr.mxu0 0.0
        %5749 = vmatpush1.msra.mxu0 0.0
        %5750 = vmatprep.subr.mxu0 0.0
        %5751 = vmatpush1.msra.mxu0 0.0
        %5752 = vmatprep.subr.mxu0 0.0
        %5753 = vmatpush1.msra.mxu0 0.0
        %5754 = vmatprep.subr.mxu0 0.0
        %5755 = vmatpush1.msra.mxu0 0.0
        %5756 = vmatprep.subr.mxu0 0.0
        %5757 = vmatpush1.msra.mxu0 0.0
        %5758 = vmatprep.subr.mxu0 0.0
        %5759 = vmatpush1.msra.mxu0 0.0
        %5760 = vmatprep.subr.mxu0 0.0
        %5761 = vmatpush1.msra.mxu0 0.0
        %5762 = vmatprep.subr.mxu0 0.0
        %5763 = vmatpush1.msra.mxu0 0.0
        %5764 = vmatprep.subr.mxu0 0.0
        %5765 = vmatpush1.msra.mxu0 0.0
        %5766 = vmatprep.subr.mxu0 0.0
        %5767 = vmatpush1.msra.mxu0 0.0
        %5768 = vmatprep.subr.mxu0 0.0
        %5769 = vmatpush1.msra.mxu0 0.0
        %5770 = vmatprep.subr.mxu0 0.0
        %5771 = vmatpush1.msra.mxu0 0.0
        %5772 = vmatprep.subr.mxu0 0.0
        %v5773 = vand.u32 %v5243, 4294901760
        %5774 = vmatpush1.msra.mxu0 %v5773
        %5775 = vmatprep.subr.mxu0 0.0
        %5776 = vmatpush2.msra.mxu0 0.0
        %5777 = vmatprep.subr.mxu0 0.0
        %5778 = vmatpush2.msra.mxu0 0.0
        %5779 = vmatprep.subr.mxu0 0.0
        %5780 = vmatpush2.msra.mxu0 0.0
        %5781 = vmatprep.subr.mxu0 0.0
        %5782 = vmatpush2.msra.mxu0 0.0
        %5783 = vmatprep.subr.mxu0 0.0
        %5784 = vmatpush2.msra.mxu0 0.0
        %5785 = vmatprep.subr.mxu0 0.0
        %5786 = vmatpush2.msra.mxu0 0.0
        %5787 = vmatprep.subr.mxu0 0.0
        %5788 = vmatpush2.msra.mxu0 0.0
        %5789 = vmatprep.subr.mxu0 0.0
        %5790 = vmatpush2.msra.mxu0 0.0
        %5791 = vmatprep.subr.mxu0 0.0
        %5792 = vmatpush2.msra.mxu0 0.0
        %5793 = vmatprep.subr.mxu0 0.0
        %5794 = vmatpush2.msra.mxu0 0.0
        %5795 = vmatprep.subr.mxu0 0.0
        %5796 = vmatpush2.msra.mxu0 0.0
        %5797 = vmatprep.subr.mxu0 0.0
        %5798 = vmatpush2.msra.mxu0 0.0
        %5799 = vmatprep.subr.mxu0 0.0
        %5800 = vmatpush2.msra.mxu0 0.0
        %5801 = vmatprep.subr.mxu0 0.0
        %5802 = vmatpush2.msra.mxu0 0.0
        %5803 = vmatprep.subr.mxu0 0.0
        %5804 = vmatpush2.msra.mxu0 0.0
        %5805 = vmatprep.subr.mxu0 0.0
        %5806 = vmatpush2.msra.mxu0 0.0
        %5807 = vmatprep.mubr.f32.mxu0 0.0
        %v5808 = vand.u32 %v5246, 4294901760
        %5809 = vmatmul.mubr.f32.gmra.mxu0 %v5808
        %v5810 = vpop.f32.mrf.mxu0
        %v5811 = vadd.f32 %v5721, %v5810
        %v5812 = vpop.f32.mrf.mxu0
        %5813 = vmatprep.mubr.f32.mxu0 0.0
        %v5814 = vand.u32 %v5249, 4294901760
        %5815 = vmatmul.mubr.f32.gmra.mxu0 %v5814
        %v5816 = vpop.f32.mrf.mxu0
        %v5817 = vadd.f32 %v5727, %v5816
        %v5818 = vpop.f32.mrf.mxu0
        %5819 = vmatprep.mubr.f32.mxu0 0.0
        %v5820 = vand.u32 %v5252, 4294901760
        %5821 = vmatmul.mubr.f32.gmra.mxu0 %v5820
        %v5822 = vpop.f32.mrf.mxu0
        %v5823 = vadd.f32 %v5733, %v5822
        %v5824 = vpop.f32.mrf.mxu0
        %5825 = vmatprep.mubr.f32.mxu0 0.0
        %v5826 = vand.u32 %v5255, 4294901760
        %5827 = vmatmul.mubr.f32.gmra.mxu0 %v5826
        %v5828 = vpop.f32.mrf.mxu0
        %v5829 = vadd.f32 %v5739, %v5828
        %v5830 = vpop.f32.mrf.mxu0
        %5831 = vdwg.mxu0
        %v5832 = vld [vmem:[%s12] sm:$0xff]
        %v5833 = vld [vmem:[%s12 + $0x8] sm:$0xff]
        %v5834 = vld [vmem:[%s12 + $0x10] sm:$0xff]
        %v5835 = vld [vmem:[%s12 + $0x18] sm:$0xff]
        %v5836 = vmul.f32 %v5811, %v5832
        %v5837 = vmul.f32 %v5817, %v5833
        %v5838 = vmul.f32 %v5823, %v5834
        %v5839 = vmul.f32 %v5829, %v5835
        %v5841 = vsel %vm874, %v4284, 0
        %5843 = vmatprep.subr.mxu0 0.0
        %5844 = vmatpush1.msra.mxu0 0.0
        %5845 = vmatprep.subr.mxu0 0.0
        %5846 = vmatpush1.msra.mxu0 0.0
        %5847 = vmatprep.subr.mxu0 0.0
        %5848 = vmatpush1.msra.mxu0 0.0
        %5849 = vmatprep.subr.mxu0 0.0
        %5850 = vmatpush1.msra.mxu0 0.0
        %5851 = vmatprep.subr.mxu0 0.0
        %5852 = vmatpush1.msra.mxu0 0.0
        %5853 = vmatprep.subr.mxu0 0.0
        %5854 = vmatpush1.msra.mxu0 0.0
        %5855 = vmatprep.subr.mxu0 0.0
        %5856 = vmatpush1.msra.mxu0 0.0
        %5857 = vmatprep.subr.mxu0 0.0
        %5858 = vmatpush1.msra.mxu0 0.0
        %5859 = vmatprep.subr.mxu0 0.0
        %5860 = vmatpush1.msra.mxu0 0.0
        %5861 = vmatprep.subr.mxu0 0.0
        %5862 = vmatpush1.msra.mxu0 0.0
        %5863 = vmatprep.subr.mxu0 0.0
        %5864 = vmatpush1.msra.mxu0 0.0
        %5865 = vmatprep.subr.mxu0 0.0
        %5866 = vmatpush1.msra.mxu0 0.0
        %5867 = vmatprep.subr.mxu0 0.0
        %v5868 = vand.u32 %v5839, 4294901760
        %5869 = vmatpush1.msra.mxu0 %v5868
        %5870 = vmatprep.subr.mxu0 0.0
        %v5871 = vand.u32 %v5838, 4294901760
        %5872 = vmatpush1.msra.mxu0 %v5871
        %5873 = vmatprep.subr.mxu0 0.0
        %v5874 = vand.u32 %v5837, 4294901760
        %5875 = vmatpush1.msra.mxu0 %v5874
        %5876 = vmatprep.subr.mxu0 0.0
        %v5877 = vand.u32 %v5836, 4294901760
        %5878 = vmatpush1.msra.mxu0 %v5877
        %5879 = vmatprep.subr.mxu0 0.0
        %5880 = vmatpush2.msra.mxu0 0.0
        %5881 = vmatprep.subr.mxu0 0.0
        %5882 = vmatpush2.msra.mxu0 0.0
        %5883 = vmatprep.subr.mxu0 0.0
        %5884 = vmatpush2.msra.mxu0 0.0
        %5885 = vmatprep.subr.mxu0 0.0
        %5886 = vmatpush2.msra.mxu0 0.0
        %5887 = vmatprep.subr.mxu0 0.0
        %5888 = vmatpush2.msra.mxu0 0.0
        %5889 = vmatprep.subr.mxu0 0.0
        %5890 = vmatpush2.msra.mxu0 0.0
        %5891 = vmatprep.subr.mxu0 0.0
        %5892 = vmatpush2.msra.mxu0 0.0
        %5893 = vmatprep.subr.mxu0 0.0
        %5894 = vmatpush2.msra.mxu0 0.0
        %5895 = vmatprep.subr.mxu0 0.0
        %5896 = vmatpush2.msra.mxu0 0.0
        %5897 = vmatprep.subr.mxu0 0.0
        %5898 = vmatpush2.msra.mxu0 0.0
        %5899 = vmatprep.subr.mxu0 0.0
        %5900 = vmatpush2.msra.mxu0 0.0
        %5901 = vmatprep.subr.mxu0 0.0
        %5902 = vmatpush2.msra.mxu0 0.0
        %5903 = vmatprep.subr.mxu0 0.0
        %5904 = vmatpush2.msra.mxu0 0.0
        %5905 = vmatprep.subr.mxu0 0.0
        %5906 = vmatpush2.msra.mxu0 0.0
        %5907 = vmatprep.subr.mxu0 0.0
        %5908 = vmatpush2.msra.mxu0 0.0
        %5909 = vmatprep.subr.mxu0 0.0
        %5910 = vmatpush2.msra.mxu0 0.0
        %5911 = vmatprep.mubr.f32.mxu0 0.0
        %v5912 = vand.u32 %v5841, 4294901760
        %v5913 = vsub.f32 %v5841, %v5912
        %v5914 = vand.u32 %v5913, 4294901760
        %v5915 = vsub.f32 %v5913, %v5914
        %v5916 = vand.u32 %v5915, 4294901760
        %5917 = vmatmul.mubr.f32.gmra.mxu0 %v5916
        %v5918 = vpop.f32.mrf.mxu0
        %v5919 = vadd.f32 0.0, %v5918
        %v5920 = vpop.f32.mrf.mxu0
        %5921 = vdwg.mxu0
        %5922 = vmatprep.subr.mxu0 0.0
        %5923 = vmatpush1.msra.mxu0 0.0
        %5924 = vmatprep.subr.mxu0 0.0
        %5925 = vmatpush1.msra.mxu0 0.0
        %5926 = vmatprep.subr.mxu0 0.0
        %5927 = vmatpush1.msra.mxu0 0.0
        %5928 = vmatprep.subr.mxu0 0.0
        %5929 = vmatpush1.msra.mxu0 0.0
        %5930 = vmatprep.subr.mxu0 0.0
        %5931 = vmatpush1.msra.mxu0 0.0
        %5932 = vmatprep.subr.mxu0 0.0
        %5933 = vmatpush1.msra.mxu0 0.0
        %5934 = vmatprep.subr.mxu0 0.0
        %5935 = vmatpush1.msra.mxu0 0.0
        %5936 = vmatprep.subr.mxu0 0.0
        %5937 = vmatpush1.msra.mxu0 0.0
        %5938 = vmatprep.subr.mxu0 0.0
        %5939 = vmatpush1.msra.mxu0 0.0
        %5940 = vmatprep.subr.mxu0 0.0
        %5941 = vmatpush1.msra.mxu0 0.0
        %5942 = vmatprep.subr.mxu0 0.0
        %5943 = vmatpush1.msra.mxu0 0.0
        %5944 = vmatprep.subr.mxu0 0.0
        %5945 = vmatpush1.msra.mxu0 0.0
        %5946 = vmatprep.subr.mxu0 0.0
        %v5947 = vand.u32 %v5839, 4294901760
        %v5948 = vsub.f32 %v5839, %v5947
        %v5949 = vand.u32 %v5948, 4294901760
        %v5950 = vsub.f32 %v5948, %v5949
        %v5951 = vand.u32 %v5950, 4294901760
        %5952 = vmatpush1.msra.mxu0 %v5951
        %5953 = vmatprep.subr.mxu0 0.0
        %v5954 = vand.u32 %v5838, 4294901760
        %v5955 = vsub.f32 %v5838, %v5954
        %v5956 = vand.u32 %v5955, 4294901760
        %v5957 = vsub.f32 %v5955, %v5956
        %v5958 = vand.u32 %v5957, 4294901760
        %5959 = vmatpush1.msra.mxu0 %v5958
        %5960 = vmatprep.subr.mxu0 0.0
        %v5961 = vand.u32 %v5837, 4294901760
        %v5962 = vsub.f32 %v5837, %v5961
        %v5963 = vand.u32 %v5962, 4294901760
        %v5964 = vsub.f32 %v5962, %v5963
        %v5965 = vand.u32 %v5964, 4294901760
        %5966 = vmatpush1.msra.mxu0 %v5965
        %5967 = vmatprep.subr.mxu0 0.0
        %v5968 = vand.u32 %v5836, 4294901760
        %v5969 = vsub.f32 %v5836, %v5968
        %v5970 = vand.u32 %v5969, 4294901760
        %v5971 = vsub.f32 %v5969, %v5970
        %v5972 = vand.u32 %v5971, 4294901760
        %5973 = vmatpush1.msra.mxu0 %v5972
        %5974 = vmatprep.subr.mxu0 0.0
        %5975 = vmatpush2.msra.mxu0 0.0
        %5976 = vmatprep.subr.mxu0 0.0
        %5977 = vmatpush2.msra.mxu0 0.0
        %5978 = vmatprep.subr.mxu0 0.0
        %5979 = vmatpush2.msra.mxu0 0.0
        %5980 = vmatprep.subr.mxu0 0.0
        %5981 = vmatpush2.msra.mxu0 0.0
        %5982 = vmatprep.subr.mxu0 0.0
        %5983 = vmatpush2.msra.mxu0 0.0
        %5984 = vmatprep.subr.mxu0 0.0
        %5985 = vmatpush2.msra.mxu0 0.0
        %5986 = vmatprep.subr.mxu0 0.0
        %5987 = vmatpush2.msra.mxu0 0.0
        %5988 = vmatprep.subr.mxu0 0.0
        %5989 = vmatpush2.msra.mxu0 0.0
        %5990 = vmatprep.subr.mxu0 0.0
        %5991 = vmatpush2.msra.mxu0 0.0
        %5992 = vmatprep.subr.mxu0 0.0
        %5993 = vmatpush2.msra.mxu0 0.0
        %5994 = vmatprep.subr.mxu0 0.0
        %5995 = vmatpush2.msra.mxu0 0.0
        %5996 = vmatprep.subr.mxu0 0.0
        %5997 = vmatpush2.msra.mxu0 0.0
        %5998 = vmatprep.subr.mxu0 0.0
        %5999 = vmatpush2.msra.mxu0 0.0
        %6000 = vmatprep.subr.mxu0 0.0
        %6001 = vmatpush2.msra.mxu0 0.0
        %6002 = vmatprep.subr.mxu0 0.0
        %6003 = vmatpush2.msra.mxu0 0.0
        %6004 = vmatprep.subr.mxu0 0.0
        %6005 = vmatpush2.msra.mxu0 0.0
        %6006 = vmatprep.mubr.f32.mxu0 0.0
        %v6007 = vand.u32 %v5841, 4294901760
        %6008 = vmatmul.mubr.f32.gmra.mxu0 %v6007
        %v6009 = vpop.f32.mrf.mxu0
        %v6010 = vadd.f32 %v5919, %v6009
        %v6011 = vpop.f32.mrf.mxu0
        %6012 = vdwg.mxu0
        %6013 = vmatprep.subr.mxu0 0.0
        %6014 = vmatpush1.msra.mxu0 0.0
        %6015 = vmatprep.subr.mxu0 0.0
        %6016 = vmatpush1.msra.mxu0 0.0
        %6017 = vmatprep.subr.mxu0 0.0
        %6018 = vmatpush1.msra.mxu0 0.0
        %6019 = vmatprep.subr.mxu0 0.0
        %6020 = vmatpush1.msra.mxu0 0.0
        %6021 = vmatprep.subr.mxu0 0.0
        %6022 = vmatpush1.msra.mxu0 0.0
        %6023 = vmatprep.subr.mxu0 0.0
        %6024 = vmatpush1.msra.mxu0 0.0
        %6025 = vmatprep.subr.mxu0 0.0
        %6026 = vmatpush1.msra.mxu0 0.0
        %6027 = vmatprep.subr.mxu0 0.0
        %6028 = vmatpush1.msra.mxu0 0.0
        %6029 = vmatprep.subr.mxu0 0.0
        %6030 = vmatpush1.msra.mxu0 0.0
        %6031 = vmatprep.subr.mxu0 0.0
        %6032 = vmatpush1.msra.mxu0 0.0
        %6033 = vmatprep.subr.mxu0 0.0
        %6034 = vmatpush1.msra.mxu0 0.0
        %6035 = vmatprep.subr.mxu0 0.0
        %6036 = vmatpush1.msra.mxu0 0.0
        %6037 = vmatprep.subr.mxu0 0.0
        %v6038 = vand.u32 %v5839, 4294901760
        %v6039 = vsub.f32 %v5839, %v6038
        %6040 = vmatpush1.msra.mxu0 %v6039
        %6041 = vmatprep.subr.mxu0 0.0
        %v6042 = vand.u32 %v5838, 4294901760
        %v6043 = vsub.f32 %v5838, %v6042
        %6044 = vmatpush1.msra.mxu0 %v6043
        %6045 = vmatprep.subr.mxu0 0.0
        %v6046 = vand.u32 %v5837, 4294901760
        %v6047 = vsub.f32 %v5837, %v6046
        %6048 = vmatpush1.msra.mxu0 %v6047
        %6049 = vmatprep.subr.mxu0 0.0
        %v6050 = vand.u32 %v5836, 4294901760
        %v6051 = vsub.f32 %v5836, %v6050
        %6052 = vmatpush1.msra.mxu0 %v6051
        %6053 = vmatprep.subr.mxu0 0.0
        %6054 = vmatpush2.msra.mxu0 0.0
        %6055 = vmatprep.subr.mxu0 0.0
        %6056 = vmatpush2.msra.mxu0 0.0
        %6057 = vmatprep.subr.mxu0 0.0
        %6058 = vmatpush2.msra.mxu0 0.0
        %6059 = vmatprep.subr.mxu0 0.0
        %6060 = vmatpush2.msra.mxu0 0.0
        %6061 = vmatprep.subr.mxu0 0.0
        %6062 = vmatpush2.msra.mxu0 0.0
        %6063 = vmatprep.subr.mxu0 0.0
        %6064 = vmatpush2.msra.mxu0 0.0
        %6065 = vmatprep.subr.mxu0 0.0
        %6066 = vmatpush2.msra.mxu0 0.0
        %6067 = vmatprep.subr.mxu0 0.0
        %6068 = vmatpush2.msra.mxu0 0.0
        %6069 = vmatprep.subr.mxu0 0.0
        %6070 = vmatpush2.msra.mxu0 0.0
        %6071 = vmatprep.subr.mxu0 0.0
        %6072 = vmatpush2.msra.mxu0 0.0
        %6073 = vmatprep.subr.mxu0 0.0
        %6074 = vmatpush2.msra.mxu0 0.0
        %6075 = vmatprep.subr.mxu0 0.0
        %6076 = vmatpush2.msra.mxu0 0.0
        %6077 = vmatprep.subr.mxu0 0.0
        %6078 = vmatpush2.msra.mxu0 0.0
        %6079 = vmatprep.subr.mxu0 0.0
        %6080 = vmatpush2.msra.mxu0 0.0
        %6081 = vmatprep.subr.mxu0 0.0
        %6082 = vmatpush2.msra.mxu0 0.0
        %6083 = vmatprep.subr.mxu0 0.0
        %6084 = vmatpush2.msra.mxu0 0.0
        %6085 = vmatprep.mubr.f32.mxu0 0.0
        %v6086 = vand.u32 %v5841, 4294901760
        %v6087 = vsub.f32 %v5841, %v6086
        %6088 = vmatmul.mubr.f32.gmra.mxu0 %v6087
        %v6089 = vpop.f32.mrf.mxu0
        %v6090 = vadd.f32 %v6010, %v6089
        %v6091 = vpop.f32.mrf.mxu0
        %6092 = vdwg.mxu0
        %6093 = vmatprep.subr.mxu0 0.0
        %6094 = vmatpush1.msra.mxu0 0.0
        %6095 = vmatprep.subr.mxu0 0.0
        %6096 = vmatpush1.msra.mxu0 0.0
        %6097 = vmatprep.subr.mxu0 0.0
        %6098 = vmatpush1.msra.mxu0 0.0
        %6099 = vmatprep.subr.mxu0 0.0
        %6100 = vmatpush1.msra.mxu0 0.0
        %6101 = vmatprep.subr.mxu0 0.0
        %6102 = vmatpush1.msra.mxu0 0.0
        %6103 = vmatprep.subr.mxu0 0.0
        %6104 = vmatpush1.msra.mxu0 0.0
        %6105 = vmatprep.subr.mxu0 0.0
        %6106 = vmatpush1.msra.mxu0 0.0
        %6107 = vmatprep.subr.mxu0 0.0
        %6108 = vmatpush1.msra.mxu0 0.0
        %6109 = vmatprep.subr.mxu0 0.0
        %6110 = vmatpush1.msra.mxu0 0.0
        %6111 = vmatprep.subr.mxu0 0.0
        %6112 = vmatpush1.msra.mxu0 0.0
        %6113 = vmatprep.subr.mxu0 0.0
        %6114 = vmatpush1.msra.mxu0 0.0
        %6115 = vmatprep.subr.mxu0 0.0
        %6116 = vmatpush1.msra.mxu0 0.0
        %6117 = vmatprep.subr.mxu0 0.0
        %v6118 = vand.u32 %v5839, 4294901760
        %6119 = vmatpush1.msra.mxu0 %v6118
        %6120 = vmatprep.subr.mxu0 0.0
        %v6121 = vand.u32 %v5838, 4294901760
        %6122 = vmatpush1.msra.mxu0 %v6121
        %6123 = vmatprep.subr.mxu0 0.0
        %v6124 = vand.u32 %v5837, 4294901760
        %6125 = vmatpush1.msra.mxu0 %v6124
        %6126 = vmatprep.subr.mxu0 0.0
        %v6127 = vand.u32 %v5836, 4294901760
        %6128 = vmatpush1.msra.mxu0 %v6127
        %6129 = vmatprep.subr.mxu0 0.0
        %6130 = vmatpush2.msra.mxu0 0.0
        %6131 = vmatprep.subr.mxu0 0.0
        %6132 = vmatpush2.msra.mxu0 0.0
        %6133 = vmatprep.subr.mxu0 0.0
        %6134 = vmatpush2.msra.mxu0 0.0
        %6135 = vmatprep.subr.mxu0 0.0
        %6136 = vmatpush2.msra.mxu0 0.0
        %6137 = vmatprep.subr.mxu0 0.0
        %6138 = vmatpush2.msra.mxu0 0.0
        %6139 = vmatprep.subr.mxu0 0.0
        %6140 = vmatpush2.msra.mxu0 0.0
        %6141 = vmatprep.subr.mxu0 0.0
        %6142 = vmatpush2.msra.mxu0 0.0
        %6143 = vmatprep.subr.mxu0 0.0
        %6144 = vmatpush2.msra.mxu0 0.0
        %6145 = vmatprep.subr.mxu0 0.0
        %6146 = vmatpush2.msra.mxu0 0.0
        %6147 = vmatprep.subr.mxu0 0.0
        %6148 = vmatpush2.msra.mxu0 0.0
        %6149 = vmatprep.subr.mxu0 0.0
        %6150 = vmatpush2.msra.mxu0 0.0
        %6151 = vmatprep.subr.mxu0 0.0
        %6152 = vmatpush2.msra.mxu0 0.0
        %6153 = vmatprep.subr.mxu0 0.0
        %6154 = vmatpush2.msra.mxu0 0.0
        %6155 = vmatprep.subr.mxu0 0.0
        %6156 = vmatpush2.msra.mxu0 0.0
        %6157 = vmatprep.subr.mxu0 0.0
        %6158 = vmatpush2.msra.mxu0 0.0
        %6159 = vmatprep.subr.mxu0 0.0
        %6160 = vmatpush2.msra.mxu0 0.0
        %6161 = vmatprep.mubr.f32.mxu0 0.0
        %v6162 = vand.u32 %v5841, 4294901760
        %v6163 = vsub.f32 %v5841, %v6162
        %v6164 = vand.u32 %v6163, 4294901760
        %6165 = vmatmul.mubr.f32.gmra.mxu0 %v6164
        %v6166 = vpop.f32.mrf.mxu0
        %v6167 = vadd.f32 %v6090, %v6166
        %v6168 = vpop.f32.mrf.mxu0
        %6169 = vdwg.mxu0
        %6170 = vmatprep.subr.mxu0 0.0
        %6171 = vmatpush1.msra.mxu0 0.0
        %6172 = vmatprep.subr.mxu0 0.0
        %6173 = vmatpush1.msra.mxu0 0.0
        %6174 = vmatprep.subr.mxu0 0.0
        %6175 = vmatpush1.msra.mxu0 0.0
        %6176 = vmatprep.subr.mxu0 0.0
        %6177 = vmatpush1.msra.mxu0 0.0
        %6178 = vmatprep.subr.mxu0 0.0
        %6179 = vmatpush1.msra.mxu0 0.0
        %6180 = vmatprep.subr.mxu0 0.0
        %6181 = vmatpush1.msra.mxu0 0.0
        %6182 = vmatprep.subr.mxu0 0.0
        %6183 = vmatpush1.msra.mxu0 0.0
        %6184 = vmatprep.subr.mxu0 0.0
        %6185 = vmatpush1.msra.mxu0 0.0
        %6186 = vmatprep.subr.mxu0 0.0
        %6187 = vmatpush1.msra.mxu0 0.0
        %6188 = vmatprep.subr.mxu0 0.0
        %6189 = vmatpush1.msra.mxu0 0.0
        %6190 = vmatprep.subr.mxu0 0.0
        %6191 = vmatpush1.msra.mxu0 0.0
        %6192 = vmatprep.subr.mxu0 0.0
        %6193 = vmatpush1.msra.mxu0 0.0
        %6194 = vmatprep.subr.mxu0 0.0
        %v6195 = vand.u32 %v5839, 4294901760
        %v6196 = vsub.f32 %v5839, %v6195
        %v6197 = vand.u32 %v6196, 4294901760
        %6198 = vmatpush1.msra.mxu0 %v6197
        %6199 = vmatprep.subr.mxu0 0.0
        %v6200 = vand.u32 %v5838, 4294901760
        %v6201 = vsub.f32 %v5838, %v6200
        %v6202 = vand.u32 %v6201, 4294901760
        %6203 = vmatpush1.msra.mxu0 %v6202
        %6204 = vmatprep.subr.mxu0 0.0
        %v6205 = vand.u32 %v5837, 4294901760
        %v6206 = vsub.f32 %v5837, %v6205
        %v6207 = vand.u32 %v6206, 4294901760
        %6208 = vmatpush1.msra.mxu0 %v6207
        %6209 = vmatprep.subr.mxu0 0.0
        %v6210 = vand.u32 %v5836, 4294901760
        %v6211 = vsub.f32 %v5836, %v6210
        %v6212 = vand.u32 %v6211, 4294901760
        %6213 = vmatpush1.msra.mxu0 %v6212
        %6214 = vmatprep.subr.mxu0 0.0
        %6215 = vmatpush2.msra.mxu0 0.0
        %6216 = vmatprep.subr.mxu0 0.0
        %6217 = vmatpush2.msra.mxu0 0.0
        %6218 = vmatprep.subr.mxu0 0.0
        %6219 = vmatpush2.msra.mxu0 0.0
        %6220 = vmatprep.subr.mxu0 0.0
        %6221 = vmatpush2.msra.mxu0 0.0
        %6222 = vmatprep.subr.mxu0 0.0
        %6223 = vmatpush2.msra.mxu0 0.0
        %6224 = vmatprep.subr.mxu0 0.0
        %6225 = vmatpush2.msra.mxu0 0.0
        %6226 = vmatprep.subr.mxu0 0.0
        %6227 = vmatpush2.msra.mxu0 0.0
        %6228 = vmatprep.subr.mxu0 0.0
        %6229 = vmatpush2.msra.mxu0 0.0
        %6230 = vmatprep.subr.mxu0 0.0
        %6231 = vmatpush2.msra.mxu0 0.0
        %6232 = vmatprep.subr.mxu0 0.0
        %6233 = vmatpush2.msra.mxu0 0.0
        %6234 = vmatprep.subr.mxu0 0.0
        %6235 = vmatpush2.msra.mxu0 0.0
        %6236 = vmatprep.subr.mxu0 0.0
        %6237 = vmatpush2.msra.mxu0 0.0
        %6238 = vmatprep.subr.mxu0 0.0
        %6239 = vmatpush2.msra.mxu0 0.0
        %6240 = vmatprep.subr.mxu0 0.0
        %6241 = vmatpush2.msra.mxu0 0.0
        %6242 = vmatprep.subr.mxu0 0.0
        %6243 = vmatpush2.msra.mxu0 0.0
        %6244 = vmatprep.subr.mxu0 0.0
        %6245 = vmatpush2.msra.mxu0 0.0
        %6246 = vmatprep.mubr.f32.mxu0 0.0
        %v6247 = vand.u32 %v5841, 4294901760
        %6248 = vmatmul.mubr.f32.gmra.mxu0 %v6247
        %v6249 = vpop.f32.mrf.mxu0
        %v6250 = vadd.f32 %v6167, %v6249
        %v6251 = vpop.f32.mrf.mxu0
        %6252 = vdwg.mxu0
        %6253 = vmatprep.subr.mxu0 0.0
        %6254 = vmatpush1.msra.mxu0 0.0
        %6255 = vmatprep.subr.mxu0 0.0
        %6256 = vmatpush1.msra.mxu0 0.0
        %6257 = vmatprep.subr.mxu0 0.0
        %6258 = vmatpush1.msra.mxu0 0.0
        %6259 = vmatprep.subr.mxu0 0.0
        %6260 = vmatpush1.msra.mxu0 0.0
        %6261 = vmatprep.subr.mxu0 0.0
        %6262 = vmatpush1.msra.mxu0 0.0
        %6263 = vmatprep.subr.mxu0 0.0
        %6264 = vmatpush1.msra.mxu0 0.0
        %6265 = vmatprep.subr.mxu0 0.0
        %6266 = vmatpush1.msra.mxu0 0.0
        %6267 = vmatprep.subr.mxu0 0.0
        %6268 = vmatpush1.msra.mxu0 0.0
        %6269 = vmatprep.subr.mxu0 0.0
        %6270 = vmatpush1.msra.mxu0 0.0
        %6271 = vmatprep.subr.mxu0 0.0
        %6272 = vmatpush1.msra.mxu0 0.0
        %6273 = vmatprep.subr.mxu0 0.0
        %6274 = vmatpush1.msra.mxu0 0.0
        %6275 = vmatprep.subr.mxu0 0.0
        %6276 = vmatpush1.msra.mxu0 0.0
        %6277 = vmatprep.subr.mxu0 0.0
        %v6278 = vand.u32 %v5839, 4294901760
        %6279 = vmatpush1.msra.mxu0 %v6278
        %6280 = vmatprep.subr.mxu0 0.0
        %v6281 = vand.u32 %v5838, 4294901760
        %6282 = vmatpush1.msra.mxu0 %v6281
        %6283 = vmatprep.subr.mxu0 0.0
        %v6284 = vand.u32 %v5837, 4294901760
        %6285 = vmatpush1.msra.mxu0 %v6284
        %6286 = vmatprep.subr.mxu0 0.0
        %v6287 = vand.u32 %v5836, 4294901760
        %6288 = vmatpush1.msra.mxu0 %v6287
        %6289 = vmatprep.subr.mxu0 0.0
        %6290 = vmatpush2.msra.mxu0 0.0
        %6291 = vmatprep.subr.mxu0 0.0
        %6292 = vmatpush2.msra.mxu0 0.0
        %6293 = vmatprep.subr.mxu0 0.0
        %6294 = vmatpush2.msra.mxu0 0.0
        %6295 = vmatprep.subr.mxu0 0.0
        %6296 = vmatpush2.msra.mxu0 0.0
        %6297 = vmatprep.subr.mxu0 0.0
        %6298 = vmatpush2.msra.mxu0 0.0
        %6299 = vmatprep.subr.mxu0 0.0
        %6300 = vmatpush2.msra.mxu0 0.0
        %6301 = vmatprep.subr.mxu0 0.0
        %6302 = vmatpush2.msra.mxu0 0.0
        %6303 = vmatprep.subr.mxu0 0.0
        %6304 = vmatpush2.msra.mxu0 0.0
        %6305 = vmatprep.subr.mxu0 0.0
        %6306 = vmatpush2.msra.mxu0 0.0
        %6307 = vmatprep.subr.mxu0 0.0
        %6308 = vmatpush2.msra.mxu0 0.0
        %6309 = vmatprep.subr.mxu0 0.0
        %6310 = vmatpush2.msra.mxu0 0.0
        %6311 = vmatprep.subr.mxu0 0.0
        %6312 = vmatpush2.msra.mxu0 0.0
        %6313 = vmatprep.subr.mxu0 0.0
        %6314 = vmatpush2.msra.mxu0 0.0
        %6315 = vmatprep.subr.mxu0 0.0
        %6316 = vmatpush2.msra.mxu0 0.0
        %6317 = vmatprep.subr.mxu0 0.0
        %6318 = vmatpush2.msra.mxu0 0.0
        %6319 = vmatprep.subr.mxu0 0.0
        %6320 = vmatpush2.msra.mxu0 0.0
        %6321 = vmatprep.mubr.f32.mxu0 0.0
        %v6322 = vand.u32 %v5841, 4294901760
        %6323 = vmatmul.mubr.f32.gmra.mxu0 %v6322
        %v6324 = vpop.f32.mrf.mxu0
        %v6325 = vadd.f32 %v6250, %v6324
        %v6326 = vpop.f32.mrf.mxu0
        %6327 = vdwg.mxu0
        %vm6328 = vcmask 523264
        %v6329 = vsel %vm6328, %v6325, -inf
        %6330 = vmax.xlane.f32.xlu0 %v6329
        %v6331 = vpop.xlane.xlu0 %6330
        %v6332 = vsub.f32 %v6325, %v6331
        %v6333 = vmul.f32 %v6332, 1.442695
        %v6334 = vpow.pop %v6333
        %v6335 = vld [vmem:[%s14] sm:$0xff]
        %v6336 = vld [vmem:[%s14 + $0x8] sm:$0xff]
        %v6337 = vld [vmem:[%s14 + $0x10] sm:$0xff]
        %v6338 = vld [vmem:[%s14 + $0x18] sm:$0xff]
        %v6339 = vld [vmem:[%s14 + $0x20] sm:$0xff]
        %v6340 = vld [vmem:[%s14 + $0x28] sm:$0xff]
        %v6341 = vld [vmem:[%s14 + $0x30] sm:$0xff]
        %v6342 = vld [vmem:[%s14 + $0x38] sm:$0xff]
        %v6344 = vsel %vm6328, %v6334, 0
        %6346 = vmatprep.subr.mxu0 0.0
        %6347 = vmatpush1.msra.mxu0 0.0
        %6348 = vmatprep.subr.mxu0 0.0
        %6349 = vmatpush1.msra.mxu0 0.0
        %6350 = vmatprep.subr.mxu0 0.0
        %6351 = vmatpush1.msra.mxu0 0.0
        %6352 = vmatprep.subr.mxu0 0.0
        %6353 = vmatpush1.msra.mxu0 0.0
        %6354 = vmatprep.subr.mxu0 0.0
        %6355 = vmatpush1.msra.mxu0 0.0
        %6356 = vmatprep.subr.mxu0 0.0
        %6357 = vmatpush1.msra.mxu0 0.0
        %6358 = vmatprep.subr.mxu0 0.0
        %6359 = vmatpush1.msra.mxu0 0.0
        %6360 = vmatprep.subr.mxu0 0.0
        %6361 = vmatpush1.msra.mxu0 0.0
        %6362 = vmatprep.subr.mxu0 0.0
        %v6363 = vand.u32 %v6342, 4294901760
        %6364 = vmatpush1.msra.mxu0 %v6363
        %6365 = vmatprep.subr.mxu0 0.0
        %v6366 = vand.u32 %v6341, 4294901760
        %6367 = vmatpush1.msra.mxu0 %v6366
        %6368 = vmatprep.subr.mxu0 0.0
        %v6369 = vand.u32 %v6340, 4294901760
        %6370 = vmatpush1.msra.mxu0 %v6369
        %6371 = vmatprep.subr.mxu0 0.0
        %v6372 = vand.u32 %v6339, 4294901760
        %6373 = vmatpush1.msra.mxu0 %v6372
        %6374 = vmatprep.subr.mxu0 0.0
        %v6375 = vand.u32 %v6338, 4294901760
        %6376 = vmatpush1.msra.mxu0 %v6375
        %6377 = vmatprep.subr.mxu0 0.0
        %v6378 = vand.u32 %v6337, 4294901760
        %6379 = vmatpush1.msra.mxu0 %v6378
        %6380 = vmatprep.subr.mxu0 0.0
        %v6381 = vand.u32 %v6336, 4294901760
        %6382 = vmatpush1.msra.mxu0 %v6381
        %6383 = vmatprep.subr.mxu0 0.0
        %v6384 = vand.u32 %v6335, 4294901760
        %6385 = vmatpush1.msra.mxu0 %v6384
        %6386 = vmatprep.subr.mxu0 0.0
        %6387 = vmatpush2.msra.mxu0 0.0
        %6388 = vmatprep.subr.mxu0 0.0
        %6389 = vmatpush2.msra.mxu0 0.0
        %6390 = vmatprep.subr.mxu0 0.0
        %6391 = vmatpush2.msra.mxu0 0.0
        %6392 = vmatprep.subr.mxu0 0.0
        %6393 = vmatpush2.msra.mxu0 0.0
        %6394 = vmatprep.subr.mxu0 0.0
        %6395 = vmatpush2.msra.mxu0 0.0
        %6396 = vmatprep.subr.mxu0 0.0
        %6397 = vmatpush2.msra.mxu0 0.0
        %6398 = vmatprep.subr.mxu0 0.0
        %6399 = vmatpush2.msra.mxu0 0.0
        %6400 = vmatprep.subr.mxu0 0.0
        %6401 = vmatpush2.msra.mxu0 0.0
        %6402 = vmatprep.subr.mxu0 0.0
        %6403 = vmatpush2.msra.mxu0 0.0
        %6404 = vmatprep.subr.mxu0 0.0
        %6405 = vmatpush2.msra.mxu0 0.0
        %6406 = vmatprep.subr.mxu0 0.0
        %6407 = vmatpush2.msra.mxu0 0.0
        %6408 = vmatprep.subr.mxu0 0.0
        %6409 = vmatpush2.msra.mxu0 0.0
        %6410 = vmatprep.subr.mxu0 0.0
        %6411 = vmatpush2.msra.mxu0 0.0
        %6412 = vmatprep.subr.mxu0 0.0
        %6413 = vmatpush2.msra.mxu0 0.0
        %6414 = vmatprep.subr.mxu0 0.0
        %6415 = vmatpush2.msra.mxu0 0.0
        %6416 = vmatprep.subr.mxu0 0.0
        %6417 = vmatpush2.msra.mxu0 0.0
        %6418 = vmatprep.mubr.f32.mxu0 0.0
        %v6419 = vand.u32 %v6344, 4294901760
        %v6420 = vsub.f32 %v6344, %v6419
        %v6421 = vand.u32 %v6420, 4294901760
        %v6422 = vsub.f32 %v6420, %v6421
        %v6423 = vand.u32 %v6422, 4294901760
        %6424 = vmatmul.mubr.f32.gmra.mxu0 %v6423
        %v6425 = vpop.f32.mrf.mxu0
        %v6426 = vadd.f32 0.0, %v6425
        %v6427 = vpop.f32.mrf.mxu0
        %6428 = vdwg.mxu0
        %6429 = vmatprep.subr.mxu0 0.0
        %6430 = vmatpush1.msra.mxu0 0.0
        %6431 = vmatprep.subr.mxu0 0.0
        %6432 = vmatpush1.msra.mxu0 0.0
        %6433 = vmatprep.subr.mxu0 0.0
        %6434 = vmatpush1.msra.mxu0 0.0
        %6435 = vmatprep.subr.mxu0 0.0
        %6436 = vmatpush1.msra.mxu0 0.0
        %6437 = vmatprep.subr.mxu0 0.0
        %6438 = vmatpush1.msra.mxu0 0.0
        %6439 = vmatprep.subr.mxu0 0.0
        %6440 = vmatpush1.msra.mxu0 0.0
        %6441 = vmatprep.subr.mxu0 0.0
        %6442 = vmatpush1.msra.mxu0 0.0
        %6443 = vmatprep.subr.mxu0 0.0
        %6444 = vmatpush1.msra.mxu0 0.0
        %6445 = vmatprep.subr.mxu0 0.0
        %v6446 = vand.u32 %v6342, 4294901760
        %v6447 = vsub.f32 %v6342, %v6446
        %v6448 = vand.u32 %v6447, 4294901760
        %v6449 = vsub.f32 %v6447, %v6448
        %v6450 = vand.u32 %v6449, 4294901760
        %6451 = vmatpush1.msra.mxu0 %v6450
        %6452 = vmatprep.subr.mxu0 0.0
        %v6453 = vand.u32 %v6341, 4294901760
        %v6454 = vsub.f32 %v6341, %v6453
        %v6455 = vand.u32 %v6454, 4294901760
        %v6456 = vsub.f32 %v6454, %v6455
        %v6457 = vand.u32 %v6456, 4294901760
        %6458 = vmatpush1.msra.mxu0 %v6457
        %6459 = vmatprep.subr.mxu0 0.0
        %v6460 = vand.u32 %v6340, 4294901760
        %v6461 = vsub.f32 %v6340, %v6460
        %v6462 = vand.u32 %v6461, 4294901760
        %v6463 = vsub.f32 %v6461, %v6462
        %v6464 = vand.u32 %v6463, 4294901760
        %6465 = vmatpush1.msra.mxu0 %v6464
        %6466 = vmatprep.subr.mxu0 0.0
        %v6467 = vand.u32 %v6339, 4294901760
        %v6468 = vsub.f32 %v6339, %v6467
        %v6469 = vand.u32 %v6468, 4294901760
        %v6470 = vsub.f32 %v6468, %v6469
        %v6471 = vand.u32 %v6470, 4294901760
        %6472 = vmatpush1.msra.mxu0 %v6471
        %6473 = vmatprep.subr.mxu0 0.0
        %v6474 = vand.u32 %v6338, 4294901760
        %v6475 = vsub.f32 %v6338, %v6474
        %v6476 = vand.u32 %v6475, 4294901760
        %v6477 = vsub.f32 %v6475, %v6476
        %v6478 = vand.u32 %v6477, 4294901760
        %6479 = vmatpush1.msra.mxu0 %v6478
        %6480 = vmatprep.subr.mxu0 0.0
        %v6481 = vand.u32 %v6337, 4294901760
        %v6482 = vsub.f32 %v6337, %v6481
        %v6483 = vand.u32 %v6482, 4294901760
        %v6484 = vsub.f32 %v6482, %v6483
        %v6485 = vand.u32 %v6484, 4294901760
        %6486 = vmatpush1.msra.mxu0 %v6485
        %6487 = vmatprep.subr.mxu0 0.0
        %v6488 = vand.u32 %v6336, 4294901760
        %v6489 = vsub.f32 %v6336, %v6488
        %v6490 = vand.u32 %v6489, 4294901760
        %v6491 = vsub.f32 %v6489, %v6490
        %v6492 = vand.u32 %v6491, 4294901760
        %6493 = vmatpush1.msra.mxu0 %v6492
        %6494 = vmatprep.subr.mxu0 0.0
        %v6495 = vand.u32 %v6335, 4294901760
        %v6496 = vsub.f32 %v6335, %v6495
        %v6497 = vand.u32 %v6496, 4294901760
        %v6498 = vsub.f32 %v6496, %v6497
        %v6499 = vand.u32 %v6498, 4294901760
        %6500 = vmatpush1.msra.mxu0 %v6499
        %6501 = vmatprep.subr.mxu0 0.0
        %6502 = vmatpush2.msra.mxu0 0.0
        %6503 = vmatprep.subr.mxu0 0.0
        %6504 = vmatpush2.msra.mxu0 0.0
        %6505 = vmatprep.subr.mxu0 0.0
        %6506 = vmatpush2.msra.mxu0 0.0
        %6507 = vmatprep.subr.mxu0 0.0
        %6508 = vmatpush2.msra.mxu0 0.0
        %6509 = vmatprep.subr.mxu0 0.0
        %6510 = vmatpush2.msra.mxu0 0.0
        %6511 = vmatprep.subr.mxu0 0.0
        %6512 = vmatpush2.msra.mxu0 0.0
        %6513 = vmatprep.subr.mxu0 0.0
        %6514 = vmatpush2.msra.mxu0 0.0
        %6515 = vmatprep.subr.mxu0 0.0
        %6516 = vmatpush2.msra.mxu0 0.0
        %6517 = vmatprep.subr.mxu0 0.0
        %6518 = vmatpush2.msra.mxu0 0.0
        %6519 = vmatprep.subr.mxu0 0.0
        %6520 = vmatpush2.msra.mxu0 0.0
        %6521 = vmatprep.subr.mxu0 0.0
        %6522 = vmatpush2.msra.mxu0 0.0
        %6523 = vmatprep.subr.mxu0 0.0
        %6524 = vmatpush2.msra.mxu0 0.0
        %6525 = vmatprep.subr.mxu0 0.0
        %6526 = vmatpush2.msra.mxu0 0.0
        %6527 = vmatprep.subr.mxu0 0.0
        %6528 = vmatpush2.msra.mxu0 0.0
        %6529 = vmatprep.subr.mxu0 0.0
        %6530 = vmatpush2.msra.mxu0 0.0
        %6531 = vmatprep.subr.mxu0 0.0
        %6532 = vmatpush2.msra.mxu0 0.0
        %6533 = vmatprep.mubr.f32.mxu0 0.0
        %v6534 = vand.u32 %v6344, 4294901760
        %6535 = vmatmul.mubr.f32.gmra.mxu0 %v6534
        %v6536 = vpop.f32.mrf.mxu0
        %v6537 = vadd.f32 %v6426, %v6536
        %v6538 = vpop.f32.mrf.mxu0
        %6539 = vdwg.mxu0
        %6540 = vmatprep.subr.mxu0 0.0
        %6541 = vmatpush1.msra.mxu0 0.0
        %6542 = vmatprep.subr.mxu0 0.0
        %6543 = vmatpush1.msra.mxu0 0.0
        %6544 = vmatprep.subr.mxu0 0.0
        %6545 = vmatpush1.msra.mxu0 0.0
        %6546 = vmatprep.subr.mxu0 0.0
        %6547 = vmatpush1.msra.mxu0 0.0
        %6548 = vmatprep.subr.mxu0 0.0
        %6549 = vmatpush1.msra.mxu0 0.0
        %6550 = vmatprep.subr.mxu0 0.0
        %6551 = vmatpush1.msra.mxu0 0.0
        %6552 = vmatprep.subr.mxu0 0.0
        %6553 = vmatpush1.msra.mxu0 0.0
        %6554 = vmatprep.subr.mxu0 0.0
        %6555 = vmatpush1.msra.mxu0 0.0
        %6556 = vmatprep.subr.mxu0 0.0
        %v6557 = vand.u32 %v6342, 4294901760
        %v6558 = vsub.f32 %v6342, %v6557
        %6559 = vmatpush1.msra.mxu0 %v6558
        %6560 = vmatprep.subr.mxu0 0.0
        %v6561 = vand.u32 %v6341, 4294901760
        %v6562 = vsub.f32 %v6341, %v6561
        %6563 = vmatpush1.msra.mxu0 %v6562
        %6564 = vmatprep.subr.mxu0 0.0
        %v6565 = vand.u32 %v6340, 4294901760
        %v6566 = vsub.f32 %v6340, %v6565
        %6567 = vmatpush1.msra.mxu0 %v6566
        %6568 = vmatprep.subr.mxu0 0.0
        %v6569 = vand.u32 %v6339, 4294901760
        %v6570 = vsub.f32 %v6339, %v6569
        %6571 = vmatpush1.msra.mxu0 %v6570
        %6572 = vmatprep.subr.mxu0 0.0
        %v6573 = vand.u32 %v6338, 4294901760
        %v6574 = vsub.f32 %v6338, %v6573
        %6575 = vmatpush1.msra.mxu0 %v6574
        %6576 = vmatprep.subr.mxu0 0.0
        %v6577 = vand.u32 %v6337, 4294901760
        %v6578 = vsub.f32 %v6337, %v6577
        %6579 = vmatpush1.msra.mxu0 %v6578
        %6580 = vmatprep.subr.mxu0 0.0
        %v6581 = vand.u32 %v6336, 4294901760
        %v6582 = vsub.f32 %v6336, %v6581
        %6583 = vmatpush1.msra.mxu0 %v6582
        %6584 = vmatprep.subr.mxu0 0.0
        %v6585 = vand.u32 %v6335, 4294901760
        %v6586 = vsub.f32 %v6335, %v6585
        %6587 = vmatpush1.msra.mxu0 %v6586
        %6588 = vmatprep.subr.mxu0 0.0
        %6589 = vmatpush2.msra.mxu0 0.0
        %6590 = vmatprep.subr.mxu0 0.0
        %6591 = vmatpush2.msra.mxu0 0.0
        %6592 = vmatprep.subr.mxu0 0.0
        %6593 = vmatpush2.msra.mxu0 0.0
        %6594 = vmatprep.subr.mxu0 0.0
        %6595 = vmatpush2.msra.mxu0 0.0
        %6596 = vmatprep.subr.mxu0 0.0
        %6597 = vmatpush2.msra.mxu0 0.0
        %6598 = vmatprep.subr.mxu0 0.0
        %6599 = vmatpush2.msra.mxu0 0.0
        %6600 = vmatprep.subr.mxu0 0.0
        %6601 = vmatpush2.msra.mxu0 0.0
        %6602 = vmatprep.subr.mxu0 0.0
        %6603 = vmatpush2.msra.mxu0 0.0
        %6604 = vmatprep.subr.mxu0 0.0
        %6605 = vmatpush2.msra.mxu0 0.0
        %6606 = vmatprep.subr.mxu0 0.0
        %6607 = vmatpush2.msra.mxu0 0.0
        %6608 = vmatprep.subr.mxu0 0.0
        %6609 = vmatpush2.msra.mxu0 0.0
        %6610 = vmatprep.subr.mxu0 0.0
        %6611 = vmatpush2.msra.mxu0 0.0
        %6612 = vmatprep.subr.mxu0 0.0
        %6613 = vmatpush2.msra.mxu0 0.0
        %6614 = vmatprep.subr.mxu0 0.0
        %6615 = vmatpush2.msra.mxu0 0.0
        %6616 = vmatprep.subr.mxu0 0.0
        %6617 = vmatpush2.msra.mxu0 0.0
        %6618 = vmatprep.subr.mxu0 0.0
        %6619 = vmatpush2.msra.mxu0 0.0
        %6620 = vmatprep.mubr.f32.mxu0 0.0
        %v6621 = vand.u32 %v6344, 4294901760
        %v6622 = vsub.f32 %v6344, %v6621
        %6623 = vmatmul.mubr.f32.gmra.mxu0 %v6622
        %v6624 = vpop.f32.mrf.mxu0
        %v6625 = vadd.f32 %v6537, %v6624
        %v6626 = vpop.f32.mrf.mxu0
        %6627 = vdwg.mxu0
        %6628 = vmatprep.subr.mxu0 0.0
        %6629 = vmatpush1.msra.mxu0 0.0
        %6630 = vmatprep.subr.mxu0 0.0
        %6631 = vmatpush1.msra.mxu0 0.0
        %6632 = vmatprep.subr.mxu0 0.0
        %6633 = vmatpush1.msra.mxu0 0.0
        %6634 = vmatprep.subr.mxu0 0.0
        %6635 = vmatpush1.msra.mxu0 0.0
        %6636 = vmatprep.subr.mxu0 0.0
        %6637 = vmatpush1.msra.mxu0 0.0
        %6638 = vmatprep.subr.mxu0 0.0
        %6639 = vmatpush1.msra.mxu0 0.0
        %6640 = vmatprep.subr.mxu0 0.0
        %6641 = vmatpush1.msra.mxu0 0.0
        %6642 = vmatprep.subr.mxu0 0.0
        %6643 = vmatpush1.msra.mxu0 0.0
        %6644 = vmatprep.subr.mxu0 0.0
        %v6645 = vand.u32 %v6342, 4294901760
        %6646 = vmatpush1.msra.mxu0 %v6645
        %6647 = vmatprep.subr.mxu0 0.0
        %v6648 = vand.u32 %v6341, 4294901760
        %6649 = vmatpush1.msra.mxu0 %v6648
        %6650 = vmatprep.subr.mxu0 0.0
        %v6651 = vand.u32 %v6340, 4294901760
        %6652 = vmatpush1.msra.mxu0 %v6651
        %6653 = vmatprep.subr.mxu0 0.0
        %v6654 = vand.u32 %v6339, 4294901760
        %6655 = vmatpush1.msra.mxu0 %v6654
        %6656 = vmatprep.subr.mxu0 0.0
        %v6657 = vand.u32 %v6338, 4294901760
        %6658 = vmatpush1.msra.mxu0 %v6657
        %6659 = vmatprep.subr.mxu0 0.0
        %v6660 = vand.u32 %v6337, 4294901760
        %6661 = vmatpush1.msra.mxu0 %v6660
        %6662 = vmatprep.subr.mxu0 0.0
        %v6663 = vand.u32 %v6336, 4294901760
        %6664 = vmatpush1.msra.mxu0 %v6663
        %6665 = vmatprep.subr.mxu0 0.0
        %v6666 = vand.u32 %v6335, 4294901760
        %6667 = vmatpush1.msra.mxu0 %v6666
        %6668 = vmatprep.subr.mxu0 0.0
        %6669 = vmatpush2.msra.mxu0 0.0
        %6670 = vmatprep.subr.mxu0 0.0
        %6671 = vmatpush2.msra.mxu0 0.0
        %6672 = vmatprep.subr.mxu0 0.0
        %6673 = vmatpush2.msra.mxu0 0.0
        %6674 = vmatprep.subr.mxu0 0.0
        %6675 = vmatpush2.msra.mxu0 0.0
        %6676 = vmatprep.subr.mxu0 0.0
        %6677 = vmatpush2.msra.mxu0 0.0
        %6678 = vmatprep.subr.mxu0 0.0
        %6679 = vmatpush2.msra.mxu0 0.0
        %6680 = vmatprep.subr.mxu0 0.0
        %6681 = vmatpush2.msra.mxu0 0.0
        %6682 = vmatprep.subr.mxu0 0.0
        %6683 = vmatpush2.msra.mxu0 0.0
        %6684 = vmatprep.subr.mxu0 0.0
        %6685 = vmatpush2.msra.mxu0 0.0
        %6686 = vmatprep.subr.mxu0 0.0
        %6687 = vmatpush2.msra.mxu0 0.0
        %6688 = vmatprep.subr.mxu0 0.0
        %6689 = vmatpush2.msra.mxu0 0.0
        %6690 = vmatprep.subr.mxu0 0.0
        %6691 = vmatpush2.msra.mxu0 0.0
        %6692 = vmatprep.subr.mxu0 0.0
        %6693 = vmatpush2.msra.mxu0 0.0
        %6694 = vmatprep.subr.mxu0 0.0
        %6695 = vmatpush2.msra.mxu0 0.0
        %6696 = vmatprep.subr.mxu0 0.0
        %6697 = vmatpush2.msra.mxu0 0.0
        %6698 = vmatprep.subr.mxu0 0.0
        %6699 = vmatpush2.msra.mxu0 0.0
        %6700 = vmatprep.mubr.f32.mxu0 0.0
        %v6701 = vand.u32 %v6344, 4294901760
        %v6702 = vsub.f32 %v6344, %v6701
        %v6703 = vand.u32 %v6702, 4294901760
        %6704 = vmatmul.mubr.f32.gmra.mxu0 %v6703
        %v6705 = vpop.f32.mrf.mxu0
        %v6706 = vadd.f32 %v6625, %v6705
        %v6707 = vpop.f32.mrf.mxu0
        %6708 = vdwg.mxu0
        %6709 = vmatprep.subr.mxu0 0.0
        %6710 = vmatpush1.msra.mxu0 0.0
        %6711 = vmatprep.subr.mxu0 0.0
        %6712 = vmatpush1.msra.mxu0 0.0
        %6713 = vmatprep.subr.mxu0 0.0
        %6714 = vmatpush1.msra.mxu0 0.0
        %6715 = vmatprep.subr.mxu0 0.0
        %6716 = vmatpush1.msra.mxu0 0.0
        %6717 = vmatprep.subr.mxu0 0.0
        %6718 = vmatpush1.msra.mxu0 0.0
        %6719 = vmatprep.subr.mxu0 0.0
        %6720 = vmatpush1.msra.mxu0 0.0
        %6721 = vmatprep.subr.mxu0 0.0
        %6722 = vmatpush1.msra.mxu0 0.0
        %6723 = vmatprep.subr.mxu0 0.0
        %6724 = vmatpush1.msra.mxu0 0.0
        %6725 = vmatprep.subr.mxu0 0.0
        %v6726 = vand.u32 %v6342, 4294901760
        %v6727 = vsub.f32 %v6342, %v6726
        %v6728 = vand.u32 %v6727, 4294901760
        %6729 = vmatpush1.msra.mxu0 %v6728
        %6730 = vmatprep.subr.mxu0 0.0
        %v6731 = vand.u32 %v6341, 4294901760
        %v6732 = vsub.f32 %v6341, %v6731
        %v6733 = vand.u32 %v6732, 4294901760
        %6734 = vmatpush1.msra.mxu0 %v6733
        %6735 = vmatprep.subr.mxu0 0.0
        %v6736 = vand.u32 %v6340, 4294901760
        %v6737 = vsub.f32 %v6340, %v6736
        %v6738 = vand.u32 %v6737, 4294901760
        %6739 = vmatpush1.msra.mxu0 %v6738
        %6740 = vmatprep.subr.mxu0 0.0
        %v6741 = vand.u32 %v6339, 4294901760
        %v6742 = vsub.f32 %v6339, %v6741
        %v6743 = vand.u32 %v6742, 4294901760
        %6744 = vmatpush1.msra.mxu0 %v6743
        %6745 = vmatprep.subr.mxu0 0.0
        %v6746 = vand.u32 %v6338, 4294901760
        %v6747 = vsub.f32 %v6338, %v6746
        %v6748 = vand.u32 %v6747, 4294901760
        %6749 = vmatpush1.msra.mxu0 %v6748
        %6750 = vmatprep.subr.mxu0 0.0
        %v6751 = vand.u32 %v6337, 4294901760
        %v6752 = vsub.f32 %v6337, %v6751
        %v6753 = vand.u32 %v6752, 4294901760
        %6754 = vmatpush1.msra.mxu0 %v6753
        %6755 = vmatprep.subr.mxu0 0.0
        %v6756 = vand.u32 %v6336, 4294901760
        %v6757 = vsub.f32 %v6336, %v6756
        %v6758 = vand.u32 %v6757, 4294901760
        %6759 = vmatpush1.msra.mxu0 %v6758
        %6760 = vmatprep.subr.mxu0 0.0
        %v6761 = vand.u32 %v6335, 4294901760
        %v6762 = vsub.f32 %v6335, %v6761
        %v6763 = vand.u32 %v6762, 4294901760
        %6764 = vmatpush1.msra.mxu0 %v6763
        %6765 = vmatprep.subr.mxu0 0.0
        %6766 = vmatpush2.msra.mxu0 0.0
        %6767 = vmatprep.subr.mxu0 0.0
        %6768 = vmatpush2.msra.mxu0 0.0
        %6769 = vmatprep.subr.mxu0 0.0
        %6770 = vmatpush2.msra.mxu0 0.0
        %6771 = vmatprep.subr.mxu0 0.0
        %6772 = vmatpush2.msra.mxu0 0.0
        %6773 = vmatprep.subr.mxu0 0.0
        %6774 = vmatpush2.msra.mxu0 0.0
        %6775 = vmatprep.subr.mxu0 0.0
        %6776 = vmatpush2.msra.mxu0 0.0
        %6777 = vmatprep.subr.mxu0 0.0
        %6778 = vmatpush2.msra.mxu0 0.0
        %6779 = vmatprep.subr.mxu0 0.0
        %6780 = vmatpush2.msra.mxu0 0.0
        %6781 = vmatprep.subr.mxu0 0.0
        %6782 = vmatpush2.msra.mxu0 0.0
        %6783 = vmatprep.subr.mxu0 0.0
        %6784 = vmatpush2.msra.mxu0 0.0
        %6785 = vmatprep.subr.mxu0 0.0
        %6786 = vmatpush2.msra.mxu0 0.0
        %6787 = vmatprep.subr.mxu0 0.0
        %6788 = vmatpush2.msra.mxu0 0.0
        %6789 = vmatprep.subr.mxu0 0.0
        %6790 = vmatpush2.msra.mxu0 0.0
        %6791 = vmatprep.subr.mxu0 0.0
        %6792 = vmatpush2.msra.mxu0 0.0
        %6793 = vmatprep.subr.mxu0 0.0
        %6794 = vmatpush2.msra.mxu0 0.0
        %6795 = vmatprep.subr.mxu0 0.0
        %6796 = vmatpush2.msra.mxu0 0.0
        %6797 = vmatprep.mubr.f32.mxu0 0.0
        %v6798 = vand.u32 %v6344, 4294901760
        %6799 = vmatmul.mubr.f32.gmra.mxu0 %v6798
        %v6800 = vpop.f32.mrf.mxu0
        %v6801 = vadd.f32 %v6706, %v6800
        %v6802 = vpop.f32.mrf.mxu0
        %6803 = vdwg.mxu0
        %6804 = vmatprep.subr.mxu0 0.0
        %6805 = vmatpush1.msra.mxu0 0.0
        %6806 = vmatprep.subr.mxu0 0.0
        %6807 = vmatpush1.msra.mxu0 0.0
        %6808 = vmatprep.subr.mxu0 0.0
        %6809 = vmatpush1.msra.mxu0 0.0
        %6810 = vmatprep.subr.mxu0 0.0
        %6811 = vmatpush1.msra.mxu0 0.0
        %6812 = vmatprep.subr.mxu0 0.0
        %6813 = vmatpush1.msra.mxu0 0.0
        %6814 = vmatprep.subr.mxu0 0.0
        %6815 = vmatpush1.msra.mxu0 0.0
        %6816 = vmatprep.subr.mxu0 0.0
        %6817 = vmatpush1.msra.mxu0 0.0
        %6818 = vmatprep.subr.mxu0 0.0
        %6819 = vmatpush1.msra.mxu0 0.0
        %6820 = vmatprep.subr.mxu0 0.0
        %v6821 = vand.u32 %v6342, 4294901760
        %6822 = vmatpush1.msra.mxu0 %v6821
        %6823 = vmatprep.subr.mxu0 0.0
        %v6824 = vand.u32 %v6341, 4294901760
        %6825 = vmatpush1.msra.mxu0 %v6824
        %6826 = vmatprep.subr.mxu0 0.0
        %v6827 = vand.u32 %v6340, 4294901760
        %6828 = vmatpush1.msra.mxu0 %v6827
        %6829 = vmatprep.subr.mxu0 0.0
        %v6830 = vand.u32 %v6339, 4294901760
        %6831 = vmatpush1.msra.mxu0 %v6830
        %6832 = vmatprep.subr.mxu0 0.0
        %v6833 = vand.u32 %v6338, 4294901760
        %6834 = vmatpush1.msra.mxu0 %v6833
        %6835 = vmatprep.subr.mxu0 0.0
        %v6836 = vand.u32 %v6337, 4294901760
        %6837 = vmatpush1.msra.mxu0 %v6836
        %6838 = vmatprep.subr.mxu0 0.0
        %v6839 = vand.u32 %v6336, 4294901760
        %6840 = vmatpush1.msra.mxu0 %v6839
        %6841 = vmatprep.subr.mxu0 0.0
        %v6842 = vand.u32 %v6335, 4294901760
        %6843 = vmatpush1.msra.mxu0 %v6842
        %6844 = vmatprep.subr.mxu0 0.0
        %6845 = vmatpush2.msra.mxu0 0.0
        %6846 = vmatprep.subr.mxu0 0.0
        %6847 = vmatpush2.msra.mxu0 0.0
        %6848 = vmatprep.subr.mxu0 0.0
        %6849 = vmatpush2.msra.mxu0 0.0
        %6850 = vmatprep.subr.mxu0 0.0
        %6851 = vmatpush2.msra.mxu0 0.0
        %6852 = vmatprep.subr.mxu0 0.0
        %6853 = vmatpush2.msra.mxu0 0.0
        %6854 = vmatprep.subr.mxu0 0.0
        %6855 = vmatpush2.msra.mxu0 0.0
        %6856 = vmatprep.subr.mxu0 0.0
        %6857 = vmatpush2.msra.mxu0 0.0
        %6858 = vmatprep.subr.mxu0 0.0
        %6859 = vmatpush2.msra.mxu0 0.0
        %6860 = vmatprep.subr.mxu0 0.0
        %6861 = vmatpush2.msra.mxu0 0.0
        %6862 = vmatprep.subr.mxu0 0.0
        %6863 = vmatpush2.msra.mxu0 0.0
        %6864 = vmatprep.subr.mxu0 0.0
        %6865 = vmatpush2.msra.mxu0 0.0
        %6866 = vmatprep.subr.mxu0 0.0
        %6867 = vmatpush2.msra.mxu0 0.0
        %6868 = vmatprep.subr.mxu0 0.0
        %6869 = vmatpush2.msra.mxu0 0.0
        %6870 = vmatprep.subr.mxu0 0.0
        %6871 = vmatpush2.msra.mxu0 0.0
        %6872 = vmatprep.subr.mxu0 0.0
        %6873 = vmatpush2.msra.mxu0 0.0
        %6874 = vmatprep.subr.mxu0 0.0
        %6875 = vmatpush2.msra.mxu0 0.0
        %6876 = vmatprep.mubr.f32.mxu0 0.0
        %v6877 = vand.u32 %v6344, 4294901760
        %6878 = vmatmul.mubr.f32.gmra.mxu0 %v6877
        %v6879 = vpop.f32.mrf.mxu0
        %v6880 = vadd.f32 %v6801, %v6879
        %v6881 = vpop.f32.mrf.mxu0
        %6882 = vdwg.mxu0
        %v6883 = vrcp.pop %v6880
        %v6884 = vmul.f32 %v6334, %v6883
        %v6885 = vld [vmem:[%s11] sm:$0xff]
        %v6886 = vld [vmem:[%s11 + $0x8] sm:$0xff]
        %v6887 = vld [vmem:[%s11 + $0x10] sm:$0xff]
        %v6888 = vld [vmem:[%s11 + $0x18] sm:$0xff]
        %v6889 = vld [vmem:[%s11 + $0x20] sm:$0xff]
        %v6890 = vld [vmem:[%s11 + $0x28] sm:$0xff]
        %v6891 = vld [vmem:[%s11 + $0x30] sm:$0xff]
        %v6892 = vld [vmem:[%s11 + $0x38] sm:$0xff]
        %v6894 = vsel %vm5244, %v6885, 0
        %v6897 = vsel %vm5244, %v6886, 0
        %v6900 = vsel %vm5244, %v6887, 0
        %v6903 = vsel %vm5244, %v6888, 0
        %v6906 = vsel %vm5244, %v6889, 0
        %v6909 = vsel %vm5244, %v6890, 0
        %v6912 = vsel %vm5244, %v6891, 0
        %v6915 = vsel %vm5244, %v6892, 0
        %6917 = vmatprep.subr.mxu0 0.0
        %6918 = vmatpush1.msra.mxu0 0.0
        %6919 = vmatprep.subr.mxu0 0.0
        %6920 = vmatpush1.msra.mxu0 0.0
        %6921 = vmatprep.subr.mxu0 0.0
        %6922 = vmatpush1.msra.mxu0 0.0
        %6923 = vmatprep.subr.mxu0 0.0
        %6924 = vmatpush1.msra.mxu0 0.0
        %6925 = vmatprep.subr.mxu0 0.0
        %6926 = vmatpush1.msra.mxu0 0.0
        %6927 = vmatprep.subr.mxu0 0.0
        %6928 = vmatpush1.msra.mxu0 0.0
        %6929 = vmatprep.subr.mxu0 0.0
        %6930 = vmatpush1.msra.mxu0 0.0
        %6931 = vmatprep.subr.mxu0 0.0
        %6932 = vmatpush1.msra.mxu0 0.0
        %6933 = vmatprep.subr.mxu0 0.0
        %6934 = vmatpush1.msra.mxu0 0.0
        %6935 = vmatprep.subr.mxu0 0.0
        %6936 = vmatpush1.msra.mxu0 0.0
        %6937 = vmatprep.subr.mxu0 0.0
        %6938 = vmatpush1.msra.mxu0 0.0
        %6939 = vmatprep.subr.mxu0 0.0
        %6940 = vmatpush1.msra.mxu0 0.0
        %6941 = vmatprep.subr.mxu0 0.0
        %6942 = vmatpush1.msra.mxu0 0.0
        %6943 = vmatprep.subr.mxu0 0.0
        %6944 = vmatpush1.msra.mxu0 0.0
        %6945 = vmatprep.subr.mxu0 0.0
        %6946 = vmatpush1.msra.mxu0 0.0
        %6947 = vmatprep.subr.mxu0 0.0
        %v6948 = vand.u32 %v5208, 4294901760
        %6949 = vmatpush1.msra.mxu0 %v6948
        %6950 = vmatprep.subr.mxu0 0.0
        %6951 = vmatpush2.msra.mxu0 0.0
        %6952 = vmatprep.subr.mxu0 0.0
        %6953 = vmatpush2.msra.mxu0 0.0
        %6954 = vmatprep.subr.mxu0 0.0
        %6955 = vmatpush2.msra.mxu0 0.0
        %6956 = vmatprep.subr.mxu0 0.0
        %6957 = vmatpush2.msra.mxu0 0.0
        %6958 = vmatprep.subr.mxu0 0.0
        %6959 = vmatpush2.msra.mxu0 0.0
        %6960 = vmatprep.subr.mxu0 0.0
        %6961 = vmatpush2.msra.mxu0 0.0
        %6962 = vmatprep.subr.mxu0 0.0
        %6963 = vmatpush2.msra.mxu0 0.0
        %6964 = vmatprep.subr.mxu0 0.0
        %6965 = vmatpush2.msra.mxu0 0.0
        %6966 = vmatprep.subr.mxu0 0.0
        %6967 = vmatpush2.msra.mxu0 0.0
        %6968 = vmatprep.subr.mxu0 0.0
        %6969 = vmatpush2.msra.mxu0 0.0
        %6970 = vmatprep.subr.mxu0 0.0
        %6971 = vmatpush2.msra.mxu0 0.0
        %6972 = vmatprep.subr.mxu0 0.0
        %6973 = vmatpush2.msra.mxu0 0.0
        %6974 = vmatprep.subr.mxu0 0.0
        %6975 = vmatpush2.msra.mxu0 0.0
        %6976 = vmatprep.subr.mxu0 0.0
        %6977 = vmatpush2.msra.mxu0 0.0
        %6978 = vmatprep.subr.mxu0 0.0
        %6979 = vmatpush2.msra.mxu0 0.0
        %6980 = vmatprep.subr.mxu0 0.0
        %6981 = vmatpush2.msra.mxu0 0.0
        %6982 = vmatprep.mubr.f32.mxu0 0.0
        %v6983 = vand.u32 %v6894, 4294901760
        %v6984 = vsub.f32 %v6894, %v6983
        %v6985 = vand.u32 %v6984, 4294901760
        %v6986 = vsub.f32 %v6984, %v6985
        %v6987 = vand.u32 %v6986, 4294901760
        %6988 = vmatmul.mubr.f32.gmra.mxu0 %v6987
        %v6989 = vpop.f32.mrf.mxu0
        %v6990 = vadd.f32 0.0, %v6989
        %v6991 = vpop.f32.mrf.mxu0
        %6992 = vmatprep.mubr.f32.mxu0 0.0
        %v6993 = vand.u32 %v6897, 4294901760
        %v6994 = vsub.f32 %v6897, %v6993
        %v6995 = vand.u32 %v6994, 4294901760
        %v6996 = vsub.f32 %v6994, %v6995
        %v6997 = vand.u32 %v6996, 4294901760
        %6998 = vmatmul.mubr.f32.gmra.mxu0 %v6997
        %v6999 = vpop.f32.mrf.mxu0
        %v7000 = vadd.f32 0.0, %v6999
        %v7001 = vpop.f32.mrf.mxu0
        %7002 = vmatprep.mubr.f32.mxu0 0.0
        %v7003 = vand.u32 %v6900, 4294901760
        %v7004 = vsub.f32 %v6900, %v7003
        %v7005 = vand.u32 %v7004, 4294901760
        %v7006 = vsub.f32 %v7004, %v7005
        %v7007 = vand.u32 %v7006, 4294901760
        %7008 = vmatmul.mubr.f32.gmra.mxu0 %v7007
        %v7009 = vpop.f32.mrf.mxu0
        %v7010 = vadd.f32 0.0, %v7009
        %v7011 = vpop.f32.mrf.mxu0
        %7012 = vmatprep.mubr.f32.mxu0 0.0
        %v7013 = vand.u32 %v6903, 4294901760
        %v7014 = vsub.f32 %v6903, %v7013
        %v7015 = vand.u32 %v7014, 4294901760
        %v7016 = vsub.f32 %v7014, %v7015
        %v7017 = vand.u32 %v7016, 4294901760
        %7018 = vmatmul.mubr.f32.gmra.mxu0 %v7017
        %v7019 = vpop.f32.mrf.mxu0
        %v7020 = vadd.f32 0.0, %v7019
        %v7021 = vpop.f32.mrf.mxu0
        %7022 = vmatprep.mubr.f32.mxu0 0.0
        %v7023 = vand.u32 %v6906, 4294901760
        %v7024 = vsub.f32 %v6906, %v7023
        %v7025 = vand.u32 %v7024, 4294901760
        %v7026 = vsub.f32 %v7024, %v7025
        %v7027 = vand.u32 %v7026, 4294901760
        %7028 = vmatmul.mubr.f32.gmra.mxu0 %v7027
        %v7029 = vpop.f32.mrf.mxu0
        %v7030 = vadd.f32 0.0, %v7029
        %v7031 = vpop.f32.mrf.mxu0
        %7032 = vmatprep.mubr.f32.mxu0 0.0
        %v7033 = vand.u32 %v6909, 4294901760
        %v7034 = vsub.f32 %v6909, %v7033
        %v7035 = vand.u32 %v7034, 4294901760
        %v7036 = vsub.f32 %v7034, %v7035
        %v7037 = vand.u32 %v7036, 4294901760
        %7038 = vmatmul.mubr.f32.gmra.mxu0 %v7037
        %v7039 = vpop.f32.mrf.mxu0
        %v7040 = vadd.f32 0.0, %v7039
        %v7041 = vpop.f32.mrf.mxu0
        %7042 = vmatprep.mubr.f32.mxu0 0.0
        %v7043 = vand.u32 %v6912, 4294901760
        %v7044 = vsub.f32 %v6912, %v7043
        %v7045 = vand.u32 %v7044, 4294901760
        %v7046 = vsub.f32 %v7044, %v7045
        %v7047 = vand.u32 %v7046, 4294901760
        %7048 = vmatmul.mubr.f32.gmra.mxu0 %v7047
        %v7049 = vpop.f32.mrf.mxu0
        %v7050 = vadd.f32 0.0, %v7049
        %v7051 = vpop.f32.mrf.mxu0
        %7052 = vmatprep.mubr.f32.mxu0 0.0
        %v7053 = vand.u32 %v6915, 4294901760
        %v7054 = vsub.f32 %v6915, %v7053
        %v7055 = vand.u32 %v7054, 4294901760
        %v7056 = vsub.f32 %v7054, %v7055
        %v7057 = vand.u32 %v7056, 4294901760
        %7058 = vmatmul.mubr.f32.gmra.mxu0 %v7057
        %v7059 = vpop.f32.mrf.mxu0
        %v7060 = vadd.f32 0.0, %v7059
        %v7061 = vpop.f32.mrf.mxu0
        %7062 = vdwg.mxu0
        %7063 = vmatprep.subr.mxu0 0.0
        %7064 = vmatpush1.msra.mxu0 0.0
        %7065 = vmatprep.subr.mxu0 0.0
        %7066 = vmatpush1.msra.mxu0 0.0
        %7067 = vmatprep.subr.mxu0 0.0
        %7068 = vmatpush1.msra.mxu0 0.0
        %7069 = vmatprep.subr.mxu0 0.0
        %7070 = vmatpush1.msra.mxu0 0.0
        %7071 = vmatprep.subr.mxu0 0.0
        %7072 = vmatpush1.msra.mxu0 0.0
        %7073 = vmatprep.subr.mxu0 0.0
        %7074 = vmatpush1.msra.mxu0 0.0
        %7075 = vmatprep.subr.mxu0 0.0
        %7076 = vmatpush1.msra.mxu0 0.0
        %7077 = vmatprep.subr.mxu0 0.0
        %7078 = vmatpush1.msra.mxu0 0.0
        %7079 = vmatprep.subr.mxu0 0.0
        %7080 = vmatpush1.msra.mxu0 0.0
        %7081 = vmatprep.subr.mxu0 0.0
        %7082 = vmatpush1.msra.mxu0 0.0
        %7083 = vmatprep.subr.mxu0 0.0
        %7084 = vmatpush1.msra.mxu0 0.0
        %7085 = vmatprep.subr.mxu0 0.0
        %7086 = vmatpush1.msra.mxu0 0.0
        %7087 = vmatprep.subr.mxu0 0.0
        %7088 = vmatpush1.msra.mxu0 0.0
        %7089 = vmatprep.subr.mxu0 0.0
        %7090 = vmatpush1.msra.mxu0 0.0
        %7091 = vmatprep.subr.mxu0 0.0
        %7092 = vmatpush1.msra.mxu0 0.0
        %7093 = vmatprep.subr.mxu0 0.0
        %v7094 = vand.u32 %v5208, 4294901760
        %v7095 = vsub.f32 %v5208, %v7094
        %v7096 = vand.u32 %v7095, 4294901760
        %v7097 = vsub.f32 %v7095, %v7096
        %v7098 = vand.u32 %v7097, 4294901760
        %7099 = vmatpush1.msra.mxu0 %v7098
        %7100 = vmatprep.subr.mxu0 0.0
        %7101 = vmatpush2.msra.mxu0 0.0
        %7102 = vmatprep.subr.mxu0 0.0
        %7103 = vmatpush2.msra.mxu0 0.0
        %7104 = vmatprep.subr.mxu0 0.0
        %7105 = vmatpush2.msra.mxu0 0.0
        %7106 = vmatprep.subr.mxu0 0.0
        %7107 = vmatpush2.msra.mxu0 0.0
        %7108 = vmatprep.subr.mxu0 0.0
        %7109 = vmatpush2.msra.mxu0 0.0
        %7110 = vmatprep.subr.mxu0 0.0
        %7111 = vmatpush2.msra.mxu0 0.0
        %7112 = vmatprep.subr.mxu0 0.0
        %7113 = vmatpush2.msra.mxu0 0.0
        %7114 = vmatprep.subr.mxu0 0.0
        %7115 = vmatpush2.msra.mxu0 0.0
        %7116 = vmatprep.subr.mxu0 0.0
        %7117 = vmatpush2.msra.mxu0 0.0
        %7118 = vmatprep.subr.mxu0 0.0
        %7119 = vmatpush2.msra.mxu0 0.0
        %7120 = vmatprep.subr.mxu0 0.0
        %7121 = vmatpush2.msra.mxu0 0.0
        %7122 = vmatprep.subr.mxu0 0.0
        %7123 = vmatpush2.msra.mxu0 0.0
        %7124 = vmatprep.subr.mxu0 0.0
        %7125 = vmatpush2.msra.mxu0 0.0
        %7126 = vmatprep.subr.mxu0 0.0
        %7127 = vmatpush2.msra.mxu0 0.0
        %7128 = vmatprep.subr.mxu0 0.0
        %7129 = vmatpush2.msra.mxu0 0.0
        %7130 = vmatprep.subr.mxu0 0.0
        %7131 = vmatpush2.msra.mxu0 0.0
        %7132 = vmatprep.mubr.f32.mxu0 0.0
        %v7133 = vand.u32 %v6894, 4294901760
        %7134 = vmatmul.mubr.f32.gmra.mxu0 %v7133
        %v7135 = vpop.f32.mrf.mxu0
        %v7136 = vadd.f32 %v6990, %v7135
        %v7137 = vpop.f32.mrf.mxu0
        %7138 = vmatprep.mubr.f32.mxu0 0.0
        %v7139 = vand.u32 %v6897, 4294901760
        %7140 = vmatmul.mubr.f32.gmra.mxu0 %v7139
        %v7141 = vpop.f32.mrf.mxu0
        %v7142 = vadd.f32 %v7000, %v7141
        %v7143 = vpop.f32.mrf.mxu0
        %7144 = vmatprep.mubr.f32.mxu0 0.0
        %v7145 = vand.u32 %v6900, 4294901760
        %7146 = vmatmul.mubr.f32.gmra.mxu0 %v7145
        %v7147 = vpop.f32.mrf.mxu0
        %v7148 = vadd.f32 %v7010, %v7147
        %v7149 = vpop.f32.mrf.mxu0
        %7150 = vmatprep.mubr.f32.mxu0 0.0
        %v7151 = vand.u32 %v6903, 4294901760
        %7152 = vmatmul.mubr.f32.gmra.mxu0 %v7151
        %v7153 = vpop.f32.mrf.mxu0
        %v7154 = vadd.f32 %v7020, %v7153
        %v7155 = vpop.f32.mrf.mxu0
        %7156 = vmatprep.mubr.f32.mxu0 0.0
        %v7157 = vand.u32 %v6906, 4294901760
        %7158 = vmatmul.mubr.f32.gmra.mxu0 %v7157
        %v7159 = vpop.f32.mrf.mxu0
        %v7160 = vadd.f32 %v7030, %v7159
        %v7161 = vpop.f32.mrf.mxu0
        %7162 = vmatprep.mubr.f32.mxu0 0.0
        %v7163 = vand.u32 %v6909, 4294901760
        %7164 = vmatmul.mubr.f32.gmra.mxu0 %v7163
        %v7165 = vpop.f32.mrf.mxu0
        %v7166 = vadd.f32 %v7040, %v7165
        %v7167 = vpop.f32.mrf.mxu0
        %7168 = vmatprep.mubr.f32.mxu0 0.0
        %v7169 = vand.u32 %v6912, 4294901760
        %7170 = vmatmul.mubr.f32.gmra.mxu0 %v7169
        %v7171 = vpop.f32.mrf.mxu0
        %v7172 = vadd.f32 %v7050, %v7171
        %v7173 = vpop.f32.mrf.mxu0
        %7174 = vmatprep.mubr.f32.mxu0 0.0
        %v7175 = vand.u32 %v6915, 4294901760
        %7176 = vmatmul.mubr.f32.gmra.mxu0 %v7175
        %v7177 = vpop.f32.mrf.mxu0
        %v7178 = vadd.f32 %v7060, %v7177
        %v7179 = vpop.f32.mrf.mxu0
        %7180 = vdwg.mxu0
        %7181 = vmatprep.subr.mxu0 0.0
        %7182 = vmatpush1.msra.mxu0 0.0
        %7183 = vmatprep.subr.mxu0 0.0
        %7184 = vmatpush1.msra.mxu0 0.0
        %7185 = vmatprep.subr.mxu0 0.0
        %7186 = vmatpush1.msra.mxu0 0.0
        %7187 = vmatprep.subr.mxu0 0.0
        %7188 = vmatpush1.msra.mxu0 0.0
        %7189 = vmatprep.subr.mxu0 0.0
        %7190 = vmatpush1.msra.mxu0 0.0
        %7191 = vmatprep.subr.mxu0 0.0
        %7192 = vmatpush1.msra.mxu0 0.0
        %7193 = vmatprep.subr.mxu0 0.0
        %7194 = vmatpush1.msra.mxu0 0.0
        %7195 = vmatprep.subr.mxu0 0.0
        %7196 = vmatpush1.msra.mxu0 0.0
        %7197 = vmatprep.subr.mxu0 0.0
        %7198 = vmatpush1.msra.mxu0 0.0
        %7199 = vmatprep.subr.mxu0 0.0
        %7200 = vmatpush1.msra.mxu0 0.0
        %7201 = vmatprep.subr.mxu0 0.0
        %7202 = vmatpush1.msra.mxu0 0.0
        %7203 = vmatprep.subr.mxu0 0.0
        %7204 = vmatpush1.msra.mxu0 0.0
        %7205 = vmatprep.subr.mxu0 0.0
        %7206 = vmatpush1.msra.mxu0 0.0
        %7207 = vmatprep.subr.mxu0 0.0
        %7208 = vmatpush1.msra.mxu0 0.0
        %7209 = vmatprep.subr.mxu0 0.0
        %7210 = vmatpush1.msra.mxu0 0.0
        %7211 = vmatprep.subr.mxu0 0.0
        %v7212 = vand.u32 %v5208, 4294901760
        %v7213 = vsub.f32 %v5208, %v7212
        %7214 = vmatpush1.msra.mxu0 %v7213
        %7215 = vmatprep.subr.mxu0 0.0
        %7216 = vmatpush2.msra.mxu0 0.0
        %7217 = vmatprep.subr.mxu0 0.0
        %7218 = vmatpush2.msra.mxu0 0.0
        %7219 = vmatprep.subr.mxu0 0.0
        %7220 = vmatpush2.msra.mxu0 0.0
        %7221 = vmatprep.subr.mxu0 0.0
        %7222 = vmatpush2.msra.mxu0 0.0
        %7223 = vmatprep.subr.mxu0 0.0
        %7224 = vmatpush2.msra.mxu0 0.0
        %7225 = vmatprep.subr.mxu0 0.0
        %7226 = vmatpush2.msra.mxu0 0.0
        %7227 = vmatprep.subr.mxu0 0.0
        %7228 = vmatpush2.msra.mxu0 0.0
        %7229 = vmatprep.subr.mxu0 0.0
        %7230 = vmatpush2.msra.mxu0 0.0
        %7231 = vmatprep.subr.mxu0 0.0
        %7232 = vmatpush2.msra.mxu0 0.0
        %7233 = vmatprep.subr.mxu0 0.0
        %7234 = vmatpush2.msra.mxu0 0.0
        %7235 = vmatprep.subr.mxu0 0.0
        %7236 = vmatpush2.msra.mxu0 0.0
        %7237 = vmatprep.subr.mxu0 0.0
        %7238 = vmatpush2.msra.mxu0 0.0
        %7239 = vmatprep.subr.mxu0 0.0
        %7240 = vmatpush2.msra.mxu0 0.0
        %7241 = vmatprep.subr.mxu0 0.0
        %7242 = vmatpush2.msra.mxu0 0.0
        %7243 = vmatprep.subr.mxu0 0.0
        %7244 = vmatpush2.msra.mxu0 0.0
        %7245 = vmatprep.subr.mxu0 0.0
        %7246 = vmatpush2.msra.mxu0 0.0
        %7247 = vmatprep.mubr.f32.mxu0 0.0
        %v7248 = vand.u32 %v6894, 4294901760
        %v7249 = vsub.f32 %v6894, %v7248
        %7250 = vmatmul.mubr.f32.gmra.mxu0 %v7249
        %v7251 = vpop.f32.mrf.mxu0
        %v7252 = vadd.f32 %v7136, %v7251
        %v7253 = vpop.f32.mrf.mxu0
        %7254 = vmatprep.mubr.f32.mxu0 0.0
        %v7255 = vand.u32 %v6897, 4294901760
        %v7256 = vsub.f32 %v6897, %v7255
        %7257 = vmatmul.mubr.f32.gmra.mxu0 %v7256
        %v7258 = vpop.f32.mrf.mxu0
        %v7259 = vadd.f32 %v7142, %v7258
        %v7260 = vpop.f32.mrf.mxu0
        %7261 = vmatprep.mubr.f32.mxu0 0.0
        %v7262 = vand.u32 %v6900, 4294901760
        %v7263 = vsub.f32 %v6900, %v7262
        %7264 = vmatmul.mubr.f32.gmra.mxu0 %v7263
        %v7265 = vpop.f32.mrf.mxu0
        %v7266 = vadd.f32 %v7148, %v7265
        %v7267 = vpop.f32.mrf.mxu0
        %7268 = vmatprep.mubr.f32.mxu0 0.0
        %v7269 = vand.u32 %v6903, 4294901760
        %v7270 = vsub.f32 %v6903, %v7269
        %7271 = vmatmul.mubr.f32.gmra.mxu0 %v7270
        %v7272 = vpop.f32.mrf.mxu0
        %v7273 = vadd.f32 %v7154, %v7272
        %v7274 = vpop.f32.mrf.mxu0
        %7275 = vmatprep.mubr.f32.mxu0 0.0
        %v7276 = vand.u32 %v6906, 4294901760
        %v7277 = vsub.f32 %v6906, %v7276
        %7278 = vmatmul.mubr.f32.gmra.mxu0 %v7277
        %v7279 = vpop.f32.mrf.mxu0
        %v7280 = vadd.f32 %v7160, %v7279
        %v7281 = vpop.f32.mrf.mxu0
        %7282 = vmatprep.mubr.f32.mxu0 0.0
        %v7283 = vand.u32 %v6909, 4294901760
        %v7284 = vsub.f32 %v6909, %v7283
        %7285 = vmatmul.mubr.f32.gmra.mxu0 %v7284
        %v7286 = vpop.f32.mrf.mxu0
        %v7287 = vadd.f32 %v7166, %v7286
        %v7288 = vpop.f32.mrf.mxu0
        %7289 = vmatprep.mubr.f32.mxu0 0.0
        %v7290 = vand.u32 %v6912, 4294901760
        %v7291 = vsub.f32 %v6912, %v7290
        %7292 = vmatmul.mubr.f32.gmra.mxu0 %v7291
        %v7293 = vpop.f32.mrf.mxu0
        %v7294 = vadd.f32 %v7172, %v7293
        %v7295 = vpop.f32.mrf.mxu0
        %7296 = vmatprep.mubr.f32.mxu0 0.0
        %v7297 = vand.u32 %v6915, 4294901760
        %v7298 = vsub.f32 %v6915, %v7297
        %7299 = vmatmul.mubr.f32.gmra.mxu0 %v7298
        %v7300 = vpop.f32.mrf.mxu0
        %v7301 = vadd.f32 %v7178, %v7300
        %v7302 = vpop.f32.mrf.mxu0
        %7303 = vdwg.mxu0
        %7304 = vmatprep.subr.mxu0 0.0
        %7305 = vmatpush1.msra.mxu0 0.0
        %7306 = vmatprep.subr.mxu0 0.0
        %7307 = vmatpush1.msra.mxu0 0.0
        %7308 = vmatprep.subr.mxu0 0.0
        %7309 = vmatpush1.msra.mxu0 0.0
        %7310 = vmatprep.subr.mxu0 0.0
        %7311 = vmatpush1.msra.mxu0 0.0
        %7312 = vmatprep.subr.mxu0 0.0
        %7313 = vmatpush1.msra.mxu0 0.0
        %7314 = vmatprep.subr.mxu0 0.0
        %7315 = vmatpush1.msra.mxu0 0.0
        %7316 = vmatprep.subr.mxu0 0.0
        %7317 = vmatpush1.msra.mxu0 0.0
        %7318 = vmatprep.subr.mxu0 0.0
        %7319 = vmatpush1.msra.mxu0 0.0
        %7320 = vmatprep.subr.mxu0 0.0
        %7321 = vmatpush1.msra.mxu0 0.0
        %7322 = vmatprep.subr.mxu0 0.0
        %7323 = vmatpush1.msra.mxu0 0.0
        %7324 = vmatprep.subr.mxu0 0.0
        %7325 = vmatpush1.msra.mxu0 0.0
        %7326 = vmatprep.subr.mxu0 0.0
        %7327 = vmatpush1.msra.mxu0 0.0
        %7328 = vmatprep.subr.mxu0 0.0
        %7329 = vmatpush1.msra.mxu0 0.0
        %7330 = vmatprep.subr.mxu0 0.0
        %7331 = vmatpush1.msra.mxu0 0.0
        %7332 = vmatprep.subr.mxu0 0.0
        %7333 = vmatpush1.msra.mxu0 0.0
        %7334 = vmatprep.subr.mxu0 0.0
        %v7335 = vand.u32 %v5208, 4294901760
        %7336 = vmatpush1.msra.mxu0 %v7335
        %7337 = vmatprep.subr.mxu0 0.0
        %7338 = vmatpush2.msra.mxu0 0.0
        %7339 = vmatprep.subr.mxu0 0.0
        %7340 = vmatpush2.msra.mxu0 0.0
        %7341 = vmatprep.subr.mxu0 0.0
        %7342 = vmatpush2.msra.mxu0 0.0
        %7343 = vmatprep.subr.mxu0 0.0
        %7344 = vmatpush2.msra.mxu0 0.0
        %7345 = vmatprep.subr.mxu0 0.0
        %7346 = vmatpush2.msra.mxu0 0.0
        %7347 = vmatprep.subr.mxu0 0.0
        %7348 = vmatpush2.msra.mxu0 0.0
        %7349 = vmatprep.subr.mxu0 0.0
        %7350 = vmatpush2.msra.mxu0 0.0
        %7351 = vmatprep.subr.mxu0 0.0
        %7352 = vmatpush2.msra.mxu0 0.0
        %7353 = vmatprep.subr.mxu0 0.0
        %7354 = vmatpush2.msra.mxu0 0.0
        %7355 = vmatprep.subr.mxu0 0.0
        %7356 = vmatpush2.msra.mxu0 0.0
        %7357 = vmatprep.subr.mxu0 0.0
        %7358 = vmatpush2.msra.mxu0 0.0
        %7359 = vmatprep.subr.mxu0 0.0
        %7360 = vmatpush2.msra.mxu0 0.0
        %7361 = vmatprep.subr.mxu0 0.0
        %7362 = vmatpush2.msra.mxu0 0.0
        %7363 = vmatprep.subr.mxu0 0.0
        %7364 = vmatpush2.msra.mxu0 0.0
        %7365 = vmatprep.subr.mxu0 0.0
        %7366 = vmatpush2.msra.mxu0 0.0
        %7367 = vmatprep.subr.mxu0 0.0
        %7368 = vmatpush2.msra.mxu0 0.0
        %7369 = vmatprep.mubr.f32.mxu0 0.0
        %v7370 = vand.u32 %v6894, 4294901760
        %v7371 = vsub.f32 %v6894, %v7370
        %v7372 = vand.u32 %v7371, 4294901760
        %7373 = vmatmul.mubr.f32.gmra.mxu0 %v7372
        %v7374 = vpop.f32.mrf.mxu0
        %v7375 = vadd.f32 %v7252, %v7374
        %v7376 = vpop.f32.mrf.mxu0
        %7377 = vmatprep.mubr.f32.mxu0 0.0
        %v7378 = vand.u32 %v6897, 4294901760
        %v7379 = vsub.f32 %v6897, %v7378
        %v7380 = vand.u32 %v7379, 4294901760
        %7381 = vmatmul.mubr.f32.gmra.mxu0 %v7380
        %v7382 = vpop.f32.mrf.mxu0
        %v7383 = vadd.f32 %v7259, %v7382
        %v7384 = vpop.f32.mrf.mxu0
        %7385 = vmatprep.mubr.f32.mxu0 0.0
        %v7386 = vand.u32 %v6900, 4294901760
        %v7387 = vsub.f32 %v6900, %v7386
        %v7388 = vand.u32 %v7387, 4294901760
        %7389 = vmatmul.mubr.f32.gmra.mxu0 %v7388
        %v7390 = vpop.f32.mrf.mxu0
        %v7391 = vadd.f32 %v7266, %v7390
        %v7392 = vpop.f32.mrf.mxu0
        %7393 = vmatprep.mubr.f32.mxu0 0.0
        %v7394 = vand.u32 %v6903, 4294901760
        %v7395 = vsub.f32 %v6903, %v7394
        %v7396 = vand.u32 %v7395, 4294901760
        %7397 = vmatmul.mubr.f32.gmra.mxu0 %v7396
        %v7398 = vpop.f32.mrf.mxu0
        %v7399 = vadd.f32 %v7273, %v7398
        %v7400 = vpop.f32.mrf.mxu0
        %7401 = vmatprep.mubr.f32.mxu0 0.0
        %v7402 = vand.u32 %v6906, 4294901760
        %v7403 = vsub.f32 %v6906, %v7402
        %v7404 = vand.u32 %v7403, 4294901760
        %7405 = vmatmul.mubr.f32.gmra.mxu0 %v7404
        %v7406 = vpop.f32.mrf.mxu0
        %v7407 = vadd.f32 %v7280, %v7406
        %v7408 = vpop.f32.mrf.mxu0
        %7409 = vmatprep.mubr.f32.mxu0 0.0
        %v7410 = vand.u32 %v6909, 4294901760
        %v7411 = vsub.f32 %v6909, %v7410
        %v7412 = vand.u32 %v7411, 4294901760
        %7413 = vmatmul.mubr.f32.gmra.mxu0 %v7412
        %v7414 = vpop.f32.mrf.mxu0
        %v7415 = vadd.f32 %v7287, %v7414
        %v7416 = vpop.f32.mrf.mxu0
        %7417 = vmatprep.mubr.f32.mxu0 0.0
        %v7418 = vand.u32 %v6912, 4294901760
        %v7419 = vsub.f32 %v6912, %v7418
        %v7420 = vand.u32 %v7419, 4294901760
        %7421 = vmatmul.mubr.f32.gmra.mxu0 %v7420
        %v7422 = vpop.f32.mrf.mxu0
        %v7423 = vadd.f32 %v7294, %v7422
        %v7424 = vpop.f32.mrf.mxu0
        %7425 = vmatprep.mubr.f32.mxu0 0.0
        %v7426 = vand.u32 %v6915, 4294901760
        %v7427 = vsub.f32 %v6915, %v7426
        %v7428 = vand.u32 %v7427, 4294901760
        %7429 = vmatmul.mubr.f32.gmra.mxu0 %v7428
        %v7430 = vpop.f32.mrf.mxu0
        %v7431 = vadd.f32 %v7301, %v7430
        %v7432 = vpop.f32.mrf.mxu0
        %7433 = vdwg.mxu0
        %7434 = vmatprep.subr.mxu0 0.0
        %7435 = vmatpush1.msra.mxu0 0.0
        %7436 = vmatprep.subr.mxu0 0.0
        %7437 = vmatpush1.msra.mxu0 0.0
        %7438 = vmatprep.subr.mxu0 0.0
        %7439 = vmatpush1.msra.mxu0 0.0
        %7440 = vmatprep.subr.mxu0 0.0
        %7441 = vmatpush1.msra.mxu0 0.0
        %7442 = vmatprep.subr.mxu0 0.0
        %7443 = vmatpush1.msra.mxu0 0.0
        %7444 = vmatprep.subr.mxu0 0.0
        %7445 = vmatpush1.msra.mxu0 0.0
        %7446 = vmatprep.subr.mxu0 0.0
        %7447 = vmatpush1.msra.mxu0 0.0
        %7448 = vmatprep.subr.mxu0 0.0
        %7449 = vmatpush1.msra.mxu0 0.0
        %7450 = vmatprep.subr.mxu0 0.0
        %7451 = vmatpush1.msra.mxu0 0.0
        %7452 = vmatprep.subr.mxu0 0.0
        %7453 = vmatpush1.msra.mxu0 0.0
        %7454 = vmatprep.subr.mxu0 0.0
        %7455 = vmatpush1.msra.mxu0 0.0
        %7456 = vmatprep.subr.mxu0 0.0
        %7457 = vmatpush1.msra.mxu0 0.0
        %7458 = vmatprep.subr.mxu0 0.0
        %7459 = vmatpush1.msra.mxu0 0.0
        %7460 = vmatprep.subr.mxu0 0.0
        %7461 = vmatpush1.msra.mxu0 0.0
        %7462 = vmatprep.subr.mxu0 0.0
        %7463 = vmatpush1.msra.mxu0 0.0
        %7464 = vmatprep.subr.mxu0 0.0
        %v7465 = vand.u32 %v5208, 4294901760
        %v7466 = vsub.f32 %v5208, %v7465
        %v7467 = vand.u32 %v7466, 4294901760
        %7468 = vmatpush1.msra.mxu0 %v7467
        %7469 = vmatprep.subr.mxu0 0.0
        %7470 = vmatpush2.msra.mxu0 0.0
        %7471 = vmatprep.subr.mxu0 0.0
        %7472 = vmatpush2.msra.mxu0 0.0
        %7473 = vmatprep.subr.mxu0 0.0
        %7474 = vmatpush2.msra.mxu0 0.0
        %7475 = vmatprep.subr.mxu0 0.0
        %7476 = vmatpush2.msra.mxu0 0.0
        %7477 = vmatprep.subr.mxu0 0.0
        %7478 = vmatpush2.msra.mxu0 0.0
        %7479 = vmatprep.subr.mxu0 0.0
        %7480 = vmatpush2.msra.mxu0 0.0
        %7481 = vmatprep.subr.mxu0 0.0
        %7482 = vmatpush2.msra.mxu0 0.0
        %7483 = vmatprep.subr.mxu0 0.0
        %7484 = vmatpush2.msra.mxu0 0.0
        %7485 = vmatprep.subr.mxu0 0.0
        %7486 = vmatpush2.msra.mxu0 0.0
        %7487 = vmatprep.subr.mxu0 0.0
        %7488 = vmatpush2.msra.mxu0 0.0
        %7489 = vmatprep.subr.mxu0 0.0
        %7490 = vmatpush2.msra.mxu0 0.0
        %7491 = vmatprep.subr.mxu0 0.0
        %7492 = vmatpush2.msra.mxu0 0.0
        %7493 = vmatprep.subr.mxu0 0.0
        %7494 = vmatpush2.msra.mxu0 0.0
        %7495 = vmatprep.subr.mxu0 0.0
        %7496 = vmatpush2.msra.mxu0 0.0
        %7497 = vmatprep.subr.mxu0 0.0
        %7498 = vmatpush2.msra.mxu0 0.0
        %7499 = vmatprep.subr.mxu0 0.0
        %7500 = vmatpush2.msra.mxu0 0.0
        %7501 = vmatprep.mubr.f32.mxu0 0.0
        %v7502 = vand.u32 %v6894, 4294901760
        %7503 = vmatmul.mubr.f32.gmra.mxu0 %v7502
        %v7504 = vpop.f32.mrf.mxu0
        %v7505 = vadd.f32 %v7375, %v7504
        %v7506 = vpop.f32.mrf.mxu0
        %7507 = vmatprep.mubr.f32.mxu0 0.0
        %v7508 = vand.u32 %v6897, 4294901760
        %7509 = vmatmul.mubr.f32.gmra.mxu0 %v7508
        %v7510 = vpop.f32.mrf.mxu0
        %v7511 = vadd.f32 %v7383, %v7510
        %v7512 = vpop.f32.mrf.mxu0
        %7513 = vmatprep.mubr.f32.mxu0 0.0
        %v7514 = vand.u32 %v6900, 4294901760
        %7515 = vmatmul.mubr.f32.gmra.mxu0 %v7514
        %v7516 = vpop.f32.mrf.mxu0
        %v7517 = vadd.f32 %v7391, %v7516
        %v7518 = vpop.f32.mrf.mxu0
        %7519 = vmatprep.mubr.f32.mxu0 0.0
        %v7520 = vand.u32 %v6903, 4294901760
        %7521 = vmatmul.mubr.f32.gmra.mxu0 %v7520
        %v7522 = vpop.f32.mrf.mxu0
        %v7523 = vadd.f32 %v7399, %v7522
        %v7524 = vpop.f32.mrf.mxu0
        %7525 = vmatprep.mubr.f32.mxu0 0.0
        %v7526 = vand.u32 %v6906, 4294901760
        %7527 = vmatmul.mubr.f32.gmra.mxu0 %v7526
        %v7528 = vpop.f32.mrf.mxu0
        %v7529 = vadd.f32 %v7407, %v7528
        %v7530 = vpop.f32.mrf.mxu0
        %7531 = vmatprep.mubr.f32.mxu0 0.0
        %v7532 = vand.u32 %v6909, 4294901760
        %7533 = vmatmul.mubr.f32.gmra.mxu0 %v7532
        %v7534 = vpop.f32.mrf.mxu0
        %v7535 = vadd.f32 %v7415, %v7534
        %v7536 = vpop.f32.mrf.mxu0
        %7537 = vmatprep.mubr.f32.mxu0 0.0
        %v7538 = vand.u32 %v6912, 4294901760
        %7539 = vmatmul.mubr.f32.gmra.mxu0 %v7538
        %v7540 = vpop.f32.mrf.mxu0
        %v7541 = vadd.f32 %v7423, %v7540
        %v7542 = vpop.f32.mrf.mxu0
        %7543 = vmatprep.mubr.f32.mxu0 0.0
        %v7544 = vand.u32 %v6915, 4294901760
        %7545 = vmatmul.mubr.f32.gmra.mxu0 %v7544
        %v7546 = vpop.f32.mrf.mxu0
        %v7547 = vadd.f32 %v7431, %v7546
        %v7548 = vpop.f32.mrf.mxu0
        %7549 = vdwg.mxu0
        %7550 = vmatprep.subr.mxu0 0.0
        %7551 = vmatpush1.msra.mxu0 0.0
        %7552 = vmatprep.subr.mxu0 0.0
        %7553 = vmatpush1.msra.mxu0 0.0
        %7554 = vmatprep.subr.mxu0 0.0
        %7555 = vmatpush1.msra.mxu0 0.0
        %7556 = vmatprep.subr.mxu0 0.0
        %7557 = vmatpush1.msra.mxu0 0.0
        %7558 = vmatprep.subr.mxu0 0.0
        %7559 = vmatpush1.msra.mxu0 0.0
        %7560 = vmatprep.subr.mxu0 0.0
        %7561 = vmatpush1.msra.mxu0 0.0
        %7562 = vmatprep.subr.mxu0 0.0
        %7563 = vmatpush1.msra.mxu0 0.0
        %7564 = vmatprep.subr.mxu0 0.0
        %7565 = vmatpush1.msra.mxu0 0.0
        %7566 = vmatprep.subr.mxu0 0.0
        %7567 = vmatpush1.msra.mxu0 0.0
        %7568 = vmatprep.subr.mxu0 0.0
        %7569 = vmatpush1.msra.mxu0 0.0
        %7570 = vmatprep.subr.mxu0 0.0
        %7571 = vmatpush1.msra.mxu0 0.0
        %7572 = vmatprep.subr.mxu0 0.0
        %7573 = vmatpush1.msra.mxu0 0.0
        %7574 = vmatprep.subr.mxu0 0.0
        %7575 = vmatpush1.msra.mxu0 0.0
        %7576 = vmatprep.subr.mxu0 0.0
        %7577 = vmatpush1.msra.mxu0 0.0
        %7578 = vmatprep.subr.mxu0 0.0
        %7579 = vmatpush1.msra.mxu0 0.0
        %7580 = vmatprep.subr.mxu0 0.0
        %v7581 = vand.u32 %v5208, 4294901760
        %7582 = vmatpush1.msra.mxu0 %v7581
        %7583 = vmatprep.subr.mxu0 0.0
        %7584 = vmatpush2.msra.mxu0 0.0
        %7585 = vmatprep.subr.mxu0 0.0
        %7586 = vmatpush2.msra.mxu0 0.0
        %7587 = vmatprep.subr.mxu0 0.0
        %7588 = vmatpush2.msra.mxu0 0.0
        %7589 = vmatprep.subr.mxu0 0.0
        %7590 = vmatpush2.msra.mxu0 0.0
        %7591 = vmatprep.subr.mxu0 0.0
        %7592 = vmatpush2.msra.mxu0 0.0
        %7593 = vmatprep.subr.mxu0 0.0
        %7594 = vmatpush2.msra.mxu0 0.0
        %7595 = vmatprep.subr.mxu0 0.0
        %7596 = vmatpush2.msra.mxu0 0.0
        %7597 = vmatprep.subr.mxu0 0.0
        %7598 = vmatpush2.msra.mxu0 0.0
        %7599 = vmatprep.subr.mxu0 0.0
        %7600 = vmatpush2.msra.mxu0 0.0
        %7601 = vmatprep.subr.mxu0 0.0
        %7602 = vmatpush2.msra.mxu0 0.0
        %7603 = vmatprep.subr.mxu0 0.0
        %7604 = vmatpush2.msra.mxu0 0.0
        %7605 = vmatprep.subr.mxu0 0.0
        %7606 = vmatpush2.msra.mxu0 0.0
        %7607 = vmatprep.subr.mxu0 0.0
        %7608 = vmatpush2.msra.mxu0 0.0
        %7609 = vmatprep.subr.mxu0 0.0
        %7610 = vmatpush2.msra.mxu0 0.0
        %7611 = vmatprep.subr.mxu0 0.0
        %7612 = vmatpush2.msra.mxu0 0.0
        %7613 = vmatprep.subr.mxu0 0.0
        %7614 = vmatpush2.msra.mxu0 0.0
        %7615 = vmatprep.mubr.f32.mxu0 0.0
        %v7616 = vand.u32 %v6894, 4294901760
        %7617 = vmatmul.mubr.f32.gmra.mxu0 %v7616
        %v7618 = vpop.f32.mrf.mxu0
        %v7619 = vadd.f32 %v7505, %v7618
        %v7620 = vpop.f32.mrf.mxu0
        %7621 = vmatprep.mubr.f32.mxu0 0.0
        %v7622 = vand.u32 %v6897, 4294901760
        %7623 = vmatmul.mubr.f32.gmra.mxu0 %v7622
        %v7624 = vpop.f32.mrf.mxu0
        %v7625 = vadd.f32 %v7511, %v7624
        %v7626 = vpop.f32.mrf.mxu0
        %7627 = vmatprep.mubr.f32.mxu0 0.0
        %v7628 = vand.u32 %v6900, 4294901760
        %7629 = vmatmul.mubr.f32.gmra.mxu0 %v7628
        %v7630 = vpop.f32.mrf.mxu0
        %v7631 = vadd.f32 %v7517, %v7630
        %v7632 = vpop.f32.mrf.mxu0
        %7633 = vmatprep.mubr.f32.mxu0 0.0
        %v7634 = vand.u32 %v6903, 4294901760
        %7635 = vmatmul.mubr.f32.gmra.mxu0 %v7634
        %v7636 = vpop.f32.mrf.mxu0
        %v7637 = vadd.f32 %v7523, %v7636
        %v7638 = vpop.f32.mrf.mxu0
        %7639 = vmatprep.mubr.f32.mxu0 0.0
        %v7640 = vand.u32 %v6906, 4294901760
        %7641 = vmatmul.mubr.f32.gmra.mxu0 %v7640
        %v7642 = vpop.f32.mrf.mxu0
        %v7643 = vadd.f32 %v7529, %v7642
        %v7644 = vpop.f32.mrf.mxu0
        %7645 = vmatprep.mubr.f32.mxu0 0.0
        %v7646 = vand.u32 %v6909, 4294901760
        %7647 = vmatmul.mubr.f32.gmra.mxu0 %v7646
        %v7648 = vpop.f32.mrf.mxu0
        %v7649 = vadd.f32 %v7535, %v7648
        %v7650 = vpop.f32.mrf.mxu0
        %7651 = vmatprep.mubr.f32.mxu0 0.0
        %v7652 = vand.u32 %v6912, 4294901760
        %7653 = vmatmul.mubr.f32.gmra.mxu0 %v7652
        %v7654 = vpop.f32.mrf.mxu0
        %v7655 = vadd.f32 %v7541, %v7654
        %v7656 = vpop.f32.mrf.mxu0
        %7657 = vmatprep.mubr.f32.mxu0 0.0
        %v7658 = vand.u32 %v6915, 4294901760
        %7659 = vmatmul.mubr.f32.gmra.mxu0 %v7658
        %v7660 = vpop.f32.mrf.mxu0
        %v7661 = vadd.f32 %v7547, %v7660
        %v7662 = vpop.f32.mrf.mxu0
        %7663 = vdwg.mxu0
        %v7664 = vld [vmem:[%s13] sm:$0xff]
        %v7665 = vld [vmem:[%s13 + $0x8] sm:$0xff]
        %v7666 = vld [vmem:[%s13 + $0x10] sm:$0xff]
        %v7667 = vld [vmem:[%s13 + $0x18] sm:$0xff]
        %v7668 = vld [vmem:[%s13 + $0x20] sm:$0xff]
        %v7669 = vld [vmem:[%s13 + $0x28] sm:$0xff]
        %v7670 = vld [vmem:[%s13 + $0x30] sm:$0xff]
        %v7671 = vld [vmem:[%s13 + $0x38] sm:$0xff]
        %v7672 = vmul.f32 %v7619, %v7664
        %v7673 = vmul.f32 %v7625, %v7665
        %v7674 = vmul.f32 %v7631, %v7666
        %v7675 = vmul.f32 %v7637, %v7667
        %v7676 = vmul.f32 %v7643, %v7668
        %v7677 = vmul.f32 %v7649, %v7669
        %v7678 = vmul.f32 %v7655, %v7670
        %v7679 = vmul.f32 %v7661, %v7671
        %v7681 = vsel %vm6328, %v6884, 0
        %7683 = vmatprep.subr.mxu0 0.0
        %7684 = vmatpush1.msra.mxu0 0.0
        %7685 = vmatprep.subr.mxu0 0.0
        %7686 = vmatpush1.msra.mxu0 0.0
        %7687 = vmatprep.subr.mxu0 0.0
        %7688 = vmatpush1.msra.mxu0 0.0
        %7689 = vmatprep.subr.mxu0 0.0
        %7690 = vmatpush1.msra.mxu0 0.0
        %7691 = vmatprep.subr.mxu0 0.0
        %7692 = vmatpush1.msra.mxu0 0.0
        %7693 = vmatprep.subr.mxu0 0.0
        %7694 = vmatpush1.msra.mxu0 0.0
        %7695 = vmatprep.subr.mxu0 0.0
        %7696 = vmatpush1.msra.mxu0 0.0
        %7697 = vmatprep.subr.mxu0 0.0
        %7698 = vmatpush1.msra.mxu0 0.0
        %7699 = vmatprep.subr.mxu0 0.0
        %v7700 = vand.u32 %v7679, 4294901760
        %7701 = vmatpush1.msra.mxu0 %v7700
        %7702 = vmatprep.subr.mxu0 0.0
        %v7703 = vand.u32 %v7678, 4294901760
        %7704 = vmatpush1.msra.mxu0 %v7703
        %7705 = vmatprep.subr.mxu0 0.0
        %v7706 = vand.u32 %v7677, 4294901760
        %7707 = vmatpush1.msra.mxu0 %v7706
        %7708 = vmatprep.subr.mxu0 0.0
        %v7709 = vand.u32 %v7676, 4294901760
        %7710 = vmatpush1.msra.mxu0 %v7709
        %7711 = vmatprep.subr.mxu0 0.0
        %v7712 = vand.u32 %v7675, 4294901760
        %7713 = vmatpush1.msra.mxu0 %v7712
        %7714 = vmatprep.subr.mxu0 0.0
        %v7715 = vand.u32 %v7674, 4294901760
        %7716 = vmatpush1.msra.mxu0 %v7715
        %7717 = vmatprep.subr.mxu0 0.0
        %v7718 = vand.u32 %v7673, 4294901760
        %7719 = vmatpush1.msra.mxu0 %v7718
        %7720 = vmatprep.subr.mxu0 0.0
        %v7721 = vand.u32 %v7672, 4294901760
        %7722 = vmatpush1.msra.mxu0 %v7721
        %7723 = vmatprep.subr.mxu0 0.0
        %7724 = vmatpush2.msra.mxu0 0.0
        %7725 = vmatprep.subr.mxu0 0.0
        %7726 = vmatpush2.msra.mxu0 0.0
        %7727 = vmatprep.subr.mxu0 0.0
        %7728 = vmatpush2.msra.mxu0 0.0
        %7729 = vmatprep.subr.mxu0 0.0
        %7730 = vmatpush2.msra.mxu0 0.0
        %7731 = vmatprep.subr.mxu0 0.0
        %7732 = vmatpush2.msra.mxu0 0.0
        %7733 = vmatprep.subr.mxu0 0.0
        %7734 = vmatpush2.msra.mxu0 0.0
        %7735 = vmatprep.subr.mxu0 0.0
        %7736 = vmatpush2.msra.mxu0 0.0
        %7737 = vmatprep.subr.mxu0 0.0
        %7738 = vmatpush2.msra.mxu0 0.0
        %7739 = vmatprep.subr.mxu0 0.0
        %7740 = vmatpush2.msra.mxu0 0.0
        %7741 = vmatprep.subr.mxu0 0.0
        %7742 = vmatpush2.msra.mxu0 0.0
        %7743 = vmatprep.subr.mxu0 0.0
        %7744 = vmatpush2.msra.mxu0 0.0
        %7745 = vmatprep.subr.mxu0 0.0
        %7746 = vmatpush2.msra.mxu0 0.0
        %7747 = vmatprep.subr.mxu0 0.0
        %7748 = vmatpush2.msra.mxu0 0.0
        %7749 = vmatprep.subr.mxu0 0.0
        %7750 = vmatpush2.msra.mxu0 0.0
        %7751 = vmatprep.subr.mxu0 0.0
        %7752 = vmatpush2.msra.mxu0 0.0
        %7753 = vmatprep.subr.mxu0 0.0
        %7754 = vmatpush2.msra.mxu0 0.0
        %7755 = vmatprep.mubr.f32.mxu0 0.0
        %v7756 = vand.u32 %v7681, 4294901760
        %v7757 = vsub.f32 %v7681, %v7756
        %v7758 = vand.u32 %v7757, 4294901760
        %v7759 = vsub.f32 %v7757, %v7758
        %v7760 = vand.u32 %v7759, 4294901760
        %7761 = vmatmul.mubr.f32.gmra.mxu0 %v7760
        %v7762 = vpop.f32.mrf.mxu0
        %v7763 = vadd.f32 0.0, %v7762
        %v7764 = vpop.f32.mrf.mxu0
        %7765 = vdwg.mxu0
        %7766 = vmatprep.subr.mxu0 0.0
        %7767 = vmatpush1.msra.mxu0 0.0
        %7768 = vmatprep.subr.mxu0 0.0
        %7769 = vmatpush1.msra.mxu0 0.0
        %7770 = vmatprep.subr.mxu0 0.0
        %7771 = vmatpush1.msra.mxu0 0.0
        %7772 = vmatprep.subr.mxu0 0.0
        %7773 = vmatpush1.msra.mxu0 0.0
        %7774 = vmatprep.subr.mxu0 0.0
        %7775 = vmatpush1.msra.mxu0 0.0
        %7776 = vmatprep.subr.mxu0 0.0
        %7777 = vmatpush1.msra.mxu0 0.0
        %7778 = vmatprep.subr.mxu0 0.0
        %7779 = vmatpush1.msra.mxu0 0.0
        %7780 = vmatprep.subr.mxu0 0.0
        %7781 = vmatpush1.msra.mxu0 0.0
        %7782 = vmatprep.subr.mxu0 0.0
        %v7783 = vand.u32 %v7679, 4294901760
        %v7784 = vsub.f32 %v7679, %v7783
        %v7785 = vand.u32 %v7784, 4294901760
        %v7786 = vsub.f32 %v7784, %v7785
        %v7787 = vand.u32 %v7786, 4294901760
        %7788 = vmatpush1.msra.mxu0 %v7787
        %7789 = vmatprep.subr.mxu0 0.0
        %v7790 = vand.u32 %v7678, 4294901760
        %v7791 = vsub.f32 %v7678, %v7790
        %v7792 = vand.u32 %v7791, 4294901760
        %v7793 = vsub.f32 %v7791, %v7792
        %v7794 = vand.u32 %v7793, 4294901760
        %7795 = vmatpush1.msra.mxu0 %v7794
        %7796 = vmatprep.subr.mxu0 0.0
        %v7797 = vand.u32 %v7677, 4294901760
        %v7798 = vsub.f32 %v7677, %v7797
        %v7799 = vand.u32 %v7798, 4294901760
        %v7800 = vsub.f32 %v7798, %v7799
        %v7801 = vand.u32 %v7800, 4294901760
        %7802 = vmatpush1.msra.mxu0 %v7801
        %7803 = vmatprep.subr.mxu0 0.0
        %v7804 = vand.u32 %v7676, 4294901760
        %v7805 = vsub.f32 %v7676, %v7804
        %v7806 = vand.u32 %v7805, 4294901760
        %v7807 = vsub.f32 %v7805, %v7806
        %v7808 = vand.u32 %v7807, 4294901760
        %7809 = vmatpush1.msra.mxu0 %v7808
        %7810 = vmatprep.subr.mxu0 0.0
        %v7811 = vand.u32 %v7675, 4294901760
        %v7812 = vsub.f32 %v7675, %v7811
        %v7813 = vand.u32 %v7812, 4294901760
        %v7814 = vsub.f32 %v7812, %v7813
        %v7815 = vand.u32 %v7814, 4294901760
        %7816 = vmatpush1.msra.mxu0 %v7815
        %7817 = vmatprep.subr.mxu0 0.0
        %v7818 = vand.u32 %v7674, 4294901760
        %v7819 = vsub.f32 %v7674, %v7818
        %v7820 = vand.u32 %v7819, 4294901760
        %v7821 = vsub.f32 %v7819, %v7820
        %v7822 = vand.u32 %v7821, 4294901760
        %7823 = vmatpush1.msra.mxu0 %v7822
        %7824 = vmatprep.subr.mxu0 0.0
        %v7825 = vand.u32 %v7673, 4294901760
        %v7826 = vsub.f32 %v7673, %v7825
        %v7827 = vand.u32 %v7826, 4294901760
        %v7828 = vsub.f32 %v7826, %v7827
        %v7829 = vand.u32 %v7828, 4294901760
        %7830 = vmatpush1.msra.mxu0 %v7829
        %7831 = vmatprep.subr.mxu0 0.0
        %v7832 = vand.u32 %v7672, 4294901760
        %v7833 = vsub.f32 %v7672, %v7832
        %v7834 = vand.u32 %v7833, 4294901760
        %v7835 = vsub.f32 %v7833, %v7834
        %v7836 = vand.u32 %v7835, 4294901760
        %7837 = vmatpush1.msra.mxu0 %v7836
        %7838 = vmatprep.subr.mxu0 0.0
        %7839 = vmatpush2.msra.mxu0 0.0
        %7840 = vmatprep.subr.mxu0 0.0
        %7841 = vmatpush2.msra.mxu0 0.0
        %7842 = vmatprep.subr.mxu0 0.0
        %7843 = vmatpush2.msra.mxu0 0.0
        %7844 = vmatprep.subr.mxu0 0.0
        %7845 = vmatpush2.msra.mxu0 0.0
        %7846 = vmatprep.subr.mxu0 0.0
        %7847 = vmatpush2.msra.mxu0 0.0
        %7848 = vmatprep.subr.mxu0 0.0
        %7849 = vmatpush2.msra.mxu0 0.0
        %7850 = vmatprep.subr.mxu0 0.0
        %7851 = vmatpush2.msra.mxu0 0.0
        %7852 = vmatprep.subr.mxu0 0.0
        %7853 = vmatpush2.msra.mxu0 0.0
        %7854 = vmatprep.subr.mxu0 0.0
        %7855 = vmatpush2.msra.mxu0 0.0
        %7856 = vmatprep.subr.mxu0 0.0
        %7857 = vmatpush2.msra.mxu0 0.0
        %7858 = vmatprep.subr.mxu0 0.0
        %7859 = vmatpush2.msra.mxu0 0.0
        %7860 = vmatprep.subr.mxu0 0.0
        %7861 = vmatpush2.msra.mxu0 0.0
        %7862 = vmatprep.subr.mxu0 0.0
        %7863 = vmatpush2.msra.mxu0 0.0
        %7864 = vmatprep.subr.mxu0 0.0
        %7865 = vmatpush2.msra.mxu0 0.0
        %7866 = vmatprep.subr.mxu0 0.0
        %7867 = vmatpush2.msra.mxu0 0.0
        %7868 = vmatprep.subr.mxu0 0.0
        %7869 = vmatpush2.msra.mxu0 0.0
        %7870 = vmatprep.mubr.f32.mxu0 0.0
        %v7871 = vand.u32 %v7681, 4294901760
        %7872 = vmatmul.mubr.f32.gmra.mxu0 %v7871
        %v7873 = vpop.f32.mrf.mxu0
        %v7874 = vadd.f32 %v7763, %v7873
        %v7875 = vpop.f32.mrf.mxu0
        %7876 = vdwg.mxu0
        %7877 = vmatprep.subr.mxu0 0.0
        %7878 = vmatpush1.msra.mxu0 0.0
        %7879 = vmatprep.subr.mxu0 0.0
        %7880 = vmatpush1.msra.mxu0 0.0
        %7881 = vmatprep.subr.mxu0 0.0
        %7882 = vmatpush1.msra.mxu0 0.0
        %7883 = vmatprep.subr.mxu0 0.0
        %7884 = vmatpush1.msra.mxu0 0.0
        %7885 = vmatprep.subr.mxu0 0.0
        %7886 = vmatpush1.msra.mxu0 0.0
        %7887 = vmatprep.subr.mxu0 0.0
        %7888 = vmatpush1.msra.mxu0 0.0
        %7889 = vmatprep.subr.mxu0 0.0
        %7890 = vmatpush1.msra.mxu0 0.0
        %7891 = vmatprep.subr.mxu0 0.0
        %7892 = vmatpush1.msra.mxu0 0.0
        %7893 = vmatprep.subr.mxu0 0.0
        %v7894 = vand.u32 %v7679, 4294901760
        %v7895 = vsub.f32 %v7679, %v7894
        %7896 = vmatpush1.msra.mxu0 %v7895
        %7897 = vmatprep.subr.mxu0 0.0
        %v7898 = vand.u32 %v7678, 4294901760
        %v7899 = vsub.f32 %v7678, %v7898
        %7900 = vmatpush1.msra.mxu0 %v7899
        %7901 = vmatprep.subr.mxu0 0.0
        %v7902 = vand.u32 %v7677, 4294901760
        %v7903 = vsub.f32 %v7677, %v7902
        %7904 = vmatpush1.msra.mxu0 %v7903
        %7905 = vmatprep.subr.mxu0 0.0
        %v7906 = vand.u32 %v7676, 4294901760
        %v7907 = vsub.f32 %v7676, %v7906
        %7908 = vmatpush1.msra.mxu0 %v7907
        %7909 = vmatprep.subr.mxu0 0.0
        %v7910 = vand.u32 %v7675, 4294901760
        %v7911 = vsub.f32 %v7675, %v7910
        %7912 = vmatpush1.msra.mxu0 %v7911
        %7913 = vmatprep.subr.mxu0 0.0
        %v7914 = vand.u32 %v7674, 4294901760
        %v7915 = vsub.f32 %v7674, %v7914
        %7916 = vmatpush1.msra.mxu0 %v7915
        %7917 = vmatprep.subr.mxu0 0.0
        %v7918 = vand.u32 %v7673, 4294901760
        %v7919 = vsub.f32 %v7673, %v7918
        %7920 = vmatpush1.msra.mxu0 %v7919
        %7921 = vmatprep.subr.mxu0 0.0
        %v7922 = vand.u32 %v7672, 4294901760
        %v7923 = vsub.f32 %v7672, %v7922
        %7924 = vmatpush1.msra.mxu0 %v7923
        %7925 = vmatprep.subr.mxu0 0.0
        %7926 = vmatpush2.msra.mxu0 0.0
        %7927 = vmatprep.subr.mxu0 0.0
        %7928 = vmatpush2.msra.mxu0 0.0
        %7929 = vmatprep.subr.mxu0 0.0
        %7930 = vmatpush2.msra.mxu0 0.0
        %7931 = vmatprep.subr.mxu0 0.0
        %7932 = vmatpush2.msra.mxu0 0.0
        %7933 = vmatprep.subr.mxu0 0.0
        %7934 = vmatpush2.msra.mxu0 0.0
        %7935 = vmatprep.subr.mxu0 0.0
        %7936 = vmatpush2.msra.mxu0 0.0
        %7937 = vmatprep.subr.mxu0 0.0
        %7938 = vmatpush2.msra.mxu0 0.0
        %7939 = vmatprep.subr.mxu0 0.0
        %7940 = vmatpush2.msra.mxu0 0.0
        %7941 = vmatprep.subr.mxu0 0.0
        %7942 = vmatpush2.msra.mxu0 0.0
        %7943 = vmatprep.subr.mxu0 0.0
        %7944 = vmatpush2.msra.mxu0 0.0
        %7945 = vmatprep.subr.mxu0 0.0
        %7946 = vmatpush2.msra.mxu0 0.0
        %7947 = vmatprep.subr.mxu0 0.0
        %7948 = vmatpush2.msra.mxu0 0.0
        %7949 = vmatprep.subr.mxu0 0.0
        %7950 = vmatpush2.msra.mxu0 0.0
        %7951 = vmatprep.subr.mxu0 0.0
        %7952 = vmatpush2.msra.mxu0 0.0
        %7953 = vmatprep.subr.mxu0 0.0
        %7954 = vmatpush2.msra.mxu0 0.0
        %7955 = vmatprep.subr.mxu0 0.0
        %7956 = vmatpush2.msra.mxu0 0.0
        %7957 = vmatprep.mubr.f32.mxu0 0.0
        %v7958 = vand.u32 %v7681, 4294901760
        %v7959 = vsub.f32 %v7681, %v7958
        %7960 = vmatmul.mubr.f32.gmra.mxu0 %v7959
        %v7961 = vpop.f32.mrf.mxu0
        %v7962 = vadd.f32 %v7874, %v7961
        %v7963 = vpop.f32.mrf.mxu0
        %7964 = vdwg.mxu0
        %7965 = vmatprep.subr.mxu0 0.0
        %7966 = vmatpush1.msra.mxu0 0.0
        %7967 = vmatprep.subr.mxu0 0.0
        %7968 = vmatpush1.msra.mxu0 0.0
        %7969 = vmatprep.subr.mxu0 0.0
        %7970 = vmatpush1.msra.mxu0 0.0
        %7971 = vmatprep.subr.mxu0 0.0
        %7972 = vmatpush1.msra.mxu0 0.0
        %7973 = vmatprep.subr.mxu0 0.0
        %7974 = vmatpush1.msra.mxu0 0.0
        %7975 = vmatprep.subr.mxu0 0.0
        %7976 = vmatpush1.msra.mxu0 0.0
        %7977 = vmatprep.subr.mxu0 0.0
        %7978 = vmatpush1.msra.mxu0 0.0
        %7979 = vmatprep.subr.mxu0 0.0
        %7980 = vmatpush1.msra.mxu0 0.0
        %7981 = vmatprep.subr.mxu0 0.0
        %v7982 = vand.u32 %v7679, 4294901760
        %7983 = vmatpush1.msra.mxu0 %v7982
        %7984 = vmatprep.subr.mxu0 0.0
        %v7985 = vand.u32 %v7678, 4294901760
        %7986 = vmatpush1.msra.mxu0 %v7985
        %7987 = vmatprep.subr.mxu0 0.0
        %v7988 = vand.u32 %v7677, 4294901760
        %7989 = vmatpush1.msra.mxu0 %v7988
        %7990 = vmatprep.subr.mxu0 0.0
        %v7991 = vand.u32 %v7676, 4294901760
        %7992 = vmatpush1.msra.mxu0 %v7991
        %7993 = vmatprep.subr.mxu0 0.0
        %v7994 = vand.u32 %v7675, 4294901760
        %7995 = vmatpush1.msra.mxu0 %v7994
        %7996 = vmatprep.subr.mxu0 0.0
        %v7997 = vand.u32 %v7674, 4294901760
        %7998 = vmatpush1.msra.mxu0 %v7997
        %7999 = vmatprep.subr.mxu0 0.0
        %v8000 = vand.u32 %v7673, 4294901760
        %8001 = vmatpush1.msra.mxu0 %v8000
        %8002 = vmatprep.subr.mxu0 0.0
        %v8003 = vand.u32 %v7672, 4294901760
        %8004 = vmatpush1.msra.mxu0 %v8003
        %8005 = vmatprep.subr.mxu0 0.0
        %8006 = vmatpush2.msra.mxu0 0.0
        %8007 = vmatprep.subr.mxu0 0.0
        %8008 = vmatpush2.msra.mxu0 0.0
        %8009 = vmatprep.subr.mxu0 0.0
        %8010 = vmatpush2.msra.mxu0 0.0
        %8011 = vmatprep.subr.mxu0 0.0
        %8012 = vmatpush2.msra.mxu0 0.0
        %8013 = vmatprep.subr.mxu0 0.0
        %8014 = vmatpush2.msra.mxu0 0.0
        %8015 = vmatprep.subr.mxu0 0.0
        %8016 = vmatpush2.msra.mxu0 0.0
        %8017 = vmatprep.subr.mxu0 0.0
        %8018 = vmatpush2.msra.mxu0 0.0
        %8019 = vmatprep.subr.mxu0 0.0
        %8020 = vmatpush2.msra.mxu0 0.0
        %8021 = vmatprep.subr.mxu0 0.0
        %8022 = vmatpush2.msra.mxu0 0.0
        %8023 = vmatprep.subr.mxu0 0.0
        %8024 = vmatpush2.msra.mxu0 0.0
        %8025 = vmatprep.subr.mxu0 0.0
        %8026 = vmatpush2.msra.mxu0 0.0
        %8027 = vmatprep.subr.mxu0 0.0
        %8028 = vmatpush2.msra.mxu0 0.0
        %8029 = vmatprep.subr.mxu0 0.0
        %8030 = vmatpush2.msra.mxu0 0.0
        %8031 = vmatprep.subr.mxu0 0.0
        %8032 = vmatpush2.msra.mxu0 0.0
        %8033 = vmatprep.subr.mxu0 0.0
        %8034 = vmatpush2.msra.mxu0 0.0
        %8035 = vmatprep.subr.mxu0 0.0
        %8036 = vmatpush2.msra.mxu0 0.0
        %8037 = vmatprep.mubr.f32.mxu0 0.0
        %v8038 = vand.u32 %v7681, 4294901760
        %v8039 = vsub.f32 %v7681, %v8038
        %v8040 = vand.u32 %v8039, 4294901760
        %8041 = vmatmul.mubr.f32.gmra.mxu0 %v8040
        %v8042 = vpop.f32.mrf.mxu0
        %v8043 = vadd.f32 %v7962, %v8042
        %v8044 = vpop.f32.mrf.mxu0
        %8045 = vdwg.mxu0
        %8046 = vmatprep.subr.mxu0 0.0
        %8047 = vmatpush1.msra.mxu0 0.0
        %8048 = vmatprep.subr.mxu0 0.0
        %8049 = vmatpush1.msra.mxu0 0.0
        %8050 = vmatprep.subr.mxu0 0.0
        %8051 = vmatpush1.msra.mxu0 0.0
        %8052 = vmatprep.subr.mxu0 0.0
        %8053 = vmatpush1.msra.mxu0 0.0
        %8054 = vmatprep.subr.mxu0 0.0
        %8055 = vmatpush1.msra.mxu0 0.0
        %8056 = vmatprep.subr.mxu0 0.0
        %8057 = vmatpush1.msra.mxu0 0.0
        %8058 = vmatprep.subr.mxu0 0.0
        %8059 = vmatpush1.msra.mxu0 0.0
        %8060 = vmatprep.subr.mxu0 0.0
        %8061 = vmatpush1.msra.mxu0 0.0
        %8062 = vmatprep.subr.mxu0 0.0
        %v8063 = vand.u32 %v7679, 4294901760
        %v8064 = vsub.f32 %v7679, %v8063
        %v8065 = vand.u32 %v8064, 4294901760
        %8066 = vmatpush1.msra.mxu0 %v8065
        %8067 = vmatprep.subr.mxu0 0.0
        %v8068 = vand.u32 %v7678, 4294901760
        %v8069 = vsub.f32 %v7678, %v8068
        %v8070 = vand.u32 %v8069, 4294901760
        %8071 = vmatpush1.msra.mxu0 %v8070
        %8072 = vmatprep.subr.mxu0 0.0
        %v8073 = vand.u32 %v7677, 4294901760
        %v8074 = vsub.f32 %v7677, %v8073
        %v8075 = vand.u32 %v8074, 4294901760
        %8076 = vmatpush1.msra.mxu0 %v8075
        %8077 = vmatprep.subr.mxu0 0.0
        %v8078 = vand.u32 %v7676, 4294901760
        %v8079 = vsub.f32 %v7676, %v8078
        %v8080 = vand.u32 %v8079, 4294901760
        %8081 = vmatpush1.msra.mxu0 %v8080
        %8082 = vmatprep.subr.mxu0 0.0
        %v8083 = vand.u32 %v7675, 4294901760
        %v8084 = vsub.f32 %v7675, %v8083
        %v8085 = vand.u32 %v8084, 4294901760
        %8086 = vmatpush1.msra.mxu0 %v8085
        %8087 = vmatprep.subr.mxu0 0.0
        %v8088 = vand.u32 %v7674, 4294901760
        %v8089 = vsub.f32 %v7674, %v8088
        %v8090 = vand.u32 %v8089, 4294901760
        %8091 = vmatpush1.msra.mxu0 %v8090
        %8092 = vmatprep.subr.mxu0 0.0
        %v8093 = vand.u32 %v7673, 4294901760
        %v8094 = vsub.f32 %v7673, %v8093
        %v8095 = vand.u32 %v8094, 4294901760
        %8096 = vmatpush1.msra.mxu0 %v8095
        %8097 = vmatprep.subr.mxu0 0.0
        %v8098 = vand.u32 %v7672, 4294901760
        %v8099 = vsub.f32 %v7672, %v8098
        %v8100 = vand.u32 %v8099, 4294901760
        %8101 = vmatpush1.msra.mxu0 %v8100
        %8102 = vmatprep.subr.mxu0 0.0
        %8103 = vmatpush2.msra.mxu0 0.0
        %8104 = vmatprep.subr.mxu0 0.0
        %8105 = vmatpush2.msra.mxu0 0.0
        %8106 = vmatprep.subr.mxu0 0.0
        %8107 = vmatpush2.msra.mxu0 0.0
        %8108 = vmatprep.subr.mxu0 0.0
        %8109 = vmatpush2.msra.mxu0 0.0
        %8110 = vmatprep.subr.mxu0 0.0
        %8111 = vmatpush2.msra.mxu0 0.0
        %8112 = vmatprep.subr.mxu0 0.0
        %8113 = vmatpush2.msra.mxu0 0.0
        %8114 = vmatprep.subr.mxu0 0.0
        %8115 = vmatpush2.msra.mxu0 0.0
        %8116 = vmatprep.subr.mxu0 0.0
        %8117 = vmatpush2.msra.mxu0 0.0
        %8118 = vmatprep.subr.mxu0 0.0
        %8119 = vmatpush2.msra.mxu0 0.0
        %8120 = vmatprep.subr.mxu0 0.0
        %8121 = vmatpush2.msra.mxu0 0.0
        %8122 = vmatprep.subr.mxu0 0.0
        %8123 = vmatpush2.msra.mxu0 0.0
        %8124 = vmatprep.subr.mxu0 0.0
        %8125 = vmatpush2.msra.mxu0 0.0
        %8126 = vmatprep.subr.mxu0 0.0
        %8127 = vmatpush2.msra.mxu0 0.0
        %8128 = vmatprep.subr.mxu0 0.0
        %8129 = vmatpush2.msra.mxu0 0.0
        %8130 = vmatprep.subr.mxu0 0.0
        %8131 = vmatpush2.msra.mxu0 0.0
        %8132 = vmatprep.subr.mxu0 0.0
        %8133 = vmatpush2.msra.mxu0 0.0
        %8134 = vmatprep.mubr.f32.mxu0 0.0
        %v8135 = vand.u32 %v7681, 4294901760
        %8136 = vmatmul.mubr.f32.gmra.mxu0 %v8135
        %v8137 = vpop.f32.mrf.mxu0
        %v8138 = vadd.f32 %v8043, %v8137
        %v8139 = vpop.f32.mrf.mxu0
        %8140 = vdwg.mxu0
        %8141 = vmatprep.subr.mxu0 0.0
        %8142 = vmatpush1.msra.mxu0 0.0
        %8143 = vmatprep.subr.mxu0 0.0
        %8144 = vmatpush1.msra.mxu0 0.0
        %8145 = vmatprep.subr.mxu0 0.0
        %8146 = vmatpush1.msra.mxu0 0.0
        %8147 = vmatprep.subr.mxu0 0.0
        %8148 = vmatpush1.msra.mxu0 0.0
        %8149 = vmatprep.subr.mxu0 0.0
        %8150 = vmatpush1.msra.mxu0 0.0
        %8151 = vmatprep.subr.mxu0 0.0
        %8152 = vmatpush1.msra.mxu0 0.0
        %8153 = vmatprep.subr.mxu0 0.0
        %8154 = vmatpush1.msra.mxu0 0.0
        %8155 = vmatprep.subr.mxu0 0.0
        %8156 = vmatpush1.msra.mxu0 0.0
        %8157 = vmatprep.subr.mxu0 0.0
        %v8158 = vand.u32 %v7679, 4294901760
        %8159 = vmatpush1.msra.mxu0 %v8158
        %8160 = vmatprep.subr.mxu0 0.0
        %v8161 = vand.u32 %v7678, 4294901760
        %8162 = vmatpush1.msra.mxu0 %v8161
        %8163 = vmatprep.subr.mxu0 0.0
        %v8164 = vand.u32 %v7677, 4294901760
        %8165 = vmatpush1.msra.mxu0 %v8164
        %8166 = vmatprep.subr.mxu0 0.0
        %v8167 = vand.u32 %v7676, 4294901760
        %8168 = vmatpush1.msra.mxu0 %v8167
        %8169 = vmatprep.subr.mxu0 0.0
        %v8170 = vand.u32 %v7675, 4294901760
        %8171 = vmatpush1.msra.mxu0 %v8170
        %8172 = vmatprep.subr.mxu0 0.0
        %v8173 = vand.u32 %v7674, 4294901760
        %8174 = vmatpush1.msra.mxu0 %v8173
        %8175 = vmatprep.subr.mxu0 0.0
        %v8176 = vand.u32 %v7673, 4294901760
        %8177 = vmatpush1.msra.mxu0 %v8176
        %8178 = vmatprep.subr.mxu0 0.0
        %v8179 = vand.u32 %v7672, 4294901760
        %8180 = vmatpush1.msra.mxu0 %v8179
        %8181 = vmatprep.subr.mxu0 0.0
        %8182 = vmatpush2.msra.mxu0 0.0
        %8183 = vmatprep.subr.mxu0 0.0
        %8184 = vmatpush2.msra.mxu0 0.0
        %8185 = vmatprep.subr.mxu0 0.0
        %8186 = vmatpush2.msra.mxu0 0.0
        %8187 = vmatprep.subr.mxu0 0.0
        %8188 = vmatpush2.msra.mxu0 0.0
        %8189 = vmatprep.subr.mxu0 0.0
        %8190 = vmatpush2.msra.mxu0 0.0
        %8191 = vmatprep.subr.mxu0 0.0
        %8192 = vmatpush2.msra.mxu0 0.0
        %8193 = vmatprep.subr.mxu0 0.0
        %8194 = vmatpush2.msra.mxu0 0.0
        %8195 = vmatprep.subr.mxu0 0.0
        %8196 = vmatpush2.msra.mxu0 0.0
        %8197 = vmatprep.subr.mxu0 0.0
        %8198 = vmatpush2.msra.mxu0 0.0
        %8199 = vmatprep.subr.mxu0 0.0
        %8200 = vmatpush2.msra.mxu0 0.0
        %8201 = vmatprep.subr.mxu0 0.0
        %8202 = vmatpush2.msra.mxu0 0.0
        %8203 = vmatprep.subr.mxu0 0.0
        %8204 = vmatpush2.msra.mxu0 0.0
        %8205 = vmatprep.subr.mxu0 0.0
        %8206 = vmatpush2.msra.mxu0 0.0
        %8207 = vmatprep.subr.mxu0 0.0
        %8208 = vmatpush2.msra.mxu0 0.0
        %8209 = vmatprep.subr.mxu0 0.0
        %8210 = vmatpush2.msra.mxu0 0.0
        %8211 = vmatprep.subr.mxu0 0.0
        %8212 = vmatpush2.msra.mxu0 0.0
        %8213 = vmatprep.mubr.f32.mxu0 0.0
        %v8214 = vand.u32 %v7681, 4294901760
        %8215 = vmatmul.mubr.f32.gmra.mxu0 %v8214
        %v8216 = vpop.f32.mrf.mxu0
        %v8217 = vadd.f32 %v8138, %v8216
        %v8218 = vpop.f32.mrf.mxu0
        %8219 = vdwg.mxu0
        %v8220 = vld [vmem:[%s841] sm:$0xff]
        %v8221 = vld [vmem:[%s841 + $0x8] sm:$0xff]
        %v8222 = vld [vmem:[%s841 + $0x10] sm:$0xff]
        %v8223 = vld [vmem:[%s841 + $0x18] sm:$0xff]
        %v8225 = vsel %vm874, %v8217, 0
        %8227 = vmatprep.subr.mxu0 0.0
        %8228 = vmatpush1.msra.mxu0 0.0
        %8229 = vmatprep.subr.mxu0 0.0
        %8230 = vmatpush1.msra.mxu0 0.0
        %8231 = vmatprep.subr.mxu0 0.0
        %8232 = vmatpush1.msra.mxu0 0.0
        %8233 = vmatprep.subr.mxu0 0.0
        %8234 = vmatpush1.msra.mxu0 0.0
        %8235 = vmatprep.subr.mxu0 0.0
        %8236 = vmatpush1.msra.mxu0 0.0
        %8237 = vmatprep.subr.mxu0 0.0
        %8238 = vmatpush1.msra.mxu0 0.0
        %8239 = vmatprep.subr.mxu0 0.0
        %8240 = vmatpush1.msra.mxu0 0.0
        %8241 = vmatprep.subr.mxu0 0.0
        %8242 = vmatpush1.msra.mxu0 0.0
        %8243 = vmatprep.subr.mxu0 0.0
        %8244 = vmatpush1.msra.mxu0 0.0
        %8245 = vmatprep.subr.mxu0 0.0
        %8246 = vmatpush1.msra.mxu0 0.0
        %8247 = vmatprep.subr.mxu0 0.0
        %8248 = vmatpush1.msra.mxu0 0.0
        %8249 = vmatprep.subr.mxu0 0.0
        %8250 = vmatpush1.msra.mxu0 0.0
        %8251 = vmatprep.subr.mxu0 0.0
        %v8252 = vand.u32 %v8223, 4294901760
        %8253 = vmatpush1.msra.mxu0 %v8252
        %8254 = vmatprep.subr.mxu0 0.0
        %v8255 = vand.u32 %v8222, 4294901760
        %8256 = vmatpush1.msra.mxu0 %v8255
        %8257 = vmatprep.subr.mxu0 0.0
        %v8258 = vand.u32 %v8221, 4294901760
        %8259 = vmatpush1.msra.mxu0 %v8258
        %8260 = vmatprep.subr.mxu0 0.0
        %v8261 = vand.u32 %v8220, 4294901760
        %8262 = vmatpush1.msra.mxu0 %v8261
        %8263 = vmatprep.subr.mxu0 0.0
        %8264 = vmatpush2.msra.mxu0 0.0
        %8265 = vmatprep.subr.mxu0 0.0
        %8266 = vmatpush2.msra.mxu0 0.0
        %8267 = vmatprep.subr.mxu0 0.0
        %8268 = vmatpush2.msra.mxu0 0.0
        %8269 = vmatprep.subr.mxu0 0.0
        %8270 = vmatpush2.msra.mxu0 0.0
        %8271 = vmatprep.subr.mxu0 0.0
        %8272 = vmatpush2.msra.mxu0 0.0
        %8273 = vmatprep.subr.mxu0 0.0
        %8274 = vmatpush2.msra.mxu0 0.0
        %8275 = vmatprep.subr.mxu0 0.0
        %8276 = vmatpush2.msra.mxu0 0.0
        %8277 = vmatprep.subr.mxu0 0.0
        %8278 = vmatpush2.msra.mxu0 0.0
        %8279 = vmatprep.subr.mxu0 0.0
        %8280 = vmatpush2.msra.mxu0 0.0
        %8281 = vmatprep.subr.mxu0 0.0
        %8282 = vmatpush2.msra.mxu0 0.0
        %8283 = vmatprep.subr.mxu0 0.0
        %8284 = vmatpush2.msra.mxu0 0.0
        %8285 = vmatprep.subr.mxu0 0.0
        %8286 = vmatpush2.msra.mxu0 0.0
        %8287 = vmatprep.subr.mxu0 0.0
        %8288 = vmatpush2.msra.mxu0 0.0
        %8289 = vmatprep.subr.mxu0 0.0
        %8290 = vmatpush2.msra.mxu0 0.0
        %8291 = vmatprep.subr.mxu0 0.0
        %8292 = vmatpush2.msra.mxu0 0.0
        %8293 = vmatprep.subr.mxu0 0.0
        %8294 = vmatpush2.msra.mxu0 0.0
        %8295 = vmatprep.mubr.f32.mxu0 0.0
        %v8296 = vand.u32 %v8225, 4294901760
        %v8297 = vsub.f32 %v8225, %v8296
        %v8298 = vand.u32 %v8297, 4294901760
        %v8299 = vsub.f32 %v8297, %v8298
        %v8300 = vand.u32 %v8299, 4294901760
        %8301 = vmatmul.mubr.f32.gmra.mxu0 %v8300
        %v8302 = vpop.f32.mrf.mxu0
        %v8303 = vadd.f32 0.0, %v8302
        %v8304 = vpop.f32.mrf.mxu0
        %8305 = vdwg.mxu0
        %8306 = vmatprep.subr.mxu0 0.0
        %8307 = vmatpush1.msra.mxu0 0.0
        %8308 = vmatprep.subr.mxu0 0.0
        %8309 = vmatpush1.msra.mxu0 0.0
        %8310 = vmatprep.subr.mxu0 0.0
        %8311 = vmatpush1.msra.mxu0 0.0
        %8312 = vmatprep.subr.mxu0 0.0
        %8313 = vmatpush1.msra.mxu0 0.0
        %8314 = vmatprep.subr.mxu0 0.0
        %8315 = vmatpush1.msra.mxu0 0.0
        %8316 = vmatprep.subr.mxu0 0.0
        %8317 = vmatpush1.msra.mxu0 0.0
        %8318 = vmatprep.subr.mxu0 0.0
        %8319 = vmatpush1.msra.mxu0 0.0
        %8320 = vmatprep.subr.mxu0 0.0
        %8321 = vmatpush1.msra.mxu0 0.0
        %8322 = vmatprep.subr.mxu0 0.0
        %8323 = vmatpush1.msra.mxu0 0.0
        %8324 = vmatprep.subr.mxu0 0.0
        %8325 = vmatpush1.msra.mxu0 0.0
        %8326 = vmatprep.subr.mxu0 0.0
        %8327 = vmatpush1.msra.mxu0 0.0
        %8328 = vmatprep.subr.mxu0 0.0
        %8329 = vmatpush1.msra.mxu0 0.0
        %8330 = vmatprep.subr.mxu0 0.0
        %v8331 = vand.u32 %v8223, 4294901760
        %v8332 = vsub.f32 %v8223, %v8331
        %v8333 = vand.u32 %v8332, 4294901760
        %v8334 = vsub.f32 %v8332, %v8333
        %v8335 = vand.u32 %v8334, 4294901760
        %8336 = vmatpush1.msra.mxu0 %v8335
        %8337 = vmatprep.subr.mxu0 0.0
        %v8338 = vand.u32 %v8222, 4294901760
        %v8339 = vsub.f32 %v8222, %v8338
        %v8340 = vand.u32 %v8339, 4294901760
        %v8341 = vsub.f32 %v8339, %v8340
        %v8342 = vand.u32 %v8341, 4294901760
        %8343 = vmatpush1.msra.mxu0 %v8342
        %8344 = vmatprep.subr.mxu0 0.0
        %v8345 = vand.u32 %v8221, 4294901760
        %v8346 = vsub.f32 %v8221, %v8345
        %v8347 = vand.u32 %v8346, 4294901760
        %v8348 = vsub.f32 %v8346, %v8347
        %v8349 = vand.u32 %v8348, 4294901760
        %8350 = vmatpush1.msra.mxu0 %v8349
        %8351 = vmatprep.subr.mxu0 0.0
        %v8352 = vand.u32 %v8220, 4294901760
        %v8353 = vsub.f32 %v8220, %v8352
        %v8354 = vand.u32 %v8353, 4294901760
        %v8355 = vsub.f32 %v8353, %v8354
        %v8356 = vand.u32 %v8355, 4294901760
        %8357 = vmatpush1.msra.mxu0 %v8356
        %8358 = vmatprep.subr.mxu0 0.0
        %8359 = vmatpush2.msra.mxu0 0.0
        %8360 = vmatprep.subr.mxu0 0.0
        %8361 = vmatpush2.msra.mxu0 0.0
        %8362 = vmatprep.subr.mxu0 0.0
        %8363 = vmatpush2.msra.mxu0 0.0
        %8364 = vmatprep.subr.mxu0 0.0
        %8365 = vmatpush2.msra.mxu0 0.0
        %8366 = vmatprep.subr.mxu0 0.0
        %8367 = vmatpush2.msra.mxu0 0.0
        %8368 = vmatprep.subr.mxu0 0.0
        %8369 = vmatpush2.msra.mxu0 0.0
        %8370 = vmatprep.subr.mxu0 0.0
        %8371 = vmatpush2.msra.mxu0 0.0
        %8372 = vmatprep.subr.mxu0 0.0
        %8373 = vmatpush2.msra.mxu0 0.0
        %8374 = vmatprep.subr.mxu0 0.0
        %8375 = vmatpush2.msra.mxu0 0.0
        %8376 = vmatprep.subr.mxu0 0.0
        %8377 = vmatpush2.msra.mxu0 0.0
        %8378 = vmatprep.subr.mxu0 0.0
        %8379 = vmatpush2.msra.mxu0 0.0
        %8380 = vmatprep.subr.mxu0 0.0
        %8381 = vmatpush2.msra.mxu0 0.0
        %8382 = vmatprep.subr.mxu0 0.0
        %8383 = vmatpush2.msra.mxu0 0.0
        %8384 = vmatprep.subr.mxu0 0.0
        %8385 = vmatpush2.msra.mxu0 0.0
        %8386 = vmatprep.subr.mxu0 0.0
        %8387 = vmatpush2.msra.mxu0 0.0
        %8388 = vmatprep.subr.mxu0 0.0
        %8389 = vmatpush2.msra.mxu0 0.0
        %8390 = vmatprep.mubr.f32.mxu0 0.0
        %v8391 = vand.u32 %v8225, 4294901760
        %8392 = vmatmul.mubr.f32.gmra.mxu0 %v8391
        %v8393 = vpop.f32.mrf.mxu0
        %v8394 = vadd.f32 %v8303, %v8393
        %v8395 = vpop.f32.mrf.mxu0
        %8396 = vdwg.mxu0
        %8397 = vmatprep.subr.mxu0 0.0
        %8398 = vmatpush1.msra.mxu0 0.0
        %8399 = vmatprep.subr.mxu0 0.0
        %8400 = vmatpush1.msra.mxu0 0.0
        %8401 = vmatprep.subr.mxu0 0.0
        %8402 = vmatpush1.msra.mxu0 0.0
        %8403 = vmatprep.subr.mxu0 0.0
        %8404 = vmatpush1.msra.mxu0 0.0
        %8405 = vmatprep.subr.mxu0 0.0
        %8406 = vmatpush1.msra.mxu0 0.0
        %8407 = vmatprep.subr.mxu0 0.0
        %8408 = vmatpush1.msra.mxu0 0.0
        %8409 = vmatprep.subr.mxu0 0.0
        %8410 = vmatpush1.msra.mxu0 0.0
        %8411 = vmatprep.subr.mxu0 0.0
        %8412 = vmatpush1.msra.mxu0 0.0
        %8413 = vmatprep.subr.mxu0 0.0
        %8414 = vmatpush1.msra.mxu0 0.0
        %8415 = vmatprep.subr.mxu0 0.0
        %8416 = vmatpush1.msra.mxu0 0.0
        %8417 = vmatprep.subr.mxu0 0.0
        %8418 = vmatpush1.msra.mxu0 0.0
        %8419 = vmatprep.subr.mxu0 0.0
        %8420 = vmatpush1.msra.mxu0 0.0
        %8421 = vmatprep.subr.mxu0 0.0
        %v8422 = vand.u32 %v8223, 4294901760
        %v8423 = vsub.f32 %v8223, %v8422
        %8424 = vmatpush1.msra.mxu0 %v8423
        %8425 = vmatprep.subr.mxu0 0.0
        %v8426 = vand.u32 %v8222, 4294901760
        %v8427 = vsub.f32 %v8222, %v8426
        %8428 = vmatpush1.msra.mxu0 %v8427
        %8429 = vmatprep.subr.mxu0 0.0
        %v8430 = vand.u32 %v8221, 4294901760
        %v8431 = vsub.f32 %v8221, %v8430
        %8432 = vmatpush1.msra.mxu0 %v8431
        %8433 = vmatprep.subr.mxu0 0.0
        %v8434 = vand.u32 %v8220, 4294901760
        %v8435 = vsub.f32 %v8220, %v8434
        %8436 = vmatpush1.msra.mxu0 %v8435
        %8437 = vmatprep.subr.mxu0 0.0
        %8438 = vmatpush2.msra.mxu0 0.0
        %8439 = vmatprep.subr.mxu0 0.0
        %8440 = vmatpush2.msra.mxu0 0.0
        %8441 = vmatprep.subr.mxu0 0.0
        %8442 = vmatpush2.msra.mxu0 0.0
        %8443 = vmatprep.subr.mxu0 0.0
        %8444 = vmatpush2.msra.mxu0 0.0
        %8445 = vmatprep.subr.mxu0 0.0
        %8446 = vmatpush2.msra.mxu0 0.0
        %8447 = vmatprep.subr.mxu0 0.0
        %8448 = vmatpush2.msra.mxu0 0.0
        %8449 = vmatprep.subr.mxu0 0.0
        %8450 = vmatpush2.msra.mxu0 0.0
        %8451 = vmatprep.subr.mxu0 0.0
        %8452 = vmatpush2.msra.mxu0 0.0
        %8453 = vmatprep.subr.mxu0 0.0
        %8454 = vmatpush2.msra.mxu0 0.0
        %8455 = vmatprep.subr.mxu0 0.0
        %8456 = vmatpush2.msra.mxu0 0.0
        %8457 = vmatprep.subr.mxu0 0.0
        %8458 = vmatpush2.msra.mxu0 0.0
        %8459 = vmatprep.subr.mxu0 0.0
        %8460 = vmatpush2.msra.mxu0 0.0
        %8461 = vmatprep.subr.mxu0 0.0
        %8462 = vmatpush2.msra.mxu0 0.0
        %8463 = vmatprep.subr.mxu0 0.0
        %8464 = vmatpush2.msra.mxu0 0.0
        %8465 = vmatprep.subr.mxu0 0.0
        %8466 = vmatpush2.msra.mxu0 0.0
        %8467 = vmatprep.subr.mxu0 0.0
        %8468 = vmatpush2.msra.mxu0 0.0
        %8469 = vmatprep.mubr.f32.mxu0 0.0
        %v8470 = vand.u32 %v8225, 4294901760
        %v8471 = vsub.f32 %v8225, %v8470
        %8472 = vmatmul.mubr.f32.gmra.mxu0 %v8471
        %v8473 = vpop.f32.mrf.mxu0
        %v8474 = vadd.f32 %v8394, %v8473
        %v8475 = vpop.f32.mrf.mxu0
        %8476 = vdwg.mxu0
        %8477 = vmatprep.subr.mxu0 0.0
        %8478 = vmatpush1.msra.mxu0 0.0
        %8479 = vmatprep.subr.mxu0 0.0
        %8480 = vmatpush1.msra.mxu0 0.0
        %8481 = vmatprep.subr.mxu0 0.0
        %8482 = vmatpush1.msra.mxu0 0.0
        %8483 = vmatprep.subr.mxu0 0.0
        %8484 = vmatpush1.msra.mxu0 0.0
        %8485 = vmatprep.subr.mxu0 0.0
        %8486 = vmatpush1.msra.mxu0 0.0
        %8487 = vmatprep.subr.mxu0 0.0
        %8488 = vmatpush1.msra.mxu0 0.0
        %8489 = vmatprep.subr.mxu0 0.0
        %8490 = vmatpush1.msra.mxu0 0.0
        %8491 = vmatprep.subr.mxu0 0.0
        %8492 = vmatpush1.msra.mxu0 0.0
        %8493 = vmatprep.subr.mxu0 0.0
        %8494 = vmatpush1.msra.mxu0 0.0
        %8495 = vmatprep.subr.mxu0 0.0
        %8496 = vmatpush1.msra.mxu0 0.0
        %8497 = vmatprep.subr.mxu0 0.0
        %8498 = vmatpush1.msra.mxu0 0.0
        %8499 = vmatprep.subr.mxu0 0.0
        %8500 = vmatpush1.msra.mxu0 0.0
        %8501 = vmatprep.subr.mxu0 0.0
        %v8502 = vand.u32 %v8223, 4294901760
        %8503 = vmatpush1.msra.mxu0 %v8502
        %8504 = vmatprep.subr.mxu0 0.0
        %v8505 = vand.u32 %v8222, 4294901760
        %8506 = vmatpush1.msra.mxu0 %v8505
        %8507 = vmatprep.subr.mxu0 0.0
        %v8508 = vand.u32 %v8221, 4294901760
        %8509 = vmatpush1.msra.mxu0 %v8508
        %8510 = vmatprep.subr.mxu0 0.0
        %v8511 = vand.u32 %v8220, 4294901760
        %8512 = vmatpush1.msra.mxu0 %v8511
        %8513 = vmatprep.subr.mxu0 0.0
        %8514 = vmatpush2.msra.mxu0 0.0
        %8515 = vmatprep.subr.mxu0 0.0
        %8516 = vmatpush2.msra.mxu0 0.0
        %8517 = vmatprep.subr.mxu0 0.0
        %8518 = vmatpush2.msra.mxu0 0.0
        %8519 = vmatprep.subr.mxu0 0.0
        %8520 = vmatpush2.msra.mxu0 0.0
        %8521 = vmatprep.subr.mxu0 0.0
        %8522 = vmatpush2.msra.mxu0 0.0
        %8523 = vmatprep.subr.mxu0 0.0
        %8524 = vmatpush2.msra.mxu0 0.0
        %8525 = vmatprep.subr.mxu0 0.0
        %8526 = vmatpush2.msra.mxu0 0.0
        %8527 = vmatprep.subr.mxu0 0.0
        %8528 = vmatpush2.msra.mxu0 0.0
        %8529 = vmatprep.subr.mxu0 0.0
        %8530 = vmatpush2.msra.mxu0 0.0
        %8531 = vmatprep.subr.mxu0 0.0
        %8532 = vmatpush2.msra.mxu0 0.0
        %8533 = vmatprep.subr.mxu0 0.0
        %8534 = vmatpush2.msra.mxu0 0.0
        %8535 = vmatprep.subr.mxu0 0.0
        %8536 = vmatpush2.msra.mxu0 0.0
        %8537 = vmatprep.subr.mxu0 0.0
        %8538 = vmatpush2.msra.mxu0 0.0
        %8539 = vmatprep.subr.mxu0 0.0
        %8540 = vmatpush2.msra.mxu0 0.0
        %8541 = vmatprep.subr.mxu0 0.0
        %8542 = vmatpush2.msra.mxu0 0.0
        %8543 = vmatprep.subr.mxu0 0.0
        %8544 = vmatpush2.msra.mxu0 0.0
        %8545 = vmatprep.mubr.f32.mxu0 0.0
        %v8546 = vand.u32 %v8225, 4294901760
        %v8547 = vsub.f32 %v8225, %v8546
        %v8548 = vand.u32 %v8547, 4294901760
        %8549 = vmatmul.mubr.f32.gmra.mxu0 %v8548
        %v8550 = vpop.f32.mrf.mxu0
        %v8551 = vadd.f32 %v8474, %v8550
        %v8552 = vpop.f32.mrf.mxu0
        %8553 = vdwg.mxu0
        %8554 = vmatprep.subr.mxu0 0.0
        %8555 = vmatpush1.msra.mxu0 0.0
        %8556 = vmatprep.subr.mxu0 0.0
        %8557 = vmatpush1.msra.mxu0 0.0
        %8558 = vmatprep.subr.mxu0 0.0
        %8559 = vmatpush1.msra.mxu0 0.0
        %8560 = vmatprep.subr.mxu0 0.0
        %8561 = vmatpush1.msra.mxu0 0.0
        %8562 = vmatprep.subr.mxu0 0.0
        %8563 = vmatpush1.msra.mxu0 0.0
        %8564 = vmatprep.subr.mxu0 0.0
        %8565 = vmatpush1.msra.mxu0 0.0
        %8566 = vmatprep.subr.mxu0 0.0
        %8567 = vmatpush1.msra.mxu0 0.0
        %8568 = vmatprep.subr.mxu0 0.0
        %8569 = vmatpush1.msra.mxu0 0.0
        %8570 = vmatprep.subr.mxu0 0.0
        %8571 = vmatpush1.msra.mxu0 0.0
        %8572 = vmatprep.subr.mxu0 0.0
        %8573 = vmatpush1.msra.mxu0 0.0
        %8574 = vmatprep.subr.mxu0 0.0
        %8575 = vmatpush1.msra.mxu0 0.0
        %8576 = vmatprep.subr.mxu0 0.0
        %8577 = vmatpush1.msra.mxu0 0.0
        %8578 = vmatprep.subr.mxu0 0.0
        %v8579 = vand.u32 %v8223, 4294901760
        %v8580 = vsub.f32 %v8223, %v8579
        %v8581 = vand.u32 %v8580, 4294901760
        %8582 = vmatpush1.msra.mxu0 %v8581
        %8583 = vmatprep.subr.mxu0 0.0
        %v8584 = vand.u32 %v8222, 4294901760
        %v8585 = vsub.f32 %v8222, %v8584
        %v8586 = vand.u32 %v8585, 4294901760
        %8587 = vmatpush1.msra.mxu0 %v8586
        %8588 = vmatprep.subr.mxu0 0.0
        %v8589 = vand.u32 %v8221, 4294901760
        %v8590 = vsub.f32 %v8221, %v8589
        %v8591 = vand.u32 %v8590, 4294901760
        %8592 = vmatpush1.msra.mxu0 %v8591
        %8593 = vmatprep.subr.mxu0 0.0
        %v8594 = vand.u32 %v8220, 4294901760
        %v8595 = vsub.f32 %v8220, %v8594
        %v8596 = vand.u32 %v8595, 4294901760
        %8597 = vmatpush1.msra.mxu0 %v8596
        %8598 = vmatprep.subr.mxu0 0.0
        %8599 = vmatpush2.msra.mxu0 0.0
        %8600 = vmatprep.subr.mxu0 0.0
        %8601 = vmatpush2.msra.mxu0 0.0
        %8602 = vmatprep.subr.mxu0 0.0
        %8603 = vmatpush2.msra.mxu0 0.0
        %8604 = vmatprep.subr.mxu0 0.0
        %8605 = vmatpush2.msra.mxu0 0.0
        %8606 = vmatprep.subr.mxu0 0.0
        %8607 = vmatpush2.msra.mxu0 0.0
        %8608 = vmatprep.subr.mxu0 0.0
        %8609 = vmatpush2.msra.mxu0 0.0
        %8610 = vmatprep.subr.mxu0 0.0
        %8611 = vmatpush2.msra.mxu0 0.0
        %8612 = vmatprep.subr.mxu0 0.0
        %8613 = vmatpush2.msra.mxu0 0.0
        %8614 = vmatprep.subr.mxu0 0.0
        %8615 = vmatpush2.msra.mxu0 0.0
        %8616 = vmatprep.subr.mxu0 0.0
        %8617 = vmatpush2.msra.mxu0 0.0
        %8618 = vmatprep.subr.mxu0 0.0
        %8619 = vmatpush2.msra.mxu0 0.0
        %8620 = vmatprep.subr.mxu0 0.0
        %8621 = vmatpush2.msra.mxu0 0.0
        %8622 = vmatprep.subr.mxu0 0.0
        %8623 = vmatpush2.msra.mxu0 0.0
        %8624 = vmatprep.subr.mxu0 0.0
        %8625 = vmatpush2.msra.mxu0 0.0
        %8626 = vmatprep.subr.mxu0 0.0
        %8627 = vmatpush2.msra.mxu0 0.0
        %8628 = vmatprep.subr.mxu0 0.0
        %8629 = vmatpush2.msra.mxu0 0.0
        %8630 = vmatprep.mubr.f32.mxu0 0.0
        %v8631 = vand.u32 %v8225, 4294901760
        %8632 = vmatmul.mubr.f32.gmra.mxu0 %v8631
        %v8633 = vpop.f32.mrf.mxu0
        %v8634 = vadd.f32 %v8551, %v8633
        %v8635 = vpop.f32.mrf.mxu0
        %8636 = vdwg.mxu0
        %8637 = vmatprep.subr.mxu0 0.0
        %8638 = vmatpush1.msra.mxu0 0.0
        %8639 = vmatprep.subr.mxu0 0.0
        %8640 = vmatpush1.msra.mxu0 0.0
        %8641 = vmatprep.subr.mxu0 0.0
        %8642 = vmatpush1.msra.mxu0 0.0
        %8643 = vmatprep.subr.mxu0 0.0
        %8644 = vmatpush1.msra.mxu0 0.0
        %8645 = vmatprep.subr.mxu0 0.0
        %8646 = vmatpush1.msra.mxu0 0.0
        %8647 = vmatprep.subr.mxu0 0.0
        %8648 = vmatpush1.msra.mxu0 0.0
        %8649 = vmatprep.subr.mxu0 0.0
        %8650 = vmatpush1.msra.mxu0 0.0
        %8651 = vmatprep.subr.mxu0 0.0
        %8652 = vmatpush1.msra.mxu0 0.0
        %8653 = vmatprep.subr.mxu0 0.0
        %8654 = vmatpush1.msra.mxu0 0.0
        %8655 = vmatprep.subr.mxu0 0.0
        %8656 = vmatpush1.msra.mxu0 0.0
        %8657 = vmatprep.subr.mxu0 0.0
        %8658 = vmatpush1.msra.mxu0 0.0
        %8659 = vmatprep.subr.mxu0 0.0
        %8660 = vmatpush1.msra.mxu0 0.0
        %8661 = vmatprep.subr.mxu0 0.0
        %v8662 = vand.u32 %v8223, 4294901760
        %8663 = vmatpush1.msra.mxu0 %v8662
        %8664 = vmatprep.subr.mxu0 0.0
        %v8665 = vand.u32 %v8222, 4294901760
        %8666 = vmatpush1.msra.mxu0 %v8665
        %8667 = vmatprep.subr.mxu0 0.0
        %v8668 = vand.u32 %v8221, 4294901760
        %8669 = vmatpush1.msra.mxu0 %v8668
        %8670 = vmatprep.subr.mxu0 0.0
        %v8671 = vand.u32 %v8220, 4294901760
        %8672 = vmatpush1.msra.mxu0 %v8671
        %8673 = vmatprep.subr.mxu0 0.0
        %8674 = vmatpush2.msra.mxu0 0.0
        %8675 = vmatprep.subr.mxu0 0.0
        %8676 = vmatpush2.msra.mxu0 0.0
        %8677 = vmatprep.subr.mxu0 0.0
        %8678 = vmatpush2.msra.mxu0 0.0
        %8679 = vmatprep.subr.mxu0 0.0
        %8680 = vmatpush2.msra.mxu0 0.0
        %8681 = vmatprep.subr.mxu0 0.0
        %8682 = vmatpush2.msra.mxu0 0.0
        %8683 = vmatprep.subr.mxu0 0.0
        %8684 = vmatpush2.msra.mxu0 0.0
        %8685 = vmatprep.subr.mxu0 0.0
        %8686 = vmatpush2.msra.mxu0 0.0
        %8687 = vmatprep.subr.mxu0 0.0
        %8688 = vmatpush2.msra.mxu0 0.0
        %8689 = vmatprep.subr.mxu0 0.0
        %8690 = vmatpush2.msra.mxu0 0.0
        %8691 = vmatprep.subr.mxu0 0.0
        %8692 = vmatpush2.msra.mxu0 0.0
        %8693 = vmatprep.subr.mxu0 0.0
        %8694 = vmatpush2.msra.mxu0 0.0
        %8695 = vmatprep.subr.mxu0 0.0
        %8696 = vmatpush2.msra.mxu0 0.0
        %8697 = vmatprep.subr.mxu0 0.0
        %8698 = vmatpush2.msra.mxu0 0.0
        %8699 = vmatprep.subr.mxu0 0.0
        %8700 = vmatpush2.msra.mxu0 0.0
        %8701 = vmatprep.subr.mxu0 0.0
        %8702 = vmatpush2.msra.mxu0 0.0
        %8703 = vmatprep.subr.mxu0 0.0
        %8704 = vmatpush2.msra.mxu0 0.0
        %8705 = vmatprep.mubr.f32.mxu0 0.0
        %v8706 = vand.u32 %v8225, 4294901760
        %8707 = vmatmul.mubr.f32.gmra.mxu0 %v8706
        %v8708 = vpop.f32.mrf.mxu0
        %v8709 = vadd.f32 %v8634, %v8708
        %v8710 = vpop.f32.mrf.mxu0
        %8711 = vdwg.mxu0
        %v8712 = vadd.f32 %v872, %v8709
        %v8713 = vmul.f32 %v8712, %v8712
        %v8714 = vsel %vm874, %v8713, 0.0
        %8715 = vadd.xlane.f32.xlu0 %v8714
        %v8716 = vpop.xlane.xlu0 %8715
        %v8717 = vmul.f32 %v8716, %v878
        %v8718 = vadd.f32 %v8717, 1e-06
        %v8719 = vrsqrt.pop %v8718
        %v8720 = vmul.f32 %v8712, %v8719
        %v8721 = vld [vmem:[%s846] sm:$0xff]
        %v8722 = vld [vmem:[%s846 + $0x8] sm:$0xff]
        %v8723 = vld [vmem:[%s846 + $0x10] sm:$0xff]
        %v8724 = vld [vmem:[%s846 + $0x18] sm:$0xff]
        %v8726 = vsel %vm874, %v8720, 0
        %8728 = vmatprep.subr.mxu0 0.0
        %8729 = vmatpush1.msra.mxu0 0.0
        %8730 = vmatprep.subr.mxu0 0.0
        %8731 = vmatpush1.msra.mxu0 0.0
        %8732 = vmatprep.subr.mxu0 0.0
        %8733 = vmatpush1.msra.mxu0 0.0
        %8734 = vmatprep.subr.mxu0 0.0
        %8735 = vmatpush1.msra.mxu0 0.0
        %8736 = vmatprep.subr.mxu0 0.0
        %8737 = vmatpush1.msra.mxu0 0.0
        %8738 = vmatprep.subr.mxu0 0.0
        %8739 = vmatpush1.msra.mxu0 0.0
        %8740 = vmatprep.subr.mxu0 0.0
        %8741 = vmatpush1.msra.mxu0 0.0
        %8742 = vmatprep.subr.mxu0 0.0
        %8743 = vmatpush1.msra.mxu0 0.0
        %8744 = vmatprep.subr.mxu0 0.0
        %8745 = vmatpush1.msra.mxu0 0.0
        %8746 = vmatprep.subr.mxu0 0.0
        %8747 = vmatpush1.msra.mxu0 0.0
        %8748 = vmatprep.subr.mxu0 0.0
        %8749 = vmatpush1.msra.mxu0 0.0
        %8750 = vmatprep.subr.mxu0 0.0
        %8751 = vmatpush1.msra.mxu0 0.0
        %8752 = vmatprep.subr.mxu0 0.0
        %v8753 = vand.u32 %v8724, 4294901760
        %8754 = vmatpush1.msra.mxu0 %v8753
        %8755 = vmatprep.subr.mxu0 0.0
        %v8756 = vand.u32 %v8723, 4294901760
        %8757 = vmatpush1.msra.mxu0 %v8756
        %8758 = vmatprep.subr.mxu0 0.0
        %v8759 = vand.u32 %v8722, 4294901760
        %8760 = vmatpush1.msra.mxu0 %v8759
        %8761 = vmatprep.subr.mxu0 0.0
        %v8762 = vand.u32 %v8721, 4294901760
        %8763 = vmatpush1.msra.mxu0 %v8762
        %8764 = vmatprep.subr.mxu0 0.0
        %8765 = vmatpush2.msra.mxu0 0.0
        %8766 = vmatprep.subr.mxu0 0.0
        %8767 = vmatpush2.msra.mxu0 0.0
        %8768 = vmatprep.subr.mxu0 0.0
        %8769 = vmatpush2.msra.mxu0 0.0
        %8770 = vmatprep.subr.mxu0 0.0
        %8771 = vmatpush2.msra.mxu0 0.0
        %8772 = vmatprep.subr.mxu0 0.0
        %8773 = vmatpush2.msra.mxu0 0.0
        %8774 = vmatprep.subr.mxu0 0.0
        %8775 = vmatpush2.msra.mxu0 0.0
        %8776 = vmatprep.subr.mxu0 0.0
        %8777 = vmatpush2.msra.mxu0 0.0
        %8778 = vmatprep.subr.mxu0 0.0
        %8779 = vmatpush2.msra.mxu0 0.0
        %8780 = vmatprep.subr.mxu0 0.0
        %8781 = vmatpush2.msra.mxu0 0.0
        %8782 = vmatprep.subr.mxu0 0.0
        %8783 = vmatpush2.msra.mxu0 0.0
        %8784 = vmatprep.subr.mxu0 0.0
        %8785 = vmatpush2.msra.mxu0 0.0
        %8786 = vmatprep.subr.mxu0 0.0
        %8787 = vmatpush2.msra.mxu0 0.0
        %8788 = vmatprep.subr.mxu0 0.0
        %8789 = vmatpush2.msra.mxu0 0.0
        %8790 = vmatprep.subr.mxu0 0.0
        %8791 = vmatpush2.msra.mxu0 0.0
        %8792 = vmatprep.subr.mxu0 0.0
        %8793 = vmatpush2.msra.mxu0 0.0
        %8794 = vmatprep.subr.mxu0 0.0
        %8795 = vmatpush2.msra.mxu0 0.0
        %8796 = vmatprep.mubr.f32.mxu0 0.0
        %v8797 = vand.u32 %v8726, 4294901760
        %v8798 = vsub.f32 %v8726, %v8797
        %v8799 = vand.u32 %v8798, 4294901760
        %v8800 = vsub.f32 %v8798, %v8799
        %v8801 = vand.u32 %v8800, 4294901760
        %8802 = vmatmul.mubr.f32.gmra.mxu0 %v8801
        %v8803 = vpop.f32.mrf.mxu0
        %v8804 = vadd.f32 0.0, %v8803
        %v8805 = vpop.f32.mrf.mxu0
        %8806 = vdwg.mxu0
        %8807 = vmatprep.subr.mxu0 0.0
        %8808 = vmatpush1.msra.mxu0 0.0
        %8809 = vmatprep.subr.mxu0 0.0
        %8810 = vmatpush1.msra.mxu0 0.0
        %8811 = vmatprep.subr.mxu0 0.0
        %8812 = vmatpush1.msra.mxu0 0.0
        %8813 = vmatprep.subr.mxu0 0.0
        %8814 = vmatpush1.msra.mxu0 0.0
        %8815 = vmatprep.subr.mxu0 0.0
        %8816 = vmatpush1.msra.mxu0 0.0
        %8817 = vmatprep.subr.mxu0 0.0
        %8818 = vmatpush1.msra.mxu0 0.0
        %8819 = vmatprep.subr.mxu0 0.0
        %8820 = vmatpush1.msra.mxu0 0.0
        %8821 = vmatprep.subr.mxu0 0.0
        %8822 = vmatpush1.msra.mxu0 0.0
        %8823 = vmatprep.subr.mxu0 0.0
        %8824 = vmatpush1.msra.mxu0 0.0
        %8825 = vmatprep.subr.mxu0 0.0
        %8826 = vmatpush1.msra.mxu0 0.0
        %8827 = vmatprep.subr.mxu0 0.0
        %8828 = vmatpush1.msra.mxu0 0.0
        %8829 = vmatprep.subr.mxu0 0.0
        %8830 = vmatpush1.msra.mxu0 0.0
        %8831 = vmatprep.subr.mxu0 0.0
        %v8832 = vand.u32 %v8724, 4294901760
        %v8833 = vsub.f32 %v8724, %v8832
        %v8834 = vand.u32 %v8833, 4294901760
        %v8835 = vsub.f32 %v8833, %v8834
        %v8836 = vand.u32 %v8835, 4294901760
        %8837 = vmatpush1.msra.mxu0 %v8836
        %8838 = vmatprep.subr.mxu0 0.0
        %v8839 = vand.u32 %v8723, 4294901760
        %v8840 = vsub.f32 %v8723, %v8839
        %v8841 = vand.u32 %v8840, 4294901760
        %v8842 = vsub.f32 %v8840, %v8841
        %v8843 = vand.u32 %v8842, 4294901760
        %8844 = vmatpush1.msra.mxu0 %v8843
        %8845 = vmatprep.subr.mxu0 0.0
        %v8846 = vand.u32 %v8722, 4294901760
        %v8847 = vsub.f32 %v8722, %v8846
        %v8848 = vand.u32 %v8847, 4294901760
        %v8849 = vsub.f32 %v8847, %v8848
        %v8850 = vand.u32 %v8849, 4294901760
        %8851 = vmatpush1.msra.mxu0 %v8850
        %8852 = vmatprep.subr.mxu0 0.0
        %v8853 = vand.u32 %v8721, 4294901760
        %v8854 = vsub.f32 %v8721, %v8853
        %v8855 = vand.u32 %v8854, 4294901760
        %v8856 = vsub.f32 %v8854, %v8855
        %v8857 = vand.u32 %v8856, 4294901760
        %8858 = vmatpush1.msra.mxu0 %v8857
        %8859 = vmatprep.subr.mxu0 0.0
        %8860 = vmatpush2.msra.mxu0 0.0
        %8861 = vmatprep.subr.mxu0 0.0
        %8862 = vmatpush2.msra.mxu0 0.0
        %8863 = vmatprep.subr.mxu0 0.0
        %8864 = vmatpush2.msra.mxu0 0.0
        %8865 = vmatprep.subr.mxu0 0.0
        %8866 = vmatpush2.msra.mxu0 0.0
        %8867 = vmatprep.subr.mxu0 0.0
        %8868 = vmatpush2.msra.mxu0 0.0
        %8869 = vmatprep.subr.mxu0 0.0
        %8870 = vmatpush2.msra.mxu0 0.0
        %8871 = vmatprep.subr.mxu0 0.0
        %8872 = vmatpush2.msra.mxu0 0.0
        %8873 = vmatprep.subr.mxu0 0.0
        %8874 = vmatpush2.msra.mxu0 0.0
        %8875 = vmatprep.subr.mxu0 0.0
        %8876 = vmatpush2.msra.mxu0 0.0
        %8877 = vmatprep.subr.mxu0 0.0
        %8878 = vmatpush2.msra.mxu0 0.0
        %8879 = vmatprep.subr.mxu0 0.0
        %8880 = vmatpush2.msra.mxu0 0.0
        %8881 = vmatprep.subr.mxu0 0.0
        %8882 = vmatpush2.msra.mxu0 0.0
        %8883 = vmatprep.subr.mxu0 0.0
        %8884 = vmatpush2.msra.mxu0 0.0
        %8885 = vmatprep.subr.mxu0 0.0
        %8886 = vmatpush2.msra.mxu0 0.0
        %8887 = vmatprep.subr.mxu0 0.0
        %8888 = vmatpush2.msra.mxu0 0.0
        %8889 = vmatprep.subr.mxu0 0.0
        %8890 = vmatpush2.msra.mxu0 0.0
        %8891 = vmatprep.mubr.f32.mxu0 0.0
        %v8892 = vand.u32 %v8726, 4294901760
        %8893 = vmatmul.mubr.f32.gmra.mxu0 %v8892
        %v8894 = vpop.f32.mrf.mxu0
        %v8895 = vadd.f32 %v8804, %v8894
        %v8896 = vpop.f32.mrf.mxu0
        %8897 = vdwg.mxu0
        %8898 = vmatprep.subr.mxu0 0.0
        %8899 = vmatpush1.msra.mxu0 0.0
        %8900 = vmatprep.subr.mxu0 0.0
        %8901 = vmatpush1.msra.mxu0 0.0
        %8902 = vmatprep.subr.mxu0 0.0
        %8903 = vmatpush1.msra.mxu0 0.0
        %8904 = vmatprep.subr.mxu0 0.0
        %8905 = vmatpush1.msra.mxu0 0.0
        %8906 = vmatprep.subr.mxu0 0.0
        %8907 = vmatpush1.msra.mxu0 0.0
        %8908 = vmatprep.subr.mxu0 0.0
        %8909 = vmatpush1.msra.mxu0 0.0
        %8910 = vmatprep.subr.mxu0 0.0
        %8911 = vmatpush1.msra.mxu0 0.0
        %8912 = vmatprep.subr.mxu0 0.0
        %8913 = vmatpush1.msra.mxu0 0.0
        %8914 = vmatprep.subr.mxu0 0.0
        %8915 = vmatpush1.msra.mxu0 0.0
        %8916 = vmatprep.subr.mxu0 0.0
        %8917 = vmatpush1.msra.mxu0 0.0
        %8918 = vmatprep.subr.mxu0 0.0
        %8919 = vmatpush1.msra.mxu0 0.0
        %8920 = vmatprep.subr.mxu0 0.0
        %8921 = vmatpush1.msra.mxu0 0.0
        %8922 = vmatprep.subr.mxu0 0.0
        %v8923 = vand.u32 %v8724, 4294901760
        %v8924 = vsub.f32 %v8724, %v8923
        %8925 = vmatpush1.msra.mxu0 %v8924
        %8926 = vmatprep.subr.mxu0 0.0
        %v8927 = vand.u32 %v8723, 4294901760
        %v8928 = vsub.f32 %v8723, %v8927
        %8929 = vmatpush1.msra.mxu0 %v8928
        %8930 = vmatprep.subr.mxu0 0.0
        %v8931 = vand.u32 %v8722, 4294901760
        %v8932 = vsub.f32 %v8722, %v8931
        %8933 = vmatpush1.msra.mxu0 %v8932
        %8934 = vmatprep.subr.mxu0 0.0
        %v8935 = vand.u32 %v8721, 4294901760
        %v8936 = vsub.f32 %v8721, %v8935
        %8937 = vmatpush1.msra.mxu0 %v8936
        %8938 = vmatprep.subr.mxu0 0.0
        %8939 = vmatpush2.msra.mxu0 0.0
        %8940 = vmatprep.subr.mxu0 0.0
        %8941 = vmatpush2.msra.mxu0 0.0
        %8942 = vmatprep.subr.mxu0 0.0
        %8943 = vmatpush2.msra.mxu0 0.0
        %8944 = vmatprep.subr.mxu0 0.0
        %8945 = vmatpush2.msra.mxu0 0.0
        %8946 = vmatprep.subr.mxu0 0.0
        %8947 = vmatpush2.msra.mxu0 0.0
        %8948 = vmatprep.subr.mxu0 0.0
        %8949 = vmatpush2.msra.mxu0 0.0
        %8950 = vmatprep.subr.mxu0 0.0
        %8951 = vmatpush2.msra.mxu0 0.0
        %8952 = vmatprep.subr.mxu0 0.0
        %8953 = vmatpush2.msra.mxu0 0.0
        %8954 = vmatprep.subr.mxu0 0.0
        %8955 = vmatpush2.msra.mxu0 0.0
        %8956 = vmatprep.subr.mxu0 0.0
        %8957 = vmatpush2.msra.mxu0 0.0
        %8958 = vmatprep.subr.mxu0 0.0
        %8959 = vmatpush2.msra.mxu0 0.0
        %8960 = vmatprep.subr.mxu0 0.0
        %8961 = vmatpush2.msra.mxu0 0.0
        %8962 = vmatprep.subr.mxu0 0.0
        %8963 = vmatpush2.msra.mxu0 0.0
        %8964 = vmatprep.subr.mxu0 0.0
        %8965 = vmatpush2.msra.mxu0 0.0
        %8966 = vmatprep.subr.mxu0 0.0
        %8967 = vmatpush2.msra.mxu0 0.0
        %8968 = vmatprep.subr.mxu0 0.0
        %8969 = vmatpush2.msra.mxu0 0.0
        %8970 = vmatprep.mubr.f32.mxu0 0.0
        %v8971 = vand.u32 %v8726, 4294901760
        %v8972 = vsub.f32 %v8726, %v8971
        %8973 = vmatmul.mubr.f32.gmra.mxu0 %v8972
        %v8974 = vpop.f32.mrf.mxu0
        %v8975 = vadd.f32 %v8895, %v8974
        %v8976 = vpop.f32.mrf.mxu0
        %8977 = vdwg.mxu0
        %8978 = vmatprep.subr.mxu0 0.0
        %8979 = vmatpush1.msra.mxu0 0.0
        %8980 = vmatprep.subr.mxu0 0.0
        %8981 = vmatpush1.msra.mxu0 0.0
        %8982 = vmatprep.subr.mxu0 0.0
        %8983 = vmatpush1.msra.mxu0 0.0
        %8984 = vmatprep.subr.mxu0 0.0
        %8985 = vmatpush1.msra.mxu0 0.0
        %8986 = vmatprep.subr.mxu0 0.0
        %8987 = vmatpush1.msra.mxu0 0.0
        %8988 = vmatprep.subr.mxu0 0.0
        %8989 = vmatpush1.msra.mxu0 0.0
        %8990 = vmatprep.subr.mxu0 0.0
        %8991 = vmatpush1.msra.mxu0 0.0
        %8992 = vmatprep.subr.mxu0 0.0
        %8993 = vmatpush1.msra.mxu0 0.0
        %8994 = vmatprep.subr.mxu0 0.0
        %8995 = vmatpush1.msra.mxu0 0.0
        %8996 = vmatprep.subr.mxu0 0.0
        %8997 = vmatpush1.msra.mxu0 0.0
        %8998 = vmatprep.subr.mxu0 0.0
        %8999 = vmatpush1.msra.mxu0 0.0
        %9000 = vmatprep.subr.mxu0 0.0
        %9001 = vmatpush1.msra.mxu0 0.0
        %9002 = vmatprep.subr.mxu0 0.0
        %v9003 = vand.u32 %v8724, 4294901760
        %9004 = vmatpush1.msra.mxu0 %v9003
        %9005 = vmatprep.subr.mxu0 0.0
        %v9006 = vand.u32 %v8723, 4294901760
        %9007 = vmatpush1.msra.mxu0 %v9006
        %9008 = vmatprep.subr.mxu0 0.0
        %v9009 = vand.u32 %v8722, 4294901760
        %9010 = vmatpush1.msra.mxu0 %v9009
        %9011 = vmatprep.subr.mxu0 0.0
        %v9012 = vand.u32 %v8721, 4294901760
        %9013 = vmatpush1.msra.mxu0 %v9012
        %9014 = vmatprep.subr.mxu0 0.0
        %9015 = vmatpush2.msra.mxu0 0.0
        %9016 = vmatprep.subr.mxu0 0.0
        %9017 = vmatpush2.msra.mxu0 0.0
        %9018 = vmatprep.subr.mxu0 0.0
        %9019 = vmatpush2.msra.mxu0 0.0
        %9020 = vmatprep.subr.mxu0 0.0
        %9021 = vmatpush2.msra.mxu0 0.0
        %9022 = vmatprep.subr.mxu0 0.0
        %9023 = vmatpush2.msra.mxu0 0.0
        %9024 = vmatprep.subr.mxu0 0.0
        %9025 = vmatpush2.msra.mxu0 0.0
        %9026 = vmatprep.subr.mxu0 0.0
        %9027 = vmatpush2.msra.mxu0 0.0
        %9028 = vmatprep.subr.mxu0 0.0
        %9029 = vmatpush2.msra.mxu0 0.0
        %9030 = vmatprep.subr.mxu0 0.0
        %9031 = vmatpush2.msra.mxu0 0.0
        %9032 = vmatprep.subr.mxu0 0.0
        %9033 = vmatpush2.msra.mxu0 0.0
        %9034 = vmatprep.subr.mxu0 0.0
        %9035 = vmatpush2.msra.mxu0 0.0
        %9036 = vmatprep.subr.mxu0 0.0
        %9037 = vmatpush2.msra.mxu0 0.0
        %9038 = vmatprep.subr.mxu0 0.0
        %9039 = vmatpush2.msra.mxu0 0.0
        %9040 = vmatprep.subr.mxu0 0.0
        %9041 = vmatpush2.msra.mxu0 0.0
        %9042 = vmatprep.subr.mxu0 0.0
        %9043 = vmatpush2.msra.mxu0 0.0
        %9044 = vmatprep.subr.mxu0 0.0
        %9045 = vmatpush2.msra.mxu0 0.0
        %9046 = vmatprep.mubr.f32.mxu0 0.0
        %v9047 = vand.u32 %v8726, 4294901760
        %v9048 = vsub.f32 %v8726, %v9047
        %v9049 = vand.u32 %v9048, 4294901760
        %9050 = vmatmul.mubr.f32.gmra.mxu0 %v9049
        %v9051 = vpop.f32.mrf.mxu0
        %v9052 = vadd.f32 %v8975, %v9051
        %v9053 = vpop.f32.mrf.mxu0
        %9054 = vdwg.mxu0
        %9055 = vmatprep.subr.mxu0 0.0
        %9056 = vmatpush1.msra.mxu0 0.0
        %9057 = vmatprep.subr.mxu0 0.0
        %9058 = vmatpush1.msra.mxu0 0.0
        %9059 = vmatprep.subr.mxu0 0.0
        %9060 = vmatpush1.msra.mxu0 0.0
        %9061 = vmatprep.subr.mxu0 0.0
        %9062 = vmatpush1.msra.mxu0 0.0
        %9063 = vmatprep.subr.mxu0 0.0
        %9064 = vmatpush1.msra.mxu0 0.0
        %9065 = vmatprep.subr.mxu0 0.0
        %9066 = vmatpush1.msra.mxu0 0.0
        %9067 = vmatprep.subr.mxu0 0.0
        %9068 = vmatpush1.msra.mxu0 0.0
        %9069 = vmatprep.subr.mxu0 0.0
        %9070 = vmatpush1.msra.mxu0 0.0
        %9071 = vmatprep.subr.mxu0 0.0
        %9072 = vmatpush1.msra.mxu0 0.0
        %9073 = vmatprep.subr.mxu0 0.0
        %9074 = vmatpush1.msra.mxu0 0.0
        %9075 = vmatprep.subr.mxu0 0.0
        %9076 = vmatpush1.msra.mxu0 0.0
        %9077 = vmatprep.subr.mxu0 0.0
        %9078 = vmatpush1.msra.mxu0 0.0
        %9079 = vmatprep.subr.mxu0 0.0
        %v9080 = vand.u32 %v8724, 4294901760
        %v9081 = vsub.f32 %v8724, %v9080
        %v9082 = vand.u32 %v9081, 4294901760
        %9083 = vmatpush1.msra.mxu0 %v9082
        %9084 = vmatprep.subr.mxu0 0.0
        %v9085 = vand.u32 %v8723, 4294901760
        %v9086 = vsub.f32 %v8723, %v9085
        %v9087 = vand.u32 %v9086, 4294901760
        %9088 = vmatpush1.msra.mxu0 %v9087
        %9089 = vmatprep.subr.mxu0 0.0
        %v9090 = vand.u32 %v8722, 4294901760
        %v9091 = vsub.f32 %v8722, %v9090
        %v9092 = vand.u32 %v9091, 4294901760
        %9093 = vmatpush1.msra.mxu0 %v9092
        %9094 = vmatprep.subr.mxu0 0.0
        %v9095 = vand.u32 %v8721, 4294901760
        %v9096 = vsub.f32 %v8721, %v9095
        %v9097 = vand.u32 %v9096, 4294901760
        %9098 = vmatpush1.msra.mxu0 %v9097
        %9099 = vmatprep.subr.mxu0 0.0
        %9100 = vmatpush2.msra.mxu0 0.0
        %9101 = vmatprep.subr.mxu0 0.0
        %9102 = vmatpush2.msra.mxu0 0.0
        %9103 = vmatprep.subr.mxu0 0.0
        %9104 = vmatpush2.msra.mxu0 0.0
        %9105 = vmatprep.subr.mxu0 0.0
        %9106 = vmatpush2.msra.mxu0 0.0
        %9107 = vmatprep.subr.mxu0 0.0
        %9108 = vmatpush2.msra.mxu0 0.0
        %9109 = vmatprep.subr.mxu0 0.0
        %9110 = vmatpush2.msra.mxu0 0.0
        %9111 = vmatprep.subr.mxu0 0.0
        %9112 = vmatpush2.msra.mxu0 0.0
        %9113 = vmatprep.subr.mxu0 0.0
        %9114 = vmatpush2.msra.mxu0 0.0
        %9115 = vmatprep.subr.mxu0 0.0
        %9116 = vmatpush2.msra.mxu0 0.0
        %9117 = vmatprep.subr.mxu0 0.0
        %9118 = vmatpush2.msra.mxu0 0.0
        %9119 = vmatprep.subr.mxu0 0.0
        %9120 = vmatpush2.msra.mxu0 0.0
        %9121 = vmatprep.subr.mxu0 0.0
        %9122 = vmatpush2.msra.mxu0 0.0
        %9123 = vmatprep.subr.mxu0 0.0
        %9124 = vmatpush2.msra.mxu0 0.0
        %9125 = vmatprep.subr.mxu0 0.0
        %9126 = vmatpush2.msra.mxu0 0.0
        %9127 = vmatprep.subr.mxu0 0.0
        %9128 = vmatpush2.msra.mxu0 0.0
        %9129 = vmatprep.subr.mxu0 0.0
        %9130 = vmatpush2.msra.mxu0 0.0
        %9131 = vmatprep.mubr.f32.mxu0 0.0
        %v9132 = vand.u32 %v8726, 4294901760
        %9133 = vmatmul.mubr.f32.gmra.mxu0 %v9132
        %v9134 = vpop.f32.mrf.mxu0
        %v9135 = vadd.f32 %v9052, %v9134
        %v9136 = vpop.f32.mrf.mxu0
        %9137 = vdwg.mxu0
        %9138 = vmatprep.subr.mxu0 0.0
        %9139 = vmatpush1.msra.mxu0 0.0
        %9140 = vmatprep.subr.mxu0 0.0
        %9141 = vmatpush1.msra.mxu0 0.0
        %9142 = vmatprep.subr.mxu0 0.0
        %9143 = vmatpush1.msra.mxu0 0.0
        %9144 = vmatprep.subr.mxu0 0.0
        %9145 = vmatpush1.msra.mxu0 0.0
        %9146 = vmatprep.subr.mxu0 0.0
        %9147 = vmatpush1.msra.mxu0 0.0
        %9148 = vmatprep.subr.mxu0 0.0
        %9149 = vmatpush1.msra.mxu0 0.0
        %9150 = vmatprep.subr.mxu0 0.0
        %9151 = vmatpush1.msra.mxu0 0.0
        %9152 = vmatprep.subr.mxu0 0.0
        %9153 = vmatpush1.msra.mxu0 0.0
        %9154 = vmatprep.subr.mxu0 0.0
        %9155 = vmatpush1.msra.mxu0 0.0
        %9156 = vmatprep.subr.mxu0 0.0
        %9157 = vmatpush1.msra.mxu0 0.0
        %9158 = vmatprep.subr.mxu0 0.0
        %9159 = vmatpush1.msra.mxu0 0.0
        %9160 = vmatprep.subr.mxu0 0.0
        %9161 = vmatpush1.msra.mxu0 0.0
        %9162 = vmatprep.subr.mxu0 0.0
        %v9163 = vand.u32 %v8724, 4294901760
        %9164 = vmatpush1.msra.mxu0 %v9163
        %9165 = vmatprep.subr.mxu0 0.0
        %v9166 = vand.u32 %v8723, 4294901760
        %9167 = vmatpush1.msra.mxu0 %v9166
        %9168 = vmatprep.subr.mxu0 0.0
        %v9169 = vand.u32 %v8722, 4294901760
        %9170 = vmatpush1.msra.mxu0 %v9169
        %9171 = vmatprep.subr.mxu0 0.0
        %v9172 = vand.u32 %v8721, 4294901760
        %9173 = vmatpush1.msra.mxu0 %v9172
        %9174 = vmatprep.subr.mxu0 0.0
        %9175 = vmatpush2.msra.mxu0 0.0
        %9176 = vmatprep.subr.mxu0 0.0
        %9177 = vmatpush2.msra.mxu0 0.0
        %9178 = vmatprep.subr.mxu0 0.0
        %9179 = vmatpush2.msra.mxu0 0.0
        %9180 = vmatprep.subr.mxu0 0.0
        %9181 = vmatpush2.msra.mxu0 0.0
        %9182 = vmatprep.subr.mxu0 0.0
        %9183 = vmatpush2.msra.mxu0 0.0
        %9184 = vmatprep.subr.mxu0 0.0
        %9185 = vmatpush2.msra.mxu0 0.0
        %9186 = vmatprep.subr.mxu0 0.0
        %9187 = vmatpush2.msra.mxu0 0.0
        %9188 = vmatprep.subr.mxu0 0.0
        %9189 = vmatpush2.msra.mxu0 0.0
        %9190 = vmatprep.subr.mxu0 0.0
        %9191 = vmatpush2.msra.mxu0 0.0
        %9192 = vmatprep.subr.mxu0 0.0
        %9193 = vmatpush2.msra.mxu0 0.0
        %9194 = vmatprep.subr.mxu0 0.0
        %9195 = vmatpush2.msra.mxu0 0.0
        %9196 = vmatprep.subr.mxu0 0.0
        %9197 = vmatpush2.msra.mxu0 0.0
        %9198 = vmatprep.subr.mxu0 0.0
        %9199 = vmatpush2.msra.mxu0 0.0
        %9200 = vmatprep.subr.mxu0 0.0
        %9201 = vmatpush2.msra.mxu0 0.0
        %9202 = vmatprep.subr.mxu0 0.0
        %9203 = vmatpush2.msra.mxu0 0.0
        %9204 = vmatprep.subr.mxu0 0.0
        %9205 = vmatpush2.msra.mxu0 0.0
        %9206 = vmatprep.mubr.f32.mxu0 0.0
        %v9207 = vand.u32 %v8726, 4294901760
        %9208 = vmatmul.mubr.f32.gmra.mxu0 %v9207
        %v9209 = vpop.f32.mrf.mxu0
        %v9210 = vadd.f32 %v9135, %v9209
        %v9211 = vpop.f32.mrf.mxu0
        %9212 = vdwg.mxu0
        %v9213 = vld [vmem:[%s851] sm:$0xff]
        %v9214 = vld [vmem:[%s851 + $0x8] sm:$0xff]
        %v9215 = vld [vmem:[%s851 + $0x10] sm:$0xff]
        %v9216 = vld [vmem:[%s851 + $0x18] sm:$0xff]
        %9217 = vmatprep.subr.mxu0 0.0
        %9218 = vmatpush1.msra.mxu0 0.0
        %9219 = vmatprep.subr.mxu0 0.0
        %9220 = vmatpush1.msra.mxu0 0.0
        %9221 = vmatprep.subr.mxu0 0.0
        %9222 = vmatpush1.msra.mxu0 0.0
        %9223 = vmatprep.subr.mxu0 0.0
        %9224 = vmatpush1.msra.mxu0 0.0
        %9225 = vmatprep.subr.mxu0 0.0
        %9226 = vmatpush1.msra.mxu0 0.0
        %9227 = vmatprep.subr.mxu0 0.0
        %9228 = vmatpush1.msra.mxu0 0.0
        %9229 = vmatprep.subr.mxu0 0.0
        %9230 = vmatpush1.msra.mxu0 0.0
        %9231 = vmatprep.subr.mxu0 0.0
        %9232 = vmatpush1.msra.mxu0 0.0
        %9233 = vmatprep.subr.mxu0 0.0
        %9234 = vmatpush1.msra.mxu0 0.0
        %9235 = vmatprep.subr.mxu0 0.0
        %9236 = vmatpush1.msra.mxu0 0.0
        %9237 = vmatprep.subr.mxu0 0.0
        %9238 = vmatpush1.msra.mxu0 0.0
        %9239 = vmatprep.subr.mxu0 0.0
        %9240 = vmatpush1.msra.mxu0 0.0
        %9241 = vmatprep.subr.mxu0 0.0
        %v9242 = vand.u32 %v9216, 4294901760
        %9243 = vmatpush1.msra.mxu0 %v9242
        %9244 = vmatprep.subr.mxu0 0.0
        %v9245 = vand.u32 %v9215, 4294901760
        %9246 = vmatpush1.msra.mxu0 %v9245
        %9247 = vmatprep.subr.mxu0 0.0
        %v9248 = vand.u32 %v9214, 4294901760
        %9249 = vmatpush1.msra.mxu0 %v9248
        %9250 = vmatprep.subr.mxu0 0.0
        %v9251 = vand.u32 %v9213, 4294901760
        %9252 = vmatpush1.msra.mxu0 %v9251
        %9253 = vmatprep.subr.mxu0 0.0
        %9254 = vmatpush2.msra.mxu0 0.0
        %9255 = vmatprep.subr.mxu0 0.0
        %9256 = vmatpush2.msra.mxu0 0.0
        %9257 = vmatprep.subr.mxu0 0.0
        %9258 = vmatpush2.msra.mxu0 0.0
        %9259 = vmatprep.subr.mxu0 0.0
        %9260 = vmatpush2.msra.mxu0 0.0
        %9261 = vmatprep.subr.mxu0 0.0
        %9262 = vmatpush2.msra.mxu0 0.0
        %9263 = vmatprep.subr.mxu0 0.0
        %9264 = vmatpush2.msra.mxu0 0.0
        %9265 = vmatprep.subr.mxu0 0.0
        %9266 = vmatpush2.msra.mxu0 0.0
        %9267 = vmatprep.subr.mxu0 0.0
        %9268 = vmatpush2.msra.mxu0 0.0
        %9269 = vmatprep.subr.mxu0 0.0
        %9270 = vmatpush2.msra.mxu0 0.0
        %9271 = vmatprep.subr.mxu0 0.0
        %9272 = vmatpush2.msra.mxu0 0.0
        %9273 = vmatprep.subr.mxu0 0.0
        %9274 = vmatpush2.msra.mxu0 0.0
        %9275 = vmatprep.subr.mxu0 0.0
        %9276 = vmatpush2.msra.mxu0 0.0
        %9277 = vmatprep.subr.mxu0 0.0
        %9278 = vmatpush2.msra.mxu0 0.0
        %9279 = vmatprep.subr.mxu0 0.0
        %9280 = vmatpush2.msra.mxu0 0.0
        %9281 = vmatprep.subr.mxu0 0.0
        %9282 = vmatpush2.msra.mxu0 0.0
        %9283 = vmatprep.subr.mxu0 0.0
        %9284 = vmatpush2.msra.mxu0 0.0
        %9285 = vmatprep.mubr.f32.mxu0 0.0
        %v9286 = vand.u32 %v8726, 4294901760
        %v9287 = vsub.f32 %v8726, %v9286
        %v9288 = vand.u32 %v9287, 4294901760
        %v9289 = vsub.f32 %v9287, %v9288
        %v9290 = vand.u32 %v9289, 4294901760
        %9291 = vmatmul.mubr.f32.gmra.mxu0 %v9290
        %v9292 = vpop.f32.mrf.mxu0
        %v9293 = vadd.f32 0.0, %v9292
        %v9294 = vpop.f32.mrf.mxu0
        %9295 = vdwg.mxu0
        %9296 = vmatprep.subr.mxu0 0.0
        %9297 = vmatpush1.msra.mxu0 0.0
        %9298 = vmatprep.subr.mxu0 0.0
        %9299 = vmatpush1.msra.mxu0 0.0
        %9300 = vmatprep.subr.mxu0 0.0
        %9301 = vmatpush1.msra.mxu0 0.0
        %9302 = vmatprep.subr.mxu0 0.0
        %9303 = vmatpush1.msra.mxu0 0.0
        %9304 = vmatprep.subr.mxu0 0.0
        %9305 = vmatpush1.msra.mxu0 0.0
        %9306 = vmatprep.subr.mxu0 0.0
        %9307 = vmatpush1.msra.mxu0 0.0
        %9308 = vmatprep.subr.mxu0 0.0
        %9309 = vmatpush1.msra.mxu0 0.0
        %9310 = vmatprep.subr.mxu0 0.0
        %9311 = vmatpush1.msra.mxu0 0.0
        %9312 = vmatprep.subr.mxu0 0.0
        %9313 = vmatpush1.msra.mxu0 0.0
        %9314 = vmatprep.subr.mxu0 0.0
        %9315 = vmatpush1.msra.mxu0 0.0
        %9316 = vmatprep.subr.mxu0 0.0
        %9317 = vmatpush1.msra.mxu0 0.0
        %9318 = vmatprep.subr.mxu0 0.0
        %9319 = vmatpush1.msra.mxu0 0.0
        %9320 = vmatprep.subr.mxu0 0.0
        %v9321 = vand.u32 %v9216, 4294901760
        %v9322 = vsub.f32 %v9216, %v9321
        %v9323 = vand.u32 %v9322, 4294901760
        %v9324 = vsub.f32 %v9322, %v9323
        %v9325 = vand.u32 %v9324, 4294901760
        %9326 = vmatpush1.msra.mxu0 %v9325
        %9327 = vmatprep.subr.mxu0 0.0
        %v9328 = vand.u32 %v9215, 4294901760
        %v9329 = vsub.f32 %v9215, %v9328
        %v9330 = vand.u32 %v9329, 4294901760
        %v9331 = vsub.f32 %v9329, %v9330
        %v9332 = vand.u32 %v9331, 4294901760
        %9333 = vmatpush1.msra.mxu0 %v9332
        %9334 = vmatprep.subr.mxu0 0.0
        %v9335 = vand.u32 %v9214, 4294901760
        %v9336 = vsub.f32 %v9214, %v9335
        %v9337 = vand.u32 %v9336, 4294901760
        %v9338 = vsub.f32 %v9336, %v9337
        %v9339 = vand.u32 %v9338, 4294901760
        %9340 = vmatpush1.msra.mxu0 %v9339
        %9341 = vmatprep.subr.mxu0 0.0
        %v9342 = vand.u32 %v9213, 4294901760
        %v9343 = vsub.f32 %v9213, %v9342
        %v9344 = vand.u32 %v9343, 4294901760
        %v9345 = vsub.f32 %v9343, %v9344
        %v9346 = vand.u32 %v9345, 4294901760
        %9347 = vmatpush1.msra.mxu0 %v9346
        %9348 = vmatprep.subr.mxu0 0.0
        %9349 = vmatpush2.msra.mxu0 0.0
        %9350 = vmatprep.subr.mxu0 0.0
        %9351 = vmatpush2.msra.mxu0 0.0
        %9352 = vmatprep.subr.mxu0 0.0
        %9353 = vmatpush2.msra.mxu0 0.0
        %9354 = vmatprep.subr.mxu0 0.0
        %9355 = vmatpush2.msra.mxu0 0.0
        %9356 = vmatprep.subr.mxu0 0.0
        %9357 = vmatpush2.msra.mxu0 0.0
        %9358 = vmatprep.subr.mxu0 0.0
        %9359 = vmatpush2.msra.mxu0 0.0
        %9360 = vmatprep.subr.mxu0 0.0
        %9361 = vmatpush2.msra.mxu0 0.0
        %9362 = vmatprep.subr.mxu0 0.0
        %9363 = vmatpush2.msra.mxu0 0.0
        %9364 = vmatprep.subr.mxu0 0.0
        %9365 = vmatpush2.msra.mxu0 0.0
        %9366 = vmatprep.subr.mxu0 0.0
        %9367 = vmatpush2.msra.mxu0 0.0
        %9368 = vmatprep.subr.mxu0 0.0
        %9369 = vmatpush2.msra.mxu0 0.0
        %9370 = vmatprep.subr.mxu0 0.0
        %9371 = vmatpush2.msra.mxu0 0.0
        %9372 = vmatprep.subr.mxu0 0.0
        %9373 = vmatpush2.msra.mxu0 0.0
        %9374 = vmatprep.subr.mxu0 0.0
        %9375 = vmatpush2.msra.mxu0 0.0
        %9376 = vmatprep.subr.mxu0 0.0
        %9377 = vmatpush2.msra.mxu0 0.0
        %9378 = vmatprep.subr.mxu0 0.0
        %9379 = vmatpush2.msra.mxu0 0.0
        %9380 = vmatprep.mubr.f32.mxu0 0.0
        %v9381 = vand.u32 %v8726, 4294901760
        %9382 = vmatmul.mubr.f32.gmra.mxu0 %v9381
        %v9383 = vpop.f32.mrf.mxu0
        %v9384 = vadd.f32 %v9293, %v9383
        %v9385 = vpop.f32.mrf.mxu0
        %9386 = vdwg.mxu0
        %9387 = vmatprep.subr.mxu0 0.0
        %9388 = vmatpush1.msra.mxu0 0.0
        %9389 = vmatprep.subr.mxu0 0.0
        %9390 = vmatpush1.msra.mxu0 0.0
        %9391 = vmatprep.subr.mxu0 0.0
        %9392 = vmatpush1.msra.mxu0 0.0
        %9393 = vmatprep.subr.mxu0 0.0
        %9394 = vmatpush1.msra.mxu0 0.0
        %9395 = vmatprep.subr.mxu0 0.0
        %9396 = vmatpush1.msra.mxu0 0.0
        %9397 = vmatprep.subr.mxu0 0.0
        %9398 = vmatpush1.msra.mxu0 0.0
        %9399 = vmatprep.subr.mxu0 0.0
        %9400 = vmatpush1.msra.mxu0 0.0
        %9401 = vmatprep.subr.mxu0 0.0
        %9402 = vmatpush1.msra.mxu0 0.0
        %9403 = vmatprep.subr.mxu0 0.0
        %9404 = vmatpush1.msra.mxu0 0.0
        %9405 = vmatprep.subr.mxu0 0.0
        %9406 = vmatpush1.msra.mxu0 0.0
        %9407 = vmatprep.subr.mxu0 0.0
        %9408 = vmatpush1.msra.mxu0 0.0
        %9409 = vmatprep.subr.mxu0 0.0
        %9410 = vmatpush1.msra.mxu0 0.0
        %9411 = vmatprep.subr.mxu0 0.0
        %v9412 = vand.u32 %v9216, 4294901760
        %v9413 = vsub.f32 %v9216, %v9412
        %9414 = vmatpush1.msra.mxu0 %v9413
        %9415 = vmatprep.subr.mxu0 0.0
        %v9416 = vand.u32 %v9215, 4294901760
        %v9417 = vsub.f32 %v9215, %v9416
        %9418 = vmatpush1.msra.mxu0 %v9417
        %9419 = vmatprep.subr.mxu0 0.0
        %v9420 = vand.u32 %v9214, 4294901760
        %v9421 = vsub.f32 %v9214, %v9420
        %9422 = vmatpush1.msra.mxu0 %v9421
        %9423 = vmatprep.subr.mxu0 0.0
        %v9424 = vand.u32 %v9213, 4294901760
        %v9425 = vsub.f32 %v9213, %v9424
        %9426 = vmatpush1.msra.mxu0 %v9425
        %9427 = vmatprep.subr.mxu0 0.0
        %9428 = vmatpush2.msra.mxu0 0.0
        %9429 = vmatprep.subr.mxu0 0.0
        %9430 = vmatpush2.msra.mxu0 0.0
        %9431 = vmatprep.subr.mxu0 0.0
        %9432 = vmatpush2.msra.mxu0 0.0
        %9433 = vmatprep.subr.mxu0 0.0
        %9434 = vmatpush2.msra.mxu0 0.0
        %9435 = vmatprep.subr.mxu0 0.0
        %9436 = vmatpush2.msra.mxu0 0.0
        %9437 = vmatprep.subr.mxu0 0.0
        %9438 = vmatpush2.msra.mxu0 0.0
        %9439 = vmatprep.subr.mxu0 0.0
        %9440 = vmatpush2.msra.mxu0 0.0
        %9441 = vmatprep.subr.mxu0 0.0
        %9442 = vmatpush2.msra.mxu0 0.0
        %9443 = vmatprep.subr.mxu0 0.0
        %9444 = vmatpush2.msra.mxu0 0.0
        %9445 = vmatprep.subr.mxu0 0.0
        %9446 = vmatpush2.msra.mxu0 0.0
        %9447 = vmatprep.subr.mxu0 0.0
        %9448 = vmatpush2.msra.mxu0 0.0
        %9449 = vmatprep.subr.mxu0 0.0
        %9450 = vmatpush2.msra.mxu0 0.0
        %9451 = vmatprep.subr.mxu0 0.0
        %9452 = vmatpush2.msra.mxu0 0.0
        %9453 = vmatprep.subr.mxu0 0.0
        %9454 = vmatpush2.msra.mxu0 0.0
        %9455 = vmatprep.subr.mxu0 0.0
        %9456 = vmatpush2.msra.mxu0 0.0
        %9457 = vmatprep.subr.mxu0 0.0
        %9458 = vmatpush2.msra.mxu0 0.0
        %9459 = vmatprep.mubr.f32.mxu0 0.0
        %v9460 = vand.u32 %v8726, 4294901760
        %v9461 = vsub.f32 %v8726, %v9460
        %9462 = vmatmul.mubr.f32.gmra.mxu0 %v9461
        %v9463 = vpop.f32.mrf.mxu0
        %v9464 = vadd.f32 %v9384, %v9463
        %v9465 = vpop.f32.mrf.mxu0
        %9466 = vdwg.mxu0
        %9467 = vmatprep.subr.mxu0 0.0
        %9468 = vmatpush1.msra.mxu0 0.0
        %9469 = vmatprep.subr.mxu0 0.0
        %9470 = vmatpush1.msra.mxu0 0.0
        %9471 = vmatprep.subr.mxu0 0.0
        %9472 = vmatpush1.msra.mxu0 0.0
        %9473 = vmatprep.subr.mxu0 0.0
        %9474 = vmatpush1.msra.mxu0 0.0
        %9475 = vmatprep.subr.mxu0 0.0
        %9476 = vmatpush1.msra.mxu0 0.0
        %9477 = vmatprep.subr.mxu0 0.0
        %9478 = vmatpush1.msra.mxu0 0.0
        %9479 = vmatprep.subr.mxu0 0.0
        %9480 = vmatpush1.msra.mxu0 0.0
        %9481 = vmatprep.subr.mxu0 0.0
        %9482 = vmatpush1.msra.mxu0 0.0
        %9483 = vmatprep.subr.mxu0 0.0
        %9484 = vmatpush1.msra.mxu0 0.0
        %9485 = vmatprep.subr.mxu0 0.0
        %9486 = vmatpush1.msra.mxu0 0.0
        %9487 = vmatprep.subr.mxu0 0.0
        %9488 = vmatpush1.msra.mxu0 0.0
        %9489 = vmatprep.subr.mxu0 0.0
        %9490 = vmatpush1.msra.mxu0 0.0
        %9491 = vmatprep.subr.mxu0 0.0
        %v9492 = vand.u32 %v9216, 4294901760
        %9493 = vmatpush1.msra.mxu0 %v9492
        %9494 = vmatprep.subr.mxu0 0.0
        %v9495 = vand.u32 %v9215, 4294901760
        %9496 = vmatpush1.msra.mxu0 %v9495
        %9497 = vmatprep.subr.mxu0 0.0
        %v9498 = vand.u32 %v9214, 4294901760
        %9499 = vmatpush1.msra.mxu0 %v9498
        %9500 = vmatprep.subr.mxu0 0.0
        %v9501 = vand.u32 %v9213, 4294901760
        %9502 = vmatpush1.msra.mxu0 %v9501
        %9503 = vmatprep.subr.mxu0 0.0
        %9504 = vmatpush2.msra.mxu0 0.0
        %9505 = vmatprep.subr.mxu0 0.0
        %9506 = vmatpush2.msra.mxu0 0.0
        %9507 = vmatprep.subr.mxu0 0.0
        %9508 = vmatpush2.msra.mxu0 0.0
        %9509 = vmatprep.subr.mxu0 0.0
        %9510 = vmatpush2.msra.mxu0 0.0
        %9511 = vmatprep.subr.mxu0 0.0
        %9512 = vmatpush2.msra.mxu0 0.0
        %9513 = vmatprep.subr.mxu0 0.0
        %9514 = vmatpush2.msra.mxu0 0.0
        %9515 = vmatprep.subr.mxu0 0.0
        %9516 = vmatpush2.msra.mxu0 0.0
        %9517 = vmatprep.subr.mxu0 0.0
        %9518 = vmatpush2.msra.mxu0 0.0
        %9519 = vmatprep.subr.mxu0 0.0
        %9520 = vmatpush2.msra.mxu0 0.0
        %9521 = vmatprep.subr.mxu0 0.0
        %9522 = vmatpush2.msra.mxu0 0.0
        %9523 = vmatprep.subr.mxu0 0.0
        %9524 = vmatpush2.msra.mxu0 0.0
        %9525 = vmatprep.subr.mxu0 0.0
        %9526 = vmatpush2.msra.mxu0 0.0
        %9527 = vmatprep.subr.mxu0 0.0
        %9528 = vmatpush2.msra.mxu0 0.0
        %9529 = vmatprep.subr.mxu0 0.0
        %9530 = vmatpush2.msra.mxu0 0.0
        %9531 = vmatprep.subr.mxu0 0.0
        %9532 = vmatpush2.msra.mxu0 0.0
        %9533 = vmatprep.subr.mxu0 0.0
        %9534 = vmatpush2.msra.mxu0 0.0
        %9535 = vmatprep.mubr.f32.mxu0 0.0
        %v9536 = vand.u32 %v8726, 4294901760
        %v9537 = vsub.f32 %v8726, %v9536
        %v9538 = vand.u32 %v9537, 4294901760
        %9539 = vmatmul.mubr.f32.gmra.mxu0 %v9538
        %v9540 = vpop.f32.mrf.mxu0
        %v9541 = vadd.f32 %v9464, %v9540
        %v9542 = vpop.f32.mrf.mxu0
        %9543 = vdwg.mxu0
        %9544 = vmatprep.subr.mxu0 0.0
        %9545 = vmatpush1.msra.mxu0 0.0
        %9546 = vmatprep.subr.mxu0 0.0
        %9547 = vmatpush1.msra.mxu0 0.0
        %9548 = vmatprep.subr.mxu0 0.0
        %9549 = vmatpush1.msra.mxu0 0.0
        %9550 = vmatprep.subr.mxu0 0.0
        %9551 = vmatpush1.msra.mxu0 0.0
        %9552 = vmatprep.subr.mxu0 0.0
        %9553 = vmatpush1.msra.mxu0 0.0
        %9554 = vmatprep.subr.mxu0 0.0
        %9555 = vmatpush1.msra.mxu0 0.0
        %9556 = vmatprep.subr.mxu0 0.0
        %9557 = vmatpush1.msra.mxu0 0.0
        %9558 = vmatprep.subr.mxu0 0.0
        %9559 = vmatpush1.msra.mxu0 0.0
        %9560 = vmatprep.subr.mxu0 0.0
        %9561 = vmatpush1.msra.mxu0 0.0
        %9562 = vmatprep.subr.mxu0 0.0
        %9563 = vmatpush1.msra.mxu0 0.0
        %9564 = vmatprep.subr.mxu0 0.0
        %9565 = vmatpush1.msra.mxu0 0.0
        %9566 = vmatprep.subr.mxu0 0.0
        %9567 = vmatpush1.msra.mxu0 0.0
        %9568 = vmatprep.subr.mxu0 0.0
        %v9569 = vand.u32 %v9216, 4294901760
        %v9570 = vsub.f32 %v9216, %v9569
        %v9571 = vand.u32 %v9570, 4294901760
        %9572 = vmatpush1.msra.mxu0 %v9571
        %9573 = vmatprep.subr.mxu0 0.0
        %v9574 = vand.u32 %v9215, 4294901760
        %v9575 = vsub.f32 %v9215, %v9574
        %v9576 = vand.u32 %v9575, 4294901760
        %9577 = vmatpush1.msra.mxu0 %v9576
        %9578 = vmatprep.subr.mxu0 0.0
        %v9579 = vand.u32 %v9214, 4294901760
        %v9580 = vsub.f32 %v9214, %v9579
        %v9581 = vand.u32 %v9580, 4294901760
        %9582 = vmatpush1.msra.mxu0 %v9581
        %9583 = vmatprep.subr.mxu0 0.0
        %v9584 = vand.u32 %v9213, 4294901760
        %v9585 = vsub.f32 %v9213, %v9584
        %v9586 = vand.u32 %v9585, 4294901760
        %9587 = vmatpush1.msra.mxu0 %v9586
        %9588 = vmatprep.subr.mxu0 0.0
        %9589 = vmatpush2.msra.mxu0 0.0
        %9590 = vmatprep.subr.mxu0 0.0
        %9591 = vmatpush2.msra.mxu0 0.0
        %9592 = vmatprep.subr.mxu0 0.0
        %9593 = vmatpush2.msra.mxu0 0.0
        %9594 = vmatprep.subr.mxu0 0.0
        %9595 = vmatpush2.msra.mxu0 0.0
        %9596 = vmatprep.subr.mxu0 0.0
        %9597 = vmatpush2.msra.mxu0 0.0
        %9598 = vmatprep.subr.mxu0 0.0
        %9599 = vmatpush2.msra.mxu0 0.0
        %9600 = vmatprep.subr.mxu0 0.0
        %9601 = vmatpush2.msra.mxu0 0.0
        %9602 = vmatprep.subr.mxu0 0.0
        %9603 = vmatpush2.msra.mxu0 0.0
        %9604 = vmatprep.subr.mxu0 0.0
        %9605 = vmatpush2.msra.mxu0 0.0
        %9606 = vmatprep.subr.mxu0 0.0
        %9607 = vmatpush2.msra.mxu0 0.0
        %9608 = vmatprep.subr.mxu0 0.0
        %9609 = vmatpush2.msra.mxu0 0.0
        %9610 = vmatprep.subr.mxu0 0.0
        %9611 = vmatpush2.msra.mxu0 0.0
        %9612 = vmatprep.subr.mxu0 0.0
        %9613 = vmatpush2.msra.mxu0 0.0
        %9614 = vmatprep.subr.mxu0 0.0
        %9615 = vmatpush2.msra.mxu0 0.0
        %9616 = vmatprep.subr.mxu0 0.0
        %9617 = vmatpush2.msra.mxu0 0.0
        %9618 = vmatprep.subr.mxu0 0.0
        %9619 = vmatpush2.msra.mxu0 0.0
        %9620 = vmatprep.mubr.f32.mxu0 0.0
        %v9621 = vand.u32 %v8726, 4294901760
        %9622 = vmatmul.mubr.f32.gmra.mxu0 %v9621
        %v9623 = vpop.f32.mrf.mxu0
        %v9624 = vadd.f32 %v9541, %v9623
        %v9625 = vpop.f32.mrf.mxu0
        %9626 = vdwg.mxu0
        %9627 = vmatprep.subr.mxu0 0.0
        %9628 = vmatpush1.msra.mxu0 0.0
        %9629 = vmatprep.subr.mxu0 0.0
        %9630 = vmatpush1.msra.mxu0 0.0
        %9631 = vmatprep.subr.mxu0 0.0
        %9632 = vmatpush1.msra.mxu0 0.0
        %9633 = vmatprep.subr.mxu0 0.0
        %9634 = vmatpush1.msra.mxu0 0.0
        %9635 = vmatprep.subr.mxu0 0.0
        %9636 = vmatpush1.msra.mxu0 0.0
        %9637 = vmatprep.subr.mxu0 0.0
        %9638 = vmatpush1.msra.mxu0 0.0
        %9639 = vmatprep.subr.mxu0 0.0
        %9640 = vmatpush1.msra.mxu0 0.0
        %9641 = vmatprep.subr.mxu0 0.0
        %9642 = vmatpush1.msra.mxu0 0.0
        %9643 = vmatprep.subr.mxu0 0.0
        %9644 = vmatpush1.msra.mxu0 0.0
        %9645 = vmatprep.subr.mxu0 0.0
        %9646 = vmatpush1.msra.mxu0 0.0
        %9647 = vmatprep.subr.mxu0 0.0
        %9648 = vmatpush1.msra.mxu0 0.0
        %9649 = vmatprep.subr.mxu0 0.0
        %9650 = vmatpush1.msra.mxu0 0.0
        %9651 = vmatprep.subr.mxu0 0.0
        %v9652 = vand.u32 %v9216, 4294901760
        %9653 = vmatpush1.msra.mxu0 %v9652
        %9654 = vmatprep.subr.mxu0 0.0
        %v9655 = vand.u32 %v9215, 4294901760
        %9656 = vmatpush1.msra.mxu0 %v9655
        %9657 = vmatprep.subr.mxu0 0.0
        %v9658 = vand.u32 %v9214, 4294901760
        %9659 = vmatpush1.msra.mxu0 %v9658
        %9660 = vmatprep.subr.mxu0 0.0
        %v9661 = vand.u32 %v9213, 4294901760
        %9662 = vmatpush1.msra.mxu0 %v9661
        %9663 = vmatprep.subr.mxu0 0.0
        %9664 = vmatpush2.msra.mxu0 0.0
        %9665 = vmatprep.subr.mxu0 0.0
        %9666 = vmatpush2.msra.mxu0 0.0
        %9667 = vmatprep.subr.mxu0 0.0
        %9668 = vmatpush2.msra.mxu0 0.0
        %9669 = vmatprep.subr.mxu0 0.0
        %9670 = vmatpush2.msra.mxu0 0.0
        %9671 = vmatprep.subr.mxu0 0.0
        %9672 = vmatpush2.msra.mxu0 0.0
        %9673 = vmatprep.subr.mxu0 0.0
        %9674 = vmatpush2.msra.mxu0 0.0
        %9675 = vmatprep.subr.mxu0 0.0
        %9676 = vmatpush2.msra.mxu0 0.0
        %9677 = vmatprep.subr.mxu0 0.0
        %9678 = vmatpush2.msra.mxu0 0.0
        %9679 = vmatprep.subr.mxu0 0.0
        %9680 = vmatpush2.msra.mxu0 0.0
        %9681 = vmatprep.subr.mxu0 0.0
        %9682 = vmatpush2.msra.mxu0 0.0
        %9683 = vmatprep.subr.mxu0 0.0
        %9684 = vmatpush2.msra.mxu0 0.0
        %9685 = vmatprep.subr.mxu0 0.0
        %9686 = vmatpush2.msra.mxu0 0.0
        %9687 = vmatprep.subr.mxu0 0.0
        %9688 = vmatpush2.msra.mxu0 0.0
        %9689 = vmatprep.subr.mxu0 0.0
        %9690 = vmatpush2.msra.mxu0 0.0
        %9691 = vmatprep.subr.mxu0 0.0
        %9692 = vmatpush2.msra.mxu0 0.0
        %9693 = vmatprep.subr.mxu0 0.0
        %9694 = vmatpush2.msra.mxu0 0.0
        %9695 = vmatprep.mubr.f32.mxu0 0.0
        %v9696 = vand.u32 %v8726, 4294901760
        %9697 = vmatmul.mubr.f32.gmra.mxu0 %v9696
        %v9698 = vpop.f32.mrf.mxu0
        %v9699 = vadd.f32 %v9624, %v9698
        %v9700 = vpop.f32.mrf.mxu0
        %9701 = vdwg.mxu0
        %v9702 = vsub.f32 0.0, %v9210
        %v9703 = vmul.f32 %v9702, 1.442695
        %v9704 = vpow.pop %v9703
        %v9705 = vadd.f32 %v9704, 1.0
        %v9706 = vrcp.pop %v9705
        %v9707 = vmul.f32 %v9210, %v9706
        %v9708 = vmul.f32 %v9707, %v9699
        %v9709 = vld [vmem:[%s856] sm:$0xff]
        %v9710 = vld [vmem:[%s856 + $0x8] sm:$0xff]
        %v9711 = vld [vmem:[%s856 + $0x10] sm:$0xff]
        %v9712 = vld [vmem:[%s856 + $0x18] sm:$0xff]
        %v9713 = vld [vmem:[%s856 + $0x20] sm:$0xff]
        %v9714 = vld [vmem:[%s856 + $0x28] sm:$0xff]
        %v9715 = vld [vmem:[%s856 + $0x30] sm:$0xff]
        %v9716 = vld [vmem:[%s856 + $0x38] sm:$0xff]
        %v9717 = vld [vmem:[%s856 + $0x40] sm:$0xff]
        %v9718 = vld [vmem:[%s856 + $0x48] sm:$0xff]
        %v9719 = vld [vmem:[%s856 + $0x50] sm:$0xff]
        %v9720 = vld [vmem:[%s856 + $0x58] sm:$0xff]
        %v9721 = vld [vmem:[%s856 + $0x60] sm:$0xff]
        %v9722 = vld [vmem:[%s856 + $0x68] sm:$0xff]
        %v9723 = vld [vmem:[%s856 + $0x70] sm:$0xff]
        %v9724 = vld [vmem:[%s856 + $0x78] sm:$0xff]
        %9725 = vmatprep.subr.mxu0 0.0
        %v9726 = vand.u32 %v9724, 4294901760
        %9727 = vmatpush1.msra.mxu0 %v9726
        %9728 = vmatprep.subr.mxu0 0.0
        %v9729 = vand.u32 %v9723, 4294901760
        %9730 = vmatpush1.msra.mxu0 %v9729
        %9731 = vmatprep.subr.mxu0 0.0
        %v9732 = vand.u32 %v9722, 4294901760
        %9733 = vmatpush1.msra.mxu0 %v9732
        %9734 = vmatprep.subr.mxu0 0.0
        %v9735 = vand.u32 %v9721, 4294901760
        %9736 = vmatpush1.msra.mxu0 %v9735
        %9737 = vmatprep.subr.mxu0 0.0
        %v9738 = vand.u32 %v9720, 4294901760
        %9739 = vmatpush1.msra.mxu0 %v9738
        %9740 = vmatprep.subr.mxu0 0.0
        %v9741 = vand.u32 %v9719, 4294901760
        %9742 = vmatpush1.msra.mxu0 %v9741
        %9743 = vmatprep.subr.mxu0 0.0
        %v9744 = vand.u32 %v9718, 4294901760
        %9745 = vmatpush1.msra.mxu0 %v9744
        %9746 = vmatprep.subr.mxu0 0.0
        %v9747 = vand.u32 %v9717, 4294901760
        %9748 = vmatpush1.msra.mxu0 %v9747
        %9749 = vmatprep.subr.mxu0 0.0
        %v9750 = vand.u32 %v9716, 4294901760
        %9751 = vmatpush1.msra.mxu0 %v9750
        %9752 = vmatprep.subr.mxu0 0.0
        %v9753 = vand.u32 %v9715, 4294901760
        %9754 = vmatpush1.msra.mxu0 %v9753
        %9755 = vmatprep.subr.mxu0 0.0
        %v9756 = vand.u32 %v9714, 4294901760
        %9757 = vmatpush1.msra.mxu0 %v9756
        %9758 = vmatprep.subr.mxu0 0.0
        %v9759 = vand.u32 %v9713, 4294901760
        %9760 = vmatpush1.msra.mxu0 %v9759
        %9761 = vmatprep.subr.mxu0 0.0
        %v9762 = vand.u32 %v9712, 4294901760
        %9763 = vmatpush1.msra.mxu0 %v9762
        %9764 = vmatprep.subr.mxu0 0.0
        %v9765 = vand.u32 %v9711, 4294901760
        %9766 = vmatpush1.msra.mxu0 %v9765
        %9767 = vmatprep.subr.mxu0 0.0
        %v9768 = vand.u32 %v9710, 4294901760
        %9769 = vmatpush1.msra.mxu0 %v9768
        %9770 = vmatprep.subr.mxu0 0.0
        %v9771 = vand.u32 %v9709, 4294901760
        %9772 = vmatpush1.msra.mxu0 %v9771
        %9773 = vmatprep.subr.mxu0 0.0
        %9774 = vmatpush2.msra.mxu0 0.0
        %9775 = vmatprep.subr.mxu0 0.0
        %9776 = vmatpush2.msra.mxu0 0.0
        %9777 = vmatprep.subr.mxu0 0.0
        %9778 = vmatpush2.msra.mxu0 0.0
        %9779 = vmatprep.subr.mxu0 0.0
        %9780 = vmatpush2.msra.mxu0 0.0
        %9781 = vmatprep.subr.mxu0 0.0
        %9782 = vmatpush2.msra.mxu0 0.0
        %9783 = vmatprep.subr.mxu0 0.0
        %9784 = vmatpush2.msra.mxu0 0.0
        %9785 = vmatprep.subr.mxu0 0.0
        %9786 = vmatpush2.msra.mxu0 0.0
        %9787 = vmatprep.subr.mxu0 0.0
        %9788 = vmatpush2.msra.mxu0 0.0
        %9789 = vmatprep.subr.mxu0 0.0
        %9790 = vmatpush2.msra.mxu0 0.0
        %9791 = vmatprep.subr.mxu0 0.0
        %9792 = vmatpush2.msra.mxu0 0.0
        %9793 = vmatprep.subr.mxu0 0.0
        %9794 = vmatpush2.msra.mxu0 0.0
        %9795 = vmatprep.subr.mxu0 0.0
        %9796 = vmatpush2.msra.mxu0 0.0
        %9797 = vmatprep.subr.mxu0 0.0
        %9798 = vmatpush2.msra.mxu0 0.0
        %9799 = vmatprep.subr.mxu0 0.0
        %9800 = vmatpush2.msra.mxu0 0.0
        %9801 = vmatprep.subr.mxu0 0.0
        %9802 = vmatpush2.msra.mxu0 0.0
        %9803 = vmatprep.subr.mxu0 0.0
        %9804 = vmatpush2.msra.mxu0 0.0
        %9805 = vmatprep.mubr.f32.mxu0 0.0
        %v9806 = vand.u32 %v9708, 4294901760
        %v9807 = vsub.f32 %v9708, %v9806
        %v9808 = vand.u32 %v9807, 4294901760
        %v9809 = vsub.f32 %v9807, %v9808
        %v9810 = vand.u32 %v9809, 4294901760
        %9811 = vmatmul.mubr.f32.gmra.mxu0 %v9810
        %v9812 = vpop.f32.mrf.mxu0
        %v9813 = vadd.f32 0.0, %v9812
        %v9814 = vpop.f32.mrf.mxu0
        %9815 = vdwg.mxu0
        %9816 = vmatprep.subr.mxu0 0.0
        %v9817 = vand.u32 %v9724, 4294901760
        %v9818 = vsub.f32 %v9724, %v9817
        %v9819 = vand.u32 %v9818, 4294901760
        %v9820 = vsub.f32 %v9818, %v9819
        %v9821 = vand.u32 %v9820, 4294901760
        %9822 = vmatpush1.msra.mxu0 %v9821
        %9823 = vmatprep.subr.mxu0 0.0
        %v9824 = vand.u32 %v9723, 4294901760
        %v9825 = vsub.f32 %v9723, %v9824
        %v9826 = vand.u32 %v9825, 4294901760
        %v9827 = vsub.f32 %v9825, %v9826
        %v9828 = vand.u32 %v9827, 4294901760
        %9829 = vmatpush1.msra.mxu0 %v9828
        %9830 = vmatprep.subr.mxu0 0.0
        %v9831 = vand.u32 %v9722, 4294901760
        %v9832 = vsub.f32 %v9722, %v9831
        %v9833 = vand.u32 %v9832, 4294901760
        %v9834 = vsub.f32 %v9832, %v9833
        %v9835 = vand.u32 %v9834, 4294901760
        %9836 = vmatpush1.msra.mxu0 %v9835
        %9837 = vmatprep.subr.mxu0 0.0
        %v9838 = vand.u32 %v9721, 4294901760
        %v9839 = vsub.f32 %v9721, %v9838
        %v9840 = vand.u32 %v9839, 4294901760
        %v9841 = vsub.f32 %v9839, %v9840
        %v9842 = vand.u32 %v9841, 4294901760
        %9843 = vmatpush1.msra.mxu0 %v9842
        %9844 = vmatprep.subr.mxu0 0.0
        %v9845 = vand.u32 %v9720, 4294901760
        %v9846 = vsub.f32 %v9720, %v9845
        %v9847 = vand.u32 %v9846, 4294901760
        %v9848 = vsub.f32 %v9846, %v9847
        %v9849 = vand.u32 %v9848, 4294901760
        %9850 = vmatpush1.msra.mxu0 %v9849
        %9851 = vmatprep.subr.mxu0 0.0
        %v9852 = vand.u32 %v9719, 4294901760
        %v9853 = vsub.f32 %v9719, %v9852
        %v9854 = vand.u32 %v9853, 4294901760
        %v9855 = vsub.f32 %v9853, %v9854
        %v9856 = vand.u32 %v9855, 4294901760
        %9857 = vmatpush1.msra.mxu0 %v9856
        %9858 = vmatprep.subr.mxu0 0.0
        %v9859 = vand.u32 %v9718, 4294901760
        %v9860 = vsub.f32 %v9718, %v9859
        %v9861 = vand.u32 %v9860, 4294901760
        %v9862 = vsub.f32 %v9860, %v9861
        %v9863 = vand.u32 %v9862, 4294901760
        %9864 = vmatpush1.msra.mxu0 %v9863
        %9865 = vmatprep.subr.mxu0 0.0
        %v9866 = vand.u32 %v9717, 4294901760
        %v9867 = vsub.f32 %v9717, %v9866
        %v9868 = vand.u32 %v9867, 4294901760
        %v9869 = vsub.f32 %v9867, %v9868
        %v9870 = vand.u32 %v9869, 4294901760
        %9871 = vmatpush1.msra.mxu0 %v9870
        %9872 = vmatprep.subr.mxu0 0.0
        %v9873 = vand.u32 %v9716, 4294901760
        %v9874 = vsub.f32 %v9716, %v9873
        %v9875 = vand.u32 %v9874, 4294901760
        %v9876 = vsub.f32 %v9874, %v9875
        %v9877 = vand.u32 %v9876, 4294901760
        %9878 = vmatpush1.msra.mxu0 %v9877
        %9879 = vmatprep.subr.mxu0 0.0
        %v9880 = vand.u32 %v9715, 4294901760
        %v9881 = vsub.f32 %v9715, %v9880
        %v9882 = vand.u32 %v9881, 4294901760
        %v9883 = vsub.f32 %v9881, %v9882
        %v9884 = vand.u32 %v9883, 4294901760
        %9885 = vmatpush1.msra.mxu0 %v9884
        %9886 = vmatprep.subr.mxu0 0.0
        %v9887 = vand.u32 %v9714, 4294901760
        %v9888 = vsub.f32 %v9714, %v9887
        %v9889 = vand.u32 %v9888, 4294901760
        %v9890 = vsub.f32 %v9888, %v9889
        %v9891 = vand.u32 %v9890, 4294901760
        %9892 = vmatpush1.msra.mxu0 %v9891
        %9893 = vmatprep.subr.mxu0 0.0
        %v9894 = vand.u32 %v9713, 4294901760
        %v9895 = vsub.f32 %v9713, %v9894
        %v9896 = vand.u32 %v9895, 4294901760
        %v9897 = vsub.f32 %v9895, %v9896
        %v9898 = vand.u32 %v9897, 4294901760
        %9899 = vmatpush1.msra.mxu0 %v9898
        %9900 = vmatprep.subr.mxu0 0.0
        %v9901 = vand.u32 %v9712, 4294901760
        %v9902 = vsub.f32 %v9712, %v9901
        %v9903 = vand.u32 %v9902, 4294901760
        %v9904 = vsub.f32 %v9902, %v9903
        %v9905 = vand.u32 %v9904, 4294901760
        %9906 = vmatpush1.msra.mxu0 %v9905
        %9907 = vmatprep.subr.mxu0 0.0
        %v9908 = vand.u32 %v9711, 4294901760
        %v9909 = vsub.f32 %v9711, %v9908
        %v9910 = vand.u32 %v9909, 4294901760
        %v9911 = vsub.f32 %v9909, %v9910
        %v9912 = vand.u32 %v9911, 4294901760
        %9913 = vmatpush1.msra.mxu0 %v9912
        %9914 = vmatprep.subr.mxu0 0.0
        %v9915 = vand.u32 %v9710, 4294901760
        %v9916 = vsub.f32 %v9710, %v9915
        %v9917 = vand.u32 %v9916, 4294901760
        %v9918 = vsub.f32 %v9916, %v9917
        %v9919 = vand.u32 %v9918, 4294901760
        %9920 = vmatpush1.msra.mxu0 %v9919
        %9921 = vmatprep.subr.mxu0 0.0
        %v9922 = vand.u32 %v9709, 4294901760
        %v9923 = vsub.f32 %v9709, %v9922
        %v9924 = vand.u32 %v9923, 4294901760
        %v9925 = vsub.f32 %v9923, %v9924
        %v9926 = vand.u32 %v9925, 4294901760
        %9927 = vmatpush1.msra.mxu0 %v9926
        %9928 = vmatprep.subr.mxu0 0.0
        %9929 = vmatpush2.msra.mxu0 0.0
        %9930 = vmatprep.subr.mxu0 0.0
        %9931 = vmatpush2.msra.mxu0 0.0
        %9932 = vmatprep.subr.mxu0 0.0
        %9933 = vmatpush2.msra.mxu0 0.0
        %9934 = vmatprep.subr.mxu0 0.0
        %9935 = vmatpush2.msra.mxu0 0.0
        %9936 = vmatprep.subr.mxu0 0.0
        %9937 = vmatpush2.msra.mxu0 0.0
        %9938 = vmatprep.subr.mxu0 0.0
        %9939 = vmatpush2.msra.mxu0 0.0
        %9940 = vmatprep.subr.mxu0 0.0
        %9941 = vmatpush2.msra.mxu0 0.0
        %9942 = vmatprep.subr.mxu0 0.0
        %9943 = vmatpush2.msra.mxu0 0.0
        %9944 = vmatprep.subr.mxu0 0.0
        %9945 = vmatpush2.msra.mxu0 0.0
        %9946 = vmatprep.subr.mxu0 0.0
        %9947 = vmatpush2.msra.mxu0 0.0
        %9948 = vmatprep.subr.mxu0 0.0
        %9949 = vmatpush2.msra.mxu0 0.0
        %9950 = vmatprep.subr.mxu0 0.0
        %9951 = vmatpush2.msra.mxu0 0.0
        %9952 = vmatprep.subr.mxu0 0.0
        %9953 = vmatpush2.msra.mxu0 0.0
        %9954 = vmatprep.subr.mxu0 0.0
        %9955 = vmatpush2.msra.mxu0 0.0
        %9956 = vmatprep.subr.mxu0 0.0
        %9957 = vmatpush2.msra.mxu0 0.0
        %9958 = vmatprep.subr.mxu0 0.0
        %9959 = vmatpush2.msra.mxu0 0.0
        %9960 = vmatprep.mubr.f32.mxu0 0.0
        %v9961 = vand.u32 %v9708, 4294901760
        %9962 = vmatmul.mubr.f32.gmra.mxu0 %v9961
        %v9963 = vpop.f32.mrf.mxu0
        %v9964 = vadd.f32 %v9813, %v9963
        %v9965 = vpop.f32.mrf.mxu0
        %9966 = vdwg.mxu0
        %9967 = vmatprep.subr.mxu0 0.0
        %v9968 = vand.u32 %v9724, 4294901760
        %v9969 = vsub.f32 %v9724, %v9968
        %9970 = vmatpush1.msra.mxu0 %v9969
        %9971 = vmatprep.subr.mxu0 0.0
        %v9972 = vand.u32 %v9723, 4294901760
        %v9973 = vsub.f32 %v9723, %v9972
        %9974 = vmatpush1.msra.mxu0 %v9973
        %9975 = vmatprep.subr.mxu0 0.0
        %v9976 = vand.u32 %v9722, 4294901760
        %v9977 = vsub.f32 %v9722, %v9976
        %9978 = vmatpush1.msra.mxu0 %v9977
        %9979 = vmatprep.subr.mxu0 0.0
        %v9980 = vand.u32 %v9721, 4294901760
        %v9981 = vsub.f32 %v9721, %v9980
        %9982 = vmatpush1.msra.mxu0 %v9981
        %9983 = vmatprep.subr.mxu0 0.0
        %v9984 = vand.u32 %v9720, 4294901760
        %v9985 = vsub.f32 %v9720, %v9984
        %9986 = vmatpush1.msra.mxu0 %v9985
        %9987 = vmatprep.subr.mxu0 0.0
        %v9988 = vand.u32 %v9719, 4294901760
        %v9989 = vsub.f32 %v9719, %v9988
        %9990 = vmatpush1.msra.mxu0 %v9989
        %9991 = vmatprep.subr.mxu0 0.0
        %v9992 = vand.u32 %v9718, 4294901760
        %v9993 = vsub.f32 %v9718, %v9992
        %9994 = vmatpush1.msra.mxu0 %v9993
        %9995 = vmatprep.subr.mxu0 0.0
        %v9996 = vand.u32 %v9717, 4294901760
        %v9997 = vsub.f32 %v9717, %v9996
        %9998 = vmatpush1.msra.mxu0 %v9997
        %9999 = vmatprep.subr.mxu0 0.0
        %v10000 = vand.u32 %v9716, 4294901760
        %v10001 = vsub.f32 %v9716, %v10000
        %10002 = vmatpush1.msra.mxu0 %v10001
        %10003 = vmatprep.subr.mxu0 0.0
        %v10004 = vand.u32 %v9715, 4294901760
        %v10005 = vsub.f32 %v9715, %v10004
        %10006 = vmatpush1.msra.mxu0 %v10005
        %10007 = vmatprep.subr.mxu0 0.0
        %v10008 = vand.u32 %v9714, 4294901760
        %v10009 = vsub.f32 %v9714, %v10008
        %10010 = vmatpush1.msra.mxu0 %v10009
        %10011 = vmatprep.subr.mxu0 0.0
        %v10012 = vand.u32 %v9713, 4294901760
        %v10013 = vsub.f32 %v9713, %v10012
        %10014 = vmatpush1.msra.mxu0 %v10013
        %10015 = vmatprep.subr.mxu0 0.0
        %v10016 = vand.u32 %v9712, 4294901760
        %v10017 = vsub.f32 %v9712, %v10016
        %10018 = vmatpush1.msra.mxu0 %v10017
        %10019 = vmatprep.subr.mxu0 0.0
        %v10020 = vand.u32 %v9711, 4294901760
        %v10021 = vsub.f32 %v9711, %v10020
        %10022 = vmatpush1.msra.mxu0 %v10021
        %10023 = vmatprep.subr.mxu0 0.0
        %v10024 = vand.u32 %v9710, 4294901760
        %v10025 = vsub.f32 %v9710, %v10024
        %10026 = vmatpush1.msra.mxu0 %v10025
        %10027 = vmatprep.subr.mxu0 0.0
        %v10028 = vand.u32 %v9709, 4294901760
        %v10029 = vsub.f32 %v9709, %v10028
        %10030 = vmatpush1.msra.mxu0 %v10029
        %10031 = vmatprep.subr.mxu0 0.0
        %10032 = vmatpush2.msra.mxu0 0.0
        %10033 = vmatprep.subr.mxu0 0.0
        %10034 = vmatpush2.msra.mxu0 0.0
        %10035 = vmatprep.subr.mxu0 0.0
        %10036 = vmatpush2.msra.mxu0 0.0
        %10037 = vmatprep.subr.mxu0 0.0
        %10038 = vmatpush2.msra.mxu0 0.0
        %10039 = vmatprep.subr.mxu0 0.0
        %10040 = vmatpush2.msra.mxu0 0.0
        %10041 = vmatprep.subr.mxu0 0.0
        %10042 = vmatpush2.msra.mxu0 0.0
        %10043 = vmatprep.subr.mxu0 0.0
        %10044 = vmatpush2.msra.mxu0 0.0
        %10045 = vmatprep.subr.mxu0 0.0
        %10046 = vmatpush2.msra.mxu0 0.0
        %10047 = vmatprep.subr.mxu0 0.0
        %10048 = vmatpush2.msra.mxu0 0.0
        %10049 = vmatprep.subr.mxu0 0.0
        %10050 = vmatpush2.msra.mxu0 0.0
        %10051 = vmatprep.subr.mxu0 0.0
        %10052 = vmatpush2.msra.mxu0 0.0
        %10053 = vmatprep.subr.mxu0 0.0
        %10054 = vmatpush2.msra.mxu0 0.0
        %10055 = vmatprep.subr.mxu0 0.0
        %10056 = vmatpush2.msra.mxu0 0.0
        %10057 = vmatprep.subr.mxu0 0.0
        %10058 = vmatpush2.msra.mxu0 0.0
        %10059 = vmatprep.subr.mxu0 0.0
        %10060 = vmatpush2.msra.mxu0 0.0
        %10061 = vmatprep.subr.mxu0 0.0
        %10062 = vmatpush2.msra.mxu0 0.0
        %10063 = vmatprep.mubr.f32.mxu0 0.0
        %v10064 = vand.u32 %v9708, 4294901760
        %v10065 = vsub.f32 %v9708, %v10064
        %10066 = vmatmul.mubr.f32.gmra.mxu0 %v10065
        %v10067 = vpop.f32.mrf.mxu0
        %v10068 = vadd.f32 %v9964, %v10067
        %v10069 = vpop.f32.mrf.mxu0
        %10070 = vdwg.mxu0
        %10071 = vmatprep.subr.mxu0 0.0
        %v10072 = vand.u32 %v9724, 4294901760
        %10073 = vmatpush1.msra.mxu0 %v10072
        %10074 = vmatprep.subr.mxu0 0.0
        %v10075 = vand.u32 %v9723, 4294901760
        %10076 = vmatpush1.msra.mxu0 %v10075
        %10077 = vmatprep.subr.mxu0 0.0
        %v10078 = vand.u32 %v9722, 4294901760
        %10079 = vmatpush1.msra.mxu0 %v10078
        %10080 = vmatprep.subr.mxu0 0.0
        %v10081 = vand.u32 %v9721, 4294901760
        %10082 = vmatpush1.msra.mxu0 %v10081
        %10083 = vmatprep.subr.mxu0 0.0
        %v10084 = vand.u32 %v9720, 4294901760
        %10085 = vmatpush1.msra.mxu0 %v10084
        %10086 = vmatprep.subr.mxu0 0.0
        %v10087 = vand.u32 %v9719, 4294901760
        %10088 = vmatpush1.msra.mxu0 %v10087
        %10089 = vmatprep.subr.mxu0 0.0
        %v10090 = vand.u32 %v9718, 4294901760
        %10091 = vmatpush1.msra.mxu0 %v10090
        %10092 = vmatprep.subr.mxu0 0.0
        %v10093 = vand.u32 %v9717, 4294901760
        %10094 = vmatpush1.msra.mxu0 %v10093
        %10095 = vmatprep.subr.mxu0 0.0
        %v10096 = vand.u32 %v9716, 4294901760
        %10097 = vmatpush1.msra.mxu0 %v10096
        %10098 = vmatprep.subr.mxu0 0.0
        %v10099 = vand.u32 %v9715, 4294901760
        %10100 = vmatpush1.msra.mxu0 %v10099
        %10101 = vmatprep.subr.mxu0 0.0
        %v10102 = vand.u32 %v9714, 4294901760
        %10103 = vmatpush1.msra.mxu0 %v10102
        %10104 = vmatprep.subr.mxu0 0.0
        %v10105 = vand.u32 %v9713, 4294901760
        %10106 = vmatpush1.msra.mxu0 %v10105
        %10107 = vmatprep.subr.mxu0 0.0
        %v10108 = vand.u32 %v9712, 4294901760
        %10109 = vmatpush1.msra.mxu0 %v10108
        %10110 = vmatprep.subr.mxu0 0.0
        %v10111 = vand.u32 %v9711, 4294901760
        %10112 = vmatpush1.msra.mxu0 %v10111
        %10113 = vmatprep.subr.mxu0 0.0
        %v10114 = vand.u32 %v9710, 4294901760
        %10115 = vmatpush1.msra.mxu0 %v10114
        %10116 = vmatprep.subr.mxu0 0.0
        %v10117 = vand.u32 %v9709, 4294901760
        %10118 = vmatpush1.msra.mxu0 %v10117
        %10119 = vmatprep.subr.mxu0 0.0
        %10120 = vmatpush2.msra.mxu0 0.0
        %10121 = vmatprep.subr.mxu0 0.0
        %10122 = vmatpush2.msra.mxu0 0.0
        %10123 = vmatprep.subr.mxu0 0.0
        %10124 = vmatpush2.msra.mxu0 0.0
        %10125 = vmatprep.subr.mxu0 0.0
        %10126 = vmatpush2.msra.mxu0 0.0
        %10127 = vmatprep.subr.mxu0 0.0
        %10128 = vmatpush2.msra.mxu0 0.0
        %10129 = vmatprep.subr.mxu0 0.0
        %10130 = vmatpush2.msra.mxu0 0.0
        %10131 = vmatprep.subr.mxu0 0.0
        %10132 = vmatpush2.msra.mxu0 0.0
        %10133 = vmatprep.subr.mxu0 0.0
        %10134 = vmatpush2.msra.mxu0 0.0
        %10135 = vmatprep.subr.mxu0 0.0
        %10136 = vmatpush2.msra.mxu0 0.0
        %10137 = vmatprep.subr.mxu0 0.0
        %10138 = vmatpush2.msra.mxu0 0.0
        %10139 = vmatprep.subr.mxu0 0.0
        %10140 = vmatpush2.msra.mxu0 0.0
        %10141 = vmatprep.subr.mxu0 0.0
        %10142 = vmatpush2.msra.mxu0 0.0
        %10143 = vmatprep.subr.mxu0 0.0
        %10144 = vmatpush2.msra.mxu0 0.0
        %10145 = vmatprep.subr.mxu0 0.0
        %10146 = vmatpush2.msra.mxu0 0.0
        %10147 = vmatprep.subr.mxu0 0.0
        %10148 = vmatpush2.msra.mxu0 0.0
        %10149 = vmatprep.subr.mxu0 0.0
        %10150 = vmatpush2.msra.mxu0 0.0
        %10151 = vmatprep.mubr.f32.mxu0 0.0
        %v10152 = vand.u32 %v9708, 4294901760
        %v10153 = vsub.f32 %v9708, %v10152
        %v10154 = vand.u32 %v10153, 4294901760
        %10155 = vmatmul.mubr.f32.gmra.mxu0 %v10154
        %v10156 = vpop.f32.mrf.mxu0
        %v10157 = vadd.f32 %v10068, %v10156
        %v10158 = vpop.f32.mrf.mxu0
        %10159 = vdwg.mxu0
        %10160 = vmatprep.subr.mxu0 0.0
        %v10161 = vand.u32 %v9724, 4294901760
        %v10162 = vsub.f32 %v9724, %v10161
        %v10163 = vand.u32 %v10162, 4294901760
        %10164 = vmatpush1.msra.mxu0 %v10163
        %10165 = vmatprep.subr.mxu0 0.0
        %v10166 = vand.u32 %v9723, 4294901760
        %v10167 = vsub.f32 %v9723, %v10166
        %v10168 = vand.u32 %v10167, 4294901760
        %10169 = vmatpush1.msra.mxu0 %v10168
        %10170 = vmatprep.subr.mxu0 0.0
        %v10171 = vand.u32 %v9722, 4294901760
        %v10172 = vsub.f32 %v9722, %v10171
        %v10173 = vand.u32 %v10172, 4294901760
        %10174 = vmatpush1.msra.mxu0 %v10173
        %10175 = vmatprep.subr.mxu0 0.0
        %v10176 = vand.u32 %v9721, 4294901760
        %v10177 = vsub.f32 %v9721, %v10176
        %v10178 = vand.u32 %v10177, 4294901760
        %10179 = vmatpush1.msra.mxu0 %v10178
        %10180 = vmatprep.subr.mxu0 0.0
        %v10181 = vand.u32 %v9720, 4294901760
        %v10182 = vsub.f32 %v9720, %v10181
        %v10183 = vand.u32 %v10182, 4294901760
        %10184 = vmatpush1.msra.mxu0 %v10183
        %10185 = vmatprep.subr.mxu0 0.0
        %v10186 = vand.u32 %v9719, 4294901760
        %v10187 = vsub.f32 %v9719, %v10186
        %v10188 = vand.u32 %v10187, 4294901760
        %10189 = vmatpush1.msra.mxu0 %v10188
        %10190 = vmatprep.subr.mxu0 0.0
        %v10191 = vand.u32 %v9718, 4294901760
        %v10192 = vsub.f32 %v9718, %v10191
        %v10193 = vand.u32 %v10192, 4294901760
        %10194 = vmatpush1.msra.mxu0 %v10193
        %10195 = vmatprep.subr.mxu0 0.0
        %v10196 = vand.u32 %v9717, 4294901760
        %v10197 = vsub.f32 %v9717, %v10196
        %v10198 = vand.u32 %v10197, 4294901760
        %10199 = vmatpush1.msra.mxu0 %v10198
        %10200 = vmatprep.subr.mxu0 0.0
        %v10201 = vand.u32 %v9716, 4294901760
        %v10202 = vsub.f32 %v9716, %v10201
        %v10203 = vand.u32 %v10202, 4294901760
        %10204 = vmatpush1.msra.mxu0 %v10203
        %10205 = vmatprep.subr.mxu0 0.0
        %v10206 = vand.u32 %v9715, 4294901760
        %v10207 = vsub.f32 %v9715, %v10206
        %v10208 = vand.u32 %v10207, 4294901760
        %10209 = vmatpush1.msra.mxu0 %v10208
        %10210 = vmatprep.subr.mxu0 0.0
        %v10211 = vand.u32 %v9714, 4294901760
        %v10212 = vsub.f32 %v9714, %v10211
        %v10213 = vand.u32 %v10212, 4294901760
        %10214 = vmatpush1.msra.mxu0 %v10213
        %10215 = vmatprep.subr.mxu0 0.0
        %v10216 = vand.u32 %v9713, 4294901760
        %v10217 = vsub.f32 %v9713, %v10216
        %v10218 = vand.u32 %v10217, 4294901760
        %10219 = vmatpush1.msra.mxu0 %v10218
        %10220 = vmatprep.subr.mxu0 0.0
        %v10221 = vand.u32 %v9712, 4294901760
        %v10222 = vsub.f32 %v9712, %v10221
        %v10223 = vand.u32 %v10222, 4294901760
        %10224 = vmatpush1.msra.mxu0 %v10223
        %10225 = vmatprep.subr.mxu0 0.0
        %v10226 = vand.u32 %v9711, 4294901760
        %v10227 = vsub.f32 %v9711, %v10226
        %v10228 = vand.u32 %v10227, 4294901760
        %10229 = vmatpush1.msra.mxu0 %v10228
        %10230 = vmatprep.subr.mxu0 0.0
        %v10231 = vand.u32 %v9710, 4294901760
        %v10232 = vsub.f32 %v9710, %v10231
        %v10233 = vand.u32 %v10232, 4294901760
        %10234 = vmatpush1.msra.mxu0 %v10233
        %10235 = vmatprep.subr.mxu0 0.0
        %v10236 = vand.u32 %v9709, 4294901760
        %v10237 = vsub.f32 %v9709, %v10236
        %v10238 = vand.u32 %v10237, 4294901760
        %10239 = vmatpush1.msra.mxu0 %v10238
        %10240 = vmatprep.subr.mxu0 0.0
        %10241 = vmatpush2.msra.mxu0 0.0
        %10242 = vmatprep.subr.mxu0 0.0
        %10243 = vmatpush2.msra.mxu0 0.0
        %10244 = vmatprep.subr.mxu0 0.0
        %10245 = vmatpush2.msra.mxu0 0.0
        %10246 = vmatprep.subr.mxu0 0.0
        %10247 = vmatpush2.msra.mxu0 0.0
        %10248 = vmatprep.subr.mxu0 0.0
        %10249 = vmatpush2.msra.mxu0 0.0
        %10250 = vmatprep.subr.mxu0 0.0
        %10251 = vmatpush2.msra.mxu0 0.0
        %10252 = vmatprep.subr.mxu0 0.0
        %10253 = vmatpush2.msra.mxu0 0.0
        %10254 = vmatprep.subr.mxu0 0.0
        %10255 = vmatpush2.msra.mxu0 0.0
        %10256 = vmatprep.subr.mxu0 0.0
        %10257 = vmatpush2.msra.mxu0 0.0
        %10258 = vmatprep.subr.mxu0 0.0
        %10259 = vmatpush2.msra.mxu0 0.0
        %10260 = vmatprep.subr.mxu0 0.0
        %10261 = vmatpush2.msra.mxu0 0.0
        %10262 = vmatprep.subr.mxu0 0.0
        %10263 = vmatpush2.msra.mxu0 0.0
        %10264 = vmatprep.subr.mxu0 0.0
        %10265 = vmatpush2.msra.mxu0 0.0
        %10266 = vmatprep.subr.mxu0 0.0
        %10267 = vmatpush2.msra.mxu0 0.0
        %10268 = vmatprep.subr.mxu0 0.0
        %10269 = vmatpush2.msra.mxu0 0.0
        %10270 = vmatprep.subr.mxu0 0.0
        %10271 = vmatpush2.msra.mxu0 0.0
        %10272 = vmatprep.mubr.f32.mxu0 0.0
        %v10273 = vand.u32 %v9708, 4294901760
        %10274 = vmatmul.mubr.f32.gmra.mxu0 %v10273
        %v10275 = vpop.f32.mrf.mxu0
        %v10276 = vadd.f32 %v10157, %v10275
        %v10277 = vpop.f32.mrf.mxu0
        %10278 = vdwg.mxu0
        %10279 = vmatprep.subr.mxu0 0.0
        %v10280 = vand.u32 %v9724, 4294901760
        %10281 = vmatpush1.msra.mxu0 %v10280
        %10282 = vmatprep.subr.mxu0 0.0
        %v10283 = vand.u32 %v9723, 4294901760
        %10284 = vmatpush1.msra.mxu0 %v10283
        %10285 = vmatprep.subr.mxu0 0.0
        %v10286 = vand.u32 %v9722, 4294901760
        %10287 = vmatpush1.msra.mxu0 %v10286
        %10288 = vmatprep.subr.mxu0 0.0
        %v10289 = vand.u32 %v9721, 4294901760
        %10290 = vmatpush1.msra.mxu0 %v10289
        %10291 = vmatprep.subr.mxu0 0.0
        %v10292 = vand.u32 %v9720, 4294901760
        %10293 = vmatpush1.msra.mxu0 %v10292
        %10294 = vmatprep.subr.mxu0 0.0
        %v10295 = vand.u32 %v9719, 4294901760
        %10296 = vmatpush1.msra.mxu0 %v10295
        %10297 = vmatprep.subr.mxu0 0.0
        %v10298 = vand.u32 %v9718, 4294901760
        %10299 = vmatpush1.msra.mxu0 %v10298
        %10300 = vmatprep.subr.mxu0 0.0
        %v10301 = vand.u32 %v9717, 4294901760
        %10302 = vmatpush1.msra.mxu0 %v10301
        %10303 = vmatprep.subr.mxu0 0.0
        %v10304 = vand.u32 %v9716, 4294901760
        %10305 = vmatpush1.msra.mxu0 %v10304
        %10306 = vmatprep.subr.mxu0 0.0
        %v10307 = vand.u32 %v9715, 4294901760
        %10308 = vmatpush1.msra.mxu0 %v10307
        %10309 = vmatprep.subr.mxu0 0.0
        %v10310 = vand.u32 %v9714, 4294901760
        %10311 = vmatpush1.msra.mxu0 %v10310
        %10312 = vmatprep.subr.mxu0 0.0
        %v10313 = vand.u32 %v9713, 4294901760
        %10314 = vmatpush1.msra.mxu0 %v10313
        %10315 = vmatprep.subr.mxu0 0.0
        %v10316 = vand.u32 %v9712, 4294901760
        %10317 = vmatpush1.msra.mxu0 %v10316
        %10318 = vmatprep.subr.mxu0 0.0
        %v10319 = vand.u32 %v9711, 4294901760
        %10320 = vmatpush1.msra.mxu0 %v10319
        %10321 = vmatprep.subr.mxu0 0.0
        %v10322 = vand.u32 %v9710, 4294901760
        %10323 = vmatpush1.msra.mxu0 %v10322
        %10324 = vmatprep.subr.mxu0 0.0
        %v10325 = vand.u32 %v9709, 4294901760
        %10326 = vmatpush1.msra.mxu0 %v10325
        %10327 = vmatprep.subr.mxu0 0.0
        %10328 = vmatpush2.msra.mxu0 0.0
        %10329 = vmatprep.subr.mxu0 0.0
        %10330 = vmatpush2.msra.mxu0 0.0
        %10331 = vmatprep.subr.mxu0 0.0
        %10332 = vmatpush2.msra.mxu0 0.0
        %10333 = vmatprep.subr.mxu0 0.0
        %10334 = vmatpush2.msra.mxu0 0.0
        %10335 = vmatprep.subr.mxu0 0.0
        %10336 = vmatpush2.msra.mxu0 0.0
        %10337 = vmatprep.subr.mxu0 0.0
        %10338 = vmatpush2.msra.mxu0 0.0
        %10339 = vmatprep.subr.mxu0 0.0
        %10340 = vmatpush2.msra.mxu0 0.0
        %10341 = vmatprep.subr.mxu0 0.0
        %10342 = vmatpush2.msra.mxu0 0.0
        %10343 = vmatprep.subr.mxu0 0.0
        %10344 = vmatpush2.msra.mxu0 0.0
        %10345 = vmatprep.subr.mxu0 0.0
        %10346 = vmatpush2.msra.mxu0 0.0
        %10347 = vmatprep.subr.mxu0 0.0
        %10348 = vmatpush2.msra.mxu0 0.0
        %10349 = vmatprep.subr.mxu0 0.0
        %10350 = vmatpush2.msra.mxu0 0.0
        %10351 = vmatprep.subr.mxu0 0.0
        %10352 = vmatpush2.msra.mxu0 0.0
        %10353 = vmatprep.subr.mxu0 0.0
        %10354 = vmatpush2.msra.mxu0 0.0
        %10355 = vmatprep.subr.mxu0 0.0
        %10356 = vmatpush2.msra.mxu0 0.0
        %10357 = vmatprep.subr.mxu0 0.0
        %10358 = vmatpush2.msra.mxu0 0.0
        %10359 = vmatprep.mubr.f32.mxu0 0.0
        %v10360 = vand.u32 %v9708, 4294901760
        %10361 = vmatmul.mubr.f32.gmra.mxu0 %v10360
        %v10362 = vpop.f32.mrf.mxu0
        %v10363 = vadd.f32 %v10276, %v10362
        %v10364 = vpop.f32.mrf.mxu0
        %10365 = vdwg.mxu0
        %v10366 = vadd.f32 %v8712, %v10363
        %10367 = vst.msk [vmem:[#allocation2] sm:$0xff] %vm874, %v10366
        %p10368 = scmp.eq.s32.totalorder %s37, 1
        // Predicated region
        $region113: #{qwen3_prefill.1} parent=107 // pred_check
          %p10369 = pneg %p10368
        $region114: #{qwen3_prefill.1} parent=107 // pred_check_branch
          %10371 = sbr.rel (%p10369) target = $region116
        $region115: #{qwen3_prefill.1} parent=107 // pred_region
          %v10372 = vmul.f32 %v10366, %v10366
          %v10373 = vsel %vm874, %v10372, 0.0
          %10374 = vadd.xlane.f32.xlu0 %v10373
          %v10375 = vpop.xlane.xlu0 %10374
          %v10376 = vmul.f32 %v10375, %v878
          %v10377 = vadd.f32 %v10376, 1e-06
          %v10378 = vrsqrt.pop %v10377
          %v10379 = vmul.f32 %v10366, %v10378
          %10380 = vst.msk [vmem:[#allocation3] sm:$0xff] %vm874, %v10379
        $region116: #{qwen3_prefill.1} parent=107 // pred_fallthru
          _
        %p10381 = scmp.lt.s32.totalorder %s37, 1
        %s10382 = scalar_select %p10381, %s37, 1
        %s10383 = smul.addr %s10382, 8
        %s10384 = scalar_lea.vmem %s23, %s10383
        %p10385 = scmp.lt.s32.totalorder %s37, 1
        %s10386 = scalar_select %p10385, %s37, 1
        %s10387 = smul.addr %s10386, 8
        %s10388 = scalar_lea.vmem %s24, %s10387
        // Predicated region
        $region117: #{qwen3_prefill.1} parent=107 // pred_check
          %p10389 = pneg %p547
        $region118: #{qwen3_prefill.1} parent=107 // pred_check_branch
          %10391 = sbr.rel (%p10389) target = $region120
        $region119: #{qwen3_prefill.1} parent=107 // pred_region
          %s10393 = ssub.s32 128, 128
          %10394 = vsyncadd [#allocation4], %s10393
          %s10396 = sshll.u32 [#allocation3], 4
          %s10397 = int_to_ptr.vmem [resolvable:$true] %s10396
          %10399 = dma.vmem_to_hbm [thread:$0]  %s10397, 128, %s22, [#allocation4]
        $region120: #{qwen3_prefill.1} parent=107 // pred_fallthru
          _
        // Predicated region
        $region121: #{qwen3_prefill.1} parent=107 // pred_check
          %p10400 = pneg %p573
        $region122: #{qwen3_prefill.1} parent=107 // pred_check_branch
          %10402 = sbr.rel (%p10400) target = $region124
        $region123: #{qwen3_prefill.1} parent=107 // pred_region
          _
        $region124: #{qwen3_prefill.1} parent=107 // pred_fallthru
          _
        // Predicated region
        $region125: #{qwen3_prefill.1} parent=107 // pred_check
          %p10403 = pneg %p599
        $region126: #{qwen3_prefill.1} parent=107 // pred_check_branch
          %10405 = sbr.rel (%p10403) target = $region128
        $region127: #{qwen3_prefill.1} parent=107 // pred_region
          _
        $region128: #{qwen3_prefill.1} parent=107 // pred_fallthru
          _
        // Predicated region
        $region129: #{qwen3_prefill.1} parent=107 // pred_check
          %p10406 = pneg %p547
        $region130: #{qwen3_prefill.1} parent=107 // pred_check_branch
          %10408 = sbr.rel (%p10406) target = $region132
        $region131: #{qwen3_prefill.1} parent=107 // pred_region
          %10409 = dma.done [#allocation4], 128
        $region132: #{qwen3_prefill.1} parent=107 // pred_fallthru
          _
      $region108: #{qwen3_prefill.1} parent=5 // pred_fallthru
        _
      %p10410 = scmp.le.s32.totalorder 2, %s32
      // Predicated region
      $region133: #{qwen3_prefill.1} parent=5 // pred_check
        %p10411 = pneg %p10410
      $region134: #{qwen3_prefill.1} parent=5 // pred_check_branch
        %10413 = sbr.rel (%p10411) target = $region136
      $region135: #{qwen3_prefill.1} parent=5 // pred_region
        %s10414 = ssub.s32 %s32, 2
        // Predicated region
        $region137: #{qwen3_prefill.1} parent=135 // pred_check
          %p10415 = pneg %p579
        $region138: #{qwen3_prefill.1} parent=135 // pred_check_branch
          %10417 = sbr.rel (%p10415) target = $region140
        $region139: #{qwen3_prefill.1} parent=135 // pred_region
          %p10418 = scmp.lt.s32.totalorder %s38, 1
          %s10419 = scalar_select %p10418, %s38, 1
          %s10420 = smul.addr %s10419, 8
          %s10421 = scalar_lea.vmem %s23, %s10420
        $region140: #{qwen3_prefill.1} parent=135 // pred_fallthru
          _
        // Predicated region
        $region141: #{qwen3_prefill.1} parent=135 // pred_check
          %p10422 = pneg %p605
        $region142: #{qwen3_prefill.1} parent=135 // pred_check_branch
          %10424 = sbr.rel (%p10422) target = $region144
        $region143: #{qwen3_prefill.1} parent=135 // pred_region
          %p10425 = scmp.lt.s32.totalorder %s38, 1
          %s10426 = scalar_select %p10425, %s38, 1
          %s10427 = smul.addr %s10426, 8
          %s10428 = scalar_lea.vmem %s24, %s10427
        $region144: #{qwen3_prefill.1} parent=135 // pred_fallthru
          _
      $region136: #{qwen3_prefill.1} parent=5 // pred_fallthru
        _
    $region6: #{qwen3_prefill.1} parent=1 // loop_footer
      %s36 = sadd.s32 1, %s32
    $region7: #{qwen3_prefill.1} parent=1 // loop_footer_branch
      %31 = sbr.rel target = $region3
    $region8: #{qwen3_prefill.1} parent=1 // loop_exit
      _
    %10429 = vsyncpa [#allocation4], 1
    %s10430 = scalar_lea.sflag [#allocation4], 1
    %10431 = vsyncpa %s10430, 1

</llo_original>
